<compile_context>
chip_gen: v5e
topology: v5e:2x2
jax: 0.10.0
libtpu: 0.0.40
codegen_flags: <defaults>
</compile_context>

<pallas_src>
import functools

import jax
import jax.numpy as jnp
from jax import lax
from jax.experimental import pallas as pl
from jax.experimental.pallas import tpu as pltpu

GN_GROUPS = 8
GN_EPS = 1e-5


def _cparams():
    return pltpu.CompilerParams(
        dimension_semantics=("parallel",),
        # Raise the scoped-VMEM budget (defaults: 16 MiB v5e / 32 MiB v6e,v7x).
        vmem_limit_bytes=64 * 1024 * 1024,
    )


# ----------------------------------------------------------------------------
# In-kernel helpers (operate on values already resident in VMEM/vregs)
# ----------------------------------------------------------------------------
def _silu(x):
    return x * jax.nn.sigmoid(x)


def _group_norm(x, gamma, beta, gmat, eps=GN_EPS):
    """GroupNorm on a single (S, C) slab. gmat: (C, G) one-hot group membership.

    Two-pass (centered) variance for numerical stability.
    """
    S, C = x.shape
    G = gmat.shape[1]
    n = float(S * (C // G))
    # pass 1: per-group mean via tiny MXU reductions (avoids lane-splitting reshapes)
    s1 = jnp.dot(jnp.sum(x, axis=0, keepdims=True), gmat,
                 preferred_element_type=jnp.float32)                    # (1, G)
    mean_g = s1 / n
    mean_c = lax.dot_general(mean_g, gmat, (((1,), (1,)), ((), ())),
                             preferred_element_type=jnp.float32)        # (1, C)
    xc = x - mean_c
    # pass 2: variance of the centered values
    s2 = jnp.dot(jnp.sum(xc * xc, axis=0, keepdims=True), gmat,
                 preferred_element_type=jnp.float32)                    # (1, G)
    var_c = lax.dot_general(s2 / n, gmat, (((1,), (1,)), ((), ())),
                            preferred_element_type=jnp.float32)         # (1, C)
    return (xc * lax.rsqrt(var_c + eps)) * gamma + beta


def _conv3x3(h_sc, w9_ref, H, W):
    """3x3 SAME conv as 9 shifted (S,Ci)x(Ci,Co) bf16 matmuls, f32 accumulation.

    h_sc:   (S=H*W, Ci) f32 activations (already GN+SiLU'd), resident in VMEM.
    w9_ref: (9, Ci, Co) bf16 weight ref; slab k corresponds to tap (ky, kx) = divmod(k, 3).
    """
    S, Ci = h_sc.shape
    Co = w9_ref.shape[-1]
    # cast to MXU dtype ONCE, then build the zero-padded window in bf16
    x_hwc = h_sc.astype(jnp.bfloat16).reshape(H, W, Ci)
    zrow = jnp.zeros((1, W, Ci), jnp.bfloat16)
    xp = jnp.concatenate([zrow, x_hwc, zrow], axis=0)
    zcol = jnp.zeros((H + 2, 1, Ci), jnp.bfloat16)
    xp = jnp.concatenate([zcol, xp, zcol], axis=1)                       # (H+2, W+2, Ci)
    acc = jnp.zeros((S, Co), jnp.float32)
    for ky in range(3):
        for kx in range(3):
            patch = xp[ky:ky + H, kx:kx + W, :].reshape(S, Ci)
            acc = acc + jnp.dot(patch, w9_ref[3 * ky + kx],
                                preferred_element_type=jnp.float32)
    return acc


# ----------------------------------------------------------------------------
# Kernels
# ----------------------------------------------------------------------------
def resnet_block_kernel(x_ref, t_ref,
                        g1_ref, bg1_ref, gm1_ref, w1_ref, cb1_ref, tw_ref, tb_ref,
                        g2_ref, bg2_ref, gm2_ref, w2_ref, cb2_ref, wr_ref, br_ref,
                        o_ref, *, H, W):
    """Fused ResNet block for one batch element (whole (S, C) slab in VMEM)."""
    x = x_ref[...].astype(jnp.float32)                                   # (S, Ci)

    # GroupNorm + SiLU (f32 elementwise)
    h = _silu(_group_norm(x, g1_ref[...], bg1_ref[...], gm1_ref[...]))

    # time-embedding projection (SiLU -> Linear), fused; broadcast over S
    t = _silu(t_ref[...].astype(jnp.float32))                            # (1, T)
    tp = jnp.dot(t.astype(jnp.bfloat16), tw_ref[...],
                 preferred_element_type=jnp.float32) + tb_ref[...]       # (1, Co)

    # conv1 (3x3) + bias + time embedding
    h = _conv3x3(h, w1_ref, H, W) + cb1_ref[...] + tp                    # (S, Co)

    # GroupNorm + SiLU
    h2 = _silu(_group_norm(h, g2_ref[...], bg2_ref[...], gm2_ref[...]))

    # conv2 (3x3) + bias + 1x1 residual conv on the block input
    out = _conv3x3(h2, w2_ref, H, W) + cb2_ref[...]
    out = out + jnp.dot(x.astype(jnp.bfloat16), wr_ref[...],
                        preferred_element_type=jnp.float32) + br_ref[...]
    o_ref[...] = out.astype(o_ref.dtype)


def attn_kernel(x_ref, g_ref, b_ref, gm_ref, wqkv_ref, bqkv_ref, wo_ref, bo_ref,
                o_ref, *, num_heads):
    """GroupNorm -> fused-QKV multi-head self-attention -> single out-proj -> residual."""
    x = x_ref[...].astype(jnp.float32)                                   # (S, C)
    S, C = x.shape
    hd = C // num_heads
    xn = _group_norm(x, g_ref[...], b_ref[...], gm_ref[...])

    # single (S, C) @ (C, 3C) projection; fold the 1/sqrt(hd) scale into Q (cheap: S*C
    # multiplies instead of S*S per head on the score path)
    qkv = jnp.dot(xn.astype(jnp.bfloat16), wqkv_ref[...],
                  preferred_element_type=jnp.float32) + bqkv_ref[...]    # (S, 3C)
    scale = 1.0 / (hd ** 0.5)
    q16 = (qkv[:, :C] * scale).astype(jnp.bfloat16)                      # (S, C)
    kv16 = qkv[:, C:].astype(jnp.bfloat16)                               # (S, 2C)

    heads = []
    for h in range(num_heads):
        qh = q16[:, h * hd:(h + 1) * hd]
        kh = kv16[:, h * hd:(h + 1) * hd]
        vh = kv16[:, C + h * hd:C + (h + 1) * hd]
        s = lax.dot_general(qh, kh, (((1,), (1,)), ((), ())),
                            preferred_element_type=jnp.float32)          # (S, S)
        s = s - jnp.max(s, axis=-1, keepdims=True)
        p = jnp.exp(s)
        p = p * pl.reciprocal(jnp.sum(p, axis=-1, keepdims=True), approx=True)
        heads.append(jnp.dot(p.astype(jnp.bfloat16), vh,
                             preferred_element_type=jnp.float32))        # (S, hd)
    ctx = jnp.concatenate(heads, axis=-1)                                # (S, C)

    # single (S, C) @ (C, C) output projection + residual
    y = jnp.dot(ctx.astype(jnp.bfloat16), wo_ref[...],
                preferred_element_type=jnp.float32) + bo_ref[...]
    o_ref[...] = (x + y).astype(o_ref.dtype)


# ----------------------------------------------------------------------------
# pallas_call wrappers
# ----------------------------------------------------------------------------
def _rep(arr):
    """BlockSpec that replicates a whole (small) array to every grid step."""
    nd = arr.ndim
    return pl.BlockSpec(arr.shape, lambda b, _n=nd: (0,) * _n)


def group_onehot(C, G=GN_GROUPS):
    cg = C // G
    ch = jnp.arange(C) // cg
    return (ch[:, None] == jnp.arange(G)[None, :]).astype(jnp.float32)


def resnet_block(x_bsc, t_emb, rp, H, W):
    B, S, Ci = x_bsc.shape
    Co = rp['conv1_b'].shape[-1]
    T = t_emb.shape[-1]
    gm1 = group_onehot(Ci)
    gm2 = group_onehot(Co)
    # weights to bf16 (MXU-native); 3x3 conv weights reshaped to 9 (Ci, Co) slabs
    w1 = rp['conv1_w'].reshape(9, Ci, Co).astype(jnp.bfloat16)
    w2 = rp['conv2_w'].reshape(9, Co, Co).astype(jnp.bfloat16)
    tw = rp['t_w'].astype(jnp.bfloat16)
    wr = rp['res_w'].astype(jnp.bfloat16)
    t3 = t_emb.reshape(B, 1, T)

    in_specs = [
        pl.BlockSpec((None, S, Ci), lambda b: (b, 0, 0)),     # x
        pl.BlockSpec((None, 1, T), lambda b: (b, 0, 0)),      # t_emb row
        _rep(rp['gn1_g']), _rep(rp['gn1_b']), _rep(gm1),
        _rep(w1), _rep(rp['conv1_b']), _rep(tw), _rep(rp['t_b']),
        _rep(rp['gn2_g']), _rep(rp['gn2_b']), _rep(gm2),
        _rep(w2), _rep(rp['conv2_b']), _rep(wr), _rep(rp['res_b']),
    ]
    return pl.pallas_call(
        functools.partial(resnet_block_kernel, H=H, W=W),
        out_shape=jax.ShapeDtypeStruct((B, S, Co), jnp.float32),
        grid=(B,),
        in_specs=in_specs,
        out_specs=pl.BlockSpec((None, S, Co), lambda b: (b, 0, 0)),
        compiler_params=_cparams(),
    )(x_bsc, t3,
      rp['gn1_g'], rp['gn1_b'], gm1, w1, rp['conv1_b'], tw, rp['t_b'],
      rp['gn2_g'], rp['gn2_b'], gm2, w2, rp['conv2_b'], wr, rp['res_b'])


def attn_block(x_bsc, ap, num_heads):
    B, S, C = x_bsc.shape
    gm = group_onehot(C)
    wqkv = jnp.concatenate([ap['wq'], ap['wk'], ap['wv']], axis=1).astype(jnp.bfloat16)
    bqkv = jnp.concatenate([ap['bq'], ap['bk'], ap['bv']], axis=1)
    wo = ap['wo'].astype(jnp.bfloat16)
    return pl.pallas_call(
        functools.partial(attn_kernel, num_heads=num_heads),
        out_shape=jax.ShapeDtypeStruct((B, S, C), jnp.float32),
        grid=(B,),
        in_specs=[pl.BlockSpec((None, S, C), lambda b: (b, 0, 0)),
                  _rep(ap['gn_g']), _rep(ap['gn_b']), _rep(gm),
                  _rep(wqkv), _rep(bqkv), _rep(wo), _rep(ap['bo'])],
        out_specs=pl.BlockSpec((None, S, C), lambda b: (b, 0, 0)),
        compiler_params=_cparams(),
    )(x_bsc, ap['gn_g'], ap['gn_b'], gm, wqkv, bqkv, wo, ap['bo'])


# ----------------------------------------------------------------------------
# Forward pass (JAX glue = layout plumbing only)
# ----------------------------------------------------------------------------
def midblock_forward(x_nchw, t_emb, params, num_heads):
    B, Cin, H, W = x_nchw.shape
    out = jnp.transpose(x_nchw, (0, 2, 3, 1)).reshape(B, H * W, Cin)   # NCHW -> (B, S, C)
    num_layers = len(params['attn'])
    for i in range(num_layers + 1):
        out = resnet_block(out, t_emb, params['resnet'][i], H, W)
        if i < num_layers:
            out = attn_block(out, params['attn'][i], num_heads)
    Co = out.shape[-1]
    return jnp.transpose(out.reshape(B, H, W, Co), (0, 3, 1, 2))       # -> NCHW


# ----------------------------------------------------------------------------
# Pure-JAX f32 reference (for correctness check)
# ----------------------------------------------------------------------------
def ref_group_norm(x_bsc, gamma, beta, G=GN_GROUPS, eps=GN_EPS):
    B, S, C = x_bsc.shape
    xg = x_bsc.reshape(B, S, G, C // G)
    mean = xg.mean(axis=(1, 3), keepdims=True)
    var = ((xg - mean) ** 2).mean(axis=(1, 3), keepdims=True)
    xn = ((xg - mean) / jnp.sqrt(var + eps)).reshape(B, S, C)
    return xn * gamma.reshape(1, 1, C) + beta.reshape(1, 1, C)


def ref_midblock(x_nchw, t_emb, params, num_heads):
    B, Cin, H, W = x_nchw.shape
    out = jnp.transpose(x_nchw, (0, 2, 3, 1))
    dn = ('NHWC', 'HWIO', 'NHWC')
    num_layers = len(params['attn'])
    for i in range(num_layers + 1):
        rp = params['resnet'][i]
        resnet_input = out
        Ci = out.shape[-1]
        Co = rp['conv1_b'].shape[-1]
        h = ref_group_norm(out.reshape(B, H * W, Ci), rp['gn1_g'], rp['gn1_b'])
        h = jax.nn.silu(h).reshape(B, H, W, Ci)
        h = lax.conv_general_dilated(h, rp['conv1_w'], (1, 1), 'SAME',
                                     dimension_numbers=dn) + rp['conv1_b'].reshape(1, 1, 1, Co)
        tp = jax.nn.silu(t_emb) @ rp['t_w'] + rp['t_b']
        h = h + tp.reshape(B, 1, 1, Co)
        h2 = ref_group_norm(h.reshape(B, H * W, Co), rp['gn2_g'], rp['gn2_b'])
        h2 = jax.nn.silu(h2).reshape(B, H, W, Co)
        h2 = lax.conv_general_dilated(h2, rp['conv2_w'], (1, 1), 'SAME',
                                      dimension_numbers=dn) + rp['conv2_b'].reshape(1, 1, 1, Co)
        res = resnet_input.reshape(B, H * W, Ci) @ rp['res_w'] + rp['res_b']
        out = h2 + res.reshape(B, H, W, Co)
        if i < num_layers:
            ap = params['attn'][i]
            xf = out.reshape(B, H * W, Co)
            xn = ref_group_norm(xf, ap['gn_g'], ap['gn_b'])
            q = xn @ ap['wq'] + ap['bq']
            k = xn @ ap['wk'] + ap['bk']
            v = xn @ ap['wv'] + ap['bv']
            hd = Co // num_heads
            qh = q.reshape(B, H * W, num_heads, hd).transpose(0, 2, 1, 3)
            kh = k.reshape(B, H * W, num_heads, hd).transpose(0, 2, 1, 3)
            vh = v.reshape(B, H * W, num_heads, hd).transpose(0, 2, 1, 3)
            s = jnp.einsum('bhsd,bhtd->bhst', qh, kh) / jnp.sqrt(float(hd))
            p = jax.nn.softmax(s, axis=-1)
            o = jnp.einsum('bhst,bhtd->bhsd', p, vh).transpose(0, 2, 1, 3).reshape(B, H * W, Co)
            y = o @ ap['wo'] + ap['bo']
            out = out + y.reshape(B, H, W, Co)
    return jnp.transpose(out, (0, 3, 1, 2))


# ----------------------------------------------------------------------------
# Deterministic parameter init (shapes mirror the PyTorch module's __init__)
# ----------------------------------------------------------------------------
def init_params(key, in_c, out_c, t_dim, num_layers):
    state = {'key': key}

    def nrm(shape, s=0.1):
        state['key'], k = jax.random.split(state['key'])
        return (s * jax.random.normal(k, shape)).astype(jnp.float32)

    resnet, attn = [], []
    for i in range(num_layers + 1):
        ci = in_c if i == 0 else out_c
        resnet.append(dict(
            gn1_g=1.0 + nrm((1, ci)), gn1_b=nrm((1, ci)),
            conv1_w=nrm((3, 3, ci, out_c)),            # HWIO (= torch (Co,Ci,3,3) transposed)
            conv1_b=nrm((1, out_c), 0.05),
            t_w=nrm((t_dim, out_c)), t_b=nrm((1, out_c), 0.05),
            gn2_g=1.0 + nrm((1, out_c)), gn2_b=nrm((1, out_c)),
            conv2_w=nrm((3, 3, out_c, out_c)), conv2_b=nrm((1, out_c), 0.05),
            res_w=nrm((ci, out_c)), res_b=nrm((1, out_c), 0.05),
        ))
    for _ in range(num_layers):
        attn.append(dict(
            gn_g=1.0 + nrm((1, out_c)), gn_b=nrm((1, out_c)),
            wq=nrm((out_c, out_c)), wk=nrm((out_c, out_c)), wv=nrm((out_c, out_c)),
            bq=nrm((1, out_c), 0.05), bk=nrm((1, out_c), 0.05), bv=nrm((1, out_c), 0.05),
            wo=nrm((out_c, out_c)), bo=nrm((1, out_c), 0.05),
        ))
    return dict(resnet=resnet, attn=attn)


if __name__ == "__main__":
    B, IN_C, OUT_C, T_DIM, H, W = 2, 16, 32, 32, 8, 8
    NUM_HEADS, NUM_LAYERS = 4, 1

    key = jax.random.PRNGKey(0)
    kx, kt, kp = jax.random.split(key, 3)
    x = jax.random.normal(kx, (B, IN_C, H, W), jnp.float32)        # NCHW, like PyTorch
    t_emb = jax.random.normal(kt, (B, T_DIM), jnp.float32)
    params = init_params(kp, IN_C, OUT_C, T_DIM, NUM_LAYERS)

    fwd = jax.jit(functools.partial(midblock_forward, num_heads=NUM_HEADS))
    out = jax.block_until_ready(fwd(x, t_emb, params))

    ref = ref_midblock(x, t_emb, params, NUM_HEADS)
    assert out.shape == (B, OUT_C, H, W), out.shape
    max_err = float(jnp.max(jnp.abs(out - ref)))
    scale = float(jnp.max(jnp.abs(ref)))
    # bf16-MXU / f32-accumulate vs. pure-f32 reference: scale-relative tolerance.
    tol = 2.5e-2 * max(scale, 1.0)
    if max_err > tol:
        raise AssertionError(
            f"Pallas MidBlock mismatch vs reference: max abs err {max_err:.4e} > tol {tol:.4e}")
    print("KERNEL_OK")
</pallas_src>

<mosaic_0001>
module attributes {stable_mosaic.version = 11 : i64} {
  func.func @attn_kernel(%arg0: i32, %arg1: memref<1x64x32xf32, #tpu.memory_space<vmem>>, %arg2: memref<1x32xf32, #tpu.memory_space<vmem>>, %arg3: memref<1x32xf32, #tpu.memory_space<vmem>>, %arg4: memref<32x8xf32, #tpu.memory_space<vmem>>, %arg5: memref<32x96xbf16, #tpu.memory_space<vmem>>, %arg6: memref<1x96xf32, #tpu.memory_space<vmem>>, %arg7: memref<32x32xbf16, #tpu.memory_space<vmem>>, %arg8: memref<1x32xf32, #tpu.memory_space<vmem>>, %arg9: memref<1x64x32xf32, #tpu.memory_space<vmem>>) attributes {dimension_semantics = [#tpu.dimension_semantics<parallel>], iteration_bounds = array<i64: 2>, scalar_prefetch = 0 : i64, scratch_operands = 0 : i64, tpu.core_type = #tpu.core_type<tc>, window_params = [{transform_indices = @transform_0, window_bounds = array<i64: 1, 64, 32>}, {pipeline_mode = #tpu.pipeline_mode<synchronous>, transform_indices = @transform_1, window_bounds = array<i64: 1, 32>}, {pipeline_mode = #tpu.pipeline_mode<synchronous>, transform_indices = @transform_2, window_bounds = array<i64: 1, 32>}, {pipeline_mode = #tpu.pipeline_mode<synchronous>, transform_indices = @transform_3, window_bounds = array<i64: 32, 8>}, {pipeline_mode = #tpu.pipeline_mode<synchronous>, transform_indices = @transform_4, window_bounds = array<i64: 32, 96>}, {pipeline_mode = #tpu.pipeline_mode<synchronous>, transform_indices = @transform_5, window_bounds = array<i64: 1, 96>}, {pipeline_mode = #tpu.pipeline_mode<synchronous>, transform_indices = @transform_6, window_bounds = array<i64: 32, 32>}, {pipeline_mode = #tpu.pipeline_mode<synchronous>, transform_indices = @transform_7, window_bounds = array<i64: 1, 32>}, {transform_indices = @transform_8, window_bounds = array<i64: 1, 64, 32>}]} {
    %c0 = arith.constant 0 : index
    %c0_0 = arith.constant 0 : index
    %c0_1 = arith.constant 0 : index
    %0 = vector.load %arg1[%c0, %c0_0, %c0_1] : memref<1x64x32xf32, #tpu.memory_space<vmem>>, vector<1x64x32xf32>
    %1 = vector.shape_cast %0 : vector<1x64x32xf32> to vector<64x32xf32>
    %c0_2 = arith.constant 0 : index
    %c0_3 = arith.constant 0 : index
    %2 = vector.load %arg2[%c0_2, %c0_3] : memref<1x32xf32, #tpu.memory_space<vmem>>, vector<1x32xf32>
    %c0_4 = arith.constant 0 : index
    %c0_5 = arith.constant 0 : index
    %3 = vector.load %arg3[%c0_4, %c0_5] : memref<1x32xf32, #tpu.memory_space<vmem>>, vector<1x32xf32>
    %c0_6 = arith.constant 0 : index
    %c0_7 = arith.constant 0 : index
    %4 = vector.load %arg4[%c0_6, %c0_7] : memref<32x8xf32, #tpu.memory_space<vmem>>, vector<32x8xf32>
    %cst = arith.constant dense<0.000000e+00> : vector<32xf32>
    %5 = vector.multi_reduction <add>, %1, %cst [0] : vector<64x32xf32> to vector<32xf32>
    %6 = vector.shape_cast %5 : vector<32xf32> to vector<1x32xf32>
    %cst_8 = arith.constant dense<0.000000e+00> : vector<1x8xf32>
    %7 = tpu.matmul %6, %4, %cst_8 {dimension_numbers = #tpu.dot_dimension_numbers<[1], [0], [0], [1], [0, 0, 1, 1], [], []>} : vector<1x32xf32>, vector<32x8xf32>, vector<1x8xf32> -> vector<1x8xf32>
    %cst_9 = arith.constant 2.560000e+02 : f32
    %8 = vector.broadcast %cst_9 : f32 to vector<1x8xf32>
    %9 = arith.divf %7, %8 : vector<1x8xf32>
    %cst_10 = arith.constant dense<0.000000e+00> : vector<1x32xf32>
    %10 = tpu.matmul %9, %4, %cst_10 {dimension_numbers = #tpu.dot_dimension_numbers<[1], [1], [0], [0], [0, 0, 1, 0], [], []>} : vector<1x8xf32>, vector<32x8xf32>, vector<1x32xf32> -> vector<1x32xf32>
    %11 = vector.broadcast %10 : vector<1x32xf32> to vector<64x32xf32>
    %12 = arith.subf %1, %11 : vector<64x32xf32>
    %13 = arith.mulf %12, %12 : vector<64x32xf32>
    %cst_11 = arith.constant dense<0.000000e+00> : vector<32xf32>
    %14 = vector.multi_reduction <add>, %13, %cst_11 [0] : vector<64x32xf32> to vector<32xf32>
    %15 = vector.shape_cast %14 : vector<32xf32> to vector<1x32xf32>
    %cst_12 = arith.constant dense<0.000000e+00> : vector<1x8xf32>
    %16 = tpu.matmul %15, %4, %cst_12 {dimension_numbers = #tpu.dot_dimension_numbers<[1], [0], [0], [1], [0, 0, 1, 1], [], []>} : vector<1x32xf32>, vector<32x8xf32>, vector<1x8xf32> -> vector<1x8xf32>
    %cst_13 = arith.constant 2.560000e+02 : f32
    %17 = vector.broadcast %cst_13 : f32 to vector<1x8xf32>
    %18 = arith.divf %16, %17 : vector<1x8xf32>
    %cst_14 = arith.constant dense<0.000000e+00> : vector<1x32xf32>
    %19 = tpu.matmul %18, %4, %cst_14 {dimension_numbers = #tpu.dot_dimension_numbers<[1], [1], [0], [0], [0, 0, 1, 0], [], []>} : vector<1x8xf32>, vector<32x8xf32>, vector<1x32xf32> -> vector<1x32xf32>
    %cst_15 = arith.constant 9.99999974E-6 : f32
    %20 = vector.broadcast %cst_15 : f32 to vector<1x32xf32>
    %21 = arith.addf %19, %20 : vector<1x32xf32>
    %22 = math.rsqrt %21 : vector<1x32xf32>
    %23 = vector.broadcast %22 : vector<1x32xf32> to vector<64x32xf32>
    %24 = arith.mulf %12, %23 : vector<64x32xf32>
    %25 = vector.broadcast %2 : vector<1x32xf32> to vector<64x32xf32>
    %26 = arith.mulf %24, %25 : vector<64x32xf32>
    %27 = vector.broadcast %3 : vector<1x32xf32> to vector<64x32xf32>
    %28 = arith.addf %26, %27 : vector<64x32xf32>
    %29 = arith.truncf %28 : vector<64x32xf32> to vector<64x32xbf16>
    %c0_16 = arith.constant 0 : index
    %c0_17 = arith.constant 0 : index
    %30 = vector.load %arg5[%c0_16, %c0_17] : memref<32x96xbf16, #tpu.memory_space<vmem>>, vector<32x96xbf16>
    %cst_18 = arith.constant dense<0.000000e+00> : vector<64x96xf32>
    %31 = tpu.matmul %29, %30, %cst_18 {dimension_numbers = #tpu.dot_dimension_numbers<[1], [0], [0], [1], [0, 0, 1, 1], [], []>} : vector<64x32xbf16>, vector<32x96xbf16>, vector<64x96xf32> -> vector<64x96xf32>
    %c0_19 = arith.constant 0 : index
    %c0_20 = arith.constant 0 : index
    %32 = vector.load %arg6[%c0_19, %c0_20] : memref<1x96xf32, #tpu.memory_space<vmem>>, vector<1x96xf32>
    %33 = vector.broadcast %32 : vector<1x96xf32> to vector<64x96xf32>
    %34 = arith.addf %31, %33 : vector<64x96xf32>
    %35 = vector.extract_strided_slice %34 {offsets = [0, 0], sizes = [64, 32], strides = [1, 1]} : vector<64x96xf32> to vector<64x32xf32>
    %cst_21 = arith.constant 0.353553385 : f32
    %36 = vector.broadcast %cst_21 : f32 to vector<64x32xf32>
    %37 = arith.mulf %35, %36 : vector<64x32xf32>
    %38 = arith.truncf %37 : vector<64x32xf32> to vector<64x32xbf16>
    %39 = vector.extract_strided_slice %34 {offsets = [0, 32], sizes = [64, 64], strides = [1, 1]} : vector<64x96xf32> to vector<64x64xf32>
    %40 = arith.truncf %39 : vector<64x64xf32> to vector<64x64xbf16>
    %41 = vector.extract_strided_slice %38 {offsets = [0, 0], sizes = [64, 8], strides = [1, 1]} : vector<64x32xbf16> to vector<64x8xbf16>
    %42 = vector.extract_strided_slice %40 {offsets = [0, 0], sizes = [64, 8], strides = [1, 1]} : vector<64x64xbf16> to vector<64x8xbf16>
    %43 = vector.extract_strided_slice %40 {offsets = [0, 32], sizes = [64, 8], strides = [1, 1]} : vector<64x64xbf16> to vector<64x8xbf16>
    %cst_22 = arith.constant dense<0.000000e+00> : vector<64x64xf32>
    %44 = tpu.matmul %41, %42, %cst_22 {dimension_numbers = #tpu.dot_dimension_numbers<[1], [1], [0], [0], [0, 0, 1, 0], [], []>} : vector<64x8xbf16>, vector<64x8xbf16>, vector<64x64xf32> -> vector<64x64xf32>
    %cst_23 = arith.constant dense<0xFF800000> : vector<64xf32>
    %45 = vector.multi_reduction <maximumf>, %44, %cst_23 [1] : vector<64x64xf32> to vector<64xf32>
    %46 = vector.shape_cast %45 : vector<64xf32> to vector<64x1xf32>
    %47 = vector.broadcast %46 : vector<64x1xf32> to vector<64x64xf32>
    %48 = arith.subf %44, %47 : vector<64x64xf32>
    %49 = math.exp %48 : vector<64x64xf32>
    %cst_24 = arith.constant dense<0.000000e+00> : vector<64xf32>
    %50 = vector.multi_reduction <add>, %49, %cst_24 [1] : vector<64x64xf32> to vector<64xf32>
    %51 = vector.shape_cast %50 : vector<64xf32> to vector<64x1xf32>
    %52 = tpu.reciprocal %51 {approx = true} : vector<64x1xf32> -> vector<64x1xf32>
    %53 = vector.broadcast %52 : vector<64x1xf32> to vector<64x64xf32>
    %54 = arith.mulf %49, %53 : vector<64x64xf32>
    %55 = arith.truncf %54 : vector<64x64xf32> to vector<64x64xbf16>
    %cst_25 = arith.constant dense<0.000000e+00> : vector<64x8xf32>
    %56 = tpu.matmul %55, %43, %cst_25 {dimension_numbers = #tpu.dot_dimension_numbers<[1], [0], [0], [1], [0, 0, 1, 1], [], []>} : vector<64x64xbf16>, vector<64x8xbf16>, vector<64x8xf32> -> vector<64x8xf32>
    %57 = vector.extract_strided_slice %38 {offsets = [0, 8], sizes = [64, 8], strides = [1, 1]} : vector<64x32xbf16> to vector<64x8xbf16>
    %58 = vector.extract_strided_slice %40 {offsets = [0, 8], sizes = [64, 8], strides = [1, 1]} : vector<64x64xbf16> to vector<64x8xbf16>
    %59 = vector.extract_strided_slice %40 {offsets = [0, 40], sizes = [64, 8], strides = [1, 1]} : vector<64x64xbf16> to vector<64x8xbf16>
    %cst_26 = arith.constant dense<0.000000e+00> : vector<64x64xf32>
    %60 = tpu.matmul %57, %58, %cst_26 {dimension_numbers = #tpu.dot_dimension_numbers<[1], [1], [0], [0], [0, 0, 1, 0], [], []>} : vector<64x8xbf16>, vector<64x8xbf16>, vector<64x64xf32> -> vector<64x64xf32>
    %cst_27 = arith.constant dense<0xFF800000> : vector<64xf32>
    %61 = vector.multi_reduction <maximumf>, %60, %cst_27 [1] : vector<64x64xf32> to vector<64xf32>
    %62 = vector.shape_cast %61 : vector<64xf32> to vector<64x1xf32>
    %63 = vector.broadcast %62 : vector<64x1xf32> to vector<64x64xf32>
    %64 = arith.subf %60, %63 : vector<64x64xf32>
    %65 = math.exp %64 : vector<64x64xf32>
    %cst_28 = arith.constant dense<0.000000e+00> : vector<64xf32>
    %66 = vector.multi_reduction <add>, %65, %cst_28 [1] : vector<64x64xf32> to vector<64xf32>
    %67 = vector.shape_cast %66 : vector<64xf32> to vector<64x1xf32>
    %68 = tpu.reciprocal %67 {approx = true} : vector<64x1xf32> -> vector<64x1xf32>
    %69 = vector.broadcast %68 : vector<64x1xf32> to vector<64x64xf32>
    %70 = arith.mulf %65, %69 : vector<64x64xf32>
    %71 = arith.truncf %70 : vector<64x64xf32> to vector<64x64xbf16>
    %cst_29 = arith.constant dense<0.000000e+00> : vector<64x8xf32>
    %72 = tpu.matmul %71, %59, %cst_29 {dimension_numbers = #tpu.dot_dimension_numbers<[1], [0], [0], [1], [0, 0, 1, 1], [], []>} : vector<64x64xbf16>, vector<64x8xbf16>, vector<64x8xf32> -> vector<64x8xf32>
    %73 = vector.extract_strided_slice %38 {offsets = [0, 16], sizes = [64, 8], strides = [1, 1]} : vector<64x32xbf16> to vector<64x8xbf16>
    %74 = vector.extract_strided_slice %40 {offsets = [0, 16], sizes = [64, 8], strides = [1, 1]} : vector<64x64xbf16> to vector<64x8xbf16>
    %75 = vector.extract_strided_slice %40 {offsets = [0, 48], sizes = [64, 8], strides = [1, 1]} : vector<64x64xbf16> to vector<64x8xbf16>
    %cst_30 = arith.constant dense<0.000000e+00> : vector<64x64xf32>
    %76 = tpu.matmul %73, %74, %cst_30 {dimension_numbers = #tpu.dot_dimension_numbers<[1], [1], [0], [0], [0, 0, 1, 0], [], []>} : vector<64x8xbf16>, vector<64x8xbf16>, vector<64x64xf32> -> vector<64x64xf32>
    %cst_31 = arith.constant dense<0xFF800000> : vector<64xf32>
    %77 = vector.multi_reduction <maximumf>, %76, %cst_31 [1] : vector<64x64xf32> to vector<64xf32>
    %78 = vector.shape_cast %77 : vector<64xf32> to vector<64x1xf32>
    %79 = vector.broadcast %78 : vector<64x1xf32> to vector<64x64xf32>
    %80 = arith.subf %76, %79 : vector<64x64xf32>
    %81 = math.exp %80 : vector<64x64xf32>
    %cst_32 = arith.constant dense<0.000000e+00> : vector<64xf32>
    %82 = vector.multi_reduction <add>, %81, %cst_32 [1] : vector<64x64xf32> to vector<64xf32>
    %83 = vector.shape_cast %82 : vector<64xf32> to vector<64x1xf32>
    %84 = tpu.reciprocal %83 {approx = true} : vector<64x1xf32> -> vector<64x1xf32>
    %85 = vector.broadcast %84 : vector<64x1xf32> to vector<64x64xf32>
    %86 = arith.mulf %81, %85 : vector<64x64xf32>
    %87 = arith.truncf %86 : vector<64x64xf32> to vector<64x64xbf16>
    %cst_33 = arith.constant dense<0.000000e+00> : vector<64x8xf32>
    %88 = tpu.matmul %87, %75, %cst_33 {dimension_numbers = #tpu.dot_dimension_numbers<[1], [0], [0], [1], [0, 0, 1, 1], [], []>} : vector<64x64xbf16>, vector<64x8xbf16>, vector<64x8xf32> -> vector<64x8xf32>
    %89 = vector.extract_strided_slice %38 {offsets = [0, 24], sizes = [64, 8], strides = [1, 1]} : vector<64x32xbf16> to vector<64x8xbf16>
    %90 = vector.extract_strided_slice %40 {offsets = [0, 24], sizes = [64, 8], strides = [1, 1]} : vector<64x64xbf16> to vector<64x8xbf16>
    %91 = vector.extract_strided_slice %40 {offsets = [0, 56], sizes = [64, 8], strides = [1, 1]} : vector<64x64xbf16> to vector<64x8xbf16>
    %cst_34 = arith.constant dense<0.000000e+00> : vector<64x64xf32>
    %92 = tpu.matmul %89, %90, %cst_34 {dimension_numbers = #tpu.dot_dimension_numbers<[1], [1], [0], [0], [0, 0, 1, 0], [], []>} : vector<64x8xbf16>, vector<64x8xbf16>, vector<64x64xf32> -> vector<64x64xf32>
    %cst_35 = arith.constant dense<0xFF800000> : vector<64xf32>
    %93 = vector.multi_reduction <maximumf>, %92, %cst_35 [1] : vector<64x64xf32> to vector<64xf32>
    %94 = vector.shape_cast %93 : vector<64xf32> to vector<64x1xf32>
    %95 = vector.broadcast %94 : vector<64x1xf32> to vector<64x64xf32>
    %96 = arith.subf %92, %95 : vector<64x64xf32>
    %97 = math.exp %96 : vector<64x64xf32>
    %cst_36 = arith.constant dense<0.000000e+00> : vector<64xf32>
    %98 = vector.multi_reduction <add>, %97, %cst_36 [1] : vector<64x64xf32> to vector<64xf32>
    %99 = vector.shape_cast %98 : vector<64xf32> to vector<64x1xf32>
    %100 = tpu.reciprocal %99 {approx = true} : vector<64x1xf32> -> vector<64x1xf32>
    %101 = vector.broadcast %100 : vector<64x1xf32> to vector<64x64xf32>
    %102 = arith.mulf %97, %101 : vector<64x64xf32>
    %103 = arith.truncf %102 : vector<64x64xf32> to vector<64x64xbf16>
    %cst_37 = arith.constant dense<0.000000e+00> : vector<64x8xf32>
    %104 = tpu.matmul %103, %91, %cst_37 {dimension_numbers = #tpu.dot_dimension_numbers<[1], [0], [0], [1], [0, 0, 1, 1], [], []>} : vector<64x64xbf16>, vector<64x8xbf16>, vector<64x8xf32> -> vector<64x8xf32>
    %105 = tpu.concatenate %56, %72, %88, %104 in 1 : vector<64x8xf32>, vector<64x8xf32>, vector<64x8xf32>, vector<64x8xf32> -> vector<64x32xf32>
    %106 = arith.truncf %105 : vector<64x32xf32> to vector<64x32xbf16>
    %c0_38 = arith.constant 0 : index
    %c0_39 = arith.constant 0 : index
    %107 = vector.load %arg7[%c0_38, %c0_39] : memref<32x32xbf16, #tpu.memory_space<vmem>>, vector<32x32xbf16>
    %cst_40 = arith.constant dense<0.000000e+00> : vector<64x32xf32>
    %108 = tpu.matmul %106, %107, %cst_40 {dimension_numbers = #tpu.dot_dimension_numbers<[1], [0], [0], [1], [0, 0, 1, 1], [], []>} : vector<64x32xbf16>, vector<32x32xbf16>, vector<64x32xf32> -> vector<64x32xf32>
    %c0_41 = arith.constant 0 : index
    %c0_42 = arith.constant 0 : index
    %109 = vector.load %arg8[%c0_41, %c0_42] : memref<1x32xf32, #tpu.memory_space<vmem>>, vector<1x32xf32>
    %110 = vector.broadcast %109 : vector<1x32xf32> to vector<64x32xf32>
    %111 = arith.addf %108, %110 : vector<64x32xf32>
    %112 = arith.addf %1, %111 : vector<64x32xf32>
    %c0_43 = arith.constant 0 : index
    %c0_44 = arith.constant 0 : index
    %c0_45 = arith.constant 0 : index
    %113 = vector.load %arg9[%c0_43, %c0_44, %c0_45] : memref<1x64x32xf32, #tpu.memory_space<vmem>>, vector<1x64x32xf32>
    %114 = vector.shape_cast %113 : vector<1x64x32xf32> to vector<64x32xf32>
    %115 = vector.shape_cast %112 : vector<64x32xf32> to vector<1x64x32xf32>
    tpu.vector_store %arg9[%c0_43, %c0_44, %c0_45], %115 {strides = array<i32>} : memref<1x64x32xf32, #tpu.memory_space<vmem>>, vector<1x64x32xf32>,
    return
  }
  func.func @transform_0(%arg0: i32) -> (i32, i32, i32) {
    %c0_i32 = arith.constant 0 : i32
    %c0_i32_0 = arith.constant 0 : i32
    %c0_i32_1 = arith.constant 0 : i32
    return %arg0, %c0_i32, %c0_i32_0 : i32, i32, i32
  }
  func.func @transform_1(%arg0: i32) -> (i32, i32) {
    %c0_i32 = arith.constant 0 : i32
    %c0_i32_0 = arith.constant 0 : i32
    %c0_i32_1 = arith.constant 0 : i32
    return %c0_i32, %c0_i32_0 : i32, i32
  }
  func.func @transform_2(%arg0: i32) -> (i32, i32) {
    %c0_i32 = arith.constant 0 : i32
    %c0_i32_0 = arith.constant 0 : i32
    %c0_i32_1 = arith.constant 0 : i32
    return %c0_i32, %c0_i32_0 : i32, i32
  }
  func.func @transform_3(%arg0: i32) -> (i32, i32) {
    %c0_i32 = arith.constant 0 : i32
    %c0_i32_0 = arith.constant 0 : i32
    %c0_i32_1 = arith.constant 0 : i32
    return %c0_i32, %c0_i32_0 : i32, i32
  }
  func.func @transform_4(%arg0: i32) -> (i32, i32) {
    %c0_i32 = arith.constant 0 : i32
    %c0_i32_0 = arith.constant 0 : i32
    %c0_i32_1 = arith.constant 0 : i32
    return %c0_i32, %c0_i32_0 : i32, i32
  }
  func.func @transform_5(%arg0: i32) -> (i32, i32) {
    %c0_i32 = arith.constant 0 : i32
    %c0_i32_0 = arith.constant 0 : i32
    %c0_i32_1 = arith.constant 0 : i32
    return %c0_i32, %c0_i32_0 : i32, i32
  }
  func.func @transform_6(%arg0: i32) -> (i32, i32) {
    %c0_i32 = arith.constant 0 : i32
    %c0_i32_0 = arith.constant 0 : i32
    %c0_i32_1 = arith.constant 0 : i32
    return %c0_i32, %c0_i32_0 : i32, i32
  }
  func.func @transform_7(%arg0: i32) -> (i32, i32) {
    %c0_i32 = arith.constant 0 : i32
    %c0_i32_0 = arith.constant 0 : i32
    %c0_i32_1 = arith.constant 0 : i32
    return %c0_i32, %c0_i32_0 : i32, i32
  }
  func.func @transform_8(%arg0: i32) -> (i32, i32, i32) {
    %c0_i32 = arith.constant 0 : i32
    %c0_i32_0 = arith.constant 0 : i32
    %c0_i32_1 = arith.constant 0 : i32
    return %arg0, %c0_i32, %c0_i32_0 : i32, i32, i32
  }
}

module attributes {stable_mosaic.version = 11 : i64} {
  func.func @resnet_block_kernel(%arg0: i32, %arg1: memref<1x64x32xf32, #tpu.memory_space<vmem>>, %arg2: memref<1x1x32xf32, #tpu.memory_space<vmem>>, %arg3: memref<1x32xf32, #tpu.memory_space<vmem>>, %arg4: memref<1x32xf32, #tpu.memory_space<vmem>>, %arg5: memref<32x8xf32, #tpu.memory_space<vmem>>, %arg6: memref<9x32x32xbf16, #tpu.memory_space<vmem>>, %arg7: memref<1x32xf32, #tpu.memory_space<vmem>>, %arg8: memref<32x32xbf16, #tpu.memory_space<vmem>>, %arg9: memref<1x32xf32, #tpu.memory_space<vmem>>, %arg10: memref<1x32xf32, #tpu.memory_space<vmem>>, %arg11: memref<1x32xf32, #tpu.memory_space<vmem>>, %arg12: memref<32x8xf32, #tpu.memory_space<vmem>>, %arg13: memref<9x32x32xbf16, #tpu.memory_space<vmem>>, %arg14: memref<1x32xf32, #tpu.memory_space<vmem>>, %arg15: memref<32x32xbf16, #tpu.memory_space<vmem>>, %arg16: memref<1x32xf32, #tpu.memory_space<vmem>>, %arg17: memref<1x64x32xf32, #tpu.memory_space<vmem>>) attributes {dimension_semantics = [#tpu.dimension_semantics<parallel>], iteration_bounds = array<i64: 2>, scalar_prefetch = 0 : i64, scratch_operands = 0 : i64, tpu.core_type = #tpu.core_type<tc>, window_params = [{transform_indices = @transform_0, window_bounds = array<i64: 1, 64, 32>}, {transform_indices = @transform_1, window_bounds = array<i64: 1, 1, 32>}, {pipeline_mode = #tpu.pipeline_mode<synchronous>, transform_indices = @transform_2, window_bounds = array<i64: 1, 32>}, {pipeline_mode = #tpu.pipeline_mode<synchronous>, transform_indices = @transform_3, window_bounds = array<i64: 1, 32>}, {pipeline_mode = #tpu.pipeline_mode<synchronous>, transform_indices = @transform_4, window_bounds = array<i64: 32, 8>}, {pipeline_mode = #tpu.pipeline_mode<synchronous>, transform_indices = @transform_5, window_bounds = array<i64: 9, 32, 32>}, {pipeline_mode = #tpu.pipeline_mode<synchronous>, transform_indices = @transform_6, window_bounds = array<i64: 1, 32>}, {pipeline_mode = #tpu.pipeline_mode<synchronous>, transform_indices = @transform_7, window_bounds = array<i64: 32, 32>}, {pipeline_mode = #tpu.pipeline_mode<synchronous>, transform_indices = @transform_8, window_bounds = array<i64: 1, 32>}, {pipeline_mode = #tpu.pipeline_mode<synchronous>, transform_indices = @transform_9, window_bounds = array<i64: 1, 32>}, {pipeline_mode = #tpu.pipeline_mode<synchronous>, transform_indices = @transform_10, window_bounds = array<i64: 1, 32>}, {pipeline_mode = #tpu.pipeline_mode<synchronous>, transform_indices = @transform_11, window_bounds = array<i64: 32, 8>}, {pipeline_mode = #tpu.pipeline_mode<synchronous>, transform_indices = @transform_12, window_bounds = array<i64: 9, 32, 32>}, {pipeline_mode = #tpu.pipeline_mode<synchronous>, transform_indices = @transform_13, window_bounds = array<i64: 1, 32>}, {pipeline_mode = #tpu.pipeline_mode<synchronous>, transform_indices = @transform_14, window_bounds = array<i64: 32, 32>}, {pipeline_mode = #tpu.pipeline_mode<synchronous>, transform_indices = @transform_15, window_bounds = array<i64: 1, 32>}, {transform_indices = @transform_16, window_bounds = array<i64: 1, 64, 32>}]} {
    %c0 = arith.constant 0 : index
    %c0_0 = arith.constant 0 : index
    %c0_1 = arith.constant 0 : index
    %0 = vector.load %arg1[%c0, %c0_0, %c0_1] : memref<1x64x32xf32, #tpu.memory_space<vmem>>, vector<1x64x32xf32>
    %1 = vector.shape_cast %0 : vector<1x64x32xf32> to vector<64x32xf32>
    %c0_2 = arith.constant 0 : index
    %c0_3 = arith.constant 0 : index
    %2 = vector.load %arg3[%c0_2, %c0_3] : memref<1x32xf32, #tpu.memory_space<vmem>>, vector<1x32xf32>
    %c0_4 = arith.constant 0 : index
    %c0_5 = arith.constant 0 : index
    %3 = vector.load %arg4[%c0_4, %c0_5] : memref<1x32xf32, #tpu.memory_space<vmem>>, vector<1x32xf32>
    %c0_6 = arith.constant 0 : index
    %c0_7 = arith.constant 0 : index
    %4 = vector.load %arg5[%c0_6, %c0_7] : memref<32x8xf32, #tpu.memory_space<vmem>>, vector<32x8xf32>
    %cst = arith.constant dense<0.000000e+00> : vector<32xf32>
    %5 = vector.multi_reduction <add>, %1, %cst [0] : vector<64x32xf32> to vector<32xf32>
    %6 = vector.shape_cast %5 : vector<32xf32> to vector<1x32xf32>
    %cst_8 = arith.constant dense<0.000000e+00> : vector<1x8xf32>
    %7 = tpu.matmul %6, %4, %cst_8 {dimension_numbers = #tpu.dot_dimension_numbers<[1], [0], [0], [1], [0, 0, 1, 1], [], []>} : vector<1x32xf32>, vector<32x8xf32>, vector<1x8xf32> -> vector<1x8xf32>
    %cst_9 = arith.constant 2.560000e+02 : f32
    %8 = vector.broadcast %cst_9 : f32 to vector<1x8xf32>
    %9 = arith.divf %7, %8 : vector<1x8xf32>
    %cst_10 = arith.constant dense<0.000000e+00> : vector<1x32xf32>
    %10 = tpu.matmul %9, %4, %cst_10 {dimension_numbers = #tpu.dot_dimension_numbers<[1], [1], [0], [0], [0, 0, 1, 0], [], []>} : vector<1x8xf32>, vector<32x8xf32>, vector<1x32xf32> -> vector<1x32xf32>
    %11 = vector.broadcast %10 : vector<1x32xf32> to vector<64x32xf32>
    %12 = arith.subf %1, %11 : vector<64x32xf32>
    %13 = arith.mulf %12, %12 : vector<64x32xf32>
    %cst_11 = arith.constant dense<0.000000e+00> : vector<32xf32>
    %14 = vector.multi_reduction <add>, %13, %cst_11 [0] : vector<64x32xf32> to vector<32xf32>
    %15 = vector.shape_cast %14 : vector<32xf32> to vector<1x32xf32>
    %cst_12 = arith.constant dense<0.000000e+00> : vector<1x8xf32>
    %16 = tpu.matmul %15, %4, %cst_12 {dimension_numbers = #tpu.dot_dimension_numbers<[1], [0], [0], [1], [0, 0, 1, 1], [], []>} : vector<1x32xf32>, vector<32x8xf32>, vector<1x8xf32> -> vector<1x8xf32>
    %cst_13 = arith.constant 2.560000e+02 : f32
    %17 = vector.broadcast %cst_13 : f32 to vector<1x8xf32>
    %18 = arith.divf %16, %17 : vector<1x8xf32>
    %cst_14 = arith.constant dense<0.000000e+00> : vector<1x32xf32>
    %19 = tpu.matmul %18, %4, %cst_14 {dimension_numbers = #tpu.dot_dimension_numbers<[1], [1], [0], [0], [0, 0, 1, 0], [], []>} : vector<1x8xf32>, vector<32x8xf32>, vector<1x32xf32> -> vector<1x32xf32>
    %cst_15 = arith.constant 9.99999974E-6 : f32
    %20 = vector.broadcast %cst_15 : f32 to vector<1x32xf32>
    %21 = arith.addf %19, %20 : vector<1x32xf32>
    %22 = math.rsqrt %21 : vector<1x32xf32>
    %23 = vector.broadcast %22 : vector<1x32xf32> to vector<64x32xf32>
    %24 = arith.mulf %12, %23 : vector<64x32xf32>
    %25 = vector.broadcast %2 : vector<1x32xf32> to vector<64x32xf32>
    %26 = arith.mulf %24, %25 : vector<64x32xf32>
    %27 = vector.broadcast %3 : vector<1x32xf32> to vector<64x32xf32>
    %28 = arith.addf %26, %27 : vector<64x32xf32>
    %29 = arith.negf %28 : vector<64x32xf32>
    %30 = math.exp %29 : vector<64x32xf32>
    %cst_16 = arith.constant 1.000000e+00 : f32
    %31 = vector.broadcast %cst_16 : f32 to vector<64x32xf32>
    %32 = arith.addf %31, %30 : vector<64x32xf32>
    %33 = arith.divf %31, %32 : vector<64x32xf32>
    %34 = arith.mulf %28, %33 : vector<64x32xf32>
    %c0_17 = arith.constant 0 : index
    %c0_18 = arith.constant 0 : index
    %c0_19 = arith.constant 0 : index
    %35 = vector.load %arg2[%c0_17, %c0_18, %c0_19] : memref<1x1x32xf32, #tpu.memory_space<vmem>>, vector<1x1x32xf32>
    %36 = vector.shape_cast %35 : vector<1x1x32xf32> to vector<1x32xf32>
    %37 = arith.negf %36 : vector<1x32xf32>
    %38 = math.exp %37 : vector<1x32xf32>
    %cst_20 = arith.constant 1.000000e+00 : f32
    %39 = vector.broadcast %cst_20 : f32 to vector<1x32xf32>
    %40 = arith.addf %39, %38 : vector<1x32xf32>
    %41 = arith.divf %39, %40 : vector<1x32xf32>
    %42 = arith.mulf %36, %41 : vector<1x32xf32>
    %43 = arith.truncf %42 : vector<1x32xf32> to vector<1x32xbf16>
    %c0_21 = arith.constant 0 : index
    %c0_22 = arith.constant 0 : index
    %44 = vector.load %arg8[%c0_21, %c0_22] : memref<32x32xbf16, #tpu.memory_space<vmem>>, vector<32x32xbf16>
    %cst_23 = arith.constant dense<0.000000e+00> : vector<1x32xf32>
    %45 = tpu.matmul %43, %44, %cst_23 {dimension_numbers = #tpu.dot_dimension_numbers<[1], [0], [0], [1], [0, 0, 1, 1], [], []>} : vector<1x32xbf16>, vector<32x32xbf16>, vector<1x32xf32> -> vector<1x32xf32>
    %c0_24 = arith.constant 0 : index
    %c0_25 = arith.constant 0 : index
    %46 = vector.load %arg9[%c0_24, %c0_25] : memref<1x32xf32, #tpu.memory_space<vmem>>, vector<1x32xf32>
    %47 = arith.addf %45, %46 : vector<1x32xf32>
    %48 = arith.truncf %34 : vector<64x32xf32> to vector<64x32xbf16>
    %49 = vector.shape_cast %48 : vector<64x32xbf16> to vector<8x8x32xbf16>
    %cst_26 = arith.constant 0.000000e+00 : bf16
    %50 = vector.broadcast %cst_26 : bf16 to vector<1x8x32xbf16>
    %51 = tpu.concatenate %50, %49, %50 in 0 : vector<1x8x32xbf16>, vector<8x8x32xbf16>, vector<1x8x32xbf16> -> vector<10x8x32xbf16>
    %cst_27 = arith.constant 0.000000e+00 : bf16
    %52 = vector.broadcast %cst_27 : bf16 to vector<10x1x32xbf16>
    %53 = tpu.concatenate %52, %51, %52 in 1 : vector<10x1x32xbf16>, vector<10x8x32xbf16>, vector<10x1x32xbf16> -> vector<10x10x32xbf16>
    %cst_28 = arith.constant 0.000000e+00 : f32
    %54 = vector.broadcast %cst_28 : f32 to vector<64x32xf32>
    %55 = vector.extract_strided_slice %53 {offsets = [0, 0, 0], sizes = [8, 8, 32], strides = [1, 1, 1]} : vector<10x10x32xbf16> to vector<8x8x32xbf16>
    %56 = vector.shape_cast %55 : vector<8x8x32xbf16> to vector<64x32xbf16>
    %c0_29 = arith.constant 0 : index
    %c0_30 = arith.constant 0 : index
    %c0_31 = arith.constant 0 : index
    %57 = vector.load %arg6[%c0_29, %c0_30, %c0_31] : memref<9x32x32xbf16, #tpu.memory_space<vmem>>, vector<1x32x32xbf16>
    %58 = vector.shape_cast %57 : vector<1x32x32xbf16> to vector<32x32xbf16>
    %cst_32 = arith.constant dense<0.000000e+00> : vector<64x32xf32>
    %59 = tpu.matmul %56, %58, %cst_32 {dimension_numbers = #tpu.dot_dimension_numbers<[1], [0], [0], [1], [0, 0, 1, 1], [], []>} : vector<64x32xbf16>, vector<32x32xbf16>, vector<64x32xf32> -> vector<64x32xf32>
    %60 = arith.addf %54, %59 : vector<64x32xf32>
    %61 = vector.extract_strided_slice %53 {offsets = [0, 1, 0], sizes = [8, 8, 32], strides = [1, 1, 1]} : vector<10x10x32xbf16> to vector<8x8x32xbf16>
    %62 = vector.shape_cast %61 : vector<8x8x32xbf16> to vector<64x32xbf16>
    %c1 = arith.constant 1 : index
    %c0_33 = arith.constant 0 : index
    %c0_34 = arith.constant 0 : index
    %63 = vector.load %arg6[%c1, %c0_33, %c0_34] : memref<9x32x32xbf16, #tpu.memory_space<vmem>>, vector<1x32x32xbf16>
    %64 = vector.shape_cast %63 : vector<1x32x32xbf16> to vector<32x32xbf16>
    %cst_35 = arith.constant dense<0.000000e+00> : vector<64x32xf32>
    %65 = tpu.matmul %62, %64, %cst_35 {dimension_numbers = #tpu.dot_dimension_numbers<[1], [0], [0], [1], [0, 0, 1, 1], [], []>} : vector<64x32xbf16>, vector<32x32xbf16>, vector<64x32xf32> -> vector<64x32xf32>
    %66 = arith.addf %60, %65 : vector<64x32xf32>
    %67 = vector.extract_strided_slice %53 {offsets = [0, 2, 0], sizes = [8, 8, 32], strides = [1, 1, 1]} : vector<10x10x32xbf16> to vector<8x8x32xbf16>
    %68 = vector.shape_cast %67 : vector<8x8x32xbf16> to vector<64x32xbf16>
    %c2 = arith.constant 2 : index
    %c0_36 = arith.constant 0 : index
    %c0_37 = arith.constant 0 : index
    %69 = vector.load %arg6[%c2, %c0_36, %c0_37] : memref<9x32x32xbf16, #tpu.memory_space<vmem>>, vector<1x32x32xbf16>
    %70 = vector.shape_cast %69 : vector<1x32x32xbf16> to vector<32x32xbf16>
    %cst_38 = arith.constant dense<0.000000e+00> : vector<64x32xf32>
    %71 = tpu.matmul %68, %70, %cst_38 {dimension_numbers = #tpu.dot_dimension_numbers<[1], [0], [0], [1], [0, 0, 1, 1], [], []>} : vector<64x32xbf16>, vector<32x32xbf16>, vector<64x32xf32> -> vector<64x32xf32>
    %72 = arith.addf %66, %71 : vector<64x32xf32>
    %73 = vector.extract_strided_slice %53 {offsets = [1, 0, 0], sizes = [8, 8, 32], strides = [1, 1, 1]} : vector<10x10x32xbf16> to vector<8x8x32xbf16>
    %74 = vector.shape_cast %73 : vector<8x8x32xbf16> to vector<64x32xbf16>
    %c3 = arith.constant 3 : index
    %c0_39 = arith.constant 0 : index
    %c0_40 = arith.constant 0 : index
    %75 = vector.load %arg6[%c3, %c0_39, %c0_40] : memref<9x32x32xbf16, #tpu.memory_space<vmem>>, vector<1x32x32xbf16>
    %76 = vector.shape_cast %75 : vector<1x32x32xbf16> to vector<32x32xbf16>
    %cst_41 = arith.constant dense<0.000000e+00> : vector<64x32xf32>
    %77 = tpu.matmul %74, %76, %cst_41 {dimension_numbers = #tpu.dot_dimension_numbers<[1], [0], [0], [1], [0, 0, 1, 1], [], []>} : vector<64x32xbf16>, vector<32x32xbf16>, vector<64x32xf32> -> vector<64x32xf32>
    %78 = arith.addf %72, %77 : vector<64x32xf32>
    %79 = vector.extract_strided_slice %53 {offsets = [1, 1, 0], sizes = [8, 8, 32], strides = [1, 1, 1]} : vector<10x10x32xbf16> to vector<8x8x32xbf16>
    %80 = vector.shape_cast %79 : vector<8x8x32xbf16> to vector<64x32xbf16>
    %c4 = arith.constant 4 : index
    %c0_42 = arith.constant 0 : index
    %c0_43 = arith.constant 0 : index
    %81 = vector.load %arg6[%c4, %c0_42, %c0_43] : memref<9x32x32xbf16, #tpu.memory_space<vmem>>, vector<1x32x32xbf16>
    %82 = vector.shape_cast %81 : vector<1x32x32xbf16> to vector<32x32xbf16>
    %cst_44 = arith.constant dense<0.000000e+00> : vector<64x32xf32>
    %83 = tpu.matmul %80, %82, %cst_44 {dimension_numbers = #tpu.dot_dimension_numbers<[1], [0], [0], [1], [0, 0, 1, 1], [], []>} : vector<64x32xbf16>, vector<32x32xbf16>, vector<64x32xf32> -> vector<64x32xf32>
    %84 = arith.addf %78, %83 : vector<64x32xf32>
    %85 = vector.extract_strided_slice %53 {offsets = [1, 2, 0], sizes = [8, 8, 32], strides = [1, 1, 1]} : vector<10x10x32xbf16> to vector<8x8x32xbf16>
    %86 = vector.shape_cast %85 : vector<8x8x32xbf16> to vector<64x32xbf16>
    %c5 = arith.constant 5 : index
    %c0_45 = arith.constant 0 : index
    %c0_46 = arith.constant 0 : index
    %87 = vector.load %arg6[%c5, %c0_45, %c0_46] : memref<9x32x32xbf16, #tpu.memory_space<vmem>>, vector<1x32x32xbf16>
    %88 = vector.shape_cast %87 : vector<1x32x32xbf16> to vector<32x32xbf16>
    %cst_47 = arith.constant dense<0.000000e+00> : vector<64x32xf32>
    %89 = tpu.matmul %86, %88, %cst_47 {dimension_numbers = #tpu.dot_dimension_numbers<[1], [0], [0], [1], [0, 0, 1, 1], [], []>} : vector<64x32xbf16>, vector<32x32xbf16>, vector<64x32xf32> -> vector<64x32xf32>
    %90 = arith.addf %84, %89 : vector<64x32xf32>
    %91 = vector.extract_strided_slice %53 {offsets = [2, 0, 0], sizes = [8, 8, 32], strides = [1, 1, 1]} : vector<10x10x32xbf16> to vector<8x8x32xbf16>
    %92 = vector.shape_cast %91 : vector<8x8x32xbf16> to vector<64x32xbf16>
    %c6 = arith.constant 6 : index
    %c0_48 = arith.constant 0 : index
    %c0_49 = arith.constant 0 : index
    %93 = vector.load %arg6[%c6, %c0_48, %c0_49] : memref<9x32x32xbf16, #tpu.memory_space<vmem>>, vector<1x32x32xbf16>
    %94 = vector.shape_cast %93 : vector<1x32x32xbf16> to vector<32x32xbf16>
    %cst_50 = arith.constant dense<0.000000e+00> : vector<64x32xf32>
    %95 = tpu.matmul %92, %94, %cst_50 {dimension_numbers = #tpu.dot_dimension_numbers<[1], [0], [0], [1], [0, 0, 1, 1], [], []>} : vector<64x32xbf16>, vector<32x32xbf16>, vector<64x32xf32> -> vector<64x32xf32>
    %96 = arith.addf %90, %95 : vector<64x32xf32>
    %97 = vector.extract_strided_slice %53 {offsets = [2, 1, 0], sizes = [8, 8, 32], strides = [1, 1, 1]} : vector<10x10x32xbf16> to vector<8x8x32xbf16>
    %98 = vector.shape_cast %97 : vector<8x8x32xbf16> to vector<64x32xbf16>
    %c7 = arith.constant 7 : index
    %c0_51 = arith.constant 0 : index
    %c0_52 = arith.constant 0 : index
    %99 = vector.load %arg6[%c7, %c0_51, %c0_52] : memref<9x32x32xbf16, #tpu.memory_space<vmem>>, vector<1x32x32xbf16>
    %100 = vector.shape_cast %99 : vector<1x32x32xbf16> to vector<32x32xbf16>
    %cst_53 = arith.constant dense<0.000000e+00> : vector<64x32xf32>
    %101 = tpu.matmul %98, %100, %cst_53 {dimension_numbers = #tpu.dot_dimension_numbers<[1], [0], [0], [1], [0, 0, 1, 1], [], []>} : vector<64x32xbf16>, vector<32x32xbf16>, vector<64x32xf32> -> vector<64x32xf32>
    %102 = arith.addf %96, %101 : vector<64x32xf32>
    %103 = vector.extract_strided_slice %53 {offsets = [2, 2, 0], sizes = [8, 8, 32], strides = [1, 1, 1]} : vector<10x10x32xbf16> to vector<8x8x32xbf16>
    %104 = vector.shape_cast %103 : vector<8x8x32xbf16> to vector<64x32xbf16>
    %c8 = arith.constant 8 : index
    %c0_54 = arith.constant 0 : index
    %c0_55 = arith.constant 0 : index
    %105 = vector.load %arg6[%c8, %c0_54, %c0_55] : memref<9x32x32xbf16, #tpu.memory_space<vmem>>, vector<1x32x32xbf16>
    %106 = vector.shape_cast %105 : vector<1x32x32xbf16> to vector<32x32xbf16>
    %cst_56 = arith.constant dense<0.000000e+00> : vector<64x32xf32>
    %107 = tpu.matmul %104, %106, %cst_56 {dimension_numbers = #tpu.dot_dimension_numbers<[1], [0], [0], [1], [0, 0, 1, 1], [], []>} : vector<64x32xbf16>, vector<32x32xbf16>, vector<64x32xf32> -> vector<64x32xf32>
    %108 = arith.addf %102, %107 : vector<64x32xf32>
    %c0_57 = arith.constant 0 : index
    %c0_58 = arith.constant 0 : index
    %109 = vector.load %arg7[%c0_57, %c0_58] : memref<1x32xf32, #tpu.memory_space<vmem>>, vector<1x32xf32>
    %110 = vector.broadcast %109 : vector<1x32xf32> to vector<64x32xf32>
    %111 = arith.addf %108, %110 : vector<64x32xf32>
    %112 = vector.broadcast %47 : vector<1x32xf32> to vector<64x32xf32>
    %113 = arith.addf %111, %112 : vector<64x32xf32>
    %c0_59 = arith.constant 0 : index
    %c0_60 = arith.constant 0 : index
    %114 = vector.load %arg10[%c0_59, %c0_60] : memref<1x32xf32, #tpu.memory_space<vmem>>, vector<1x32xf32>
    %c0_61 = arith.constant 0 : index
    %c0_62 = arith.constant 0 : index
    %115 = vector.load %arg11[%c0_61, %c0_62] : memref<1x32xf32, #tpu.memory_space<vmem>>, vector<1x32xf32>
    %c0_63 = arith.constant 0 : index
    %c0_64 = arith.constant 0 : index
    %116 = vector.load %arg12[%c0_63, %c0_64] : memref<32x8xf32, #tpu.memory_space<vmem>>, vector<32x8xf32>
    %cst_65 = arith.constant dense<0.000000e+00> : vector<32xf32>
    %117 = vector.multi_reduction <add>, %113, %cst_65 [0] : vector<64x32xf32> to vector<32xf32>
    %118 = vector.shape_cast %117 : vector<32xf32> to vector<1x32xf32>
    %cst_66 = arith.constant dense<0.000000e+00> : vector<1x8xf32>
    %119 = tpu.matmul %118, %116, %cst_66 {dimension_numbers = #tpu.dot_dimension_numbers<[1], [0], [0], [1], [0, 0, 1, 1], [], []>} : vector<1x32xf32>, vector<32x8xf32>, vector<1x8xf32> -> vector<1x8xf32>
    %cst_67 = arith.constant 2.560000e+02 : f32
    %120 = vector.broadcast %cst_67 : f32 to vector<1x8xf32>
    %121 = arith.divf %119, %120 : vector<1x8xf32>
    %cst_68 = arith.constant dense<0.000000e+00> : vector<1x32xf32>
    %122 = tpu.matmul %121, %116, %cst_68 {dimension_numbers = #tpu.dot_dimension_numbers<[1], [1], [0], [0], [0, 0, 1, 0], [], []>} : vector<1x8xf32>, vector<32x8xf32>, vector<1x32xf32> -> vector<1x32xf32>
    %123 = vector.broadcast %122 : vector<1x32xf32> to vector<64x32xf32>
    %124 = arith.subf %113, %123 : vector<64x32xf32>
    %125 = arith.mulf %124, %124 : vector<64x32xf32>
    %cst_69 = arith.constant dense<0.000000e+00> : vector<32xf32>
    %126 = vector.multi_reduction <add>, %125, %cst_69 [0] : vector<64x32xf32> to vector<32xf32>
    %127 = vector.shape_cast %126 : vector<32xf32> to vector<1x32xf32>
    %cst_70 = arith.constant dense<0.000000e+00> : vector<1x8xf32>
    %128 = tpu.matmul %127, %116, %cst_70 {dimension_numbers = #tpu.dot_dimension_numbers<[1], [0], [0], [1], [0, 0, 1, 1], [], []>} : vector<1x32xf32>, vector<32x8xf32>, vector<1x8xf32> -> vector<1x8xf32>
    %cst_71 = arith.constant 2.560000e+02 : f32
    %129 = vector.broadcast %cst_71 : f32 to vector<1x8xf32>
    %130 = arith.divf %128, %129 : vector<1x8xf32>
    %cst_72 = arith.constant dense<0.000000e+00> : vector<1x32xf32>
    %131 = tpu.matmul %130, %116, %cst_72 {dimension_numbers = #tpu.dot_dimension_numbers<[1], [1], [0], [0], [0, 0, 1, 0], [], []>} : vector<1x8xf32>, vector<32x8xf32>, vector<1x32xf32> -> vector<1x32xf32>
    %cst_73 = arith.constant 9.99999974E-6 : f32
    %132 = vector.broadcast %cst_73 : f32 to vector<1x32xf32>
    %133 = arith.addf %131, %132 : vector<1x32xf32>
    %134 = math.rsqrt %133 : vector<1x32xf32>
    %135 = vector.broadcast %134 : vector<1x32xf32> to vector<64x32xf32>
    %136 = arith.mulf %124, %135 : vector<64x32xf32>
    %137 = vector.broadcast %114 : vector<1x32xf32> to vector<64x32xf32>
    %138 = arith.mulf %136, %137 : vector<64x32xf32>
    %139 = vector.broadcast %115 : vector<1x32xf32> to vector<64x32xf32>
    %140 = arith.addf %138, %139 : vector<64x32xf32>
    %141 = arith.negf %140 : vector<64x32xf32>
    %142 = math.exp %141 : vector<64x32xf32>
    %cst_74 = arith.constant 1.000000e+00 : f32
    %143 = vector.broadcast %cst_74 : f32 to vector<64x32xf32>
    %144 = arith.addf %143, %142 : vector<64x32xf32>
    %145 = arith.divf %143, %144 : vector<64x32xf32>
    %146 = arith.mulf %140, %145 : vector<64x32xf32>
    %147 = arith.truncf %146 : vector<64x32xf32> to vector<64x32xbf16>
    %148 = vector.shape_cast %147 : vector<64x32xbf16> to vector<8x8x32xbf16>
    %cst_75 = arith.constant 0.000000e+00 : bf16
    %149 = vector.broadcast %cst_75 : bf16 to vector<1x8x32xbf16>
    %150 = tpu.concatenate %149, %148, %149 in 0 : vector<1x8x32xbf16>, vector<8x8x32xbf16>, vector<1x8x32xbf16> -> vector<10x8x32xbf16>
    %cst_76 = arith.constant 0.000000e+00 : bf16
    %151 = vector.broadcast %cst_76 : bf16 to vector<10x1x32xbf16>
    %152 = tpu.concatenate %151, %150, %151 in 1 : vector<10x1x32xbf16>, vector<10x8x32xbf16>, vector<10x1x32xbf16> -> vector<10x10x32xbf16>
    %cst_77 = arith.constant 0.000000e+00 : f32
    %153 = vector.broadcast %cst_77 : f32 to vector<64x32xf32>
    %154 = vector.extract_strided_slice %152 {offsets = [0, 0, 0], sizes = [8, 8, 32], strides = [1, 1, 1]} : vector<10x10x32xbf16> to vector<8x8x32xbf16>
    %155 = vector.shape_cast %154 : vector<8x8x32xbf16> to vector<64x32xbf16>
    %c0_78 = arith.constant 0 : index
    %c0_79 = arith.constant 0 : index
    %c0_80 = arith.constant 0 : index
    %156 = vector.load %arg13[%c0_78, %c0_79, %c0_80] : memref<9x32x32xbf16, #tpu.memory_space<vmem>>, vector<1x32x32xbf16>
    %157 = vector.shape_cast %156 : vector<1x32x32xbf16> to vector<32x32xbf16>
    %cst_81 = arith.constant dense<0.000000e+00> : vector<64x32xf32>
    %158 = tpu.matmul %155, %157, %cst_81 {dimension_numbers = #tpu.dot_dimension_numbers<[1], [0], [0], [1], [0, 0, 1, 1], [], []>} : vector<64x32xbf16>, vector<32x32xbf16>, vector<64x32xf32> -> vector<64x32xf32>
    %159 = arith.addf %153, %158 : vector<64x32xf32>
    %160 = vector.extract_strided_slice %152 {offsets = [0, 1, 0], sizes = [8, 8, 32], strides = [1, 1, 1]} : vector<10x10x32xbf16> to vector<8x8x32xbf16>
    %161 = vector.shape_cast %160 : vector<8x8x32xbf16> to vector<64x32xbf16>
    %c1_82 = arith.constant 1 : index
    %c0_83 = arith.constant 0 : index
    %c0_84 = arith.constant 0 : index
    %162 = vector.load %arg13[%c1_82, %c0_83, %c0_84] : memref<9x32x32xbf16, #tpu.memory_space<vmem>>, vector<1x32x32xbf16>
    %163 = vector.shape_cast %162 : vector<1x32x32xbf16> to vector<32x32xbf16>
    %cst_85 = arith.constant dense<0.000000e+00> : vector<64x32xf32>
    %164 = tpu.matmul %161, %163, %cst_85 {dimension_numbers = #tpu.dot_dimension_numbers<[1], [0], [0], [1], [0, 0, 1, 1], [], []>} : vector<64x32xbf16>, vector<32x32xbf16>, vector<64x32xf32> -> vector<64x32xf32>
    %165 = arith.addf %159, %164 : vector<64x32xf32>
    %166 = vector.extract_strided_slice %152 {offsets = [0, 2, 0], sizes = [8, 8, 32], strides = [1, 1, 1]} : vector<10x10x32xbf16> to vector<8x8x32xbf16>
    %167 = vector.shape_cast %166 : vector<8x8x32xbf16> to vector<64x32xbf16>
    %c2_86 = arith.constant 2 : index
    %c0_87 = arith.constant 0 : index
    %c0_88 = arith.constant 0 : index
    %168 = vector.load %arg13[%c2_86, %c0_87, %c0_88] : memref<9x32x32xbf16, #tpu.memory_space<vmem>>, vector<1x32x32xbf16>
    %169 = vector.shape_cast %168 : vector<1x32x32xbf16> to vector<32x32xbf16>
    %cst_89 = arith.constant dense<0.000000e+00> : vector<64x32xf32>
    %170 = tpu.matmul %167, %169, %cst_89 {dimension_numbers = #tpu.dot_dimension_numbers<[1], [0], [0], [1], [0, 0, 1, 1], [], []>} : vector<64x32xbf16>, vector<32x32xbf16>, vector<64x32xf32> -> vector<64x32xf32>
    %171 = arith.addf %165, %170 : vector<64x32xf32>
    %172 = vector.extract_strided_slice %152 {offsets = [1, 0, 0], sizes = [8, 8, 32], strides = [1, 1, 1]} : vector<10x10x32xbf16> to vector<8x8x32xbf16>
    %173 = vector.shape_cast %172 : vector<8x8x32xbf16> to vector<64x32xbf16>
    %c3_90 = arith.constant 3 : index
    %c0_91 = arith.constant 0 : index
    %c0_92 = arith.constant 0 : index
    %174 = vector.load %arg13[%c3_90, %c0_91, %c0_92] : memref<9x32x32xbf16, #tpu.memory_space<vmem>>, vector<1x32x32xbf16>
    %175 = vector.shape_cast %174 : vector<1x32x32xbf16> to vector<32x32xbf16>
    %cst_93 = arith.constant dense<0.000000e+00> : vector<64x32xf32>
    %176 = tpu.matmul %173, %175, %cst_93 {dimension_numbers = #tpu.dot_dimension_numbers<[1], [0], [0], [1], [0, 0, 1, 1], [], []>} : vector<64x32xbf16>, vector<32x32xbf16>, vector<64x32xf32> -> vector<64x32xf32>
    %177 = arith.addf %171, %176 : vector<64x32xf32>
    %178 = vector.extract_strided_slice %152 {offsets = [1, 1, 0], sizes = [8, 8, 32], strides = [1, 1, 1]} : vector<10x10x32xbf16> to vector<8x8x32xbf16>
    %179 = vector.shape_cast %178 : vector<8x8x32xbf16> to vector<64x32xbf16>
    %c4_94 = arith.constant 4 : index
    %c0_95 = arith.constant 0 : index
    %c0_96 = arith.constant 0 : index
    %180 = vector.load %arg13[%c4_94, %c0_95, %c0_96] : memref<9x32x32xbf16, #tpu.memory_space<vmem>>, vector<1x32x32xbf16>
    %181 = vector.shape_cast %180 : vector<1x32x32xbf16> to vector<32x32xbf16>
    %cst_97 = arith.constant dense<0.000000e+00> : vector<64x32xf32>
    %182 = tpu.matmul %179, %181, %cst_97 {dimension_numbers = #tpu.dot_dimension_numbers<[1], [0], [0], [1], [0, 0, 1, 1], [], []>} : vector<64x32xbf16>, vector<32x32xbf16>, vector<64x32xf32> -> vector<64x32xf32>
    %183 = arith.addf %177, %182 : vector<64x32xf32>
    %184 = vector.extract_strided_slice %152 {offsets = [1, 2, 0], sizes = [8, 8, 32], strides = [1, 1, 1]} : vector<10x10x32xbf16> to vector<8x8x32xbf16>
    %185 = vector.shape_cast %184 : vector<8x8x32xbf16> to vector<64x32xbf16>
    %c5_98 = arith.constant 5 : index
    %c0_99 = arith.constant 0 : index
    %c0_100 = arith.constant 0 : index
    %186 = vector.load %arg13[%c5_98, %c0_99, %c0_100] : memref<9x32x32xbf16, #tpu.memory_space<vmem>>, vector<1x32x32xbf16>
    %187 = vector.shape_cast %186 : vector<1x32x32xbf16> to vector<32x32xbf16>
    %cst_101 = arith.constant dense<0.000000e+00> : vector<64x32xf32>
    %188 = tpu.matmul %185, %187, %cst_101 {dimension_numbers = #tpu.dot_dimension_numbers<[1], [0], [0], [1], [0, 0, 1, 1], [], []>} : vector<64x32xbf16>, vector<32x32xbf16>, vector<64x32xf32> -> vector<64x32xf32>
    %189 = arith.addf %183, %188 : vector<64x32xf32>
    %190 = vector.extract_strided_slice %152 {offsets = [2, 0, 0], sizes = [8, 8, 32], strides = [1, 1, 1]} : vector<10x10x32xbf16> to vector<8x8x32xbf16>
    %191 = vector.shape_cast %190 : vector<8x8x32xbf16> to vector<64x32xbf16>
    %c6_102 = arith.constant 6 : index
    %c0_103 = arith.constant 0 : index
    %c0_104 = arith.constant 0 : index
    %192 = vector.load %arg13[%c6_102, %c0_103, %c0_104] : memref<9x32x32xbf16, #tpu.memory_space<vmem>>, vector<1x32x32xbf16>
    %193 = vector.shape_cast %192 : vector<1x32x32xbf16> to vector<32x32xbf16>
    %cst_105 = arith.constant dense<0.000000e+00> : vector<64x32xf32>
    %194 = tpu.matmul %191, %193, %cst_105 {dimension_numbers = #tpu.dot_dimension_numbers<[1], [0], [0], [1], [0, 0, 1, 1], [], []>} : vector<64x32xbf16>, vector<32x32xbf16>, vector<64x32xf32> -> vector<64x32xf32>
    %195 = arith.addf %189, %194 : vector<64x32xf32>
    %196 = vector.extract_strided_slice %152 {offsets = [2, 1, 0], sizes = [8, 8, 32], strides = [1, 1, 1]} : vector<10x10x32xbf16> to vector<8x8x32xbf16>
    %197 = vector.shape_cast %196 : vector<8x8x32xbf16> to vector<64x32xbf16>
    %c7_106 = arith.constant 7 : index
    %c0_107 = arith.constant 0 : index
    %c0_108 = arith.constant 0 : index
    %198 = vector.load %arg13[%c7_106, %c0_107, %c0_108] : memref<9x32x32xbf16, #tpu.memory_space<vmem>>, vector<1x32x32xbf16>
    %199 = vector.shape_cast %198 : vector<1x32x32xbf16> to vector<32x32xbf16>
    %cst_109 = arith.constant dense<0.000000e+00> : vector<64x32xf32>
    %200 = tpu.matmul %197, %199, %cst_109 {dimension_numbers = #tpu.dot_dimension_numbers<[1], [0], [0], [1], [0, 0, 1, 1], [], []>} : vector<64x32xbf16>, vector<32x32xbf16>, vector<64x32xf32> -> vector<64x32xf32>
    %201 = arith.addf %195, %200 : vector<64x32xf32>
    %202 = vector.extract_strided_slice %152 {offsets = [2, 2, 0], sizes = [8, 8, 32], strides = [1, 1, 1]} : vector<10x10x32xbf16> to vector<8x8x32xbf16>
    %203 = vector.shape_cast %202 : vector<8x8x32xbf16> to vector<64x32xbf16>
    %c8_110 = arith.constant 8 : index
    %c0_111 = arith.constant 0 : index
    %c0_112 = arith.constant 0 : index
    %204 = vector.load %arg13[%c8_110, %c0_111, %c0_112] : memref<9x32x32xbf16, #tpu.memory_space<vmem>>, vector<1x32x32xbf16>
    %205 = vector.shape_cast %204 : vector<1x32x32xbf16> to vector<32x32xbf16>
    %cst_113 = arith.constant dense<0.000000e+00> : vector<64x32xf32>
    %206 = tpu.matmul %203, %205, %cst_113 {dimension_numbers = #tpu.dot_dimension_numbers<[1], [0], [0], [1], [0, 0, 1, 1], [], []>} : vector<64x32xbf16>, vector<32x32xbf16>, vector<64x32xf32> -> vector<64x32xf32>
    %207 = arith.addf %201, %206 : vector<64x32xf32>
    %c0_114 = arith.constant 0 : index
    %c0_115 = arith.constant 0 : index
    %208 = vector.load %arg14[%c0_114, %c0_115] : memref<1x32xf32, #tpu.memory_space<vmem>>, vector<1x32xf32>
    %209 = vector.broadcast %208 : vector<1x32xf32> to vector<64x32xf32>
    %210 = arith.addf %207, %209 : vector<64x32xf32>
    %211 = arith.truncf %1 : vector<64x32xf32> to vector<64x32xbf16>
    %c0_116 = arith.constant 0 : index
    %c0_117 = arith.constant 0 : index
    %212 = vector.load %arg15[%c0_116, %c0_117] : memref<32x32xbf16, #tpu.memory_space<vmem>>, vector<32x32xbf16>
    %cst_118 = arith.constant dense<0.000000e+00> : vector<64x32xf32>
    %213 = tpu.matmul %211, %212, %cst_118 {dimension_numbers = #tpu.dot_dimension_numbers<[1], [0], [0], [1], [0, 0, 1, 1], [], []>} : vector<64x32xbf16>, vector<32x32xbf16>, vector<64x32xf32> -> vector<64x32xf32>
    %214 = arith.addf %210, %213 : vector<64x32xf32>
    %c0_119 = arith.constant 0 : index
    %c0_120 = arith.constant 0 : index
    %215 = vector.load %arg16[%c0_119, %c0_120] : memref<1x32xf32, #tpu.memory_space<vmem>>, vector<1x32xf32>
    %216 = vector.broadcast %215 : vector<1x32xf32> to vector<64x32xf32>
    %217 = arith.addf %214, %216 : vector<64x32xf32>
    %c0_121 = arith.constant 0 : index
    %c0_122 = arith.constant 0 : index
    %c0_123 = arith.constant 0 : index
    %218 = vector.load %arg17[%c0_121, %c0_122, %c0_123] : memref<1x64x32xf32, #tpu.memory_space<vmem>>, vector<1x64x32xf32>
    %219 = vector.shape_cast %218 : vector<1x64x32xf32> to vector<64x32xf32>
    %220 = vector.shape_cast %217 : vector<64x32xf32> to vector<1x64x32xf32>
    tpu.vector_store %arg17[%c0_121, %c0_122, %c0_123], %220 {strides = array<i32>} : memref<1x64x32xf32, #tpu.memory_space<vmem>>, vector<1x64x32xf32>,
    return
  }
  func.func @transform_0(%arg0: i32) -> (i32, i32, i32) {
    %c0_i32 = arith.constant 0 : i32
    %c0_i32_0 = arith.constant 0 : i32
    %c0_i32_1 = arith.constant 0 : i32
    return %arg0, %c0_i32, %c0_i32_0 : i32, i32, i32
  }
  func.func @transform_1(%arg0: i32) -> (i32, i32, i32) {
    %c0_i32 = arith.constant 0 : i32
    %c0_i32_0 = arith.constant 0 : i32
    %c0_i32_1 = arith.constant 0 : i32
    return %arg0, %c0_i32, %c0_i32_0 : i32, i32, i32
  }
  func.func @transform_2(%arg0: i32) -> (i32, i32) {
    %c0_i32 = arith.constant 0 : i32
    %c0_i32_0 = arith.constant 0 : i32
    %c0_i32_1 = arith.constant 0 : i32
    return %c0_i32, %c0_i32_0 : i32, i32
  }
  func.func @transform_3(%arg0: i32) -> (i32, i32) {
    %c0_i32 = arith.constant 0 : i32
    %c0_i32_0 = arith.constant 0 : i32
    %c0_i32_1 = arith.constant 0 : i32
    return %c0_i32, %c0_i32_0 : i32, i32
  }
  func.func @transform_4(%arg0: i32) -> (i32, i32) {
    %c0_i32 = arith.constant 0 : i32
    %c0_i32_0 = arith.constant 0 : i32
    %c0_i32_1 = arith.constant 0 : i32
    return %c0_i32, %c0_i32_0 : i32, i32
  }
  func.func @transform_5(%arg0: i32) -> (i32, i32, i32) {
    %c0_i32 = arith.constant 0 : i32
    %c0_i32_0 = arith.constant 0 : i32
    %c0_i32_1 = arith.constant 0 : i32
    %c0_i32_2 = arith.constant 0 : i32
    return %c0_i32, %c0_i32_0, %c0_i32_1 : i32, i32, i32
  }
  func.func @transform_6(%arg0: i32) -> (i32, i32) {
    %c0_i32 = arith.constant 0 : i32
    %c0_i32_0 = arith.constant 0 : i32
    %c0_i32_1 = arith.constant 0 : i32
    return %c0_i32, %c0_i32_0 : i32, i32
  }
  func.func @transform_7(%arg0: i32) -> (i32, i32) {
    %c0_i32 = arith.constant 0 : i32
    %c0_i32_0 = arith.constant 0 : i32
    %c0_i32_1 = arith.constant 0 : i32
    return %c0_i32, %c0_i32_0 : i32, i32
  }
  func.func @transform_8(%arg0: i32) -> (i32, i32) {
    %c0_i32 = arith.constant 0 : i32
    %c0_i32_0 = arith.constant 0 : i32
    %c0_i32_1 = arith.constant 0 : i32
    return %c0_i32, %c0_i32_0 : i32, i32
  }
  func.func @transform_9(%arg0: i32) -> (i32, i32) {
    %c0_i32 = arith.constant 0 : i32
    %c0_i32_0 = arith.constant 0 : i32
    %c0_i32_1 = arith.constant 0 : i32
    return %c0_i32, %c0_i32_0 : i32, i32
  }
  func.func @transform_10(%arg0: i32) -> (i32, i32) {
    %c0_i32 = arith.constant 0 : i32
    %c0_i32_0 = arith.constant 0 : i32
    %c0_i32_1 = arith.constant 0 : i32
    return %c0_i32, %c0_i32_0 : i32, i32
  }
  func.func @transform_11(%arg0: i32) -> (i32, i32) {
    %c0_i32 = arith.constant 0 : i32
    %c0_i32_0 = arith.constant 0 : i32
    %c0_i32_1 = arith.constant 0 : i32
    return %c0_i32, %c0_i32_0 : i32, i32
  }
  func.func @transform_12(%arg0: i32) -> (i32, i32, i32) {
    %c0_i32 = arith.constant 0 : i32
    %c0_i32_0 = arith.constant 0 : i32
    %c0_i32_1 = arith.constant 0 : i32
    %c0_i32_2 = arith.constant 0 : i32
    return %c0_i32, %c0_i32_0, %c0_i32_1 : i32, i32, i32
  }
  func.func @transform_13(%arg0: i32) -> (i32, i32) {
    %c0_i32 = arith.constant 0 : i32
    %c0_i32_0 = arith.constant 0 : i32
    %c0_i32_1 = arith.constant 0 : i32
    return %c0_i32, %c0_i32_0 : i32, i32
  }
  func.func @transform_14(%arg0: i32) -> (i32, i32) {
    %c0_i32 = arith.constant 0 : i32
    %c0_i32_0 = arith.constant 0 : i32
    %c0_i32_1 = arith.constant 0 : i32
    return %c0_i32, %c0_i32_0 : i32, i32
  }
  func.func @transform_15(%arg0: i32) -> (i32, i32) {
    %c0_i32 = arith.constant 0 : i32
    %c0_i32_0 = arith.constant 0 : i32
    %c0_i32_1 = arith.constant 0 : i32
    return %c0_i32, %c0_i32_0 : i32, i32
  }
  func.func @transform_16(%arg0: i32) -> (i32, i32, i32) {
    %c0_i32 = arith.constant 0 : i32
    %c0_i32_0 = arith.constant 0 : i32
    %c0_i32_1 = arith.constant 0 : i32
    return %arg0, %c0_i32, %c0_i32_0 : i32, i32, i32
  }
}

module attributes {stable_mosaic.version = 11 : i64} {
  func.func @resnet_block_kernel(%arg0: i32, %arg1: memref<1x64x16xf32, #tpu.memory_space<vmem>>, %arg2: memref<1x1x32xf32, #tpu.memory_space<vmem>>, %arg3: memref<1x16xf32, #tpu.memory_space<vmem>>, %arg4: memref<1x16xf32, #tpu.memory_space<vmem>>, %arg5: memref<16x8xf32, #tpu.memory_space<vmem>>, %arg6: memref<9x16x32xbf16, #tpu.memory_space<vmem>>, %arg7: memref<1x32xf32, #tpu.memory_space<vmem>>, %arg8: memref<32x32xbf16, #tpu.memory_space<vmem>>, %arg9: memref<1x32xf32, #tpu.memory_space<vmem>>, %arg10: memref<1x32xf32, #tpu.memory_space<vmem>>, %arg11: memref<1x32xf32, #tpu.memory_space<vmem>>, %arg12: memref<32x8xf32, #tpu.memory_space<vmem>>, %arg13: memref<9x32x32xbf16, #tpu.memory_space<vmem>>, %arg14: memref<1x32xf32, #tpu.memory_space<vmem>>, %arg15: memref<16x32xbf16, #tpu.memory_space<vmem>>, %arg16: memref<1x32xf32, #tpu.memory_space<vmem>>, %arg17: memref<1x64x32xf32, #tpu.memory_space<vmem>>) attributes {dimension_semantics = [#tpu.dimension_semantics<parallel>], iteration_bounds = array<i64: 2>, scalar_prefetch = 0 : i64, scratch_operands = 0 : i64, tpu.core_type = #tpu.core_type<tc>, window_params = [{transform_indices = @transform_0, window_bounds = array<i64: 1, 64, 16>}, {transform_indices = @transform_1, window_bounds = array<i64: 1, 1, 32>}, {pipeline_mode = #tpu.pipeline_mode<synchronous>, transform_indices = @transform_2, window_bounds = array<i64: 1, 16>}, {pipeline_mode = #tpu.pipeline_mode<synchronous>, transform_indices = @transform_3, window_bounds = array<i64: 1, 16>}, {pipeline_mode = #tpu.pipeline_mode<synchronous>, transform_indices = @transform_4, window_bounds = array<i64: 16, 8>}, {pipeline_mode = #tpu.pipeline_mode<synchronous>, transform_indices = @transform_5, window_bounds = array<i64: 9, 16, 32>}, {pipeline_mode = #tpu.pipeline_mode<synchronous>, transform_indices = @transform_6, window_bounds = array<i64: 1, 32>}, {pipeline_mode = #tpu.pipeline_mode<synchronous>, transform_indices = @transform_7, window_bounds = array<i64: 32, 32>}, {pipeline_mode = #tpu.pipeline_mode<synchronous>, transform_indices = @transform_8, window_bounds = array<i64: 1, 32>}, {pipeline_mode = #tpu.pipeline_mode<synchronous>, transform_indices = @transform_9, window_bounds = array<i64: 1, 32>}, {pipeline_mode = #tpu.pipeline_mode<synchronous>, transform_indices = @transform_10, window_bounds = array<i64: 1, 32>}, {pipeline_mode = #tpu.pipeline_mode<synchronous>, transform_indices = @transform_11, window_bounds = array<i64: 32, 8>}, {pipeline_mode = #tpu.pipeline_mode<synchronous>, transform_indices = @transform_12, window_bounds = array<i64: 9, 32, 32>}, {pipeline_mode = #tpu.pipeline_mode<synchronous>, transform_indices = @transform_13, window_bounds = array<i64: 1, 32>}, {pipeline_mode = #tpu.pipeline_mode<synchronous>, transform_indices = @transform_14, window_bounds = array<i64: 16, 32>}, {pipeline_mode = #tpu.pipeline_mode<synchronous>, transform_indices = @transform_15, window_bounds = array<i64: 1, 32>}, {transform_indices = @transform_16, window_bounds = array<i64: 1, 64, 32>}]} {
    %c0 = arith.constant 0 : index
    %c0_0 = arith.constant 0 : index
    %c0_1 = arith.constant 0 : index
    %0 = vector.load %arg1[%c0, %c0_0, %c0_1] : memref<1x64x16xf32, #tpu.memory_space<vmem>>, vector<1x64x16xf32>
    %1 = vector.shape_cast %0 : vector<1x64x16xf32> to vector<64x16xf32>
    %c0_2 = arith.constant 0 : index
    %c0_3 = arith.constant 0 : index
    %2 = vector.load %arg3[%c0_2, %c0_3] : memref<1x16xf32, #tpu.memory_space<vmem>>, vector<1x16xf32>
    %c0_4 = arith.constant 0 : index
    %c0_5 = arith.constant 0 : index
    %3 = vector.load %arg4[%c0_4, %c0_5] : memref<1x16xf32, #tpu.memory_space<vmem>>, vector<1x16xf32>
    %c0_6 = arith.constant 0 : index
    %c0_7 = arith.constant 0 : index
    %4 = vector.load %arg5[%c0_6, %c0_7] : memref<16x8xf32, #tpu.memory_space<vmem>>, vector<16x8xf32>
    %cst = arith.constant dense<0.000000e+00> : vector<16xf32>
    %5 = vector.multi_reduction <add>, %1, %cst [0] : vector<64x16xf32> to vector<16xf32>
    %6 = vector.shape_cast %5 : vector<16xf32> to vector<1x16xf32>
    %cst_8 = arith.constant dense<0.000000e+00> : vector<1x8xf32>
    %7 = tpu.matmul %6, %4, %cst_8 {dimension_numbers = #tpu.dot_dimension_numbers<[1], [0], [0], [1], [0, 0, 1, 1], [], []>} : vector<1x16xf32>, vector<16x8xf32>, vector<1x8xf32> -> vector<1x8xf32>
    %cst_9 = arith.constant 1.280000e+02 : f32
    %8 = vector.broadcast %cst_9 : f32 to vector<1x8xf32>
    %9 = arith.divf %7, %8 : vector<1x8xf32>
    %cst_10 = arith.constant dense<0.000000e+00> : vector<1x16xf32>
    %10 = tpu.matmul %9, %4, %cst_10 {dimension_numbers = #tpu.dot_dimension_numbers<[1], [1], [0], [0], [0, 0, 1, 0], [], []>} : vector<1x8xf32>, vector<16x8xf32>, vector<1x16xf32> -> vector<1x16xf32>
    %11 = vector.broadcast %10 : vector<1x16xf32> to vector<64x16xf32>
    %12 = arith.subf %1, %11 : vector<64x16xf32>
    %13 = arith.mulf %12, %12 : vector<64x16xf32>
    %cst_11 = arith.constant dense<0.000000e+00> : vector<16xf32>
    %14 = vector.multi_reduction <add>, %13, %cst_11 [0] : vector<64x16xf32> to vector<16xf32>
    %15 = vector.shape_cast %14 : vector<16xf32> to vector<1x16xf32>
    %cst_12 = arith.constant dense<0.000000e+00> : vector<1x8xf32>
    %16 = tpu.matmul %15, %4, %cst_12 {dimension_numbers = #tpu.dot_dimension_numbers<[1], [0], [0], [1], [0, 0, 1, 1], [], []>} : vector<1x16xf32>, vector<16x8xf32>, vector<1x8xf32> -> vector<1x8xf32>
    %cst_13 = arith.constant 1.280000e+02 : f32
    %17 = vector.broadcast %cst_13 : f32 to vector<1x8xf32>
    %18 = arith.divf %16, %17 : vector<1x8xf32>
    %cst_14 = arith.constant dense<0.000000e+00> : vector<1x16xf32>
    %19 = tpu.matmul %18, %4, %cst_14 {dimension_numbers = #tpu.dot_dimension_numbers<[1], [1], [0], [0], [0, 0, 1, 0], [], []>} : vector<1x8xf32>, vector<16x8xf32>, vector<1x16xf32> -> vector<1x16xf32>
    %cst_15 = arith.constant 9.99999974E-6 : f32
    %20 = vector.broadcast %cst_15 : f32 to vector<1x16xf32>
    %21 = arith.addf %19, %20 : vector<1x16xf32>
    %22 = math.rsqrt %21 : vector<1x16xf32>
    %23 = vector.broadcast %22 : vector<1x16xf32> to vector<64x16xf32>
    %24 = arith.mulf %12, %23 : vector<64x16xf32>
    %25 = vector.broadcast %2 : vector<1x16xf32> to vector<64x16xf32>
    %26 = arith.mulf %24, %25 : vector<64x16xf32>
    %27 = vector.broadcast %3 : vector<1x16xf32> to vector<64x16xf32>
    %28 = arith.addf %26, %27 : vector<64x16xf32>
    %29 = arith.negf %28 : vector<64x16xf32>
    %30 = math.exp %29 : vector<64x16xf32>
    %cst_16 = arith.constant 1.000000e+00 : f32
    %31 = vector.broadcast %cst_16 : f32 to vector<64x16xf32>
    %32 = arith.addf %31, %30 : vector<64x16xf32>
    %33 = arith.divf %31, %32 : vector<64x16xf32>
    %34 = arith.mulf %28, %33 : vector<64x16xf32>
    %c0_17 = arith.constant 0 : index
    %c0_18 = arith.constant 0 : index
    %c0_19 = arith.constant 0 : index
    %35 = vector.load %arg2[%c0_17, %c0_18, %c0_19] : memref<1x1x32xf32, #tpu.memory_space<vmem>>, vector<1x1x32xf32>
    %36 = vector.shape_cast %35 : vector<1x1x32xf32> to vector<1x32xf32>
    %37 = arith.negf %36 : vector<1x32xf32>
    %38 = math.exp %37 : vector<1x32xf32>
    %cst_20 = arith.constant 1.000000e+00 : f32
    %39 = vector.broadcast %cst_20 : f32 to vector<1x32xf32>
    %40 = arith.addf %39, %38 : vector<1x32xf32>
    %41 = arith.divf %39, %40 : vector<1x32xf32>
    %42 = arith.mulf %36, %41 : vector<1x32xf32>
    %43 = arith.truncf %42 : vector<1x32xf32> to vector<1x32xbf16>
    %c0_21 = arith.constant 0 : index
    %c0_22 = arith.constant 0 : index
    %44 = vector.load %arg8[%c0_21, %c0_22] : memref<32x32xbf16, #tpu.memory_space<vmem>>, vector<32x32xbf16>
    %cst_23 = arith.constant dense<0.000000e+00> : vector<1x32xf32>
    %45 = tpu.matmul %43, %44, %cst_23 {dimension_numbers = #tpu.dot_dimension_numbers<[1], [0], [0], [1], [0, 0, 1, 1], [], []>} : vector<1x32xbf16>, vector<32x32xbf16>, vector<1x32xf32> -> vector<1x32xf32>
    %c0_24 = arith.constant 0 : index
    %c0_25 = arith.constant 0 : index
    %46 = vector.load %arg9[%c0_24, %c0_25] : memref<1x32xf32, #tpu.memory_space<vmem>>, vector<1x32xf32>
    %47 = arith.addf %45, %46 : vector<1x32xf32>
    %48 = arith.truncf %34 : vector<64x16xf32> to vector<64x16xbf16>
    %49 = vector.shape_cast %48 : vector<64x16xbf16> to vector<8x8x16xbf16>
    %cst_26 = arith.constant 0.000000e+00 : bf16
    %50 = vector.broadcast %cst_26 : bf16 to vector<1x8x16xbf16>
    %51 = tpu.concatenate %50, %49, %50 in 0 : vector<1x8x16xbf16>, vector<8x8x16xbf16>, vector<1x8x16xbf16> -> vector<10x8x16xbf16>
    %cst_27 = arith.constant 0.000000e+00 : bf16
    %52 = vector.broadcast %cst_27 : bf16 to vector<10x1x16xbf16>
    %53 = tpu.concatenate %52, %51, %52 in 1 : vector<10x1x16xbf16>, vector<10x8x16xbf16>, vector<10x1x16xbf16> -> vector<10x10x16xbf16>
    %cst_28 = arith.constant 0.000000e+00 : f32
    %54 = vector.broadcast %cst_28 : f32 to vector<64x32xf32>
    %55 = vector.extract_strided_slice %53 {offsets = [0, 0, 0], sizes = [8, 8, 16], strides = [1, 1, 1]} : vector<10x10x16xbf16> to vector<8x8x16xbf16>
    %56 = vector.shape_cast %55 : vector<8x8x16xbf16> to vector<64x16xbf16>
    %c0_29 = arith.constant 0 : index
    %c0_30 = arith.constant 0 : index
    %c0_31 = arith.constant 0 : index
    %57 = vector.load %arg6[%c0_29, %c0_30, %c0_31] : memref<9x16x32xbf16, #tpu.memory_space<vmem>>, vector<1x16x32xbf16>
    %58 = vector.shape_cast %57 : vector<1x16x32xbf16> to vector<16x32xbf16>
    %cst_32 = arith.constant dense<0.000000e+00> : vector<64x32xf32>
    %59 = tpu.matmul %56, %58, %cst_32 {dimension_numbers = #tpu.dot_dimension_numbers<[1], [0], [0], [1], [0, 0, 1, 1], [], []>} : vector<64x16xbf16>, vector<16x32xbf16>, vector<64x32xf32> -> vector<64x32xf32>
    %60 = arith.addf %54, %59 : vector<64x32xf32>
    %61 = vector.extract_strided_slice %53 {offsets = [0, 1, 0], sizes = [8, 8, 16], strides = [1, 1, 1]} : vector<10x10x16xbf16> to vector<8x8x16xbf16>
    %62 = vector.shape_cast %61 : vector<8x8x16xbf16> to vector<64x16xbf16>
    %c1 = arith.constant 1 : index
    %c0_33 = arith.constant 0 : index
    %c0_34 = arith.constant 0 : index
    %63 = vector.load %arg6[%c1, %c0_33, %c0_34] : memref<9x16x32xbf16, #tpu.memory_space<vmem>>, vector<1x16x32xbf16>
    %64 = vector.shape_cast %63 : vector<1x16x32xbf16> to vector<16x32xbf16>
    %cst_35 = arith.constant dense<0.000000e+00> : vector<64x32xf32>
    %65 = tpu.matmul %62, %64, %cst_35 {dimension_numbers = #tpu.dot_dimension_numbers<[1], [0], [0], [1], [0, 0, 1, 1], [], []>} : vector<64x16xbf16>, vector<16x32xbf16>, vector<64x32xf32> -> vector<64x32xf32>
    %66 = arith.addf %60, %65 : vector<64x32xf32>
    %67 = vector.extract_strided_slice %53 {offsets = [0, 2, 0], sizes = [8, 8, 16], strides = [1, 1, 1]} : vector<10x10x16xbf16> to vector<8x8x16xbf16>
    %68 = vector.shape_cast %67 : vector<8x8x16xbf16> to vector<64x16xbf16>
    %c2 = arith.constant 2 : index
    %c0_36 = arith.constant 0 : index
    %c0_37 = arith.constant 0 : index
    %69 = vector.load %arg6[%c2, %c0_36, %c0_37] : memref<9x16x32xbf16, #tpu.memory_space<vmem>>, vector<1x16x32xbf16>
    %70 = vector.shape_cast %69 : vector<1x16x32xbf16> to vector<16x32xbf16>
    %cst_38 = arith.constant dense<0.000000e+00> : vector<64x32xf32>
    %71 = tpu.matmul %68, %70, %cst_38 {dimension_numbers = #tpu.dot_dimension_numbers<[1], [0], [0], [1], [0, 0, 1, 1], [], []>} : vector<64x16xbf16>, vector<16x32xbf16>, vector<64x32xf32> -> vector<64x32xf32>
    %72 = arith.addf %66, %71 : vector<64x32xf32>
    %73 = vector.extract_strided_slice %53 {offsets = [1, 0, 0], sizes = [8, 8, 16], strides = [1, 1, 1]} : vector<10x10x16xbf16> to vector<8x8x16xbf16>
    %74 = vector.shape_cast %73 : vector<8x8x16xbf16> to vector<64x16xbf16>
    %c3 = arith.constant 3 : index
    %c0_39 = arith.constant 0 : index
    %c0_40 = arith.constant 0 : index
    %75 = vector.load %arg6[%c3, %c0_39, %c0_40] : memref<9x16x32xbf16, #tpu.memory_space<vmem>>, vector<1x16x32xbf16>
    %76 = vector.shape_cast %75 : vector<1x16x32xbf16> to vector<16x32xbf16>
    %cst_41 = arith.constant dense<0.000000e+00> : vector<64x32xf32>
    %77 = tpu.matmul %74, %76, %cst_41 {dimension_numbers = #tpu.dot_dimension_numbers<[1], [0], [0], [1], [0, 0, 1, 1], [], []>} : vector<64x16xbf16>, vector<16x32xbf16>, vector<64x32xf32> -> vector<64x32xf32>
    %78 = arith.addf %72, %77 : vector<64x32xf32>
    %79 = vector.extract_strided_slice %53 {offsets = [1, 1, 0], sizes = [8, 8, 16], strides = [1, 1, 1]} : vector<10x10x16xbf16> to vector<8x8x16xbf16>
    %80 = vector.shape_cast %79 : vector<8x8x16xbf16> to vector<64x16xbf16>
    %c4 = arith.constant 4 : index
    %c0_42 = arith.constant 0 : index
    %c0_43 = arith.constant 0 : index
    %81 = vector.load %arg6[%c4, %c0_42, %c0_43] : memref<9x16x32xbf16, #tpu.memory_space<vmem>>, vector<1x16x32xbf16>
    %82 = vector.shape_cast %81 : vector<1x16x32xbf16> to vector<16x32xbf16>
    %cst_44 = arith.constant dense<0.000000e+00> : vector<64x32xf32>
    %83 = tpu.matmul %80, %82, %cst_44 {dimension_numbers = #tpu.dot_dimension_numbers<[1], [0], [0], [1], [0, 0, 1, 1], [], []>} : vector<64x16xbf16>, vector<16x32xbf16>, vector<64x32xf32> -> vector<64x32xf32>
    %84 = arith.addf %78, %83 : vector<64x32xf32>
    %85 = vector.extract_strided_slice %53 {offsets = [1, 2, 0], sizes = [8, 8, 16], strides = [1, 1, 1]} : vector<10x10x16xbf16> to vector<8x8x16xbf16>
    %86 = vector.shape_cast %85 : vector<8x8x16xbf16> to vector<64x16xbf16>
    %c5 = arith.constant 5 : index
    %c0_45 = arith.constant 0 : index
    %c0_46 = arith.constant 0 : index
    %87 = vector.load %arg6[%c5, %c0_45, %c0_46] : memref<9x16x32xbf16, #tpu.memory_space<vmem>>, vector<1x16x32xbf16>
    %88 = vector.shape_cast %87 : vector<1x16x32xbf16> to vector<16x32xbf16>
    %cst_47 = arith.constant dense<0.000000e+00> : vector<64x32xf32>
    %89 = tpu.matmul %86, %88, %cst_47 {dimension_numbers = #tpu.dot_dimension_numbers<[1], [0], [0], [1], [0, 0, 1, 1], [], []>} : vector<64x16xbf16>, vector<16x32xbf16>, vector<64x32xf32> -> vector<64x32xf32>
    %90 = arith.addf %84, %89 : vector<64x32xf32>
    %91 = vector.extract_strided_slice %53 {offsets = [2, 0, 0], sizes = [8, 8, 16], strides = [1, 1, 1]} : vector<10x10x16xbf16> to vector<8x8x16xbf16>
    %92 = vector.shape_cast %91 : vector<8x8x16xbf16> to vector<64x16xbf16>
    %c6 = arith.constant 6 : index
    %c0_48 = arith.constant 0 : index
    %c0_49 = arith.constant 0 : index
    %93 = vector.load %arg6[%c6, %c0_48, %c0_49] : memref<9x16x32xbf16, #tpu.memory_space<vmem>>, vector<1x16x32xbf16>
    %94 = vector.shape_cast %93 : vector<1x16x32xbf16> to vector<16x32xbf16>
    %cst_50 = arith.constant dense<0.000000e+00> : vector<64x32xf32>
    %95 = tpu.matmul %92, %94, %cst_50 {dimension_numbers = #tpu.dot_dimension_numbers<[1], [0], [0], [1], [0, 0, 1, 1], [], []>} : vector<64x16xbf16>, vector<16x32xbf16>, vector<64x32xf32> -> vector<64x32xf32>
    %96 = arith.addf %90, %95 : vector<64x32xf32>
    %97 = vector.extract_strided_slice %53 {offsets = [2, 1, 0], sizes = [8, 8, 16], strides = [1, 1, 1]} : vector<10x10x16xbf16> to vector<8x8x16xbf16>
    %98 = vector.shape_cast %97 : vector<8x8x16xbf16> to vector<64x16xbf16>
    %c7 = arith.constant 7 : index
    %c0_51 = arith.constant 0 : index
    %c0_52 = arith.constant 0 : index
    %99 = vector.load %arg6[%c7, %c0_51, %c0_52] : memref<9x16x32xbf16, #tpu.memory_space<vmem>>, vector<1x16x32xbf16>
    %100 = vector.shape_cast %99 : vector<1x16x32xbf16> to vector<16x32xbf16>
    %cst_53 = arith.constant dense<0.000000e+00> : vector<64x32xf32>
    %101 = tpu.matmul %98, %100, %cst_53 {dimension_numbers = #tpu.dot_dimension_numbers<[1], [0], [0], [1], [0, 0, 1, 1], [], []>} : vector<64x16xbf16>, vector<16x32xbf16>, vector<64x32xf32> -> vector<64x32xf32>
    %102 = arith.addf %96, %101 : vector<64x32xf32>
    %103 = vector.extract_strided_slice %53 {offsets = [2, 2, 0], sizes = [8, 8, 16], strides = [1, 1, 1]} : vector<10x10x16xbf16> to vector<8x8x16xbf16>
    %104 = vector.shape_cast %103 : vector<8x8x16xbf16> to vector<64x16xbf16>
    %c8 = arith.constant 8 : index
    %c0_54 = arith.constant 0 : index
    %c0_55 = arith.constant 0 : index
    %105 = vector.load %arg6[%c8, %c0_54, %c0_55] : memref<9x16x32xbf16, #tpu.memory_space<vmem>>, vector<1x16x32xbf16>
    %106 = vector.shape_cast %105 : vector<1x16x32xbf16> to vector<16x32xbf16>
    %cst_56 = arith.constant dense<0.000000e+00> : vector<64x32xf32>
    %107 = tpu.matmul %104, %106, %cst_56 {dimension_numbers = #tpu.dot_dimension_numbers<[1], [0], [0], [1], [0, 0, 1, 1], [], []>} : vector<64x16xbf16>, vector<16x32xbf16>, vector<64x32xf32> -> vector<64x32xf32>
    %108 = arith.addf %102, %107 : vector<64x32xf32>
    %c0_57 = arith.constant 0 : index
    %c0_58 = arith.constant 0 : index
    %109 = vector.load %arg7[%c0_57, %c0_58] : memref<1x32xf32, #tpu.memory_space<vmem>>, vector<1x32xf32>
    %110 = vector.broadcast %109 : vector<1x32xf32> to vector<64x32xf32>
    %111 = arith.addf %108, %110 : vector<64x32xf32>
    %112 = vector.broadcast %47 : vector<1x32xf32> to vector<64x32xf32>
    %113 = arith.addf %111, %112 : vector<64x32xf32>
    %c0_59 = arith.constant 0 : index
    %c0_60 = arith.constant 0 : index
    %114 = vector.load %arg10[%c0_59, %c0_60] : memref<1x32xf32, #tpu.memory_space<vmem>>, vector<1x32xf32>
    %c0_61 = arith.constant 0 : index
    %c0_62 = arith.constant 0 : index
    %115 = vector.load %arg11[%c0_61, %c0_62] : memref<1x32xf32, #tpu.memory_space<vmem>>, vector<1x32xf32>
    %c0_63 = arith.constant 0 : index
    %c0_64 = arith.constant 0 : index
    %116 = vector.load %arg12[%c0_63, %c0_64] : memref<32x8xf32, #tpu.memory_space<vmem>>, vector<32x8xf32>
    %cst_65 = arith.constant dense<0.000000e+00> : vector<32xf32>
    %117 = vector.multi_reduction <add>, %113, %cst_65 [0] : vector<64x32xf32> to vector<32xf32>
    %118 = vector.shape_cast %117 : vector<32xf32> to vector<1x32xf32>
    %cst_66 = arith.constant dense<0.000000e+00> : vector<1x8xf32>
    %119 = tpu.matmul %118, %116, %cst_66 {dimension_numbers = #tpu.dot_dimension_numbers<[1], [0], [0], [1], [0, 0, 1, 1], [], []>} : vector<1x32xf32>, vector<32x8xf32>, vector<1x8xf32> -> vector<1x8xf32>
    %cst_67 = arith.constant 2.560000e+02 : f32
    %120 = vector.broadcast %cst_67 : f32 to vector<1x8xf32>
    %121 = arith.divf %119, %120 : vector<1x8xf32>
    %cst_68 = arith.constant dense<0.000000e+00> : vector<1x32xf32>
    %122 = tpu.matmul %121, %116, %cst_68 {dimension_numbers = #tpu.dot_dimension_numbers<[1], [1], [0], [0], [0, 0, 1, 0], [], []>} : vector<1x8xf32>, vector<32x8xf32>, vector<1x32xf32> -> vector<1x32xf32>
    %123 = vector.broadcast %122 : vector<1x32xf32> to vector<64x32xf32>
    %124 = arith.subf %113, %123 : vector<64x32xf32>
    %125 = arith.mulf %124, %124 : vector<64x32xf32>
    %cst_69 = arith.constant dense<0.000000e+00> : vector<32xf32>
    %126 = vector.multi_reduction <add>, %125, %cst_69 [0] : vector<64x32xf32> to vector<32xf32>
    %127 = vector.shape_cast %126 : vector<32xf32> to vector<1x32xf32>
    %cst_70 = arith.constant dense<0.000000e+00> : vector<1x8xf32>
    %128 = tpu.matmul %127, %116, %cst_70 {dimension_numbers = #tpu.dot_dimension_numbers<[1], [0], [0], [1], [0, 0, 1, 1], [], []>} : vector<1x32xf32>, vector<32x8xf32>, vector<1x8xf32> -> vector<1x8xf32>
    %cst_71 = arith.constant 2.560000e+02 : f32
    %129 = vector.broadcast %cst_71 : f32 to vector<1x8xf32>
    %130 = arith.divf %128, %129 : vector<1x8xf32>
    %cst_72 = arith.constant dense<0.000000e+00> : vector<1x32xf32>
    %131 = tpu.matmul %130, %116, %cst_72 {dimension_numbers = #tpu.dot_dimension_numbers<[1], [1], [0], [0], [0, 0, 1, 0], [], []>} : vector<1x8xf32>, vector<32x8xf32>, vector<1x32xf32> -> vector<1x32xf32>
    %cst_73 = arith.constant 9.99999974E-6 : f32
    %132 = vector.broadcast %cst_73 : f32 to vector<1x32xf32>
    %133 = arith.addf %131, %132 : vector<1x32xf32>
    %134 = math.rsqrt %133 : vector<1x32xf32>
    %135 = vector.broadcast %134 : vector<1x32xf32> to vector<64x32xf32>
    %136 = arith.mulf %124, %135 : vector<64x32xf32>
    %137 = vector.broadcast %114 : vector<1x32xf32> to vector<64x32xf32>
    %138 = arith.mulf %136, %137 : vector<64x32xf32>
    %139 = vector.broadcast %115 : vector<1x32xf32> to vector<64x32xf32>
    %140 = arith.addf %138, %139 : vector<64x32xf32>
    %141 = arith.negf %140 : vector<64x32xf32>
    %142 = math.exp %141 : vector<64x32xf32>
    %cst_74 = arith.constant 1.000000e+00 : f32
    %143 = vector.broadcast %cst_74 : f32 to vector<64x32xf32>
    %144 = arith.addf %143, %142 : vector<64x32xf32>
    %145 = arith.divf %143, %144 : vector<64x32xf32>
    %146 = arith.mulf %140, %145 : vector<64x32xf32>
    %147 = arith.truncf %146 : vector<64x32xf32> to vector<64x32xbf16>
    %148 = vector.shape_cast %147 : vector<64x32xbf16> to vector<8x8x32xbf16>
    %cst_75 = arith.constant 0.000000e+00 : bf16
    %149 = vector.broadcast %cst_75 : bf16 to vector<1x8x32xbf16>
    %150 = tpu.concatenate %149, %148, %149 in 0 : vector<1x8x32xbf16>, vector<8x8x32xbf16>, vector<1x8x32xbf16> -> vector<10x8x32xbf16>
    %cst_76 = arith.constant 0.000000e+00 : bf16
    %151 = vector.broadcast %cst_76 : bf16 to vector<10x1x32xbf16>
    %152 = tpu.concatenate %151, %150, %151 in 1 : vector<10x1x32xbf16>, vector<10x8x32xbf16>, vector<10x1x32xbf16> -> vector<10x10x32xbf16>
    %cst_77 = arith.constant 0.000000e+00 : f32
    %153 = vector.broadcast %cst_77 : f32 to vector<64x32xf32>
    %154 = vector.extract_strided_slice %152 {offsets = [0, 0, 0], sizes = [8, 8, 32], strides = [1, 1, 1]} : vector<10x10x32xbf16> to vector<8x8x32xbf16>
    %155 = vector.shape_cast %154 : vector<8x8x32xbf16> to vector<64x32xbf16>
    %c0_78 = arith.constant 0 : index
    %c0_79 = arith.constant 0 : index
    %c0_80 = arith.constant 0 : index
    %156 = vector.load %arg13[%c0_78, %c0_79, %c0_80] : memref<9x32x32xbf16, #tpu.memory_space<vmem>>, vector<1x32x32xbf16>
    %157 = vector.shape_cast %156 : vector<1x32x32xbf16> to vector<32x32xbf16>
    %cst_81 = arith.constant dense<0.000000e+00> : vector<64x32xf32>
    %158 = tpu.matmul %155, %157, %cst_81 {dimension_numbers = #tpu.dot_dimension_numbers<[1], [0], [0], [1], [0, 0, 1, 1], [], []>} : vector<64x32xbf16>, vector<32x32xbf16>, vector<64x32xf32> -> vector<64x32xf32>
    %159 = arith.addf %153, %158 : vector<64x32xf32>
    %160 = vector.extract_strided_slice %152 {offsets = [0, 1, 0], sizes = [8, 8, 32], strides = [1, 1, 1]} : vector<10x10x32xbf16> to vector<8x8x32xbf16>
    %161 = vector.shape_cast %160 : vector<8x8x32xbf16> to vector<64x32xbf16>
    %c1_82 = arith.constant 1 : index
    %c0_83 = arith.constant 0 : index
    %c0_84 = arith.constant 0 : index
    %162 = vector.load %arg13[%c1_82, %c0_83, %c0_84] : memref<9x32x32xbf16, #tpu.memory_space<vmem>>, vector<1x32x32xbf16>
    %163 = vector.shape_cast %162 : vector<1x32x32xbf16> to vector<32x32xbf16>
    %cst_85 = arith.constant dense<0.000000e+00> : vector<64x32xf32>
    %164 = tpu.matmul %161, %163, %cst_85 {dimension_numbers = #tpu.dot_dimension_numbers<[1], [0], [0], [1], [0, 0, 1, 1], [], []>} : vector<64x32xbf16>, vector<32x32xbf16>, vector<64x32xf32> -> vector<64x32xf32>
    %165 = arith.addf %159, %164 : vector<64x32xf32>
    %166 = vector.extract_strided_slice %152 {offsets = [0, 2, 0], sizes = [8, 8, 32], strides = [1, 1, 1]} : vector<10x10x32xbf16> to vector<8x8x32xbf16>
    %167 = vector.shape_cast %166 : vector<8x8x32xbf16> to vector<64x32xbf16>
    %c2_86 = arith.constant 2 : index
    %c0_87 = arith.constant 0 : index
    %c0_88 = arith.constant 0 : index
    %168 = vector.load %arg13[%c2_86, %c0_87, %c0_88] : memref<9x32x32xbf16, #tpu.memory_space<vmem>>, vector<1x32x32xbf16>
    %169 = vector.shape_cast %168 : vector<1x32x32xbf16> to vector<32x32xbf16>
    %cst_89 = arith.constant dense<0.000000e+00> : vector<64x32xf32>
    %170 = tpu.matmul %167, %169, %cst_89 {dimension_numbers = #tpu.dot_dimension_numbers<[1], [0], [0], [1], [0, 0, 1, 1], [], []>} : vector<64x32xbf16>, vector<32x32xbf16>, vector<64x32xf32> -> vector<64x32xf32>
    %171 = arith.addf %165, %170 : vector<64x32xf32>
    %172 = vector.extract_strided_slice %152 {offsets = [1, 0, 0], sizes = [8, 8, 32], strides = [1, 1, 1]} : vector<10x10x32xbf16> to vector<8x8x32xbf16>
    %173 = vector.shape_cast %172 : vector<8x8x32xbf16> to vector<64x32xbf16>
    %c3_90 = arith.constant 3 : index
    %c0_91 = arith.constant 0 : index
    %c0_92 = arith.constant 0 : index
    %174 = vector.load %arg13[%c3_90, %c0_91, %c0_92] : memref<9x32x32xbf16, #tpu.memory_space<vmem>>, vector<1x32x32xbf16>
    %175 = vector.shape_cast %174 : vector<1x32x32xbf16> to vector<32x32xbf16>
    %cst_93 = arith.constant dense<0.000000e+00> : vector<64x32xf32>
    %176 = tpu.matmul %173, %175, %cst_93 {dimension_numbers = #tpu.dot_dimension_numbers<[1], [0], [0], [1], [0, 0, 1, 1], [], []>} : vector<64x32xbf16>, vector<32x32xbf16>, vector<64x32xf32> -> vector<64x32xf32>
    %177 = arith.addf %171, %176 : vector<64x32xf32>
    %178 = vector.extract_strided_slice %152 {offsets = [1, 1, 0], sizes = [8, 8, 32], strides = [1, 1, 1]} : vector<10x10x32xbf16> to vector<8x8x32xbf16>
    %179 = vector.shape_cast %178 : vector<8x8x32xbf16> to vector<64x32xbf16>
    %c4_94 = arith.constant 4 : index
    %c0_95 = arith.constant 0 : index
    %c0_96 = arith.constant 0 : index
    %180 = vector.load %arg13[%c4_94, %c0_95, %c0_96] : memref<9x32x32xbf16, #tpu.memory_space<vmem>>, vector<1x32x32xbf16>
    %181 = vector.shape_cast %180 : vector<1x32x32xbf16> to vector<32x32xbf16>
    %cst_97 = arith.constant dense<0.000000e+00> : vector<64x32xf32>
    %182 = tpu.matmul %179, %181, %cst_97 {dimension_numbers = #tpu.dot_dimension_numbers<[1], [0], [0], [1], [0, 0, 1, 1], [], []>} : vector<64x32xbf16>, vector<32x32xbf16>, vector<64x32xf32> -> vector<64x32xf32>
    %183 = arith.addf %177, %182 : vector<64x32xf32>
    %184 = vector.extract_strided_slice %152 {offsets = [1, 2, 0], sizes = [8, 8, 32], strides = [1, 1, 1]} : vector<10x10x32xbf16> to vector<8x8x32xbf16>
    %185 = vector.shape_cast %184 : vector<8x8x32xbf16> to vector<64x32xbf16>
    %c5_98 = arith.constant 5 : index
    %c0_99 = arith.constant 0 : index
    %c0_100 = arith.constant 0 : index
    %186 = vector.load %arg13[%c5_98, %c0_99, %c0_100] : memref<9x32x32xbf16, #tpu.memory_space<vmem>>, vector<1x32x32xbf16>
    %187 = vector.shape_cast %186 : vector<1x32x32xbf16> to vector<32x32xbf16>
    %cst_101 = arith.constant dense<0.000000e+00> : vector<64x32xf32>
    %188 = tpu.matmul %185, %187, %cst_101 {dimension_numbers = #tpu.dot_dimension_numbers<[1], [0], [0], [1], [0, 0, 1, 1], [], []>} : vector<64x32xbf16>, vector<32x32xbf16>, vector<64x32xf32> -> vector<64x32xf32>
    %189 = arith.addf %183, %188 : vector<64x32xf32>
    %190 = vector.extract_strided_slice %152 {offsets = [2, 0, 0], sizes = [8, 8, 32], strides = [1, 1, 1]} : vector<10x10x32xbf16> to vector<8x8x32xbf16>
    %191 = vector.shape_cast %190 : vector<8x8x32xbf16> to vector<64x32xbf16>
    %c6_102 = arith.constant 6 : index
    %c0_103 = arith.constant 0 : index
    %c0_104 = arith.constant 0 : index
    %192 = vector.load %arg13[%c6_102, %c0_103, %c0_104] : memref<9x32x32xbf16, #tpu.memory_space<vmem>>, vector<1x32x32xbf16>
    %193 = vector.shape_cast %192 : vector<1x32x32xbf16> to vector<32x32xbf16>
    %cst_105 = arith.constant dense<0.000000e+00> : vector<64x32xf32>
    %194 = tpu.matmul %191, %193, %cst_105 {dimension_numbers = #tpu.dot_dimension_numbers<[1], [0], [0], [1], [0, 0, 1, 1], [], []>} : vector<64x32xbf16>, vector<32x32xbf16>, vector<64x32xf32> -> vector<64x32xf32>
    %195 = arith.addf %189, %194 : vector<64x32xf32>
    %196 = vector.extract_strided_slice %152 {offsets = [2, 1, 0], sizes = [8, 8, 32], strides = [1, 1, 1]} : vector<10x10x32xbf16> to vector<8x8x32xbf16>
    %197 = vector.shape_cast %196 : vector<8x8x32xbf16> to vector<64x32xbf16>
    %c7_106 = arith.constant 7 : index
    %c0_107 = arith.constant 0 : index
    %c0_108 = arith.constant 0 : index
    %198 = vector.load %arg13[%c7_106, %c0_107, %c0_108] : memref<9x32x32xbf16, #tpu.memory_space<vmem>>, vector<1x32x32xbf16>
    %199 = vector.shape_cast %198 : vector<1x32x32xbf16> to vector<32x32xbf16>
    %cst_109 = arith.constant dense<0.000000e+00> : vector<64x32xf32>
    %200 = tpu.matmul %197, %199, %cst_109 {dimension_numbers = #tpu.dot_dimension_numbers<[1], [0], [0], [1], [0, 0, 1, 1], [], []>} : vector<64x32xbf16>, vector<32x32xbf16>, vector<64x32xf32> -> vector<64x32xf32>
    %201 = arith.addf %195, %200 : vector<64x32xf32>
    %202 = vector.extract_strided_slice %152 {offsets = [2, 2, 0], sizes = [8, 8, 32], strides = [1, 1, 1]} : vector<10x10x32xbf16> to vector<8x8x32xbf16>
    %203 = vector.shape_cast %202 : vector<8x8x32xbf16> to vector<64x32xbf16>
    %c8_110 = arith.constant 8 : index
    %c0_111 = arith.constant 0 : index
    %c0_112 = arith.constant 0 : index
    %204 = vector.load %arg13[%c8_110, %c0_111, %c0_112] : memref<9x32x32xbf16, #tpu.memory_space<vmem>>, vector<1x32x32xbf16>
    %205 = vector.shape_cast %204 : vector<1x32x32xbf16> to vector<32x32xbf16>
    %cst_113 = arith.constant dense<0.000000e+00> : vector<64x32xf32>
    %206 = tpu.matmul %203, %205, %cst_113 {dimension_numbers = #tpu.dot_dimension_numbers<[1], [0], [0], [1], [0, 0, 1, 1], [], []>} : vector<64x32xbf16>, vector<32x32xbf16>, vector<64x32xf32> -> vector<64x32xf32>
    %207 = arith.addf %201, %206 : vector<64x32xf32>
    %c0_114 = arith.constant 0 : index
    %c0_115 = arith.constant 0 : index
    %208 = vector.load %arg14[%c0_114, %c0_115] : memref<1x32xf32, #tpu.memory_space<vmem>>, vector<1x32xf32>
    %209 = vector.broadcast %208 : vector<1x32xf32> to vector<64x32xf32>
    %210 = arith.addf %207, %209 : vector<64x32xf32>
    %211 = arith.truncf %1 : vector<64x16xf32> to vector<64x16xbf16>
    %c0_116 = arith.constant 0 : index
    %c0_117 = arith.constant 0 : index
    %212 = vector.load %arg15[%c0_116, %c0_117] : memref<16x32xbf16, #tpu.memory_space<vmem>>, vector<16x32xbf16>
    %cst_118 = arith.constant dense<0.000000e+00> : vector<64x32xf32>
    %213 = tpu.matmul %211, %212, %cst_118 {dimension_numbers = #tpu.dot_dimension_numbers<[1], [0], [0], [1], [0, 0, 1, 1], [], []>} : vector<64x16xbf16>, vector<16x32xbf16>, vector<64x32xf32> -> vector<64x32xf32>
    %214 = arith.addf %210, %213 : vector<64x32xf32>
    %c0_119 = arith.constant 0 : index
    %c0_120 = arith.constant 0 : index
    %215 = vector.load %arg16[%c0_119, %c0_120] : memref<1x32xf32, #tpu.memory_space<vmem>>, vector<1x32xf32>
    %216 = vector.broadcast %215 : vector<1x32xf32> to vector<64x32xf32>
    %217 = arith.addf %214, %216 : vector<64x32xf32>
    %c0_121 = arith.constant 0 : index
    %c0_122 = arith.constant 0 : index
    %c0_123 = arith.constant 0 : index
    %218 = vector.load %arg17[%c0_121, %c0_122, %c0_123] : memref<1x64x32xf32, #tpu.memory_space<vmem>>, vector<1x64x32xf32>
    %219 = vector.shape_cast %218 : vector<1x64x32xf32> to vector<64x32xf32>
    %220 = vector.shape_cast %217 : vector<64x32xf32> to vector<1x64x32xf32>
    tpu.vector_store %arg17[%c0_121, %c0_122, %c0_123], %220 {strides = array<i32>} : memref<1x64x32xf32, #tpu.memory_space<vmem>>, vector<1x64x32xf32>,
    return
  }
  func.func @transform_0(%arg0: i32) -> (i32, i32, i32) {
    %c0_i32 = arith.constant 0 : i32
    %c0_i32_0 = arith.constant 0 : i32
    %c0_i32_1 = arith.constant 0 : i32
    return %arg0, %c0_i32, %c0_i32_0 : i32, i32, i32
  }
  func.func @transform_1(%arg0: i32) -> (i32, i32, i32) {
    %c0_i32 = arith.constant 0 : i32
    %c0_i32_0 = arith.constant 0 : i32
    %c0_i32_1 = arith.constant 0 : i32
    return %arg0, %c0_i32, %c0_i32_0 : i32, i32, i32
  }
  func.func @transform_2(%arg0: i32) -> (i32, i32) {
    %c0_i32 = arith.constant 0 : i32
    %c0_i32_0 = arith.constant 0 : i32
    %c0_i32_1 = arith.constant 0 : i32
    return %c0_i32, %c0_i32_0 : i32, i32
  }
  func.func @transform_3(%arg0: i32) -> (i32, i32) {
    %c0_i32 = arith.constant 0 : i32
    %c0_i32_0 = arith.constant 0 : i32
    %c0_i32_1 = arith.constant 0 : i32
    return %c0_i32, %c0_i32_0 : i32, i32
  }
  func.func @transform_4(%arg0: i32) -> (i32, i32) {
    %c0_i32 = arith.constant 0 : i32
    %c0_i32_0 = arith.constant 0 : i32
    %c0_i32_1 = arith.constant 0 : i32
    return %c0_i32, %c0_i32_0 : i32, i32
  }
  func.func @transform_5(%arg0: i32) -> (i32, i32, i32) {
    %c0_i32 = arith.constant 0 : i32
    %c0_i32_0 = arith.constant 0 : i32
    %c0_i32_1 = arith.constant 0 : i32
    %c0_i32_2 = arith.constant 0 : i32
    return %c0_i32, %c0_i32_0, %c0_i32_1 : i32, i32, i32
  }
  func.func @transform_6(%arg0: i32) -> (i32, i32) {
    %c0_i32 = arith.constant 0 : i32
    %c0_i32_0 = arith.constant 0 : i32
    %c0_i32_1 = arith.constant 0 : i32
    return %c0_i32, %c0_i32_0 : i32, i32
  }
  func.func @transform_7(%arg0: i32) -> (i32, i32) {
    %c0_i32 = arith.constant 0 : i32
    %c0_i32_0 = arith.constant 0 : i32
    %c0_i32_1 = arith.constant 0 : i32
    return %c0_i32, %c0_i32_0 : i32, i32
  }
  func.func @transform_8(%arg0: i32) -> (i32, i32) {
    %c0_i32 = arith.constant 0 : i32
    %c0_i32_0 = arith.constant 0 : i32
    %c0_i32_1 = arith.constant 0 : i32
    return %c0_i32, %c0_i32_0 : i32, i32
  }
  func.func @transform_9(%arg0: i32) -> (i32, i32) {
    %c0_i32 = arith.constant 0 : i32
    %c0_i32_0 = arith.constant 0 : i32
    %c0_i32_1 = arith.constant 0 : i32
    return %c0_i32, %c0_i32_0 : i32, i32
  }
  func.func @transform_10(%arg0: i32) -> (i32, i32) {
    %c0_i32 = arith.constant 0 : i32
    %c0_i32_0 = arith.constant 0 : i32
    %c0_i32_1 = arith.constant 0 : i32
    return %c0_i32, %c0_i32_0 : i32, i32
  }
  func.func @transform_11(%arg0: i32) -> (i32, i32) {
    %c0_i32 = arith.constant 0 : i32
    %c0_i32_0 = arith.constant 0 : i32
    %c0_i32_1 = arith.constant 0 : i32
    return %c0_i32, %c0_i32_0 : i32, i32
  }
  func.func @transform_12(%arg0: i32) -> (i32, i32, i32) {
    %c0_i32 = arith.constant 0 : i32
    %c0_i32_0 = arith.constant 0 : i32
    %c0_i32_1 = arith.constant 0 : i32
    %c0_i32_2 = arith.constant 0 : i32
    return %c0_i32, %c0_i32_0, %c0_i32_1 : i32, i32, i32
  }
  func.func @transform_13(%arg0: i32) -> (i32, i32) {
    %c0_i32 = arith.constant 0 : i32
    %c0_i32_0 = arith.constant 0 : i32
    %c0_i32_1 = arith.constant 0 : i32
    return %c0_i32, %c0_i32_0 : i32, i32
  }
  func.func @transform_14(%arg0: i32) -> (i32, i32) {
    %c0_i32 = arith.constant 0 : i32
    %c0_i32_0 = arith.constant 0 : i32
    %c0_i32_1 = arith.constant 0 : i32
    return %c0_i32, %c0_i32_0 : i32, i32
  }
  func.func @transform_15(%arg0: i32) -> (i32, i32) {
    %c0_i32 = arith.constant 0 : i32
    %c0_i32_0 = arith.constant 0 : i32
    %c0_i32_1 = arith.constant 0 : i32
    return %c0_i32, %c0_i32_0 : i32, i32
  }
  func.func @transform_16(%arg0: i32) -> (i32, i32, i32) {
    %c0_i32 = arith.constant 0 : i32
    %c0_i32_0 = arith.constant 0 : i32
    %c0_i32_1 = arith.constant 0 : i32
    return %arg0, %c0_i32, %c0_i32_0 : i32, i32, i32
  }
}

</mosaic_0001>

<llo_original>
// kernel: midblock_forward.4
$region0: #{midblock_forward.4}
  #allocation0 [shape = 'u32[]', space=smem, size = 0x4, offset = 0x4, fixed_abs, tag = 'smem constant byte address 0x4 - core index']
  #allocation1 [shape = 'u32[72,128]{1,0:T(1,128)}', space=vmem, size = 0x9000, scoped, tag = 'internal scratch']
  %s0 = inlined_call_operand.vmem [shape: f32[2,64,32], index: 0, kind: input, shape index: {}]
  %s1 = inlined_call_operand.vmem [shape: f32[1,32], index: 1, kind: input, shape index: {}]
  %s2 = inlined_call_operand.vmem [shape: f32[1,32], index: 2, kind: input, shape index: {}]
  %s3 = inlined_call_operand.vmem [shape: f32[32,8], index: 3, kind: input, shape index: {}]
  %s4 = inlined_call_operand.vmem [shape: bf16[32,96], index: 4, kind: input, shape index: {}]
  %s5 = inlined_call_operand.vmem [shape: f32[1,96], index: 5, kind: input, shape index: {}]
  %s6 = inlined_call_operand.vmem [shape: bf16[32,32], index: 6, kind: input, shape index: {}]
  %s7 = inlined_call_operand.vmem [shape: f32[1,32], index: 7, kind: input, shape index: {}]
  %s8 = inlined_call_operand.vmem [shape: f32[2,64,32], index: 8, kind: output, shape index: {}]
  %s9 = sld [smem:[#allocation0]]
  $region65: #{midblock_forward.4} parent=0
    _
  %s11 = ssub.s32 1, %s9
  %s12 = scalar_select 0, %s11, %s9
  loop: start=0, step=1, limit=4
  $region2: #{midblock_forward.4} parent=0 // loop_pre_header
    _
  $region3: #{midblock_forward.4} parent=0 // loop_header
    %s14 = sphi 0, %s18
    %p15 = scmp.ge.s32.totalorder %s14, 4
    %s24 = sphi 0, %s26
    %s27 = sphi 0, %s24
    %s28 = sphi 0, %s27
    %s44 = sphi 0, %s28
    %s48 = sphi 0, %s48
    %s50 = sphi 0, %s48
    %s51 = sphi 0, %s50
    %s65 = sphi 0, %s51
    %s69 = sphi 0, %s69
    %s71 = sphi 0, %s69
    %s72 = sphi 0, %s71
    %s86 = sphi 0, %s72
    %s90 = sphi 0, %s90
    %s92 = sphi 0, %s90
    %s93 = sphi 0, %s92
    %s107 = sphi 0, %s93
    %s111 = sphi 0, %s111
    %s113 = sphi 0, %s111
    %s114 = sphi 0, %s113
    %s128 = sphi 0, %s114
    %s132 = sphi 0, %s132
    %s134 = sphi 0, %s132
    %s135 = sphi 0, %s134
    %s149 = sphi 0, %s135
    %s153 = sphi 0, %s153
    %s155 = sphi 0, %s153
    %s156 = sphi 0, %s155
    %s170 = sphi 0, %s156
    %s174 = sphi 0, %s174
    %s176 = sphi 0, %s174
    %s177 = sphi 0, %s176
    %s191 = sphi 0, %s177
    %s197 = sphi 0, %s199
    %s200 = sphi 0, %s197
    %s201 = sphi 0, %s200
    %s217 = sphi 0, %s201
  $region4: #{midblock_forward.4} parent=0 // loop_header_branch
    %17 = sbr.rel (%p15) target = $region8
  $region5: #{midblock_forward.4} parent=0 // loop_body
    %s19 = ssub.s32 %s14, 1
    %s20 = ssub.s32 %s14, 2
    %s21 = sadd.s32 %s14, 1
    %s22 = ssub.s32 %s14, %s21
    %p23 = scmp.eq.s32.totalorder %s22, 0
    %s25 = sadd.s32 %s24, 1
    %s26 = scalar_select %p23, %s24, %s25
    %p29 = pneg %p23
    %p30 = scmp.eq.s32.totalorder %s14, 1
    %p31 = por %p29, %p30
    %p32 = scmp.ne.s32.totalorder %s24, %s27
    %p33 = scmp.eq.s32.totalorder %s14, 0
    %p34 = por %p32, %p33
    %p35 = scmp.ne.s32.totalorder %s24, %s27
    %p36 = scmp.eq.s32.totalorder %s19, 1
    %p37 = por %p35, %p36
    %p38 = scmp.ne.s32.totalorder %s27, %s28
    %p39 = scmp.eq.s32.totalorder %s19, 0
    %p40 = por %p38, %p39
    %p41 = scmp.ne.s32.totalorder %s27, %s28
    %p42 = scmp.eq.s32.totalorder %s20, 1
    %p43 = por %p41, %p42
    %p45 = scmp.ne.s32.totalorder %s28, %s44
    %p46 = scmp.eq.s32.totalorder %s20, 0
    %p47 = por %p45, %p46
    %s49 = sadd.s32 %s48, 1
    %p52 = scmp.eq.s32.totalorder %s14, 1
    %p53 = scmp.ne.s32.totalorder %s48, %s50
    %p54 = scmp.eq.s32.totalorder %s14, 0
    %p55 = por %p53, %p54
    %p56 = scmp.ne.s32.totalorder %s48, %s50
    %p57 = scmp.eq.s32.totalorder %s19, 1
    %p58 = por %p56, %p57
    %p59 = scmp.ne.s32.totalorder %s50, %s51
    %p60 = scmp.eq.s32.totalorder %s19, 0
    %p61 = por %p59, %p60
    %p62 = scmp.ne.s32.totalorder %s50, %s51
    %p63 = scmp.eq.s32.totalorder %s20, 1
    %p64 = por %p62, %p63
    %p66 = scmp.ne.s32.totalorder %s51, %s65
    %p67 = scmp.eq.s32.totalorder %s20, 0
    %p68 = por %p66, %p67
    %s70 = sadd.s32 %s69, 1
    %p73 = scmp.eq.s32.totalorder %s14, 1
    %p74 = scmp.ne.s32.totalorder %s69, %s71
    %p75 = scmp.eq.s32.totalorder %s14, 0
    %p76 = por %p74, %p75
    %p77 = scmp.ne.s32.totalorder %s69, %s71
    %p78 = scmp.eq.s32.totalorder %s19, 1
    %p79 = por %p77, %p78
    %p80 = scmp.ne.s32.totalorder %s71, %s72
    %p81 = scmp.eq.s32.totalorder %s19, 0
    %p82 = por %p80, %p81
    %p83 = scmp.ne.s32.totalorder %s71, %s72
    %p84 = scmp.eq.s32.totalorder %s20, 1
    %p85 = por %p83, %p84
    %p87 = scmp.ne.s32.totalorder %s72, %s86
    %p88 = scmp.eq.s32.totalorder %s20, 0
    %p89 = por %p87, %p88
    %s91 = sadd.s32 %s90, 1
    %p94 = scmp.eq.s32.totalorder %s14, 1
    %p95 = scmp.ne.s32.totalorder %s90, %s92
    %p96 = scmp.eq.s32.totalorder %s14, 0
    %p97 = por %p95, %p96
    %p98 = scmp.ne.s32.totalorder %s90, %s92
    %p99 = scmp.eq.s32.totalorder %s19, 1
    %p100 = por %p98, %p99
    %p101 = scmp.ne.s32.totalorder %s92, %s93
    %p102 = scmp.eq.s32.totalorder %s19, 0
    %p103 = por %p101, %p102
    %p104 = scmp.ne.s32.totalorder %s92, %s93
    %p105 = scmp.eq.s32.totalorder %s20, 1
    %p106 = por %p104, %p105
    %p108 = scmp.ne.s32.totalorder %s93, %s107
    %p109 = scmp.eq.s32.totalorder %s20, 0
    %p110 = por %p108, %p109
    %s112 = sadd.s32 %s111, 1
    %p115 = scmp.eq.s32.totalorder %s14, 1
    %p116 = scmp.ne.s32.totalorder %s111, %s113
    %p117 = scmp.eq.s32.totalorder %s14, 0
    %p118 = por %p116, %p117
    %p119 = scmp.ne.s32.totalorder %s111, %s113
    %p120 = scmp.eq.s32.totalorder %s19, 1
    %p121 = por %p119, %p120
    %p122 = scmp.ne.s32.totalorder %s113, %s114
    %p123 = scmp.eq.s32.totalorder %s19, 0
    %p124 = por %p122, %p123
    %p125 = scmp.ne.s32.totalorder %s113, %s114
    %p126 = scmp.eq.s32.totalorder %s20, 1
    %p127 = por %p125, %p126
    %p129 = scmp.ne.s32.totalorder %s114, %s128
    %p130 = scmp.eq.s32.totalorder %s20, 0
    %p131 = por %p129, %p130
    %s133 = sadd.s32 %s132, 1
    %p136 = scmp.eq.s32.totalorder %s14, 1
    %p137 = scmp.ne.s32.totalorder %s132, %s134
    %p138 = scmp.eq.s32.totalorder %s14, 0
    %p139 = por %p137, %p138
    %p140 = scmp.ne.s32.totalorder %s132, %s134
    %p141 = scmp.eq.s32.totalorder %s19, 1
    %p142 = por %p140, %p141
    %p143 = scmp.ne.s32.totalorder %s134, %s135
    %p144 = scmp.eq.s32.totalorder %s19, 0
    %p145 = por %p143, %p144
    %p146 = scmp.ne.s32.totalorder %s134, %s135
    %p147 = scmp.eq.s32.totalorder %s20, 1
    %p148 = por %p146, %p147
    %p150 = scmp.ne.s32.totalorder %s135, %s149
    %p151 = scmp.eq.s32.totalorder %s20, 0
    %p152 = por %p150, %p151
    %s154 = sadd.s32 %s153, 1
    %p157 = scmp.eq.s32.totalorder %s14, 1
    %p158 = scmp.ne.s32.totalorder %s153, %s155
    %p159 = scmp.eq.s32.totalorder %s14, 0
    %p160 = por %p158, %p159
    %p161 = scmp.ne.s32.totalorder %s153, %s155
    %p162 = scmp.eq.s32.totalorder %s19, 1
    %p163 = por %p161, %p162
    %p164 = scmp.ne.s32.totalorder %s155, %s156
    %p165 = scmp.eq.s32.totalorder %s19, 0
    %p166 = por %p164, %p165
    %p167 = scmp.ne.s32.totalorder %s155, %s156
    %p168 = scmp.eq.s32.totalorder %s20, 1
    %p169 = por %p167, %p168
    %p171 = scmp.ne.s32.totalorder %s156, %s170
    %p172 = scmp.eq.s32.totalorder %s20, 0
    %p173 = por %p171, %p172
    %s175 = sadd.s32 %s174, 1
    %p178 = scmp.eq.s32.totalorder %s14, 1
    %p179 = scmp.ne.s32.totalorder %s174, %s176
    %p180 = scmp.eq.s32.totalorder %s14, 0
    %p181 = por %p179, %p180
    %p182 = scmp.ne.s32.totalorder %s174, %s176
    %p183 = scmp.eq.s32.totalorder %s19, 1
    %p184 = por %p182, %p183
    %p185 = scmp.ne.s32.totalorder %s176, %s177
    %p186 = scmp.eq.s32.totalorder %s19, 0
    %p187 = por %p185, %p186
    %p188 = scmp.ne.s32.totalorder %s176, %s177
    %p189 = scmp.eq.s32.totalorder %s20, 1
    %p190 = por %p188, %p189
    %p192 = scmp.ne.s32.totalorder %s177, %s191
    %p193 = scmp.eq.s32.totalorder %s20, 0
    %p194 = por %p192, %p193
    %s195 = ssub.s32 %s14, %s21
    %p196 = scmp.eq.s32.totalorder %s195, 0
    %s198 = sadd.s32 %s197, 1
    %s199 = scalar_select %p196, %s197, %s198
    %p202 = pneg %p196
    %p203 = scmp.eq.s32.totalorder %s14, 1
    %p204 = por %p202, %p203
    %p205 = scmp.ne.s32.totalorder %s197, %s200
    %p206 = scmp.eq.s32.totalorder %s14, 0
    %p207 = por %p205, %p206
    %p208 = scmp.ne.s32.totalorder %s197, %s200
    %p209 = scmp.eq.s32.totalorder %s19, 1
    %p210 = por %p208, %p209
    %p211 = scmp.ne.s32.totalorder %s200, %s201
    %p212 = scmp.eq.s32.totalorder %s19, 0
    %p213 = por %p211, %p212
    %p214 = scmp.ne.s32.totalorder %s200, %s201
    %p215 = scmp.eq.s32.totalorder %s20, 1
    %p216 = por %p214, %p215
    %p218 = scmp.ne.s32.totalorder %s201, %s217
    %p219 = scmp.eq.s32.totalorder %s20, 0
    %p220 = por %p218, %p219
    %p221 = scmp.le.s32.totalorder 1, %s14
    %p222 = scmp.lt.s32.totalorder %s14, 3
    %p223 = pnand %p221, %p222
    %p224 = pneg %p223
    // Predicated region
    $region9: #{midblock_forward.4} parent=5 // pred_check
      _
    $region10: #{midblock_forward.4} parent=5 // pred_check_branch
      %226 = sbr.rel (%p223) target = $region12
    $region11: #{midblock_forward.4} parent=5 // pred_region
      %s227 = ssub.s32 %s14, 1
      // Predicated region
      $region13: #{midblock_forward.4} parent=11 // pred_check
        %p228 = pneg %p61
      $region14: #{midblock_forward.4} parent=11 // pred_check_branch
        %230 = sbr.rel (%p228) target = $region16
      $region15: #{midblock_forward.4} parent=11 // pred_region
        _
      $region16: #{midblock_forward.4} parent=11 // pred_fallthru
        _
      // Predicated region
      $region17: #{midblock_forward.4} parent=11 // pred_check
        %p231 = pneg %p82
      $region18: #{midblock_forward.4} parent=11 // pred_check_branch
        %233 = sbr.rel (%p231) target = $region20
      $region19: #{midblock_forward.4} parent=11 // pred_region
        _
      $region20: #{midblock_forward.4} parent=11 // pred_fallthru
        _
      // Predicated region
      $region21: #{midblock_forward.4} parent=11 // pred_check
        %p234 = pneg %p103
      $region22: #{midblock_forward.4} parent=11 // pred_check_branch
        %236 = sbr.rel (%p234) target = $region24
      $region23: #{midblock_forward.4} parent=11 // pred_region
        _
      $region24: #{midblock_forward.4} parent=11 // pred_fallthru
        _
      // Predicated region
      $region25: #{midblock_forward.4} parent=11 // pred_check
        %p237 = pneg %p124
      $region26: #{midblock_forward.4} parent=11 // pred_check_branch
        %239 = sbr.rel (%p237) target = $region28
      $region27: #{midblock_forward.4} parent=11 // pred_region
        _
      $region28: #{midblock_forward.4} parent=11 // pred_fallthru
        _
      // Predicated region
      $region29: #{midblock_forward.4} parent=11 // pred_check
        %p240 = pneg %p145
      $region30: #{midblock_forward.4} parent=11 // pred_check_branch
        %242 = sbr.rel (%p240) target = $region32
      $region31: #{midblock_forward.4} parent=11 // pred_region
        _
      $region32: #{midblock_forward.4} parent=11 // pred_fallthru
        _
      // Predicated region
      $region33: #{midblock_forward.4} parent=11 // pred_check
        %p243 = pneg %p166
      $region34: #{midblock_forward.4} parent=11 // pred_check_branch
        %245 = sbr.rel (%p243) target = $region36
      $region35: #{midblock_forward.4} parent=11 // pred_region
        _
      $region36: #{midblock_forward.4} parent=11 // pred_fallthru
        _
      // Predicated region
      $region37: #{midblock_forward.4} parent=11 // pred_check
        %p246 = pneg %p187
      $region38: #{midblock_forward.4} parent=11 // pred_check_branch
        %248 = sbr.rel (%p246) target = $region40
      $region39: #{midblock_forward.4} parent=11 // pred_region
        _
      $region40: #{midblock_forward.4} parent=11 // pred_fallthru
        _
    $region12: #{midblock_forward.4} parent=5 // pred_fallthru
      _
    %p249 = scmp.lt.s32.totalorder %s14, 2
    // Predicated region
    $region41: #{midblock_forward.4} parent=5 // pred_check
      %p250 = pneg %p249
    $region42: #{midblock_forward.4} parent=5 // pred_check_branch
      %252 = sbr.rel (%p250) target = $region44
    $region43: #{midblock_forward.4} parent=5 // pred_region
      // Predicated region
      $region45: #{midblock_forward.4} parent=43 // pred_check
        %p253 = pneg %p34
      $region46: #{midblock_forward.4} parent=43 // pred_check_branch
        %255 = sbr.rel (%p253) target = $region48
      $region47: #{midblock_forward.4} parent=43 // pred_region
        %p256 = scmp.lt.s32.totalorder %s14, 1
        %s257 = scalar_select %p256, %s14, 1
        %s258 = smul.addr %s257, 8
        %s259 = smul.addr %s258, 8
        %s260 = scalar_lea.vmem %s0, %s259
      $region48: #{midblock_forward.4} parent=43 // pred_fallthru
        _
    $region44: #{midblock_forward.4} parent=5 // pred_fallthru
      _
    %p261 = scmp.le.s32.totalorder 1, %s14
    %p262 = scmp.lt.s32.totalorder %s14, 3
    %p263 = pnand %p261, %p262
    %p264 = pneg %p263
    // Predicated region
    $region49: #{midblock_forward.4} parent=5 // pred_check
      _
    $region50: #{midblock_forward.4} parent=5 // pred_check_branch
      %266 = sbr.rel (%p263) target = $region52
    $region51: #{midblock_forward.4} parent=5 // pred_region
      %s267 = ssub.s32 %s14, 1
      %p268 = scmp.lt.s32.totalorder %s19, 1
      %s269 = scalar_select %p268, %s19, 1
      %s270 = smul.addr %s269, 8
      %s271 = smul.addr %s270, 8
      %s272 = scalar_lea.vmem %s0, %s271
      %p273 = pneg %p40
      %p274 = pneg %p37
      %p275 = pneg %p61
      %p276 = pneg %p58
      %p277 = pneg %p82
      %p278 = pneg %p79
      %p279 = pneg %p103
      %p280 = pneg %p100
      %p281 = pneg %p124
      %p282 = pneg %p121
      %p283 = pneg %p145
      %p284 = pneg %p142
      %p285 = pneg %p166
      %p286 = pneg %p163
      %p287 = pneg %p187
      %p288 = pneg %p184
      %p289 = pneg %p213
      %p290 = pneg %p210
      %p291 = scmp.lt.s32.totalorder %s19, 1
      %s292 = scalar_select %p291, %s19, 1
      %s293 = smul.addr %s292, 8
      %s294 = smul.addr %s293, 8
      %s295 = scalar_lea.vmem %s8, %s294
      %p296 = scmp.lt.s32.totalorder %s19, 1
      %s297 = scalar_select %p296, %s19, 1
      %s298 = smul.addr %s297, 8
      %s299 = smul.addr %s298, 8
      %s300 = scalar_lea.vmem %s0, %s299
      %p301 = scmp.lt.s32.totalorder %s19, 1
      %s302 = scalar_select %p301, %s19, 1
      %s303 = smul.addr %s302, 8
      %s304 = smul.addr %s303, 8
      %s305 = scalar_lea.vmem %s8, %s304
      %v307 = vld [vmem:[%s300] sm:$0xff]
      %v308 = vld [vmem:[%s300 + $0x8] sm:$0xff]
      %v309 = vld [vmem:[%s300 + $0x10] sm:$0xff]
      %v310 = vld [vmem:[%s300 + $0x18] sm:$0xff]
      %v311 = vld [vmem:[%s300 + $0x20] sm:$0xff]
      %v312 = vld [vmem:[%s300 + $0x28] sm:$0xff]
      %v313 = vld [vmem:[%s300 + $0x30] sm:$0xff]
      %v314 = vld [vmem:[%s300 + $0x38] sm:$0xff]
      %v315 = vld [vmem:[%s1] sm:$0x1]
      %v316 = vld [vmem:[%s2] sm:$0x1]
      %v317 = vld [vmem:[%s3] sm:$0xff]
      %v318 = vld [vmem:[%s3 + $0x8] sm:$0xff]
      %v319 = vld [vmem:[%s3 + $0x10] sm:$0xff]
      %v320 = vld [vmem:[%s3 + $0x18] sm:$0xff]
      %vm321 = vcmask 261120
      %v322 = vsel %vm321, %v307, 0.0
      %v323 = vsel %vm321, %v308, 0.0
      %v324 = vadd.f32 %v322, %v323
      %v325 = vsel %vm321, %v309, 0.0
      %v326 = vadd.f32 %v324, %v325
      %v327 = vsel %vm321, %v310, 0.0
      %v328 = vadd.f32 %v326, %v327
      %v329 = vsel %vm321, %v311, 0.0
      %v330 = vadd.f32 %v328, %v329
      %v331 = vsel %vm321, %v312, 0.0
      %v332 = vadd.f32 %v330, %v331
      %v333 = vsel %vm321, %v313, 0.0
      %v334 = vadd.f32 %v332, %v333
      %v335 = vsel %vm321, %v314, 0.0
      %v336 = vadd.f32 %v334, %v335
      %v337 = vrot.slane %v336, 4
      %v338 = vadd.f32 %v336, %v337
      %v339 = vrot.slane %v338, 2
      %v340 = vadd.f32 %v338, %v339
      %v341 = vrot.slane %v340, 1
      %v342 = vadd.f32 %v340, %v341
      %v344 = vsel %vm321, %v342, 0
      %346 = vmatpush.msra.mxu0 0.0
      %347 = vmatpush.msra.mxu0 0.0
      %348 = vmatpush.msra.mxu0 0.0
      %349 = vmatpush.msra.mxu0 0.0
      %350 = vmatpush.msra.mxu0 0.0
      %351 = vmatpush.msra.mxu0 0.0
      %352 = vmatpush.msra.mxu0 0.0
      %353 = vmatpush.msra.mxu0 0.0
      %354 = vmatpush.msra.mxu0 0.0
      %355 = vmatpush.msra.mxu0 0.0
      %356 = vmatpush.msra.mxu0 0.0
      %357 = vmatpush.msra.mxu0 0.0
      %358 = vmatpush.msra.mxu0 %v320
      %359 = vmatpush.msra.mxu0 %v319
      %360 = vmatpush.msra.mxu0 %v318
      %361 = vmatpush.msra.mxu0 %v317
      %362 = vmatmul.f32.gmra.mxu0 %v344
      %v363 = vpop.f32.mrf.mxu0
      %v364 = vadd.f32 0.0, %v363
      %365 = vdwg.mxu0
      %v366 = vrcp.pop 256.0
      %v367 = vmul.f32 256.0, %v366
      %v368 = vsub.f32 1.0, %v367
      %v369 = vmul.f32 %v366, %v368
      %v370 = vadd.f32 %v366, %v369
      %vm371 = vweird.f32 %v366
      %v372 = vsel %vm371, %v366, %v370
      %v373 = vmul.f32 %v364, %v372
      %vm374 = vcmask 64512
      %v376 = vsel %vm374, %v373, 0
      %v379 = vsel %vm374, %v317, 0
      %v382 = vsel %vm374, %v318, 0
      %v385 = vsel %vm374, %v319, 0
      %v388 = vsel %vm374, %v320, 0
      %390 = vmatpush.xpose.msra.mxu0 0.0
      %391 = vmatpush.xpose.msra.mxu0 0.0
      %392 = vmatpush.xpose.msra.mxu0 0.0
      %393 = vmatpush.xpose.msra.mxu0 0.0
      %394 = vmatpush.xpose.msra.mxu0 0.0
      %395 = vmatpush.xpose.msra.mxu0 0.0
      %396 = vmatpush.xpose.msra.mxu0 0.0
      %397 = vmatpush.xpose.msra.mxu0 0.0
      %398 = vmatpush.xpose.msra.mxu0 0.0
      %399 = vmatpush.xpose.msra.mxu0 0.0
      %400 = vmatpush.xpose.msra.mxu0 0.0
      %401 = vmatpush.xpose.msra.mxu0 0.0
      %402 = vmatpush.xpose.msra.mxu0 %v388
      %403 = vmatpush.xpose.msra.mxu0 %v385
      %404 = vmatpush.xpose.msra.mxu0 %v382
      %405 = vmatpush.xpose.msra.mxu0 %v379
      %406 = vmatmul.f32.gmra.mxu0 %v376
      %v407 = vpop.f32.mrf.mxu0
      %v408 = vadd.f32 0.0, %v407
      %409 = vdwg.mxu0
      %v410 = vperm.slane %v408, 0
      %v411 = vsub.f32 %v307, %v410
      %v412 = vsub.f32 %v308, %v410
      %v413 = vsub.f32 %v309, %v410
      %v414 = vsub.f32 %v310, %v410
      %v415 = vsub.f32 %v311, %v410
      %v416 = vsub.f32 %v312, %v410
      %v417 = vsub.f32 %v313, %v410
      %v418 = vsub.f32 %v314, %v410
      %v419 = vmul.f32 %v411, %v411
      %v420 = vmul.f32 %v412, %v412
      %v421 = vmul.f32 %v413, %v413
      %v422 = vmul.f32 %v414, %v414
      %v423 = vmul.f32 %v415, %v415
      %v424 = vmul.f32 %v416, %v416
      %v425 = vmul.f32 %v417, %v417
      %v426 = vmul.f32 %v418, %v418
      %v427 = vsel %vm321, %v419, 0.0
      %v428 = vsel %vm321, %v420, 0.0
      %v429 = vadd.f32 %v427, %v428
      %v430 = vsel %vm321, %v421, 0.0
      %v431 = vadd.f32 %v429, %v430
      %v432 = vsel %vm321, %v422, 0.0
      %v433 = vadd.f32 %v431, %v432
      %v434 = vsel %vm321, %v423, 0.0
      %v435 = vadd.f32 %v433, %v434
      %v436 = vsel %vm321, %v424, 0.0
      %v437 = vadd.f32 %v435, %v436
      %v438 = vsel %vm321, %v425, 0.0
      %v439 = vadd.f32 %v437, %v438
      %v440 = vsel %vm321, %v426, 0.0
      %v441 = vadd.f32 %v439, %v440
      %v442 = vrot.slane %v441, 4
      %v443 = vadd.f32 %v441, %v442
      %v444 = vrot.slane %v443, 2
      %v445 = vadd.f32 %v443, %v444
      %v446 = vrot.slane %v445, 1
      %v447 = vadd.f32 %v445, %v446
      %v449 = vsel %vm321, %v447, 0
      %451 = vmatpush.msra.mxu0 0.0
      %452 = vmatpush.msra.mxu0 0.0
      %453 = vmatpush.msra.mxu0 0.0
      %454 = vmatpush.msra.mxu0 0.0
      %455 = vmatpush.msra.mxu0 0.0
      %456 = vmatpush.msra.mxu0 0.0
      %457 = vmatpush.msra.mxu0 0.0
      %458 = vmatpush.msra.mxu0 0.0
      %459 = vmatpush.msra.mxu0 0.0
      %460 = vmatpush.msra.mxu0 0.0
      %461 = vmatpush.msra.mxu0 0.0
      %462 = vmatpush.msra.mxu0 0.0
      %463 = vmatpush.msra.mxu0 %v320
      %464 = vmatpush.msra.mxu0 %v319
      %465 = vmatpush.msra.mxu0 %v318
      %466 = vmatpush.msra.mxu0 %v317
      %467 = vmatmul.f32.gmra.mxu0 %v449
      %v468 = vpop.f32.mrf.mxu0
      %v469 = vadd.f32 0.0, %v468
      %470 = vdwg.mxu0
      %v471 = vmul.f32 %v469, %v372
      %v473 = vsel %vm374, %v471, 0
      %475 = vmatpush.xpose.msra.mxu0 0.0
      %476 = vmatpush.xpose.msra.mxu0 0.0
      %477 = vmatpush.xpose.msra.mxu0 0.0
      %478 = vmatpush.xpose.msra.mxu0 0.0
      %479 = vmatpush.xpose.msra.mxu0 0.0
      %480 = vmatpush.xpose.msra.mxu0 0.0
      %481 = vmatpush.xpose.msra.mxu0 0.0
      %482 = vmatpush.xpose.msra.mxu0 0.0
      %483 = vmatpush.xpose.msra.mxu0 0.0
      %484 = vmatpush.xpose.msra.mxu0 0.0
      %485 = vmatpush.xpose.msra.mxu0 0.0
      %486 = vmatpush.xpose.msra.mxu0 0.0
      %487 = vmatpush.xpose.msra.mxu0 %v388
      %488 = vmatpush.xpose.msra.mxu0 %v385
      %489 = vmatpush.xpose.msra.mxu0 %v382
      %490 = vmatpush.xpose.msra.mxu0 %v379
      %491 = vmatmul.f32.gmra.mxu0 %v473
      %v492 = vpop.f32.mrf.mxu0
      %v493 = vadd.f32 1e-05, %v492
      %494 = vdwg.mxu0
      %v495 = vrsqrt.pop %v493
      %v496 = vmul.f32 %v495, %v493
      %v497 = vmul.f32 %v496, %v495
      %v498 = vmul.f32 0.5, %v497
      %v499 = vsub.f32 1.5, %v498
      %v500 = vmul.f32 %v495, %v499
      %vm501 = vweird.f32 %v493
      %vm502 = vweird.f32 %v495
      %vm503 = vmor %vm501, %vm502
      %v504 = vsel %vm503, %v495, %v500
      %v505 = vperm.slane %v504, 0
      %v506 = vmul.f32 %v411, %v505
      %v507 = vmul.f32 %v412, %v505
      %v508 = vmul.f32 %v413, %v505
      %v509 = vmul.f32 %v414, %v505
      %v510 = vmul.f32 %v415, %v505
      %v511 = vmul.f32 %v416, %v505
      %v512 = vmul.f32 %v417, %v505
      %v513 = vmul.f32 %v418, %v505
      %v515 = vperm.slane %v315, 0
      %v517 = vmul.f32 %v506, %v515
      %v518 = vmul.f32 %v507, %v515
      %v519 = vmul.f32 %v508, %v515
      %v520 = vmul.f32 %v509, %v515
      %v521 = vmul.f32 %v510, %v515
      %v522 = vmul.f32 %v511, %v515
      %v523 = vmul.f32 %v512, %v515
      %v524 = vmul.f32 %v513, %v515
      %v526 = vperm.slane %v316, 0
      %v528 = vadd.f32 %v517, %v526
      %v529 = vadd.f32 %v518, %v526
      %v530 = vadd.f32 %v519, %v526
      %v531 = vadd.f32 %v520, %v526
      %v532 = vadd.f32 %v521, %v526
      %v533 = vadd.f32 %v522, %v526
      %v534 = vadd.f32 %v523, %v526
      %v535 = vadd.f32 %v524, %v526
      %v536 = vpack.c.bf16 %v529, %v528
      %v537 = vpack.c.bf16 %v531, %v530
      %v538 = vpack.c.bf16 %v533, %v532
      %v539 = vpack.c.bf16 %v535, %v534
      %v540 = vld [vmem:[%s4] sm:$0xf]
      %v541 = vld [vmem:[%s4 + $0x4] sm:$0xf]
      %v542 = vld [vmem:[%s4 + $0x8] sm:$0xf]
      %v543 = vld [vmem:[%s4 + $0xc] sm:$0xf]
      %v544 = vld [vmem:[%s5] sm:$0x1]
      %v546 = vperm.slane %v544, 0
      %v552 = vunpack.c.l.b16 %v540
      %v553 = vunpack.c.l.b16 %v541
      %v554 = vunpack.c.l.b16 %v542
      %v555 = vunpack.c.l.b16 %v543
      %v556 = vpack.c.b16 %v553, %v552
      %v557 = vpack.c.b16 %v555, %v554
      %v561 = vsel %vm321, %v536, 0
      %v564 = vsel %vm321, %v537, 0
      %v567 = vsel %vm321, %v538, 0
      %v570 = vsel %vm321, %v539, 0
      %572 = vmatpush.bf16.msra.mxu0 0
      %573 = vmatpush.bf16.msra.mxu0 0
      %574 = vmatpush.bf16.msra.mxu0 0
      %575 = vmatpush.bf16.msra.mxu0 0
      %576 = vmatpush.bf16.msra.mxu0 0
      %577 = vmatpush.bf16.msra.mxu0 0
      %578 = vmatpush.bf16.msra.mxu0 %v557
      %579 = vmatpush.bf16.msra.mxu0 %v556
      %580 = vmatmul.bf16.gmra.mxu0 %v561
      %v581 = vpop.f32.mrf.mxu0
      %v582 = vadd.f32 %v546, %v581
      %v583 = vpop.f32.mrf.mxu0
      %v584 = vadd.f32 %v546, %v583
      %585 = vmatmul.bf16.gmra.mxu0 %v564
      %v586 = vpop.f32.mrf.mxu0
      %v587 = vadd.f32 %v546, %v586
      %v588 = vpop.f32.mrf.mxu0
      %v589 = vadd.f32 %v546, %v588
      %590 = vmatmul.bf16.gmra.mxu0 %v567
      %v591 = vpop.f32.mrf.mxu0
      %v592 = vadd.f32 %v546, %v591
      %v593 = vpop.f32.mrf.mxu0
      %v594 = vadd.f32 %v546, %v593
      %595 = vmatmul.bf16.gmra.mxu0 %v570
      %v596 = vpop.f32.mrf.mxu0
      %v597 = vadd.f32 %v546, %v596
      %v598 = vpop.f32.mrf.mxu0
      %v599 = vadd.f32 %v546, %v598
      %600 = vdwg.mxu0
      %v601 = vmul.f32 %v582, 0.35355338
      %v602 = vmul.f32 %v584, 0.35355338
      %v603 = vmul.f32 %v587, 0.35355338
      %v604 = vmul.f32 %v589, 0.35355338
      %v605 = vmul.f32 %v592, 0.35355338
      %v606 = vmul.f32 %v594, 0.35355338
      %v607 = vmul.f32 %v597, 0.35355338
      %v608 = vmul.f32 %v599, 0.35355338
      %v609 = vpack.c.bf16 %v601, %v601
      %v610 = vpack.c.bf16 %v602, %v602
      %v611 = vpack.c.bf16 %v603, %v603
      %v612 = vpack.c.bf16 %v604, %v604
      %v613 = vpack.c.bf16 %v605, %v605
      %v614 = vpack.c.bf16 %v606, %v606
      %v615 = vpack.c.bf16 %v607, %v607
      %v616 = vpack.c.bf16 %v608, %v608
      %v617 = vpack.c.bf16 %v582, %v582
      %v618 = vpack.c.bf16 %v584, %v584
      %v619 = vpack.c.bf16 %v587, %v587
      %v620 = vpack.c.bf16 %v589, %v589
      %v621 = vpack.c.bf16 %v592, %v592
      %v622 = vpack.c.bf16 %v594, %v594
      %v623 = vpack.c.bf16 %v597, %v597
      %v624 = vpack.c.bf16 %v599, %v599
      %v633 = vunpack.c.l.b16 %v609
      %v634 = vunpack.c.l.b16 %v610
      %v635 = vunpack.c.l.b16 %v611
      %v636 = vunpack.c.l.b16 %v612
      %v637 = vunpack.c.l.b16 %v613
      %v638 = vunpack.c.l.b16 %v614
      %v639 = vunpack.c.l.b16 %v615
      %v640 = vunpack.c.l.b16 %v616
      %v641 = vpack.c.b16 %v634, %v633
      %v642 = vpack.c.b16 %v636, %v635
      %v643 = vpack.c.b16 %v638, %v637
      %v644 = vpack.c.b16 %v640, %v639
      %v653 = vunpack.c.l.b16 %v617
      %v654 = vunpack.c.l.b16 %v618
      %v655 = vunpack.c.l.b16 %v619
      %v656 = vunpack.c.l.b16 %v620
      %v657 = vunpack.c.l.b16 %v621
      %v658 = vunpack.c.l.b16 %v622
      %v659 = vunpack.c.l.b16 %v623
      %v660 = vunpack.c.l.b16 %v624
      %v661 = vpack.c.b16 %v654, %v653
      %v662 = vpack.c.b16 %v656, %v655
      %v663 = vpack.c.b16 %v658, %v657
      %v664 = vpack.c.b16 %v660, %v659
      %665 = vrot.lane.b32.xlu0 %v661, 96
      %v666 = vpop.permute.xlu0 %665
      %667 = vrot.lane.b32.xlu0 %v662, 96
      %v668 = vpop.permute.xlu0 %667
      %669 = vrot.lane.b32.xlu0 %v663, 96
      %v670 = vpop.permute.xlu0 %669
      %671 = vrot.lane.b32.xlu0 %v664, 96
      %v672 = vpop.permute.xlu0 %671
      %v674 = vsel %vm374, %v641, 0
      %v677 = vsel %vm374, %v642, 0
      %v680 = vsel %vm374, %v643, 0
      %v683 = vsel %vm374, %v644, 0
      %v686 = vsel %vm374, %v666, 0
      %v689 = vsel %vm374, %v668, 0
      %v692 = vsel %vm374, %v670, 0
      %v695 = vsel %vm374, %v672, 0
      %697 = vmatpush.bf16.xpose.msra.mxu0 0
      %698 = vmatpush.bf16.xpose.msra.mxu0 0
      %699 = vmatpush.bf16.xpose.msra.mxu0 0
      %700 = vmatpush.bf16.xpose.msra.mxu0 0
      %701 = vmatpush.bf16.xpose.msra.mxu0 %v695
      %702 = vmatpush.bf16.xpose.msra.mxu0 %v692
      %703 = vmatpush.bf16.xpose.msra.mxu0 %v689
      %704 = vmatpush.bf16.xpose.msra.mxu0 %v686
      %705 = vmatmul.bf16.gmra.mxu0 %v674
      %v706 = vpop.f32.mrf.mxu0
      %v707 = vadd.f32 0.0, %v706
      %v708 = vpop.f32.mrf.mxu0
      %v709 = vadd.f32 0.0, %v708
      %710 = vmatmul.bf16.gmra.mxu0 %v677
      %v711 = vpop.f32.mrf.mxu0
      %v712 = vadd.f32 0.0, %v711
      %v713 = vpop.f32.mrf.mxu0
      %v714 = vadd.f32 0.0, %v713
      %715 = vmatmul.bf16.gmra.mxu0 %v680
      %v716 = vpop.f32.mrf.mxu0
      %v717 = vadd.f32 0.0, %v716
      %v718 = vpop.f32.mrf.mxu0
      %v719 = vadd.f32 0.0, %v718
      %720 = vmatmul.bf16.gmra.mxu0 %v683
      %v721 = vpop.f32.mrf.mxu0
      %v722 = vadd.f32 0.0, %v721
      %v723 = vpop.f32.mrf.mxu0
      %v724 = vadd.f32 0.0, %v723
      %725 = vdwg.mxu0
      %vm726 = vcmask 523264
      %v727 = vsel %vm726, %v707, -inf
      %728 = vmax.xlane.f32.xlu0 %v727
      %v729 = vpop.xlane.xlu0 %728
      %v730 = vsel %vm726, %v709, -inf
      %731 = vmax.xlane.f32.xlu0 %v730
      %v732 = vpop.xlane.xlu0 %731
      %v733 = vsel %vm726, %v712, -inf
      %734 = vmax.xlane.f32.xlu0 %v733
      %v735 = vpop.xlane.xlu0 %734
      %v736 = vsel %vm726, %v714, -inf
      %737 = vmax.xlane.f32.xlu0 %v736
      %v738 = vpop.xlane.xlu0 %737
      %v739 = vsel %vm726, %v717, -inf
      %740 = vmax.xlane.f32.xlu0 %v739
      %v741 = vpop.xlane.xlu0 %740
      %v742 = vsel %vm726, %v719, -inf
      %743 = vmax.xlane.f32.xlu0 %v742
      %v744 = vpop.xlane.xlu0 %743
      %v745 = vsel %vm726, %v722, -inf
      %746 = vmax.xlane.f32.xlu0 %v745
      %v747 = vpop.xlane.xlu0 %746
      %v748 = vsel %vm726, %v724, -inf
      %749 = vmax.xlane.f32.xlu0 %v748
      %v750 = vpop.xlane.xlu0 %749
      %v751 = vsub.f32 %v707, %v729
      %v752 = vsub.f32 %v709, %v732
      %v753 = vsub.f32 %v712, %v735
      %v754 = vsub.f32 %v714, %v738
      %v755 = vsub.f32 %v717, %v741
      %v756 = vsub.f32 %v719, %v744
      %v757 = vsub.f32 %v722, %v747
      %v758 = vsub.f32 %v724, %v750
      %v759 = vmul.f32 %v751, 1.442695
      %v760 = vpow.pop %v759
      %v761 = vmul.f32 %v752, 1.442695
      %v762 = vpow.pop %v761
      %v763 = vmul.f32 %v753, 1.442695
      %v764 = vpow.pop %v763
      %v765 = vmul.f32 %v754, 1.442695
      %v766 = vpow.pop %v765
      %v767 = vmul.f32 %v755, 1.442695
      %v768 = vpow.pop %v767
      %v769 = vmul.f32 %v756, 1.442695
      %v770 = vpow.pop %v769
      %v771 = vmul.f32 %v757, 1.442695
      %v772 = vpow.pop %v771
      %v773 = vmul.f32 %v758, 1.442695
      %v774 = vpow.pop %v773
      %v775 = vsel %vm726, %v760, 0.0
      %776 = vadd.xlane.f32.xlu0 %v775
      %v777 = vpop.xlane.xlu0 %776
      %v778 = vsel %vm726, %v762, 0.0
      %779 = vadd.xlane.f32.xlu0 %v778
      %v780 = vpop.xlane.xlu0 %779
      %v781 = vsel %vm726, %v764, 0.0
      %782 = vadd.xlane.f32.xlu0 %v781
      %v783 = vpop.xlane.xlu0 %782
      %v784 = vsel %vm726, %v766, 0.0
      %785 = vadd.xlane.f32.xlu0 %v784
      %v786 = vpop.xlane.xlu0 %785
      %v787 = vsel %vm726, %v768, 0.0
      %788 = vadd.xlane.f32.xlu0 %v787
      %v789 = vpop.xlane.xlu0 %788
      %v790 = vsel %vm726, %v770, 0.0
      %791 = vadd.xlane.f32.xlu0 %v790
      %v792 = vpop.xlane.xlu0 %791
      %v793 = vsel %vm726, %v772, 0.0
      %794 = vadd.xlane.f32.xlu0 %v793
      %v795 = vpop.xlane.xlu0 %794
      %v796 = vsel %vm726, %v774, 0.0
      %797 = vadd.xlane.f32.xlu0 %v796
      %v798 = vpop.xlane.xlu0 %797
      %v799 = vrcp.pop %v777
      %v800 = vrcp.pop %v780
      %v801 = vrcp.pop %v783
      %v802 = vrcp.pop %v786
      %v803 = vrcp.pop %v789
      %v804 = vrcp.pop %v792
      %v805 = vrcp.pop %v795
      %v806 = vrcp.pop %v798
      %v807 = vmul.f32 %v760, %v799
      %v808 = vmul.f32 %v762, %v800
      %v809 = vmul.f32 %v764, %v801
      %v810 = vmul.f32 %v766, %v802
      %v811 = vmul.f32 %v768, %v803
      %v812 = vmul.f32 %v770, %v804
      %v813 = vmul.f32 %v772, %v805
      %v814 = vmul.f32 %v774, %v806
      %v815 = vpack.c.bf16 %v808, %v807
      %v816 = vpack.c.bf16 %v810, %v809
      %v817 = vpack.c.bf16 %v812, %v811
      %v818 = vpack.c.bf16 %v814, %v813
      %819 = vrot.lane.b32.xlu0 %v661, 64
      %v820 = vpop.permute.xlu0 %819
      %821 = vrot.lane.b32.xlu0 %v662, 64
      %v822 = vpop.permute.xlu0 %821
      %823 = vrot.lane.b32.xlu0 %v663, 64
      %v824 = vpop.permute.xlu0 %823
      %825 = vrot.lane.b32.xlu0 %v664, 64
      %v826 = vpop.permute.xlu0 %825
      %v832 = vsel %vm726, %v815, 0
      %v835 = vsel %vm726, %v816, 0
      %v838 = vsel %vm726, %v817, 0
      %v841 = vsel %vm726, %v818, 0
      %843 = vmatpush.bf16.msra.mxu0 0
      %844 = vmatpush.bf16.msra.mxu0 0
      %845 = vmatpush.bf16.msra.mxu0 0
      %846 = vmatpush.bf16.msra.mxu0 0
      %847 = vmatpush.bf16.msra.mxu0 %v826
      %848 = vmatpush.bf16.msra.mxu0 %v824
      %849 = vmatpush.bf16.msra.mxu0 %v822
      %850 = vmatpush.bf16.msra.mxu0 %v820
      %851 = vmatmul.bf16.gmra.mxu0 %v832
      %v852 = vpop.f32.mrf.mxu0
      %v853 = vadd.f32 0.0, %v852
      %v854 = vpop.f32.mrf.mxu0
      %v855 = vadd.f32 0.0, %v854
      %856 = vmatmul.bf16.gmra.mxu0 %v835
      %v857 = vpop.f32.mrf.mxu0
      %v858 = vadd.f32 0.0, %v857
      %v859 = vpop.f32.mrf.mxu0
      %v860 = vadd.f32 0.0, %v859
      %861 = vmatmul.bf16.gmra.mxu0 %v838
      %v862 = vpop.f32.mrf.mxu0
      %v863 = vadd.f32 0.0, %v862
      %v864 = vpop.f32.mrf.mxu0
      %v865 = vadd.f32 0.0, %v864
      %866 = vmatmul.bf16.gmra.mxu0 %v841
      %v867 = vpop.f32.mrf.mxu0
      %v868 = vadd.f32 0.0, %v867
      %v869 = vpop.f32.mrf.mxu0
      %v870 = vadd.f32 0.0, %v869
      %871 = vdwg.mxu0
      %872 = vrot.lane.b32.xlu0 %v641, 120
      %v873 = vpop.permute.xlu0 %872
      %874 = vrot.lane.b32.xlu0 %v642, 120
      %v875 = vpop.permute.xlu0 %874
      %876 = vrot.lane.b32.xlu0 %v643, 120
      %v877 = vpop.permute.xlu0 %876
      %878 = vrot.lane.b32.xlu0 %v644, 120
      %v879 = vpop.permute.xlu0 %878
      %880 = vrot.lane.b32.xlu0 %v661, 88
      %v881 = vpop.permute.xlu0 %880
      %882 = vrot.lane.b32.xlu0 %v662, 88
      %v883 = vpop.permute.xlu0 %882
      %884 = vrot.lane.b32.xlu0 %v663, 88
      %v885 = vpop.permute.xlu0 %884
      %886 = vrot.lane.b32.xlu0 %v664, 88
      %v887 = vpop.permute.xlu0 %886
      %v889 = vsel %vm374, %v873, 0
      %v892 = vsel %vm374, %v875, 0
      %v895 = vsel %vm374, %v877, 0
      %v898 = vsel %vm374, %v879, 0
      %v901 = vsel %vm374, %v881, 0
      %v904 = vsel %vm374, %v883, 0
      %v907 = vsel %vm374, %v885, 0
      %v910 = vsel %vm374, %v887, 0
      %912 = vmatpush.bf16.xpose.msra.mxu0 0
      %913 = vmatpush.bf16.xpose.msra.mxu0 0
      %914 = vmatpush.bf16.xpose.msra.mxu0 0
      %915 = vmatpush.bf16.xpose.msra.mxu0 0
      %916 = vmatpush.bf16.xpose.msra.mxu0 %v910
      %917 = vmatpush.bf16.xpose.msra.mxu0 %v907
      %918 = vmatpush.bf16.xpose.msra.mxu0 %v904
      %919 = vmatpush.bf16.xpose.msra.mxu0 %v901
      %920 = vmatmul.bf16.gmra.mxu0 %v889
      %v921 = vpop.f32.mrf.mxu0
      %v922 = vadd.f32 0.0, %v921
      %v923 = vpop.f32.mrf.mxu0
      %v924 = vadd.f32 0.0, %v923
      %925 = vmatmul.bf16.gmra.mxu0 %v892
      %v926 = vpop.f32.mrf.mxu0
      %v927 = vadd.f32 0.0, %v926
      %v928 = vpop.f32.mrf.mxu0
      %v929 = vadd.f32 0.0, %v928
      %930 = vmatmul.bf16.gmra.mxu0 %v895
      %v931 = vpop.f32.mrf.mxu0
      %v932 = vadd.f32 0.0, %v931
      %v933 = vpop.f32.mrf.mxu0
      %v934 = vadd.f32 0.0, %v933
      %935 = vmatmul.bf16.gmra.mxu0 %v898
      %v936 = vpop.f32.mrf.mxu0
      %v937 = vadd.f32 0.0, %v936
      %v938 = vpop.f32.mrf.mxu0
      %v939 = vadd.f32 0.0, %v938
      %940 = vdwg.mxu0
      %v941 = vsel %vm726, %v922, -inf
      %942 = vmax.xlane.f32.xlu0 %v941
      %v943 = vpop.xlane.xlu0 %942
      %v944 = vsel %vm726, %v924, -inf
      %945 = vmax.xlane.f32.xlu0 %v944
      %v946 = vpop.xlane.xlu0 %945
      %v947 = vsel %vm726, %v927, -inf
      %948 = vmax.xlane.f32.xlu0 %v947
      %v949 = vpop.xlane.xlu0 %948
      %v950 = vsel %vm726, %v929, -inf
      %951 = vmax.xlane.f32.xlu0 %v950
      %v952 = vpop.xlane.xlu0 %951
      %v953 = vsel %vm726, %v932, -inf
      %954 = vmax.xlane.f32.xlu0 %v953
      %v955 = vpop.xlane.xlu0 %954
      %v956 = vsel %vm726, %v934, -inf
      %957 = vmax.xlane.f32.xlu0 %v956
      %v958 = vpop.xlane.xlu0 %957
      %v959 = vsel %vm726, %v937, -inf
      %960 = vmax.xlane.f32.xlu0 %v959
      %v961 = vpop.xlane.xlu0 %960
      %v962 = vsel %vm726, %v939, -inf
      %963 = vmax.xlane.f32.xlu0 %v962
      %v964 = vpop.xlane.xlu0 %963
      %v965 = vsub.f32 %v922, %v943
      %v966 = vsub.f32 %v924, %v946
      %v967 = vsub.f32 %v927, %v949
      %v968 = vsub.f32 %v929, %v952
      %v969 = vsub.f32 %v932, %v955
      %v970 = vsub.f32 %v934, %v958
      %v971 = vsub.f32 %v937, %v961
      %v972 = vsub.f32 %v939, %v964
      %v973 = vmul.f32 %v965, 1.442695
      %v974 = vpow.pop %v973
      %v975 = vmul.f32 %v966, 1.442695
      %v976 = vpow.pop %v975
      %v977 = vmul.f32 %v967, 1.442695
      %v978 = vpow.pop %v977
      %v979 = vmul.f32 %v968, 1.442695
      %v980 = vpow.pop %v979
      %v981 = vmul.f32 %v969, 1.442695
      %v982 = vpow.pop %v981
      %v983 = vmul.f32 %v970, 1.442695
      %v984 = vpow.pop %v983
      %v985 = vmul.f32 %v971, 1.442695
      %v986 = vpow.pop %v985
      %v987 = vmul.f32 %v972, 1.442695
      %v988 = vpow.pop %v987
      %v989 = vsel %vm726, %v974, 0.0
      %990 = vadd.xlane.f32.xlu0 %v989
      %v991 = vpop.xlane.xlu0 %990
      %v992 = vsel %vm726, %v976, 0.0
      %993 = vadd.xlane.f32.xlu0 %v992
      %v994 = vpop.xlane.xlu0 %993
      %v995 = vsel %vm726, %v978, 0.0
      %996 = vadd.xlane.f32.xlu0 %v995
      %v997 = vpop.xlane.xlu0 %996
      %v998 = vsel %vm726, %v980, 0.0
      %999 = vadd.xlane.f32.xlu0 %v998
      %v1000 = vpop.xlane.xlu0 %999
      %v1001 = vsel %vm726, %v982, 0.0
      %1002 = vadd.xlane.f32.xlu0 %v1001
      %v1003 = vpop.xlane.xlu0 %1002
      %v1004 = vsel %vm726, %v984, 0.0
      %1005 = vadd.xlane.f32.xlu0 %v1004
      %v1006 = vpop.xlane.xlu0 %1005
      %v1007 = vsel %vm726, %v986, 0.0
      %1008 = vadd.xlane.f32.xlu0 %v1007
      %v1009 = vpop.xlane.xlu0 %1008
      %v1010 = vsel %vm726, %v988, 0.0
      %1011 = vadd.xlane.f32.xlu0 %v1010
      %v1012 = vpop.xlane.xlu0 %1011
      %v1013 = vrcp.pop %v991
      %v1014 = vrcp.pop %v994
      %v1015 = vrcp.pop %v997
      %v1016 = vrcp.pop %v1000
      %v1017 = vrcp.pop %v1003
      %v1018 = vrcp.pop %v1006
      %v1019 = vrcp.pop %v1009
      %v1020 = vrcp.pop %v1012
      %v1021 = vmul.f32 %v974, %v1013
      %v1022 = vmul.f32 %v976, %v1014
      %v1023 = vmul.f32 %v978, %v1015
      %v1024 = vmul.f32 %v980, %v1016
      %v1025 = vmul.f32 %v982, %v1017
      %v1026 = vmul.f32 %v984, %v1018
      %v1027 = vmul.f32 %v986, %v1019
      %v1028 = vmul.f32 %v988, %v1020
      %v1029 = vpack.c.bf16 %v1022, %v1021
      %v1030 = vpack.c.bf16 %v1024, %v1023
      %v1031 = vpack.c.bf16 %v1026, %v1025
      %v1032 = vpack.c.bf16 %v1028, %v1027
      %1033 = vrot.lane.b32.xlu0 %v661, 56
      %v1034 = vpop.permute.xlu0 %1033
      %1035 = vrot.lane.b32.xlu0 %v662, 56
      %v1036 = vpop.permute.xlu0 %1035
      %1037 = vrot.lane.b32.xlu0 %v663, 56
      %v1038 = vpop.permute.xlu0 %1037
      %1039 = vrot.lane.b32.xlu0 %v664, 56
      %v1040 = vpop.permute.xlu0 %1039
      %v1046 = vsel %vm726, %v1029, 0
      %v1049 = vsel %vm726, %v1030, 0
      %v1052 = vsel %vm726, %v1031, 0
      %v1055 = vsel %vm726, %v1032, 0
      %1057 = vmatpush.bf16.msra.mxu0 0
      %1058 = vmatpush.bf16.msra.mxu0 0
      %1059 = vmatpush.bf16.msra.mxu0 0
      %1060 = vmatpush.bf16.msra.mxu0 0
      %1061 = vmatpush.bf16.msra.mxu0 %v1040
      %1062 = vmatpush.bf16.msra.mxu0 %v1038
      %1063 = vmatpush.bf16.msra.mxu0 %v1036
      %1064 = vmatpush.bf16.msra.mxu0 %v1034
      %1065 = vmatmul.bf16.gmra.mxu0 %v1046
      %v1066 = vpop.f32.mrf.mxu0
      %v1067 = vadd.f32 0.0, %v1066
      %v1068 = vpop.f32.mrf.mxu0
      %v1069 = vadd.f32 0.0, %v1068
      %1070 = vmatmul.bf16.gmra.mxu0 %v1049
      %v1071 = vpop.f32.mrf.mxu0
      %v1072 = vadd.f32 0.0, %v1071
      %v1073 = vpop.f32.mrf.mxu0
      %v1074 = vadd.f32 0.0, %v1073
      %1075 = vmatmul.bf16.gmra.mxu0 %v1052
      %v1076 = vpop.f32.mrf.mxu0
      %v1077 = vadd.f32 0.0, %v1076
      %v1078 = vpop.f32.mrf.mxu0
      %v1079 = vadd.f32 0.0, %v1078
      %1080 = vmatmul.bf16.gmra.mxu0 %v1055
      %v1081 = vpop.f32.mrf.mxu0
      %v1082 = vadd.f32 0.0, %v1081
      %v1083 = vpop.f32.mrf.mxu0
      %v1084 = vadd.f32 0.0, %v1083
      %1085 = vdwg.mxu0
      %1086 = vrot.lane.b32.xlu0 %v641, 112
      %v1087 = vpop.permute.xlu0 %1086
      %1088 = vrot.lane.b32.xlu0 %v642, 112
      %v1089 = vpop.permute.xlu0 %1088
      %1090 = vrot.lane.b32.xlu0 %v643, 112
      %v1091 = vpop.permute.xlu0 %1090
      %1092 = vrot.lane.b32.xlu0 %v644, 112
      %v1093 = vpop.permute.xlu0 %1092
      %1094 = vrot.lane.b32.xlu0 %v661, 80
      %v1095 = vpop.permute.xlu0 %1094
      %1096 = vrot.lane.b32.xlu0 %v662, 80
      %v1097 = vpop.permute.xlu0 %1096
      %1098 = vrot.lane.b32.xlu0 %v663, 80
      %v1099 = vpop.permute.xlu0 %1098
      %1100 = vrot.lane.b32.xlu0 %v664, 80
      %v1101 = vpop.permute.xlu0 %1100
      %v1103 = vsel %vm374, %v1087, 0
      %v1106 = vsel %vm374, %v1089, 0
      %v1109 = vsel %vm374, %v1091, 0
      %v1112 = vsel %vm374, %v1093, 0
      %v1115 = vsel %vm374, %v1095, 0
      %v1118 = vsel %vm374, %v1097, 0
      %v1121 = vsel %vm374, %v1099, 0
      %v1124 = vsel %vm374, %v1101, 0
      %1126 = vmatpush.bf16.xpose.msra.mxu0 0
      %1127 = vmatpush.bf16.xpose.msra.mxu0 0
      %1128 = vmatpush.bf16.xpose.msra.mxu0 0
      %1129 = vmatpush.bf16.xpose.msra.mxu0 0
      %1130 = vmatpush.bf16.xpose.msra.mxu0 %v1124
      %1131 = vmatpush.bf16.xpose.msra.mxu0 %v1121
      %1132 = vmatpush.bf16.xpose.msra.mxu0 %v1118
      %1133 = vmatpush.bf16.xpose.msra.mxu0 %v1115
      %1134 = vmatmul.bf16.gmra.mxu0 %v1103
      %v1135 = vpop.f32.mrf.mxu0
      %v1136 = vadd.f32 0.0, %v1135
      %v1137 = vpop.f32.mrf.mxu0
      %v1138 = vadd.f32 0.0, %v1137
      %1139 = vmatmul.bf16.gmra.mxu0 %v1106
      %v1140 = vpop.f32.mrf.mxu0
      %v1141 = vadd.f32 0.0, %v1140
      %v1142 = vpop.f32.mrf.mxu0
      %v1143 = vadd.f32 0.0, %v1142
      %1144 = vmatmul.bf16.gmra.mxu0 %v1109
      %v1145 = vpop.f32.mrf.mxu0
      %v1146 = vadd.f32 0.0, %v1145
      %v1147 = vpop.f32.mrf.mxu0
      %v1148 = vadd.f32 0.0, %v1147
      %1149 = vmatmul.bf16.gmra.mxu0 %v1112
      %v1150 = vpop.f32.mrf.mxu0
      %v1151 = vadd.f32 0.0, %v1150
      %v1152 = vpop.f32.mrf.mxu0
      %v1153 = vadd.f32 0.0, %v1152
      %1154 = vdwg.mxu0
      %v1155 = vsel %vm726, %v1136, -inf
      %1156 = vmax.xlane.f32.xlu0 %v1155
      %v1157 = vpop.xlane.xlu0 %1156
      %v1158 = vsel %vm726, %v1138, -inf
      %1159 = vmax.xlane.f32.xlu0 %v1158
      %v1160 = vpop.xlane.xlu0 %1159
      %v1161 = vsel %vm726, %v1141, -inf
      %1162 = vmax.xlane.f32.xlu0 %v1161
      %v1163 = vpop.xlane.xlu0 %1162
      %v1164 = vsel %vm726, %v1143, -inf
      %1165 = vmax.xlane.f32.xlu0 %v1164
      %v1166 = vpop.xlane.xlu0 %1165
      %v1167 = vsel %vm726, %v1146, -inf
      %1168 = vmax.xlane.f32.xlu0 %v1167
      %v1169 = vpop.xlane.xlu0 %1168
      %v1170 = vsel %vm726, %v1148, -inf
      %1171 = vmax.xlane.f32.xlu0 %v1170
      %v1172 = vpop.xlane.xlu0 %1171
      %v1173 = vsel %vm726, %v1151, -inf
      %1174 = vmax.xlane.f32.xlu0 %v1173
      %v1175 = vpop.xlane.xlu0 %1174
      %v1176 = vsel %vm726, %v1153, -inf
      %1177 = vmax.xlane.f32.xlu0 %v1176
      %v1178 = vpop.xlane.xlu0 %1177
      %v1179 = vsub.f32 %v1136, %v1157
      %v1180 = vsub.f32 %v1138, %v1160
      %v1181 = vsub.f32 %v1141, %v1163
      %v1182 = vsub.f32 %v1143, %v1166
      %v1183 = vsub.f32 %v1146, %v1169
      %v1184 = vsub.f32 %v1148, %v1172
      %v1185 = vsub.f32 %v1151, %v1175
      %v1186 = vsub.f32 %v1153, %v1178
      %v1187 = vmul.f32 %v1179, 1.442695
      %v1188 = vpow.pop %v1187
      %v1189 = vmul.f32 %v1180, 1.442695
      %v1190 = vpow.pop %v1189
      %v1191 = vmul.f32 %v1181, 1.442695
      %v1192 = vpow.pop %v1191
      %v1193 = vmul.f32 %v1182, 1.442695
      %v1194 = vpow.pop %v1193
      %v1195 = vmul.f32 %v1183, 1.442695
      %v1196 = vpow.pop %v1195
      %v1197 = vmul.f32 %v1184, 1.442695
      %v1198 = vpow.pop %v1197
      %v1199 = vmul.f32 %v1185, 1.442695
      %v1200 = vpow.pop %v1199
      %v1201 = vmul.f32 %v1186, 1.442695
      %v1202 = vpow.pop %v1201
      %v1203 = vsel %vm726, %v1188, 0.0
      %1204 = vadd.xlane.f32.xlu0 %v1203
      %v1205 = vpop.xlane.xlu0 %1204
      %v1206 = vsel %vm726, %v1190, 0.0
      %1207 = vadd.xlane.f32.xlu0 %v1206
      %v1208 = vpop.xlane.xlu0 %1207
      %v1209 = vsel %vm726, %v1192, 0.0
      %1210 = vadd.xlane.f32.xlu0 %v1209
      %v1211 = vpop.xlane.xlu0 %1210
      %v1212 = vsel %vm726, %v1194, 0.0
      %1213 = vadd.xlane.f32.xlu0 %v1212
      %v1214 = vpop.xlane.xlu0 %1213
      %v1215 = vsel %vm726, %v1196, 0.0
      %1216 = vadd.xlane.f32.xlu0 %v1215
      %v1217 = vpop.xlane.xlu0 %1216
      %v1218 = vsel %vm726, %v1198, 0.0
      %1219 = vadd.xlane.f32.xlu0 %v1218
      %v1220 = vpop.xlane.xlu0 %1219
      %v1221 = vsel %vm726, %v1200, 0.0
      %1222 = vadd.xlane.f32.xlu0 %v1221
      %v1223 = vpop.xlane.xlu0 %1222
      %v1224 = vsel %vm726, %v1202, 0.0
      %1225 = vadd.xlane.f32.xlu0 %v1224
      %v1226 = vpop.xlane.xlu0 %1225
      %v1227 = vrcp.pop %v1205
      %v1228 = vrcp.pop %v1208
      %v1229 = vrcp.pop %v1211
      %v1230 = vrcp.pop %v1214
      %v1231 = vrcp.pop %v1217
      %v1232 = vrcp.pop %v1220
      %v1233 = vrcp.pop %v1223
      %v1234 = vrcp.pop %v1226
      %v1235 = vmul.f32 %v1188, %v1227
      %v1236 = vmul.f32 %v1190, %v1228
      %v1237 = vmul.f32 %v1192, %v1229
      %v1238 = vmul.f32 %v1194, %v1230
      %v1239 = vmul.f32 %v1196, %v1231
      %v1240 = vmul.f32 %v1198, %v1232
      %v1241 = vmul.f32 %v1200, %v1233
      %v1242 = vmul.f32 %v1202, %v1234
      %v1243 = vpack.c.bf16 %v1236, %v1235
      %v1244 = vpack.c.bf16 %v1238, %v1237
      %v1245 = vpack.c.bf16 %v1240, %v1239
      %v1246 = vpack.c.bf16 %v1242, %v1241
      %1247 = vrot.lane.b32.xlu0 %v661, 48
      %v1248 = vpop.permute.xlu0 %1247
      %1249 = vrot.lane.b32.xlu0 %v662, 48
      %v1250 = vpop.permute.xlu0 %1249
      %1251 = vrot.lane.b32.xlu0 %v663, 48
      %v1252 = vpop.permute.xlu0 %1251
      %1253 = vrot.lane.b32.xlu0 %v664, 48
      %v1254 = vpop.permute.xlu0 %1253
      %v1260 = vsel %vm726, %v1243, 0
      %v1263 = vsel %vm726, %v1244, 0
      %v1266 = vsel %vm726, %v1245, 0
      %v1269 = vsel %vm726, %v1246, 0
      %1271 = vmatpush.bf16.msra.mxu0 0
      %1272 = vmatpush.bf16.msra.mxu0 0
      %1273 = vmatpush.bf16.msra.mxu0 0
      %1274 = vmatpush.bf16.msra.mxu0 0
      %1275 = vmatpush.bf16.msra.mxu0 %v1254
      %1276 = vmatpush.bf16.msra.mxu0 %v1252
      %1277 = vmatpush.bf16.msra.mxu0 %v1250
      %1278 = vmatpush.bf16.msra.mxu0 %v1248
      %1279 = vmatmul.bf16.gmra.mxu0 %v1260
      %v1280 = vpop.f32.mrf.mxu0
      %v1281 = vadd.f32 0.0, %v1280
      %v1282 = vpop.f32.mrf.mxu0
      %v1283 = vadd.f32 0.0, %v1282
      %1284 = vmatmul.bf16.gmra.mxu0 %v1263
      %v1285 = vpop.f32.mrf.mxu0
      %v1286 = vadd.f32 0.0, %v1285
      %v1287 = vpop.f32.mrf.mxu0
      %v1288 = vadd.f32 0.0, %v1287
      %1289 = vmatmul.bf16.gmra.mxu0 %v1266
      %v1290 = vpop.f32.mrf.mxu0
      %v1291 = vadd.f32 0.0, %v1290
      %v1292 = vpop.f32.mrf.mxu0
      %v1293 = vadd.f32 0.0, %v1292
      %1294 = vmatmul.bf16.gmra.mxu0 %v1269
      %v1295 = vpop.f32.mrf.mxu0
      %v1296 = vadd.f32 0.0, %v1295
      %v1297 = vpop.f32.mrf.mxu0
      %v1298 = vadd.f32 0.0, %v1297
      %1299 = vdwg.mxu0
      %1300 = vrot.lane.b32.xlu0 %v641, 104
      %v1301 = vpop.permute.xlu0 %1300
      %1302 = vrot.lane.b32.xlu0 %v642, 104
      %v1303 = vpop.permute.xlu0 %1302
      %1304 = vrot.lane.b32.xlu0 %v643, 104
      %v1305 = vpop.permute.xlu0 %1304
      %1306 = vrot.lane.b32.xlu0 %v644, 104
      %v1307 = vpop.permute.xlu0 %1306
      %1308 = vrot.lane.b32.xlu0 %v661, 72
      %v1309 = vpop.permute.xlu0 %1308
      %1310 = vrot.lane.b32.xlu0 %v662, 72
      %v1311 = vpop.permute.xlu0 %1310
      %1312 = vrot.lane.b32.xlu0 %v663, 72
      %v1313 = vpop.permute.xlu0 %1312
      %1314 = vrot.lane.b32.xlu0 %v664, 72
      %v1315 = vpop.permute.xlu0 %1314
      %v1317 = vsel %vm374, %v1301, 0
      %v1320 = vsel %vm374, %v1303, 0
      %v1323 = vsel %vm374, %v1305, 0
      %v1326 = vsel %vm374, %v1307, 0
      %v1329 = vsel %vm374, %v1309, 0
      %v1332 = vsel %vm374, %v1311, 0
      %v1335 = vsel %vm374, %v1313, 0
      %v1338 = vsel %vm374, %v1315, 0
      %1340 = vmatpush.bf16.xpose.msra.mxu0 0
      %1341 = vmatpush.bf16.xpose.msra.mxu0 0
      %1342 = vmatpush.bf16.xpose.msra.mxu0 0
      %1343 = vmatpush.bf16.xpose.msra.mxu0 0
      %1344 = vmatpush.bf16.xpose.msra.mxu0 %v1338
      %1345 = vmatpush.bf16.xpose.msra.mxu0 %v1335
      %1346 = vmatpush.bf16.xpose.msra.mxu0 %v1332
      %1347 = vmatpush.bf16.xpose.msra.mxu0 %v1329
      %1348 = vmatmul.bf16.gmra.mxu0 %v1317
      %v1349 = vpop.f32.mrf.mxu0
      %v1350 = vadd.f32 0.0, %v1349
      %v1351 = vpop.f32.mrf.mxu0
      %v1352 = vadd.f32 0.0, %v1351
      %1353 = vmatmul.bf16.gmra.mxu0 %v1320
      %v1354 = vpop.f32.mrf.mxu0
      %v1355 = vadd.f32 0.0, %v1354
      %v1356 = vpop.f32.mrf.mxu0
      %v1357 = vadd.f32 0.0, %v1356
      %1358 = vmatmul.bf16.gmra.mxu0 %v1323
      %v1359 = vpop.f32.mrf.mxu0
      %v1360 = vadd.f32 0.0, %v1359
      %v1361 = vpop.f32.mrf.mxu0
      %v1362 = vadd.f32 0.0, %v1361
      %1363 = vmatmul.bf16.gmra.mxu0 %v1326
      %v1364 = vpop.f32.mrf.mxu0
      %v1365 = vadd.f32 0.0, %v1364
      %v1366 = vpop.f32.mrf.mxu0
      %v1367 = vadd.f32 0.0, %v1366
      %1368 = vdwg.mxu0
      %v1369 = vsel %vm726, %v1350, -inf
      %1370 = vmax.xlane.f32.xlu0 %v1369
      %v1371 = vpop.xlane.xlu0 %1370
      %v1372 = vsel %vm726, %v1352, -inf
      %1373 = vmax.xlane.f32.xlu0 %v1372
      %v1374 = vpop.xlane.xlu0 %1373
      %v1375 = vsel %vm726, %v1355, -inf
      %1376 = vmax.xlane.f32.xlu0 %v1375
      %v1377 = vpop.xlane.xlu0 %1376
      %v1378 = vsel %vm726, %v1357, -inf
      %1379 = vmax.xlane.f32.xlu0 %v1378
      %v1380 = vpop.xlane.xlu0 %1379
      %v1381 = vsel %vm726, %v1360, -inf
      %1382 = vmax.xlane.f32.xlu0 %v1381
      %v1383 = vpop.xlane.xlu0 %1382
      %v1384 = vsel %vm726, %v1362, -inf
      %1385 = vmax.xlane.f32.xlu0 %v1384
      %v1386 = vpop.xlane.xlu0 %1385
      %v1387 = vsel %vm726, %v1365, -inf
      %1388 = vmax.xlane.f32.xlu0 %v1387
      %v1389 = vpop.xlane.xlu0 %1388
      %v1390 = vsel %vm726, %v1367, -inf
      %1391 = vmax.xlane.f32.xlu0 %v1390
      %v1392 = vpop.xlane.xlu0 %1391
      %v1393 = vsub.f32 %v1350, %v1371
      %v1394 = vsub.f32 %v1352, %v1374
      %v1395 = vsub.f32 %v1355, %v1377
      %v1396 = vsub.f32 %v1357, %v1380
      %v1397 = vsub.f32 %v1360, %v1383
      %v1398 = vsub.f32 %v1362, %v1386
      %v1399 = vsub.f32 %v1365, %v1389
      %v1400 = vsub.f32 %v1367, %v1392
      %v1401 = vmul.f32 %v1393, 1.442695
      %v1402 = vpow.pop %v1401
      %v1403 = vmul.f32 %v1394, 1.442695
      %v1404 = vpow.pop %v1403
      %v1405 = vmul.f32 %v1395, 1.442695
      %v1406 = vpow.pop %v1405
      %v1407 = vmul.f32 %v1396, 1.442695
      %v1408 = vpow.pop %v1407
      %v1409 = vmul.f32 %v1397, 1.442695
      %v1410 = vpow.pop %v1409
      %v1411 = vmul.f32 %v1398, 1.442695
      %v1412 = vpow.pop %v1411
      %v1413 = vmul.f32 %v1399, 1.442695
      %v1414 = vpow.pop %v1413
      %v1415 = vmul.f32 %v1400, 1.442695
      %v1416 = vpow.pop %v1415
      %v1417 = vsel %vm726, %v1402, 0.0
      %1418 = vadd.xlane.f32.xlu0 %v1417
      %v1419 = vpop.xlane.xlu0 %1418
      %v1420 = vsel %vm726, %v1404, 0.0
      %1421 = vadd.xlane.f32.xlu0 %v1420
      %v1422 = vpop.xlane.xlu0 %1421
      %v1423 = vsel %vm726, %v1406, 0.0
      %1424 = vadd.xlane.f32.xlu0 %v1423
      %v1425 = vpop.xlane.xlu0 %1424
      %v1426 = vsel %vm726, %v1408, 0.0
      %1427 = vadd.xlane.f32.xlu0 %v1426
      %v1428 = vpop.xlane.xlu0 %1427
      %v1429 = vsel %vm726, %v1410, 0.0
      %1430 = vadd.xlane.f32.xlu0 %v1429
      %v1431 = vpop.xlane.xlu0 %1430
      %v1432 = vsel %vm726, %v1412, 0.0
      %1433 = vadd.xlane.f32.xlu0 %v1432
      %v1434 = vpop.xlane.xlu0 %1433
      %v1435 = vsel %vm726, %v1414, 0.0
      %1436 = vadd.xlane.f32.xlu0 %v1435
      %v1437 = vpop.xlane.xlu0 %1436
      %v1438 = vsel %vm726, %v1416, 0.0
      %1439 = vadd.xlane.f32.xlu0 %v1438
      %v1440 = vpop.xlane.xlu0 %1439
      %v1441 = vrcp.pop %v1419
      %v1442 = vrcp.pop %v1422
      %v1443 = vrcp.pop %v1425
      %v1444 = vrcp.pop %v1428
      %v1445 = vrcp.pop %v1431
      %v1446 = vrcp.pop %v1434
      %v1447 = vrcp.pop %v1437
      %v1448 = vrcp.pop %v1440
      %v1449 = vmul.f32 %v1402, %v1441
      %v1450 = vmul.f32 %v1404, %v1442
      %v1451 = vmul.f32 %v1406, %v1443
      %v1452 = vmul.f32 %v1408, %v1444
      %v1453 = vmul.f32 %v1410, %v1445
      %v1454 = vmul.f32 %v1412, %v1446
      %v1455 = vmul.f32 %v1414, %v1447
      %v1456 = vmul.f32 %v1416, %v1448
      %v1457 = vpack.c.bf16 %v1450, %v1449
      %v1458 = vpack.c.bf16 %v1452, %v1451
      %v1459 = vpack.c.bf16 %v1454, %v1453
      %v1460 = vpack.c.bf16 %v1456, %v1455
      %1461 = vrot.lane.b32.xlu0 %v661, 40
      %v1462 = vpop.permute.xlu0 %1461
      %1463 = vrot.lane.b32.xlu0 %v662, 40
      %v1464 = vpop.permute.xlu0 %1463
      %1465 = vrot.lane.b32.xlu0 %v663, 40
      %v1466 = vpop.permute.xlu0 %1465
      %1467 = vrot.lane.b32.xlu0 %v664, 40
      %v1468 = vpop.permute.xlu0 %1467
      %v1474 = vsel %vm726, %v1457, 0
      %v1477 = vsel %vm726, %v1458, 0
      %v1480 = vsel %vm726, %v1459, 0
      %v1483 = vsel %vm726, %v1460, 0
      %1485 = vmatpush.bf16.msra.mxu0 0
      %1486 = vmatpush.bf16.msra.mxu0 0
      %1487 = vmatpush.bf16.msra.mxu0 0
      %1488 = vmatpush.bf16.msra.mxu0 0
      %1489 = vmatpush.bf16.msra.mxu0 %v1468
      %1490 = vmatpush.bf16.msra.mxu0 %v1466
      %1491 = vmatpush.bf16.msra.mxu0 %v1464
      %1492 = vmatpush.bf16.msra.mxu0 %v1462
      %1493 = vmatmul.bf16.gmra.mxu0 %v1474
      %v1494 = vpop.f32.mrf.mxu0
      %v1495 = vadd.f32 0.0, %v1494
      %v1496 = vpop.f32.mrf.mxu0
      %v1497 = vadd.f32 0.0, %v1496
      %1498 = vmatmul.bf16.gmra.mxu0 %v1477
      %v1499 = vpop.f32.mrf.mxu0
      %v1500 = vadd.f32 0.0, %v1499
      %v1501 = vpop.f32.mrf.mxu0
      %v1502 = vadd.f32 0.0, %v1501
      %1503 = vmatmul.bf16.gmra.mxu0 %v1480
      %v1504 = vpop.f32.mrf.mxu0
      %v1505 = vadd.f32 0.0, %v1504
      %v1506 = vpop.f32.mrf.mxu0
      %v1507 = vadd.f32 0.0, %v1506
      %1508 = vmatmul.bf16.gmra.mxu0 %v1483
      %v1509 = vpop.f32.mrf.mxu0
      %v1510 = vadd.f32 0.0, %v1509
      %v1511 = vpop.f32.mrf.mxu0
      %v1512 = vadd.f32 0.0, %v1511
      %1513 = vdwg.mxu0
      %1522 = vrot.lane.b32.xlu0 %v1067, 8
      %v1523 = vpop.permute.xlu0 %1522
      %1524 = vrot.lane.b32.xlu0 %v1069, 8
      %v1525 = vpop.permute.xlu0 %1524
      %1526 = vrot.lane.b32.xlu0 %v1072, 8
      %v1527 = vpop.permute.xlu0 %1526
      %1528 = vrot.lane.b32.xlu0 %v1074, 8
      %v1529 = vpop.permute.xlu0 %1528
      %1530 = vrot.lane.b32.xlu0 %v1077, 8
      %v1531 = vpop.permute.xlu0 %1530
      %1532 = vrot.lane.b32.xlu0 %v1079, 8
      %v1533 = vpop.permute.xlu0 %1532
      %1534 = vrot.lane.b32.xlu0 %v1082, 8
      %v1535 = vpop.permute.xlu0 %1534
      %1536 = vrot.lane.b32.xlu0 %v1084, 8
      %v1537 = vpop.permute.xlu0 %1536
      %1554 = vrot.lane.b32.xlu0 %v1281, 16
      %v1555 = vpop.permute.xlu0 %1554
      %1556 = vrot.lane.b32.xlu0 %v1283, 16
      %v1557 = vpop.permute.xlu0 %1556
      %1558 = vrot.lane.b32.xlu0 %v1286, 16
      %v1559 = vpop.permute.xlu0 %1558
      %1560 = vrot.lane.b32.xlu0 %v1288, 16
      %v1561 = vpop.permute.xlu0 %1560
      %1562 = vrot.lane.b32.xlu0 %v1291, 16
      %v1563 = vpop.permute.xlu0 %1562
      %1564 = vrot.lane.b32.xlu0 %v1293, 16
      %v1565 = vpop.permute.xlu0 %1564
      %1566 = vrot.lane.b32.xlu0 %v1296, 16
      %v1567 = vpop.permute.xlu0 %1566
      %1568 = vrot.lane.b32.xlu0 %v1298, 16
      %v1569 = vpop.permute.xlu0 %1568
      %1586 = vrot.lane.b32.xlu0 %v1495, 24
      %v1587 = vpop.permute.xlu0 %1586
      %1588 = vrot.lane.b32.xlu0 %v1497, 24
      %v1589 = vpop.permute.xlu0 %1588
      %1590 = vrot.lane.b32.xlu0 %v1500, 24
      %v1591 = vpop.permute.xlu0 %1590
      %1592 = vrot.lane.b32.xlu0 %v1502, 24
      %v1593 = vpop.permute.xlu0 %1592
      %1594 = vrot.lane.b32.xlu0 %v1505, 24
      %v1595 = vpop.permute.xlu0 %1594
      %1596 = vrot.lane.b32.xlu0 %v1507, 24
      %v1597 = vpop.permute.xlu0 %1596
      %1598 = vrot.lane.b32.xlu0 %v1510, 24
      %v1599 = vpop.permute.xlu0 %1598
      %1600 = vrot.lane.b32.xlu0 %v1512, 24
      %v1601 = vpop.permute.xlu0 %1600
      %v1610 = vsel %vm374, %v853, %v1523
      %v1611 = vsel %vm374, %v855, %v1525
      %v1612 = vsel %vm374, %v858, %v1527
      %v1613 = vsel %vm374, %v860, %v1529
      %v1614 = vsel %vm374, %v863, %v1531
      %v1615 = vsel %vm374, %v865, %v1533
      %v1616 = vsel %vm374, %v868, %v1535
      %v1617 = vsel %vm374, %v870, %v1537
      %vm1618 = vcmask 130048
      %v1619 = vsel %vm1618, %v1610, %v1555
      %v1620 = vsel %vm1618, %v1611, %v1557
      %v1621 = vsel %vm1618, %v1612, %v1559
      %v1622 = vsel %vm1618, %v1613, %v1561
      %v1623 = vsel %vm1618, %v1614, %v1563
      %v1624 = vsel %vm1618, %v1615, %v1565
      %v1625 = vsel %vm1618, %v1616, %v1567
      %v1626 = vsel %vm1618, %v1617, %v1569
      %vm1627 = vcmask 195584
      %v1628 = vsel %vm1627, %v1619, %v1587
      %v1629 = vsel %vm1627, %v1620, %v1589
      %v1630 = vsel %vm1627, %v1621, %v1591
      %v1631 = vsel %vm1627, %v1622, %v1593
      %v1632 = vsel %vm1627, %v1623, %v1595
      %v1633 = vsel %vm1627, %v1624, %v1597
      %v1634 = vsel %vm1627, %v1625, %v1599
      %v1635 = vsel %vm1627, %v1626, %v1601
      %v1636 = vpack.c.bf16 %v1629, %v1628
      %v1637 = vpack.c.bf16 %v1631, %v1630
      %v1638 = vpack.c.bf16 %v1633, %v1632
      %v1639 = vpack.c.bf16 %v1635, %v1634
      %v1640 = vld [vmem:[%s6] sm:$0xf]
      %v1641 = vld [vmem:[%s6 + $0x4] sm:$0xf]
      %v1642 = vld [vmem:[%s6 + $0x8] sm:$0xf]
      %v1643 = vld [vmem:[%s6 + $0xc] sm:$0xf]
      %v1644 = vld [vmem:[%s7] sm:$0x1]
      %v1646 = vperm.slane %v1644, 0
      %v1652 = vunpack.c.l.b16 %v1640
      %v1653 = vunpack.c.l.b16 %v1641
      %v1654 = vunpack.c.l.b16 %v1642
      %v1655 = vunpack.c.l.b16 %v1643
      %v1656 = vpack.c.b16 %v1653, %v1652
      %v1657 = vpack.c.b16 %v1655, %v1654
      %v1661 = vsel %vm321, %v1636, 0
      %v1664 = vsel %vm321, %v1637, 0
      %v1667 = vsel %vm321, %v1638, 0
      %v1670 = vsel %vm321, %v1639, 0
      %1672 = vmatpush.bf16.msra.mxu0 0
      %1673 = vmatpush.bf16.msra.mxu0 0
      %1674 = vmatpush.bf16.msra.mxu0 0
      %1675 = vmatpush.bf16.msra.mxu0 0
      %1676 = vmatpush.bf16.msra.mxu0 0
      %1677 = vmatpush.bf16.msra.mxu0 0
      %1678 = vmatpush.bf16.msra.mxu0 %v1657
      %1679 = vmatpush.bf16.msra.mxu0 %v1656
      %1680 = vmatmul.bf16.gmra.mxu0 %v1661
      %v1681 = vpop.f32.mrf.mxu0
      %v1682 = vadd.f32 %v1646, %v1681
      %v1683 = vpop.f32.mrf.mxu0
      %v1684 = vadd.f32 %v1646, %v1683
      %1685 = vmatmul.bf16.gmra.mxu0 %v1664
      %v1686 = vpop.f32.mrf.mxu0
      %v1687 = vadd.f32 %v1646, %v1686
      %v1688 = vpop.f32.mrf.mxu0
      %v1689 = vadd.f32 %v1646, %v1688
      %1690 = vmatmul.bf16.gmra.mxu0 %v1667
      %v1691 = vpop.f32.mrf.mxu0
      %v1692 = vadd.f32 %v1646, %v1691
      %v1693 = vpop.f32.mrf.mxu0
      %v1694 = vadd.f32 %v1646, %v1693
      %1695 = vmatmul.bf16.gmra.mxu0 %v1670
      %v1696 = vpop.f32.mrf.mxu0
      %v1697 = vadd.f32 %v1646, %v1696
      %v1698 = vpop.f32.mrf.mxu0
      %v1699 = vadd.f32 %v1646, %v1698
      %1700 = vdwg.mxu0
      %v1701 = vadd.f32 %v307, %v1682
      %v1702 = vadd.f32 %v308, %v1684
      %v1703 = vadd.f32 %v309, %v1687
      %v1704 = vadd.f32 %v310, %v1689
      %v1705 = vadd.f32 %v311, %v1692
      %v1706 = vadd.f32 %v312, %v1694
      %v1707 = vadd.f32 %v313, %v1697
      %v1708 = vadd.f32 %v314, %v1699
      %1709 = vst.msk [vmem:[%s305] sm:$0xff] %vm321, %v1701
      %1710 = vst.msk [vmem:[%s305 + $0x8] sm:$0xff] %vm321, %v1702
      %1711 = vst.msk [vmem:[%s305 + $0x10] sm:$0xff] %vm321, %v1703
      %1712 = vst.msk [vmem:[%s305 + $0x18] sm:$0xff] %vm321, %v1704
      %1713 = vst.msk [vmem:[%s305 + $0x20] sm:$0xff] %vm321, %v1705
      %1714 = vst.msk [vmem:[%s305 + $0x28] sm:$0xff] %vm321, %v1706
      %1715 = vst.msk [vmem:[%s305 + $0x30] sm:$0xff] %vm321, %v1707
      %1716 = vst.msk [vmem:[%s305 + $0x38] sm:$0xff] %vm321, %v1708
      %p1717 = scmp.lt.s32.totalorder %s19, 1
      %s1718 = scalar_select %p1717, %s19, 1
      %s1719 = smul.addr %s1718, 8
      %s1720 = smul.addr %s1719, 8
      %s1721 = scalar_lea.vmem %s8, %s1720
      // Predicated region
      $region53: #{midblock_forward.4} parent=51 // pred_check
        %p1722 = pneg %p210
      $region54: #{midblock_forward.4} parent=51 // pred_check_branch
        %1724 = sbr.rel (%p1722) target = $region56
      $region55: #{midblock_forward.4} parent=51 // pred_region
        _
      $region56: #{midblock_forward.4} parent=51 // pred_fallthru
        _
    $region52: #{midblock_forward.4} parent=5 // pred_fallthru
      _
    %p1725 = scmp.le.s32.totalorder 2, %s14
    // Predicated region
    $region57: #{midblock_forward.4} parent=5 // pred_check
      %p1726 = pneg %p1725
    $region58: #{midblock_forward.4} parent=5 // pred_check_branch
      %1728 = sbr.rel (%p1726) target = $region60
    $region59: #{midblock_forward.4} parent=5 // pred_region
      %s1729 = ssub.s32 %s14, 2
      // Predicated region
      $region61: #{midblock_forward.4} parent=59 // pred_check
        %p1730 = pneg %p216
      $region62: #{midblock_forward.4} parent=59 // pred_check_branch
        %1732 = sbr.rel (%p1730) target = $region64
      $region63: #{midblock_forward.4} parent=59 // pred_region
        %p1733 = scmp.lt.s32.totalorder %s20, 1
        %s1734 = scalar_select %p1733, %s20, 1
        %s1735 = smul.addr %s1734, 8
        %s1736 = smul.addr %s1735, 8
        %s1737 = scalar_lea.vmem %s8, %s1736
      $region64: #{midblock_forward.4} parent=59 // pred_fallthru
        _
    $region60: #{midblock_forward.4} parent=5 // pred_fallthru
      _
  $region6: #{midblock_forward.4} parent=0 // loop_footer
    %s18 = sadd.s32 1, %s14
  $region7: #{midblock_forward.4} parent=0 // loop_footer_branch
    %13 = sbr.rel target = $region3
  $region8: #{midblock_forward.4} parent=0 // loop_exit
    _

// kernel: midblock_forward.3
$region0: #{midblock_forward.3}
  #allocation0 [shape = 'u32[]', space=smem, size = 0x4, offset = 0x4, fixed_abs, tag = 'smem constant byte address 0x4 - core index']
  #allocation1 [shape = 'u32[72,128]{1,0:T(1,128)}', space=vmem, size = 0x9000, scoped, tag = 'internal scratch']
  %s0 = inlined_call_operand.vmem [shape: f32[2,64,16], index: 0, kind: input, shape index: {}]
  %s1 = inlined_call_operand.vmem [shape: f32[2,1,32], index: 1, kind: input, shape index: {}]
  %s2 = inlined_call_operand.vmem [shape: f32[1,16], index: 2, kind: input, shape index: {}]
  %s3 = inlined_call_operand.vmem [shape: f32[1,16], index: 3, kind: input, shape index: {}]
  %s4 = inlined_call_operand.vmem [shape: f32[16,8], index: 4, kind: input, shape index: {}]
  %s5 = inlined_call_operand.vmem [shape: bf16[9,16,32], index: 5, kind: input, shape index: {}]
  %s6 = inlined_call_operand.vmem [shape: f32[1,32], index: 6, kind: input, shape index: {}]
  %s7 = inlined_call_operand.vmem [shape: bf16[32,32], index: 7, kind: input, shape index: {}]
  %s8 = inlined_call_operand.vmem [shape: f32[1,32], index: 8, kind: input, shape index: {}]
  %s9 = inlined_call_operand.vmem [shape: f32[1,32], index: 9, kind: input, shape index: {}]
  %s10 = inlined_call_operand.vmem [shape: f32[1,32], index: 10, kind: input, shape index: {}]
  %s11 = inlined_call_operand.vmem [shape: f32[32,8], index: 11, kind: input, shape index: {}]
  %s12 = inlined_call_operand.vmem [shape: bf16[9,32,32], index: 12, kind: input, shape index: {}]
  %s13 = inlined_call_operand.vmem [shape: f32[1,32], index: 13, kind: input, shape index: {}]
  %s14 = inlined_call_operand.vmem [shape: bf16[16,32], index: 14, kind: input, shape index: {}]
  %s15 = inlined_call_operand.vmem [shape: f32[1,32], index: 15, kind: input, shape index: {}]
  %s16 = inlined_call_operand.vmem [shape: f32[2,64,32], index: 16, kind: output, shape index: {}]
  %s17 = sld [smem:[#allocation0]]
  $region97: #{midblock_forward.3} parent=0
    _
  %s19 = ssub.s32 1, %s17
  %s20 = scalar_select 0, %s19, %s17
  loop: start=0, step=1, limit=4
  $region2: #{midblock_forward.3} parent=0 // loop_pre_header
    _
  $region3: #{midblock_forward.3} parent=0 // loop_header
    %s22 = sphi 0, %s26
    %p23 = scmp.ge.s32.totalorder %s22, 4
    %s32 = sphi 0, %s34
    %s35 = sphi 0, %s32
    %s36 = sphi 0, %s35
    %s52 = sphi 0, %s36
    %s58 = sphi 0, %s60
    %s61 = sphi 0, %s58
    %s62 = sphi 0, %s61
    %s78 = sphi 0, %s62
    %s82 = sphi 0, %s82
    %s84 = sphi 0, %s82
    %s85 = sphi 0, %s84
    %s99 = sphi 0, %s85
    %s103 = sphi 0, %s103
    %s105 = sphi 0, %s103
    %s106 = sphi 0, %s105
    %s120 = sphi 0, %s106
    %s124 = sphi 0, %s124
    %s126 = sphi 0, %s124
    %s127 = sphi 0, %s126
    %s141 = sphi 0, %s127
    %s145 = sphi 0, %s145
    %s147 = sphi 0, %s145
    %s148 = sphi 0, %s147
    %s162 = sphi 0, %s148
    %s166 = sphi 0, %s166
    %s168 = sphi 0, %s166
    %s169 = sphi 0, %s168
    %s183 = sphi 0, %s169
    %s187 = sphi 0, %s187
    %s189 = sphi 0, %s187
    %s190 = sphi 0, %s189
    %s204 = sphi 0, %s190
    %s208 = sphi 0, %s208
    %s210 = sphi 0, %s208
    %s211 = sphi 0, %s210
    %s225 = sphi 0, %s211
    %s229 = sphi 0, %s229
    %s231 = sphi 0, %s229
    %s232 = sphi 0, %s231
    %s246 = sphi 0, %s232
    %s250 = sphi 0, %s250
    %s252 = sphi 0, %s250
    %s253 = sphi 0, %s252
    %s267 = sphi 0, %s253
    %s271 = sphi 0, %s271
    %s273 = sphi 0, %s271
    %s274 = sphi 0, %s273
    %s288 = sphi 0, %s274
    %s292 = sphi 0, %s292
    %s294 = sphi 0, %s292
    %s295 = sphi 0, %s294
    %s309 = sphi 0, %s295
    %s313 = sphi 0, %s313
    %s315 = sphi 0, %s313
    %s316 = sphi 0, %s315
    %s330 = sphi 0, %s316
    %s334 = sphi 0, %s334
    %s336 = sphi 0, %s334
    %s337 = sphi 0, %s336
    %s351 = sphi 0, %s337
    %s355 = sphi 0, %s355
    %s357 = sphi 0, %s355
    %s358 = sphi 0, %s357
    %s372 = sphi 0, %s358
    %s378 = sphi 0, %s380
    %s381 = sphi 0, %s378
    %s382 = sphi 0, %s381
    %s398 = sphi 0, %s382
  $region4: #{midblock_forward.3} parent=0 // loop_header_branch
    %25 = sbr.rel (%p23) target = $region8
  $region5: #{midblock_forward.3} parent=0 // loop_body
    %s27 = ssub.s32 %s22, 1
    %s28 = ssub.s32 %s22, 2
    %s29 = sadd.s32 %s22, 1
    %s30 = ssub.s32 %s22, %s29
    %p31 = scmp.eq.s32.totalorder %s30, 0
    %s33 = sadd.s32 %s32, 1
    %s34 = scalar_select %p31, %s32, %s33
    %p37 = pneg %p31
    %p38 = scmp.eq.s32.totalorder %s22, 1
    %p39 = por %p37, %p38
    %p40 = scmp.ne.s32.totalorder %s32, %s35
    %p41 = scmp.eq.s32.totalorder %s22, 0
    %p42 = por %p40, %p41
    %p43 = scmp.ne.s32.totalorder %s32, %s35
    %p44 = scmp.eq.s32.totalorder %s27, 1
    %p45 = por %p43, %p44
    %p46 = scmp.ne.s32.totalorder %s35, %s36
    %p47 = scmp.eq.s32.totalorder %s27, 0
    %p48 = por %p46, %p47
    %p49 = scmp.ne.s32.totalorder %s35, %s36
    %p50 = scmp.eq.s32.totalorder %s28, 1
    %p51 = por %p49, %p50
    %p53 = scmp.ne.s32.totalorder %s36, %s52
    %p54 = scmp.eq.s32.totalorder %s28, 0
    %p55 = por %p53, %p54
    %s56 = ssub.s32 %s22, %s29
    %p57 = scmp.eq.s32.totalorder %s56, 0
    %s59 = sadd.s32 %s58, 1
    %s60 = scalar_select %p57, %s58, %s59
    %p63 = pneg %p57
    %p64 = scmp.eq.s32.totalorder %s22, 1
    %p65 = por %p63, %p64
    %p66 = scmp.ne.s32.totalorder %s58, %s61
    %p67 = scmp.eq.s32.totalorder %s22, 0
    %p68 = por %p66, %p67
    %p69 = scmp.ne.s32.totalorder %s58, %s61
    %p70 = scmp.eq.s32.totalorder %s27, 1
    %p71 = por %p69, %p70
    %p72 = scmp.ne.s32.totalorder %s61, %s62
    %p73 = scmp.eq.s32.totalorder %s27, 0
    %p74 = por %p72, %p73
    %p75 = scmp.ne.s32.totalorder %s61, %s62
    %p76 = scmp.eq.s32.totalorder %s28, 1
    %p77 = por %p75, %p76
    %p79 = scmp.ne.s32.totalorder %s62, %s78
    %p80 = scmp.eq.s32.totalorder %s28, 0
    %p81 = por %p79, %p80
    %s83 = sadd.s32 %s82, 1
    %p86 = scmp.eq.s32.totalorder %s22, 1
    %p87 = scmp.ne.s32.totalorder %s82, %s84
    %p88 = scmp.eq.s32.totalorder %s22, 0
    %p89 = por %p87, %p88
    %p90 = scmp.ne.s32.totalorder %s82, %s84
    %p91 = scmp.eq.s32.totalorder %s27, 1
    %p92 = por %p90, %p91
    %p93 = scmp.ne.s32.totalorder %s84, %s85
    %p94 = scmp.eq.s32.totalorder %s27, 0
    %p95 = por %p93, %p94
    %p96 = scmp.ne.s32.totalorder %s84, %s85
    %p97 = scmp.eq.s32.totalorder %s28, 1
    %p98 = por %p96, %p97
    %p100 = scmp.ne.s32.totalorder %s85, %s99
    %p101 = scmp.eq.s32.totalorder %s28, 0
    %p102 = por %p100, %p101
    %s104 = sadd.s32 %s103, 1
    %p107 = scmp.eq.s32.totalorder %s22, 1
    %p108 = scmp.ne.s32.totalorder %s103, %s105
    %p109 = scmp.eq.s32.totalorder %s22, 0
    %p110 = por %p108, %p109
    %p111 = scmp.ne.s32.totalorder %s103, %s105
    %p112 = scmp.eq.s32.totalorder %s27, 1
    %p113 = por %p111, %p112
    %p114 = scmp.ne.s32.totalorder %s105, %s106
    %p115 = scmp.eq.s32.totalorder %s27, 0
    %p116 = por %p114, %p115
    %p117 = scmp.ne.s32.totalorder %s105, %s106
    %p118 = scmp.eq.s32.totalorder %s28, 1
    %p119 = por %p117, %p118
    %p121 = scmp.ne.s32.totalorder %s106, %s120
    %p122 = scmp.eq.s32.totalorder %s28, 0
    %p123 = por %p121, %p122
    %s125 = sadd.s32 %s124, 1
    %p128 = scmp.eq.s32.totalorder %s22, 1
    %p129 = scmp.ne.s32.totalorder %s124, %s126
    %p130 = scmp.eq.s32.totalorder %s22, 0
    %p131 = por %p129, %p130
    %p132 = scmp.ne.s32.totalorder %s124, %s126
    %p133 = scmp.eq.s32.totalorder %s27, 1
    %p134 = por %p132, %p133
    %p135 = scmp.ne.s32.totalorder %s126, %s127
    %p136 = scmp.eq.s32.totalorder %s27, 0
    %p137 = por %p135, %p136
    %p138 = scmp.ne.s32.totalorder %s126, %s127
    %p139 = scmp.eq.s32.totalorder %s28, 1
    %p140 = por %p138, %p139
    %p142 = scmp.ne.s32.totalorder %s127, %s141
    %p143 = scmp.eq.s32.totalorder %s28, 0
    %p144 = por %p142, %p143
    %s146 = sadd.s32 %s145, 1
    %p149 = scmp.eq.s32.totalorder %s22, 1
    %p150 = scmp.ne.s32.totalorder %s145, %s147
    %p151 = scmp.eq.s32.totalorder %s22, 0
    %p152 = por %p150, %p151
    %p153 = scmp.ne.s32.totalorder %s145, %s147
    %p154 = scmp.eq.s32.totalorder %s27, 1
    %p155 = por %p153, %p154
    %p156 = scmp.ne.s32.totalorder %s147, %s148
    %p157 = scmp.eq.s32.totalorder %s27, 0
    %p158 = por %p156, %p157
    %p159 = scmp.ne.s32.totalorder %s147, %s148
    %p160 = scmp.eq.s32.totalorder %s28, 1
    %p161 = por %p159, %p160
    %p163 = scmp.ne.s32.totalorder %s148, %s162
    %p164 = scmp.eq.s32.totalorder %s28, 0
    %p165 = por %p163, %p164
    %s167 = sadd.s32 %s166, 1
    %p170 = scmp.eq.s32.totalorder %s22, 1
    %p171 = scmp.ne.s32.totalorder %s166, %s168
    %p172 = scmp.eq.s32.totalorder %s22, 0
    %p173 = por %p171, %p172
    %p174 = scmp.ne.s32.totalorder %s166, %s168
    %p175 = scmp.eq.s32.totalorder %s27, 1
    %p176 = por %p174, %p175
    %p177 = scmp.ne.s32.totalorder %s168, %s169
    %p178 = scmp.eq.s32.totalorder %s27, 0
    %p179 = por %p177, %p178
    %p180 = scmp.ne.s32.totalorder %s168, %s169
    %p181 = scmp.eq.s32.totalorder %s28, 1
    %p182 = por %p180, %p181
    %p184 = scmp.ne.s32.totalorder %s169, %s183
    %p185 = scmp.eq.s32.totalorder %s28, 0
    %p186 = por %p184, %p185
    %s188 = sadd.s32 %s187, 1
    %p191 = scmp.eq.s32.totalorder %s22, 1
    %p192 = scmp.ne.s32.totalorder %s187, %s189
    %p193 = scmp.eq.s32.totalorder %s22, 0
    %p194 = por %p192, %p193
    %p195 = scmp.ne.s32.totalorder %s187, %s189
    %p196 = scmp.eq.s32.totalorder %s27, 1
    %p197 = por %p195, %p196
    %p198 = scmp.ne.s32.totalorder %s189, %s190
    %p199 = scmp.eq.s32.totalorder %s27, 0
    %p200 = por %p198, %p199
    %p201 = scmp.ne.s32.totalorder %s189, %s190
    %p202 = scmp.eq.s32.totalorder %s28, 1
    %p203 = por %p201, %p202
    %p205 = scmp.ne.s32.totalorder %s190, %s204
    %p206 = scmp.eq.s32.totalorder %s28, 0
    %p207 = por %p205, %p206
    %s209 = sadd.s32 %s208, 1
    %p212 = scmp.eq.s32.totalorder %s22, 1
    %p213 = scmp.ne.s32.totalorder %s208, %s210
    %p214 = scmp.eq.s32.totalorder %s22, 0
    %p215 = por %p213, %p214
    %p216 = scmp.ne.s32.totalorder %s208, %s210
    %p217 = scmp.eq.s32.totalorder %s27, 1
    %p218 = por %p216, %p217
    %p219 = scmp.ne.s32.totalorder %s210, %s211
    %p220 = scmp.eq.s32.totalorder %s27, 0
    %p221 = por %p219, %p220
    %p222 = scmp.ne.s32.totalorder %s210, %s211
    %p223 = scmp.eq.s32.totalorder %s28, 1
    %p224 = por %p222, %p223
    %p226 = scmp.ne.s32.totalorder %s211, %s225
    %p227 = scmp.eq.s32.totalorder %s28, 0
    %p228 = por %p226, %p227
    %s230 = sadd.s32 %s229, 1
    %p233 = scmp.eq.s32.totalorder %s22, 1
    %p234 = scmp.ne.s32.totalorder %s229, %s231
    %p235 = scmp.eq.s32.totalorder %s22, 0
    %p236 = por %p234, %p235
    %p237 = scmp.ne.s32.totalorder %s229, %s231
    %p238 = scmp.eq.s32.totalorder %s27, 1
    %p239 = por %p237, %p238
    %p240 = scmp.ne.s32.totalorder %s231, %s232
    %p241 = scmp.eq.s32.totalorder %s27, 0
    %p242 = por %p240, %p241
    %p243 = scmp.ne.s32.totalorder %s231, %s232
    %p244 = scmp.eq.s32.totalorder %s28, 1
    %p245 = por %p243, %p244
    %p247 = scmp.ne.s32.totalorder %s232, %s246
    %p248 = scmp.eq.s32.totalorder %s28, 0
    %p249 = por %p247, %p248
    %s251 = sadd.s32 %s250, 1
    %p254 = scmp.eq.s32.totalorder %s22, 1
    %p255 = scmp.ne.s32.totalorder %s250, %s252
    %p256 = scmp.eq.s32.totalorder %s22, 0
    %p257 = por %p255, %p256
    %p258 = scmp.ne.s32.totalorder %s250, %s252
    %p259 = scmp.eq.s32.totalorder %s27, 1
    %p260 = por %p258, %p259
    %p261 = scmp.ne.s32.totalorder %s252, %s253
    %p262 = scmp.eq.s32.totalorder %s27, 0
    %p263 = por %p261, %p262
    %p264 = scmp.ne.s32.totalorder %s252, %s253
    %p265 = scmp.eq.s32.totalorder %s28, 1
    %p266 = por %p264, %p265
    %p268 = scmp.ne.s32.totalorder %s253, %s267
    %p269 = scmp.eq.s32.totalorder %s28, 0
    %p270 = por %p268, %p269
    %s272 = sadd.s32 %s271, 1
    %p275 = scmp.eq.s32.totalorder %s22, 1
    %p276 = scmp.ne.s32.totalorder %s271, %s273
    %p277 = scmp.eq.s32.totalorder %s22, 0
    %p278 = por %p276, %p277
    %p279 = scmp.ne.s32.totalorder %s271, %s273
    %p280 = scmp.eq.s32.totalorder %s27, 1
    %p281 = por %p279, %p280
    %p282 = scmp.ne.s32.totalorder %s273, %s274
    %p283 = scmp.eq.s32.totalorder %s27, 0
    %p284 = por %p282, %p283
    %p285 = scmp.ne.s32.totalorder %s273, %s274
    %p286 = scmp.eq.s32.totalorder %s28, 1
    %p287 = por %p285, %p286
    %p289 = scmp.ne.s32.totalorder %s274, %s288
    %p290 = scmp.eq.s32.totalorder %s28, 0
    %p291 = por %p289, %p290
    %s293 = sadd.s32 %s292, 1
    %p296 = scmp.eq.s32.totalorder %s22, 1
    %p297 = scmp.ne.s32.totalorder %s292, %s294
    %p298 = scmp.eq.s32.totalorder %s22, 0
    %p299 = por %p297, %p298
    %p300 = scmp.ne.s32.totalorder %s292, %s294
    %p301 = scmp.eq.s32.totalorder %s27, 1
    %p302 = por %p300, %p301
    %p303 = scmp.ne.s32.totalorder %s294, %s295
    %p304 = scmp.eq.s32.totalorder %s27, 0
    %p305 = por %p303, %p304
    %p306 = scmp.ne.s32.totalorder %s294, %s295
    %p307 = scmp.eq.s32.totalorder %s28, 1
    %p308 = por %p306, %p307
    %p310 = scmp.ne.s32.totalorder %s295, %s309
    %p311 = scmp.eq.s32.totalorder %s28, 0
    %p312 = por %p310, %p311
    %s314 = sadd.s32 %s313, 1
    %p317 = scmp.eq.s32.totalorder %s22, 1
    %p318 = scmp.ne.s32.totalorder %s313, %s315
    %p319 = scmp.eq.s32.totalorder %s22, 0
    %p320 = por %p318, %p319
    %p321 = scmp.ne.s32.totalorder %s313, %s315
    %p322 = scmp.eq.s32.totalorder %s27, 1
    %p323 = por %p321, %p322
    %p324 = scmp.ne.s32.totalorder %s315, %s316
    %p325 = scmp.eq.s32.totalorder %s27, 0
    %p326 = por %p324, %p325
    %p327 = scmp.ne.s32.totalorder %s315, %s316
    %p328 = scmp.eq.s32.totalorder %s28, 1
    %p329 = por %p327, %p328
    %p331 = scmp.ne.s32.totalorder %s316, %s330
    %p332 = scmp.eq.s32.totalorder %s28, 0
    %p333 = por %p331, %p332
    %s335 = sadd.s32 %s334, 1
    %p338 = scmp.eq.s32.totalorder %s22, 1
    %p339 = scmp.ne.s32.totalorder %s334, %s336
    %p340 = scmp.eq.s32.totalorder %s22, 0
    %p341 = por %p339, %p340
    %p342 = scmp.ne.s32.totalorder %s334, %s336
    %p343 = scmp.eq.s32.totalorder %s27, 1
    %p344 = por %p342, %p343
    %p345 = scmp.ne.s32.totalorder %s336, %s337
    %p346 = scmp.eq.s32.totalorder %s27, 0
    %p347 = por %p345, %p346
    %p348 = scmp.ne.s32.totalorder %s336, %s337
    %p349 = scmp.eq.s32.totalorder %s28, 1
    %p350 = por %p348, %p349
    %p352 = scmp.ne.s32.totalorder %s337, %s351
    %p353 = scmp.eq.s32.totalorder %s28, 0
    %p354 = por %p352, %p353
    %s356 = sadd.s32 %s355, 1
    %p359 = scmp.eq.s32.totalorder %s22, 1
    %p360 = scmp.ne.s32.totalorder %s355, %s357
    %p361 = scmp.eq.s32.totalorder %s22, 0
    %p362 = por %p360, %p361
    %p363 = scmp.ne.s32.totalorder %s355, %s357
    %p364 = scmp.eq.s32.totalorder %s27, 1
    %p365 = por %p363, %p364
    %p366 = scmp.ne.s32.totalorder %s357, %s358
    %p367 = scmp.eq.s32.totalorder %s27, 0
    %p368 = por %p366, %p367
    %p369 = scmp.ne.s32.totalorder %s357, %s358
    %p370 = scmp.eq.s32.totalorder %s28, 1
    %p371 = por %p369, %p370
    %p373 = scmp.ne.s32.totalorder %s358, %s372
    %p374 = scmp.eq.s32.totalorder %s28, 0
    %p375 = por %p373, %p374
    %s376 = ssub.s32 %s22, %s29
    %p377 = scmp.eq.s32.totalorder %s376, 0
    %s379 = sadd.s32 %s378, 1
    %s380 = scalar_select %p377, %s378, %s379
    %p383 = pneg %p377
    %p384 = scmp.eq.s32.totalorder %s22, 1
    %p385 = por %p383, %p384
    %p386 = scmp.ne.s32.totalorder %s378, %s381
    %p387 = scmp.eq.s32.totalorder %s22, 0
    %p388 = por %p386, %p387
    %p389 = scmp.ne.s32.totalorder %s378, %s381
    %p390 = scmp.eq.s32.totalorder %s27, 1
    %p391 = por %p389, %p390
    %p392 = scmp.ne.s32.totalorder %s381, %s382
    %p393 = scmp.eq.s32.totalorder %s27, 0
    %p394 = por %p392, %p393
    %p395 = scmp.ne.s32.totalorder %s381, %s382
    %p396 = scmp.eq.s32.totalorder %s28, 1
    %p397 = por %p395, %p396
    %p399 = scmp.ne.s32.totalorder %s382, %s398
    %p400 = scmp.eq.s32.totalorder %s28, 0
    %p401 = por %p399, %p400
    %p402 = scmp.le.s32.totalorder 1, %s22
    %p403 = scmp.lt.s32.totalorder %s22, 3
    %p404 = pnand %p402, %p403
    %p405 = pneg %p404
    // Predicated region
    $region9: #{midblock_forward.3} parent=5 // pred_check
      _
    $region10: #{midblock_forward.3} parent=5 // pred_check_branch
      %407 = sbr.rel (%p404) target = $region12
    $region11: #{midblock_forward.3} parent=5 // pred_region
      %s408 = ssub.s32 %s22, 1
      // Predicated region
      $region13: #{midblock_forward.3} parent=11 // pred_check
        %p409 = pneg %p95
      $region14: #{midblock_forward.3} parent=11 // pred_check_branch
        %411 = sbr.rel (%p409) target = $region16
      $region15: #{midblock_forward.3} parent=11 // pred_region
        _
      $region16: #{midblock_forward.3} parent=11 // pred_fallthru
        _
      // Predicated region
      $region17: #{midblock_forward.3} parent=11 // pred_check
        %p412 = pneg %p116
      $region18: #{midblock_forward.3} parent=11 // pred_check_branch
        %414 = sbr.rel (%p412) target = $region20
      $region19: #{midblock_forward.3} parent=11 // pred_region
        _
      $region20: #{midblock_forward.3} parent=11 // pred_fallthru
        _
      // Predicated region
      $region21: #{midblock_forward.3} parent=11 // pred_check
        %p415 = pneg %p137
      $region22: #{midblock_forward.3} parent=11 // pred_check_branch
        %417 = sbr.rel (%p415) target = $region24
      $region23: #{midblock_forward.3} parent=11 // pred_region
        _
      $region24: #{midblock_forward.3} parent=11 // pred_fallthru
        _
      // Predicated region
      $region25: #{midblock_forward.3} parent=11 // pred_check
        %p418 = pneg %p158
      $region26: #{midblock_forward.3} parent=11 // pred_check_branch
        %420 = sbr.rel (%p418) target = $region28
      $region27: #{midblock_forward.3} parent=11 // pred_region
        _
      $region28: #{midblock_forward.3} parent=11 // pred_fallthru
        _
      // Predicated region
      $region29: #{midblock_forward.3} parent=11 // pred_check
        %p421 = pneg %p179
      $region30: #{midblock_forward.3} parent=11 // pred_check_branch
        %423 = sbr.rel (%p421) target = $region32
      $region31: #{midblock_forward.3} parent=11 // pred_region
        _
      $region32: #{midblock_forward.3} parent=11 // pred_fallthru
        _
      // Predicated region
      $region33: #{midblock_forward.3} parent=11 // pred_check
        %p424 = pneg %p200
      $region34: #{midblock_forward.3} parent=11 // pred_check_branch
        %426 = sbr.rel (%p424) target = $region36
      $region35: #{midblock_forward.3} parent=11 // pred_region
        _
      $region36: #{midblock_forward.3} parent=11 // pred_fallthru
        _
      // Predicated region
      $region37: #{midblock_forward.3} parent=11 // pred_check
        %p427 = pneg %p221
      $region38: #{midblock_forward.3} parent=11 // pred_check_branch
        %429 = sbr.rel (%p427) target = $region40
      $region39: #{midblock_forward.3} parent=11 // pred_region
        _
      $region40: #{midblock_forward.3} parent=11 // pred_fallthru
        _
      // Predicated region
      $region41: #{midblock_forward.3} parent=11 // pred_check
        %p430 = pneg %p242
      $region42: #{midblock_forward.3} parent=11 // pred_check_branch
        %432 = sbr.rel (%p430) target = $region44
      $region43: #{midblock_forward.3} parent=11 // pred_region
        _
      $region44: #{midblock_forward.3} parent=11 // pred_fallthru
        _
      // Predicated region
      $region45: #{midblock_forward.3} parent=11 // pred_check
        %p433 = pneg %p263
      $region46: #{midblock_forward.3} parent=11 // pred_check_branch
        %435 = sbr.rel (%p433) target = $region48
      $region47: #{midblock_forward.3} parent=11 // pred_region
        _
      $region48: #{midblock_forward.3} parent=11 // pred_fallthru
        _
      // Predicated region
      $region49: #{midblock_forward.3} parent=11 // pred_check
        %p436 = pneg %p284
      $region50: #{midblock_forward.3} parent=11 // pred_check_branch
        %438 = sbr.rel (%p436) target = $region52
      $region51: #{midblock_forward.3} parent=11 // pred_region
        _
      $region52: #{midblock_forward.3} parent=11 // pred_fallthru
        _
      // Predicated region
      $region53: #{midblock_forward.3} parent=11 // pred_check
        %p439 = pneg %p305
      $region54: #{midblock_forward.3} parent=11 // pred_check_branch
        %441 = sbr.rel (%p439) target = $region56
      $region55: #{midblock_forward.3} parent=11 // pred_region
        _
      $region56: #{midblock_forward.3} parent=11 // pred_fallthru
        _
      // Predicated region
      $region57: #{midblock_forward.3} parent=11 // pred_check
        %p442 = pneg %p326
      $region58: #{midblock_forward.3} parent=11 // pred_check_branch
        %444 = sbr.rel (%p442) target = $region60
      $region59: #{midblock_forward.3} parent=11 // pred_region
        _
      $region60: #{midblock_forward.3} parent=11 // pred_fallthru
        _
      // Predicated region
      $region61: #{midblock_forward.3} parent=11 // pred_check
        %p445 = pneg %p347
      $region62: #{midblock_forward.3} parent=11 // pred_check_branch
        %447 = sbr.rel (%p445) target = $region64
      $region63: #{midblock_forward.3} parent=11 // pred_region
        _
      $region64: #{midblock_forward.3} parent=11 // pred_fallthru
        _
      // Predicated region
      $region65: #{midblock_forward.3} parent=11 // pred_check
        %p448 = pneg %p368
      $region66: #{midblock_forward.3} parent=11 // pred_check_branch
        %450 = sbr.rel (%p448) target = $region68
      $region67: #{midblock_forward.3} parent=11 // pred_region
        _
      $region68: #{midblock_forward.3} parent=11 // pred_fallthru
        _
    $region12: #{midblock_forward.3} parent=5 // pred_fallthru
      _
    %p451 = scmp.lt.s32.totalorder %s22, 2
    // Predicated region
    $region69: #{midblock_forward.3} parent=5 // pred_check
      %p452 = pneg %p451
    $region70: #{midblock_forward.3} parent=5 // pred_check_branch
      %454 = sbr.rel (%p452) target = $region72
    $region71: #{midblock_forward.3} parent=5 // pred_region
      // Predicated region
      $region73: #{midblock_forward.3} parent=71 // pred_check
        %p455 = pneg %p42
      $region74: #{midblock_forward.3} parent=71 // pred_check_branch
        %457 = sbr.rel (%p455) target = $region76
      $region75: #{midblock_forward.3} parent=71 // pred_region
        %p458 = scmp.lt.s32.totalorder %s22, 1
        %s459 = scalar_select %p458, %s22, 1
        %s460 = smul.addr %s459, 8
        %s461 = smul.addr %s460, 8
        %s462 = scalar_lea.vmem %s0, %s461
      $region76: #{midblock_forward.3} parent=71 // pred_fallthru
        _
      // Predicated region
      $region77: #{midblock_forward.3} parent=71 // pred_check
        %p463 = pneg %p68
      $region78: #{midblock_forward.3} parent=71 // pred_check_branch
        %465 = sbr.rel (%p463) target = $region80
      $region79: #{midblock_forward.3} parent=71 // pred_region
        %p466 = scmp.lt.s32.totalorder %s22, 1
        %s467 = scalar_select %p466, %s22, 1
        %s468 = scalar_lea.vmem %s1, %s467
      $region80: #{midblock_forward.3} parent=71 // pred_fallthru
        _
    $region72: #{midblock_forward.3} parent=5 // pred_fallthru
      _
    %p469 = scmp.le.s32.totalorder 1, %s22
    %p470 = scmp.lt.s32.totalorder %s22, 3
    %p471 = pnand %p469, %p470
    %p472 = pneg %p471
    // Predicated region
    $region81: #{midblock_forward.3} parent=5 // pred_check
      _
    $region82: #{midblock_forward.3} parent=5 // pred_check_branch
      %474 = sbr.rel (%p471) target = $region84
    $region83: #{midblock_forward.3} parent=5 // pred_region
      %s475 = ssub.s32 %s22, 1
      %p476 = scmp.lt.s32.totalorder %s27, 1
      %s477 = scalar_select %p476, %s27, 1
      %s478 = smul.addr %s477, 8
      %s479 = smul.addr %s478, 8
      %s480 = scalar_lea.vmem %s0, %s479
      %p481 = pneg %p48
      %p482 = pneg %p45
      %p483 = scmp.lt.s32.totalorder %s27, 1
      %s484 = scalar_select %p483, %s27, 1
      %s485 = scalar_lea.vmem %s1, %s484
      %p486 = pneg %p74
      %p487 = pneg %p71
      %p488 = pneg %p95
      %p489 = pneg %p92
      %p490 = pneg %p116
      %p491 = pneg %p113
      %p492 = pneg %p137
      %p493 = pneg %p134
      %p494 = pneg %p158
      %p495 = pneg %p155
      %p496 = pneg %p179
      %p497 = pneg %p176
      %p498 = pneg %p200
      %p499 = pneg %p197
      %p500 = pneg %p221
      %p501 = pneg %p218
      %p502 = pneg %p242
      %p503 = pneg %p239
      %p504 = pneg %p263
      %p505 = pneg %p260
      %p506 = pneg %p284
      %p507 = pneg %p281
      %p508 = pneg %p305
      %p509 = pneg %p302
      %p510 = pneg %p326
      %p511 = pneg %p323
      %p512 = pneg %p347
      %p513 = pneg %p344
      %p514 = pneg %p368
      %p515 = pneg %p365
      %p516 = pneg %p394
      %p517 = pneg %p391
      %p518 = scmp.lt.s32.totalorder %s27, 1
      %s519 = scalar_select %p518, %s27, 1
      %s520 = smul.addr %s519, 8
      %s521 = smul.addr %s520, 8
      %s522 = scalar_lea.vmem %s16, %s521
      %p523 = scmp.lt.s32.totalorder %s27, 1
      %s524 = scalar_select %p523, %s27, 1
      %s525 = smul.addr %s524, 8
      %s526 = smul.addr %s525, 8
      %s527 = scalar_lea.vmem %s0, %s526
      %p528 = scmp.lt.s32.totalorder %s27, 1
      %s529 = scalar_select %p528, %s27, 1
      %s530 = scalar_lea.vmem %s1, %s529
      %p531 = scmp.lt.s32.totalorder %s27, 1
      %s532 = scalar_select %p531, %s27, 1
      %s533 = smul.addr %s532, 8
      %s534 = smul.addr %s533, 8
      %s535 = scalar_lea.vmem %s16, %s534
      %v537 = vld [vmem:[%s527] sm:$0xff]
      %v538 = vld [vmem:[%s527 + $0x8] sm:$0xff]
      %v539 = vld [vmem:[%s527 + $0x10] sm:$0xff]
      %v540 = vld [vmem:[%s527 + $0x18] sm:$0xff]
      %v541 = vld [vmem:[%s527 + $0x20] sm:$0xff]
      %v542 = vld [vmem:[%s527 + $0x28] sm:$0xff]
      %v543 = vld [vmem:[%s527 + $0x30] sm:$0xff]
      %v544 = vld [vmem:[%s527 + $0x38] sm:$0xff]
      %v545 = vld [vmem:[%s2] sm:$0x1]
      %v546 = vld [vmem:[%s3] sm:$0x1]
      %v547 = vld [vmem:[%s4] sm:$0xff]
      %v548 = vld [vmem:[%s4 + $0x8] sm:$0xff]
      %vm549 = vcmask 130048
      %v550 = vsel %vm549, %v537, 0.0
      %v551 = vsel %vm549, %v538, 0.0
      %v552 = vadd.f32 %v550, %v551
      %v553 = vsel %vm549, %v539, 0.0
      %v554 = vadd.f32 %v552, %v553
      %v555 = vsel %vm549, %v540, 0.0
      %v556 = vadd.f32 %v554, %v555
      %v557 = vsel %vm549, %v541, 0.0
      %v558 = vadd.f32 %v556, %v557
      %v559 = vsel %vm549, %v542, 0.0
      %v560 = vadd.f32 %v558, %v559
      %v561 = vsel %vm549, %v543, 0.0
      %v562 = vadd.f32 %v560, %v561
      %v563 = vsel %vm549, %v544, 0.0
      %v564 = vadd.f32 %v562, %v563
      %v565 = vrot.slane %v564, 4
      %v566 = vadd.f32 %v564, %v565
      %v567 = vrot.slane %v566, 2
      %v568 = vadd.f32 %v566, %v567
      %v569 = vrot.slane %v568, 1
      %v570 = vadd.f32 %v568, %v569
      %v572 = vsel %vm549, %v570, 0
      %574 = vmatpush.msra.mxu0 0.0
      %575 = vmatpush.msra.mxu0 0.0
      %576 = vmatpush.msra.mxu0 0.0
      %577 = vmatpush.msra.mxu0 0.0
      %578 = vmatpush.msra.mxu0 0.0
      %579 = vmatpush.msra.mxu0 0.0
      %580 = vmatpush.msra.mxu0 0.0
      %581 = vmatpush.msra.mxu0 0.0
      %582 = vmatpush.msra.mxu0 0.0
      %583 = vmatpush.msra.mxu0 0.0
      %584 = vmatpush.msra.mxu0 0.0
      %585 = vmatpush.msra.mxu0 0.0
      %586 = vmatpush.msra.mxu0 0.0
      %587 = vmatpush.msra.mxu0 0.0
      %588 = vmatpush.msra.mxu0 %v548
      %589 = vmatpush.msra.mxu0 %v547
      %590 = vmatmul.f32.gmra.mxu0 %v572
      %v591 = vpop.f32.mrf.mxu0
      %v592 = vadd.f32 0.0, %v591
      %593 = vdwg.mxu0
      %v594 = vrcp.pop 128.0
      %v595 = vmul.f32 128.0, %v594
      %v596 = vsub.f32 1.0, %v595
      %v597 = vmul.f32 %v594, %v596
      %v598 = vadd.f32 %v594, %v597
      %vm599 = vweird.f32 %v594
      %v600 = vsel %vm599, %v594, %v598
      %v601 = vmul.f32 %v592, %v600
      %vm602 = vcmask 64512
      %v604 = vsel %vm602, %v601, 0
      %v607 = vsel %vm602, %v547, 0
      %v610 = vsel %vm602, %v548, 0
      %612 = vmatpush.xpose.msra.mxu0 0.0
      %613 = vmatpush.xpose.msra.mxu0 0.0
      %614 = vmatpush.xpose.msra.mxu0 0.0
      %615 = vmatpush.xpose.msra.mxu0 0.0
      %616 = vmatpush.xpose.msra.mxu0 0.0
      %617 = vmatpush.xpose.msra.mxu0 0.0
      %618 = vmatpush.xpose.msra.mxu0 0.0
      %619 = vmatpush.xpose.msra.mxu0 0.0
      %620 = vmatpush.xpose.msra.mxu0 0.0
      %621 = vmatpush.xpose.msra.mxu0 0.0
      %622 = vmatpush.xpose.msra.mxu0 0.0
      %623 = vmatpush.xpose.msra.mxu0 0.0
      %624 = vmatpush.xpose.msra.mxu0 0.0
      %625 = vmatpush.xpose.msra.mxu0 0.0
      %626 = vmatpush.xpose.msra.mxu0 %v610
      %627 = vmatpush.xpose.msra.mxu0 %v607
      %628 = vmatmul.f32.gmra.mxu0 %v604
      %v629 = vpop.f32.mrf.mxu0
      %v630 = vadd.f32 0.0, %v629
      %631 = vdwg.mxu0
      %v632 = vperm.slane %v630, 0
      %v633 = vsub.f32 %v537, %v632
      %v634 = vsub.f32 %v538, %v632
      %v635 = vsub.f32 %v539, %v632
      %v636 = vsub.f32 %v540, %v632
      %v637 = vsub.f32 %v541, %v632
      %v638 = vsub.f32 %v542, %v632
      %v639 = vsub.f32 %v543, %v632
      %v640 = vsub.f32 %v544, %v632
      %v641 = vmul.f32 %v633, %v633
      %v642 = vmul.f32 %v634, %v634
      %v643 = vmul.f32 %v635, %v635
      %v644 = vmul.f32 %v636, %v636
      %v645 = vmul.f32 %v637, %v637
      %v646 = vmul.f32 %v638, %v638
      %v647 = vmul.f32 %v639, %v639
      %v648 = vmul.f32 %v640, %v640
      %v649 = vsel %vm549, %v641, 0.0
      %v650 = vsel %vm549, %v642, 0.0
      %v651 = vadd.f32 %v649, %v650
      %v652 = vsel %vm549, %v643, 0.0
      %v653 = vadd.f32 %v651, %v652
      %v654 = vsel %vm549, %v644, 0.0
      %v655 = vadd.f32 %v653, %v654
      %v656 = vsel %vm549, %v645, 0.0
      %v657 = vadd.f32 %v655, %v656
      %v658 = vsel %vm549, %v646, 0.0
      %v659 = vadd.f32 %v657, %v658
      %v660 = vsel %vm549, %v647, 0.0
      %v661 = vadd.f32 %v659, %v660
      %v662 = vsel %vm549, %v648, 0.0
      %v663 = vadd.f32 %v661, %v662
      %v664 = vrot.slane %v663, 4
      %v665 = vadd.f32 %v663, %v664
      %v666 = vrot.slane %v665, 2
      %v667 = vadd.f32 %v665, %v666
      %v668 = vrot.slane %v667, 1
      %v669 = vadd.f32 %v667, %v668
      %v671 = vsel %vm549, %v669, 0
      %673 = vmatpush.msra.mxu0 0.0
      %674 = vmatpush.msra.mxu0 0.0
      %675 = vmatpush.msra.mxu0 0.0
      %676 = vmatpush.msra.mxu0 0.0
      %677 = vmatpush.msra.mxu0 0.0
      %678 = vmatpush.msra.mxu0 0.0
      %679 = vmatpush.msra.mxu0 0.0
      %680 = vmatpush.msra.mxu0 0.0
      %681 = vmatpush.msra.mxu0 0.0
      %682 = vmatpush.msra.mxu0 0.0
      %683 = vmatpush.msra.mxu0 0.0
      %684 = vmatpush.msra.mxu0 0.0
      %685 = vmatpush.msra.mxu0 0.0
      %686 = vmatpush.msra.mxu0 0.0
      %687 = vmatpush.msra.mxu0 %v548
      %688 = vmatpush.msra.mxu0 %v547
      %689 = vmatmul.f32.gmra.mxu0 %v671
      %v690 = vpop.f32.mrf.mxu0
      %v691 = vadd.f32 0.0, %v690
      %692 = vdwg.mxu0
      %v693 = vmul.f32 %v691, %v600
      %v695 = vsel %vm602, %v693, 0
      %697 = vmatpush.xpose.msra.mxu0 0.0
      %698 = vmatpush.xpose.msra.mxu0 0.0
      %699 = vmatpush.xpose.msra.mxu0 0.0
      %700 = vmatpush.xpose.msra.mxu0 0.0
      %701 = vmatpush.xpose.msra.mxu0 0.0
      %702 = vmatpush.xpose.msra.mxu0 0.0
      %703 = vmatpush.xpose.msra.mxu0 0.0
      %704 = vmatpush.xpose.msra.mxu0 0.0
      %705 = vmatpush.xpose.msra.mxu0 0.0
      %706 = vmatpush.xpose.msra.mxu0 0.0
      %707 = vmatpush.xpose.msra.mxu0 0.0
      %708 = vmatpush.xpose.msra.mxu0 0.0
      %709 = vmatpush.xpose.msra.mxu0 0.0
      %710 = vmatpush.xpose.msra.mxu0 0.0
      %711 = vmatpush.xpose.msra.mxu0 %v610
      %712 = vmatpush.xpose.msra.mxu0 %v607
      %713 = vmatmul.f32.gmra.mxu0 %v695
      %v714 = vpop.f32.mrf.mxu0
      %v715 = vadd.f32 1e-05, %v714
      %716 = vdwg.mxu0
      %v717 = vrsqrt.pop %v715
      %v718 = vmul.f32 %v717, %v715
      %v719 = vmul.f32 %v718, %v717
      %v720 = vmul.f32 0.5, %v719
      %v721 = vsub.f32 1.5, %v720
      %v722 = vmul.f32 %v717, %v721
      %vm723 = vweird.f32 %v715
      %vm724 = vweird.f32 %v717
      %vm725 = vmor %vm723, %vm724
      %v726 = vsel %vm725, %v717, %v722
      %v727 = vperm.slane %v726, 0
      %v728 = vmul.f32 %v633, %v727
      %v729 = vmul.f32 %v634, %v727
      %v730 = vmul.f32 %v635, %v727
      %v731 = vmul.f32 %v636, %v727
      %v732 = vmul.f32 %v637, %v727
      %v733 = vmul.f32 %v638, %v727
      %v734 = vmul.f32 %v639, %v727
      %v735 = vmul.f32 %v640, %v727
      %v737 = vperm.slane %v545, 0
      %v739 = vmul.f32 %v728, %v737
      %v740 = vmul.f32 %v729, %v737
      %v741 = vmul.f32 %v730, %v737
      %v742 = vmul.f32 %v731, %v737
      %v743 = vmul.f32 %v732, %v737
      %v744 = vmul.f32 %v733, %v737
      %v745 = vmul.f32 %v734, %v737
      %v746 = vmul.f32 %v735, %v737
      %v748 = vperm.slane %v546, 0
      %v750 = vadd.f32 %v739, %v748
      %v751 = vadd.f32 %v740, %v748
      %v752 = vadd.f32 %v741, %v748
      %v753 = vadd.f32 %v742, %v748
      %v754 = vadd.f32 %v743, %v748
      %v755 = vadd.f32 %v744, %v748
      %v756 = vadd.f32 %v745, %v748
      %v757 = vadd.f32 %v746, %v748
      %v758 = vxor.u32 %v750, 2147483648
      %v759 = vxor.u32 %v751, 2147483648
      %v760 = vxor.u32 %v752, 2147483648
      %v761 = vxor.u32 %v753, 2147483648
      %v762 = vxor.u32 %v754, 2147483648
      %v763 = vxor.u32 %v755, 2147483648
      %v764 = vxor.u32 %v756, 2147483648
      %v765 = vxor.u32 %v757, 2147483648
      %v766 = vmul.f32 %v758, 1.442695
      %v767 = vpow.pop %v766
      %v768 = vmul.f32 %v759, 1.442695
      %v769 = vpow.pop %v768
      %v770 = vmul.f32 %v760, 1.442695
      %v771 = vpow.pop %v770
      %v772 = vmul.f32 %v761, 1.442695
      %v773 = vpow.pop %v772
      %v774 = vmul.f32 %v762, 1.442695
      %v775 = vpow.pop %v774
      %v776 = vmul.f32 %v763, 1.442695
      %v777 = vpow.pop %v776
      %v778 = vmul.f32 %v764, 1.442695
      %v779 = vpow.pop %v778
      %v780 = vmul.f32 %v765, 1.442695
      %v781 = vpow.pop %v780
      %v782 = vadd.f32 %v767, 1.0
      %v783 = vadd.f32 %v769, 1.0
      %v784 = vadd.f32 %v771, 1.0
      %v785 = vadd.f32 %v773, 1.0
      %v786 = vadd.f32 %v775, 1.0
      %v787 = vadd.f32 %v777, 1.0
      %v788 = vadd.f32 %v779, 1.0
      %v789 = vadd.f32 %v781, 1.0
      %v790 = vrcp.pop %v782
      %v791 = vmul.f32 %v782, %v790
      %v792 = vsub.f32 1.0, %v791
      %v793 = vmul.f32 %v790, %v792
      %v794 = vadd.f32 %v790, %v793
      %vm795 = vweird.f32 %v782
      %vm796 = vweird.f32 %v790
      %vm797 = vmor %vm795, %vm796
      %v798 = vsel %vm797, %v790, %v794
      %v799 = vand.u32 2147483647, %v782
      %vm800 = vcmp.eq.f32.partialorder %v799, 8.507059e+37
      %v801 = vand.u32 %v782, 2147483648
      %v802 = vor.u32 1.1754944e-38, %v801
      %v803 = vsel %vm800, %v802, %v798
      %v804 = vmul.f32 1.0, %v803
      %v805 = vrcp.pop %v783
      %v806 = vmul.f32 %v783, %v805
      %v807 = vsub.f32 1.0, %v806
      %v808 = vmul.f32 %v805, %v807
      %v809 = vadd.f32 %v805, %v808
      %vm810 = vweird.f32 %v783
      %vm811 = vweird.f32 %v805
      %vm812 = vmor %vm810, %vm811
      %v813 = vsel %vm812, %v805, %v809
      %v814 = vand.u32 2147483647, %v783
      %vm815 = vcmp.eq.f32.partialorder %v814, 8.507059e+37
      %v816 = vand.u32 %v783, 2147483648
      %v817 = vor.u32 1.1754944e-38, %v816
      %v818 = vsel %vm815, %v817, %v813
      %v819 = vmul.f32 1.0, %v818
      %v820 = vrcp.pop %v784
      %v821 = vmul.f32 %v784, %v820
      %v822 = vsub.f32 1.0, %v821
      %v823 = vmul.f32 %v820, %v822
      %v824 = vadd.f32 %v820, %v823
      %vm825 = vweird.f32 %v784
      %vm826 = vweird.f32 %v820
      %vm827 = vmor %vm825, %vm826
      %v828 = vsel %vm827, %v820, %v824
      %v829 = vand.u32 2147483647, %v784
      %vm830 = vcmp.eq.f32.partialorder %v829, 8.507059e+37
      %v831 = vand.u32 %v784, 2147483648
      %v832 = vor.u32 1.1754944e-38, %v831
      %v833 = vsel %vm830, %v832, %v828
      %v834 = vmul.f32 1.0, %v833
      %v835 = vrcp.pop %v785
      %v836 = vmul.f32 %v785, %v835
      %v837 = vsub.f32 1.0, %v836
      %v838 = vmul.f32 %v835, %v837
      %v839 = vadd.f32 %v835, %v838
      %vm840 = vweird.f32 %v785
      %vm841 = vweird.f32 %v835
      %vm842 = vmor %vm840, %vm841
      %v843 = vsel %vm842, %v835, %v839
      %v844 = vand.u32 2147483647, %v785
      %vm845 = vcmp.eq.f32.partialorder %v844, 8.507059e+37
      %v846 = vand.u32 %v785, 2147483648
      %v847 = vor.u32 1.1754944e-38, %v846
      %v848 = vsel %vm845, %v847, %v843
      %v849 = vmul.f32 1.0, %v848
      %v850 = vrcp.pop %v786
      %v851 = vmul.f32 %v786, %v850
      %v852 = vsub.f32 1.0, %v851
      %v853 = vmul.f32 %v850, %v852
      %v854 = vadd.f32 %v850, %v853
      %vm855 = vweird.f32 %v786
      %vm856 = vweird.f32 %v850
      %vm857 = vmor %vm855, %vm856
      %v858 = vsel %vm857, %v850, %v854
      %v859 = vand.u32 2147483647, %v786
      %vm860 = vcmp.eq.f32.partialorder %v859, 8.507059e+37
      %v861 = vand.u32 %v786, 2147483648
      %v862 = vor.u32 1.1754944e-38, %v861
      %v863 = vsel %vm860, %v862, %v858
      %v864 = vmul.f32 1.0, %v863
      %v865 = vrcp.pop %v787
      %v866 = vmul.f32 %v787, %v865
      %v867 = vsub.f32 1.0, %v866
      %v868 = vmul.f32 %v865, %v867
      %v869 = vadd.f32 %v865, %v868
      %vm870 = vweird.f32 %v787
      %vm871 = vweird.f32 %v865
      %vm872 = vmor %vm870, %vm871
      %v873 = vsel %vm872, %v865, %v869
      %v874 = vand.u32 2147483647, %v787
      %vm875 = vcmp.eq.f32.partialorder %v874, 8.507059e+37
      %v876 = vand.u32 %v787, 2147483648
      %v877 = vor.u32 1.1754944e-38, %v876
      %v878 = vsel %vm875, %v877, %v873
      %v879 = vmul.f32 1.0, %v878
      %v880 = vrcp.pop %v788
      %v881 = vmul.f32 %v788, %v880
      %v882 = vsub.f32 1.0, %v881
      %v883 = vmul.f32 %v880, %v882
      %v884 = vadd.f32 %v880, %v883
      %vm885 = vweird.f32 %v788
      %vm886 = vweird.f32 %v880
      %vm887 = vmor %vm885, %vm886
      %v888 = vsel %vm887, %v880, %v884
      %v889 = vand.u32 2147483647, %v788
      %vm890 = vcmp.eq.f32.partialorder %v889, 8.507059e+37
      %v891 = vand.u32 %v788, 2147483648
      %v892 = vor.u32 1.1754944e-38, %v891
      %v893 = vsel %vm890, %v892, %v888
      %v894 = vmul.f32 1.0, %v893
      %v895 = vrcp.pop %v789
      %v896 = vmul.f32 %v789, %v895
      %v897 = vsub.f32 1.0, %v896
      %v898 = vmul.f32 %v895, %v897
      %v899 = vadd.f32 %v895, %v898
      %vm900 = vweird.f32 %v789
      %vm901 = vweird.f32 %v895
      %vm902 = vmor %vm900, %vm901
      %v903 = vsel %vm902, %v895, %v899
      %v904 = vand.u32 2147483647, %v789
      %vm905 = vcmp.eq.f32.partialorder %v904, 8.507059e+37
      %v906 = vand.u32 %v789, 2147483648
      %v907 = vor.u32 1.1754944e-38, %v906
      %v908 = vsel %vm905, %v907, %v903
      %v909 = vmul.f32 1.0, %v908
      %v910 = vmul.f32 %v750, %v804
      %v911 = vmul.f32 %v751, %v819
      %v912 = vmul.f32 %v752, %v834
      %v913 = vmul.f32 %v753, %v849
      %v914 = vmul.f32 %v754, %v864
      %v915 = vmul.f32 %v755, %v879
      %v916 = vmul.f32 %v756, %v894
      %v917 = vmul.f32 %v757, %v909
      %v918 = vld [vmem:[%s530] sm:$0x1]
      %v919 = vxor.u32 %v918, 2147483648
      %v920 = vmul.f32 %v919, 1.442695
      %v921 = vpow.pop %v920
      %v922 = vadd.f32 %v921, 1.0
      %v923 = vrcp.pop %v922
      %v924 = vmul.f32 %v922, %v923
      %v925 = vsub.f32 1.0, %v924
      %v926 = vmul.f32 %v923, %v925
      %v927 = vadd.f32 %v923, %v926
      %vm928 = vweird.f32 %v922
      %vm929 = vweird.f32 %v923
      %vm930 = vmor %vm928, %vm929
      %v931 = vsel %vm930, %v923, %v927
      %v932 = vand.u32 2147483647, %v922
      %vm933 = vcmp.eq.f32.partialorder %v932, 8.507059e+37
      %v934 = vand.u32 %v922, 2147483648
      %v935 = vor.u32 1.1754944e-38, %v934
      %v936 = vsel %vm933, %v935, %v931
      %v937 = vmul.f32 1.0, %v936
      %v938 = vmul.f32 %v918, %v937
      %v939 = vpack.c.bf16 %v938, %v938
      %v940 = vld [vmem:[%s7] sm:$0xf]
      %v941 = vld [vmem:[%s7 + $0x4] sm:$0xf]
      %v942 = vld [vmem:[%s7 + $0x8] sm:$0xf]
      %v943 = vld [vmem:[%s7 + $0xc] sm:$0xf]
      %v944 = vld [vmem:[%s8] sm:$0x1]
      %v949 = vunpack.c.l.b16 %v940
      %v950 = vunpack.c.l.b16 %v941
      %v951 = vunpack.c.l.b16 %v942
      %v952 = vunpack.c.l.b16 %v943
      %v953 = vpack.c.b16 %v950, %v949
      %v954 = vpack.c.b16 %v952, %v951
      %vm957 = vcmask 261120
      %v959 = vsel %vm957, %v939, 0
      %961 = vmatpush.bf16.msra.mxu0 0
      %962 = vmatpush.bf16.msra.mxu0 0
      %963 = vmatpush.bf16.msra.mxu0 0
      %964 = vmatpush.bf16.msra.mxu0 0
      %965 = vmatpush.bf16.msra.mxu0 0
      %966 = vmatpush.bf16.msra.mxu0 0
      %967 = vmatpush.bf16.msra.mxu0 %v954
      %968 = vmatpush.bf16.msra.mxu0 %v953
      %969 = vmatmul.bf16.gmra.mxu0 %v959
      %v970 = vpop.f32.mrf.mxu0
      %v971 = vadd.f32 %v944, %v970
      %v972 = vpop.f32.mrf.mxu0
      %973 = vdwg.mxu0
      %v974 = vpack.c.bf16 %v910, %v910
      %v975 = vpack.c.bf16 %v911, %v911
      %v976 = vpack.c.bf16 %v912, %v912
      %v977 = vpack.c.bf16 %v913, %v913
      %v978 = vpack.c.bf16 %v914, %v914
      %v979 = vpack.c.bf16 %v915, %v915
      %v980 = vpack.c.bf16 %v916, %v916
      %v981 = vpack.c.bf16 %v917, %v917
      %v983 = vshrl.u32 0, 16
      %v985 = vrot.slane %v983, 7
      %v986 = vshll.u32 0, 16
      %v988 = vor.u32 %v985, %v986
      %v990 = vshrl.u32 %v974, 16
      %v992 = vrot.slane %v990, 7
      %v993 = vshll.u32 %v974, 16
      %v995 = vor.u32 %v992, %v993
      %v997 = vshrl.u32 %v975, 16
      %v999 = vrot.slane %v997, 7
      %v1000 = vshll.u32 %v975, 16
      %v1002 = vor.u32 %v999, %v1000
      %v1004 = vshrl.u32 %v976, 16
      %v1006 = vrot.slane %v1004, 7
      %v1007 = vshll.u32 %v976, 16
      %v1009 = vor.u32 %v1006, %v1007
      %v1011 = vshrl.u32 %v977, 16
      %v1013 = vrot.slane %v1011, 7
      %v1014 = vshll.u32 %v977, 16
      %v1016 = vor.u32 %v1013, %v1014
      %v1018 = vshrl.u32 %v978, 16
      %v1020 = vrot.slane %v1018, 7
      %v1021 = vshll.u32 %v978, 16
      %v1023 = vor.u32 %v1020, %v1021
      %v1025 = vshrl.u32 %v979, 16
      %v1027 = vrot.slane %v1025, 7
      %v1028 = vshll.u32 %v979, 16
      %v1030 = vor.u32 %v1027, %v1028
      %v1032 = vshrl.u32 %v980, 16
      %v1034 = vrot.slane %v1032, 7
      %v1035 = vshll.u32 %v980, 16
      %v1037 = vor.u32 %v1034, %v1035
      %v1039 = vshrl.u32 %v981, 16
      %v1041 = vrot.slane %v1039, 7
      %v1042 = vshll.u32 %v981, 16
      %v1044 = vor.u32 %v1041, %v1042
      %vm1054 = vcmask 1040384
      %vm1055 = vsmask.f32 256
      %vm1056 = vmand %vm1054, %vm1055
      %v1057 = vsel %vm1056, 0, %v988
      %v1058 = vsel %vm1056, 0, %v995
      %v1059 = vsel %vm1056, 0, %v1002
      %v1060 = vsel %vm1056, 0, %v1009
      %v1061 = vsel %vm1056, 0, %v1016
      %v1062 = vsel %vm1056, 0, %v1023
      %v1063 = vsel %vm1056, 0, %v1030
      %v1064 = vsel %vm1056, 0, %v1037
      %v1065 = vsel %vm1056, 0, %v1044
      %vm1066 = vcmask 1044480
      %vm1067 = vsmask.f32 4352
      %vm1068 = vmand %vm1066, %vm1067
      %v1069 = vsel %vm1068, %v1057, 0
      %v1070 = vsel %vm1068, %v1058, 0
      %v1071 = vsel %vm1068, %v1059, 0
      %v1072 = vsel %vm1068, %v1060, 0
      %v1073 = vsel %vm1068, %v1061, 0
      %v1074 = vsel %vm1068, %v1062, 0
      %v1075 = vsel %vm1068, %v1063, 0
      %v1076 = vsel %vm1068, %v1064, 0
      %v1077 = vsel %vm1068, %v1065, 0
      %v1078 = vld [vmem:[%s5] sm:$0xf]
      %v1079 = vld [vmem:[%s5 + $0x4] sm:$0xf]
      %v1088 = vunpack.c.l.b16 %v1069
      %v1089 = vunpack.c.h.b16 %v1069
      %v1090 = vunpack.c.l.b16 %v1070
      %v1091 = vunpack.c.h.b16 %v1070
      %v1092 = vunpack.c.l.b16 %v1071
      %v1093 = vunpack.c.h.b16 %v1071
      %v1094 = vunpack.c.l.b16 %v1072
      %v1095 = vunpack.c.h.b16 %v1072
      %v1096 = vunpack.c.l.b16 %v1073
      %v1097 = vunpack.c.h.b16 %v1073
      %v1098 = vunpack.c.l.b16 %v1074
      %v1099 = vunpack.c.h.b16 %v1074
      %v1100 = vunpack.c.l.b16 %v1075
      %v1101 = vunpack.c.h.b16 %v1075
      %v1102 = vunpack.c.l.b16 %v1076
      %v1103 = vunpack.c.h.b16 %v1076
      %v1104 = vpack.c.b16 %v1088, %v1088
      %v1105 = vpack.c.b16 %v1089, %v1089
      %v1106 = vpack.c.b16 %v1090, %v1090
      %v1107 = vpack.c.b16 %v1091, %v1091
      %v1108 = vpack.c.b16 %v1092, %v1092
      %v1109 = vpack.c.b16 %v1093, %v1093
      %v1110 = vpack.c.b16 %v1094, %v1094
      %v1111 = vpack.c.b16 %v1095, %v1095
      %v1112 = vpack.c.b16 %v1096, %v1096
      %v1113 = vpack.c.b16 %v1097, %v1097
      %v1114 = vpack.c.b16 %v1098, %v1098
      %v1115 = vpack.c.b16 %v1099, %v1099
      %v1116 = vpack.c.b16 %v1100, %v1100
      %v1117 = vpack.c.b16 %v1101, %v1101
      %v1118 = vpack.c.b16 %v1102, %v1102
      %v1119 = vpack.c.b16 %v1103, %v1103
      %vm1120 = vsmask.f32 3328
      %vm1121 = vsmask.f32 7440
      %vm1122 = vmor %vm1120, %vm1121
      %v1124 = vshrl.u32 %v1104, 16
      %v1126 = vrot.slane %v1124, 4
      %v1127 = vshll.u32 %v1104, 16
      %v1129 = vrot.slane %v1127, 5
      %v1130 = vor.u32 %v1126, %v1129
      %v1131 = vrot.slane %v1130, 4
      %v1133 = vshll.u32 %v1105, 16
      %v1135 = vrot.slane %v1133, 5
      %v1136 = vsel %vm1122, %v1131, %v1135
      %v1138 = vshrl.u32 %v1106, 16
      %v1140 = vrot.slane %v1138, 4
      %v1141 = vshll.u32 %v1106, 16
      %v1143 = vrot.slane %v1141, 5
      %v1144 = vor.u32 %v1140, %v1143
      %v1145 = vrot.slane %v1144, 4
      %v1147 = vshll.u32 %v1107, 16
      %v1149 = vrot.slane %v1147, 5
      %v1150 = vsel %vm1122, %v1145, %v1149
      %v1152 = vshrl.u32 %v1108, 16
      %v1154 = vrot.slane %v1152, 4
      %v1155 = vshll.u32 %v1108, 16
      %v1157 = vrot.slane %v1155, 5
      %v1158 = vor.u32 %v1154, %v1157
      %v1159 = vrot.slane %v1158, 4
      %v1161 = vshll.u32 %v1109, 16
      %v1163 = vrot.slane %v1161, 5
      %v1164 = vsel %vm1122, %v1159, %v1163
      %v1166 = vshrl.u32 %v1110, 16
      %v1168 = vrot.slane %v1166, 4
      %v1169 = vshll.u32 %v1110, 16
      %v1171 = vrot.slane %v1169, 5
      %v1172 = vor.u32 %v1168, %v1171
      %v1173 = vrot.slane %v1172, 4
      %v1175 = vshll.u32 %v1111, 16
      %v1177 = vrot.slane %v1175, 5
      %v1178 = vsel %vm1122, %v1173, %v1177
      %v1180 = vshrl.u32 %v1112, 16
      %v1182 = vrot.slane %v1180, 4
      %v1183 = vshll.u32 %v1112, 16
      %v1185 = vrot.slane %v1183, 5
      %v1186 = vor.u32 %v1182, %v1185
      %v1187 = vrot.slane %v1186, 4
      %v1189 = vshll.u32 %v1113, 16
      %v1191 = vrot.slane %v1189, 5
      %v1192 = vsel %vm1122, %v1187, %v1191
      %v1194 = vshrl.u32 %v1114, 16
      %v1196 = vrot.slane %v1194, 4
      %v1197 = vshll.u32 %v1114, 16
      %v1199 = vrot.slane %v1197, 5
      %v1200 = vor.u32 %v1196, %v1199
      %v1201 = vrot.slane %v1200, 4
      %v1203 = vshll.u32 %v1115, 16
      %v1205 = vrot.slane %v1203, 5
      %v1206 = vsel %vm1122, %v1201, %v1205
      %v1208 = vshrl.u32 %v1116, 16
      %v1210 = vrot.slane %v1208, 4
      %v1211 = vshll.u32 %v1116, 16
      %v1213 = vrot.slane %v1211, 5
      %v1214 = vor.u32 %v1210, %v1213
      %v1215 = vrot.slane %v1214, 4
      %v1217 = vshll.u32 %v1117, 16
      %v1219 = vrot.slane %v1217, 5
      %v1220 = vsel %vm1122, %v1215, %v1219
      %v1222 = vshrl.u32 %v1118, 16
      %v1224 = vrot.slane %v1222, 4
      %v1225 = vshll.u32 %v1118, 16
      %v1227 = vrot.slane %v1225, 5
      %v1228 = vor.u32 %v1224, %v1227
      %v1229 = vrot.slane %v1228, 4
      %v1231 = vshll.u32 %v1119, 16
      %v1233 = vrot.slane %v1231, 5
      %v1234 = vsel %vm1122, %v1229, %v1233
      %s1235 = scalar_lea.vmem %s5, 8
      %v1236 = vld [vmem:[%s1235] sm:$0xf]
      %v1237 = vld [vmem:[%s1235 + $0x4] sm:$0xf]
      %v1238 = vunpack.c.l.b16 %v1136
      %v1239 = vunpack.c.l.b16 %v1150
      %v1240 = vunpack.c.l.b16 %v1164
      %v1241 = vunpack.c.l.b16 %v1178
      %v1242 = vunpack.c.l.b16 %v1192
      %v1243 = vunpack.c.l.b16 %v1206
      %v1244 = vunpack.c.l.b16 %v1220
      %v1245 = vunpack.c.l.b16 %v1234
      %v1246 = vpack.c.b16 %v1239, %v1238
      %v1247 = vpack.c.b16 %v1241, %v1240
      %v1248 = vpack.c.b16 %v1243, %v1242
      %v1249 = vpack.c.b16 %v1245, %v1244
      %v1252 = vunpack.c.l.b16 %v1236
      %v1253 = vunpack.c.l.b16 %v1237
      %v1254 = vpack.c.b16 %v1253, %v1252
      %v1257 = vsel %vm549, %v1246, 0
      %v1260 = vsel %vm549, %v1247, 0
      %v1263 = vsel %vm549, %v1248, 0
      %v1266 = vsel %vm549, %v1249, 0
      %1268 = vmatpush.bf16.msra.mxu0 0
      %1269 = vmatpush.bf16.msra.mxu0 0
      %1270 = vmatpush.bf16.msra.mxu0 0
      %1271 = vmatpush.bf16.msra.mxu0 0
      %1272 = vmatpush.bf16.msra.mxu0 0
      %1273 = vmatpush.bf16.msra.mxu0 0
      %1274 = vmatpush.bf16.msra.mxu0 0
      %1275 = vmatpush.bf16.msra.mxu0 %v1254
      %1276 = vmatmul.bf16.gmra.mxu0 %v1257
      %v1277 = vpop.f32.mrf.mxu0
      %v1278 = vadd.f32 0.0, %v1277
      %v1279 = vpop.f32.mrf.mxu0
      %v1280 = vadd.f32 0.0, %v1279
      %1281 = vmatmul.bf16.gmra.mxu0 %v1260
      %v1282 = vpop.f32.mrf.mxu0
      %v1283 = vadd.f32 0.0, %v1282
      %v1284 = vpop.f32.mrf.mxu0
      %v1285 = vadd.f32 0.0, %v1284
      %1286 = vmatmul.bf16.gmra.mxu0 %v1263
      %v1287 = vpop.f32.mrf.mxu0
      %v1288 = vadd.f32 0.0, %v1287
      %v1289 = vpop.f32.mrf.mxu0
      %v1290 = vadd.f32 0.0, %v1289
      %1291 = vmatmul.bf16.gmra.mxu0 %v1266
      %v1292 = vpop.f32.mrf.mxu0
      %v1293 = vadd.f32 0.0, %v1292
      %v1294 = vpop.f32.mrf.mxu0
      %v1295 = vadd.f32 0.0, %v1294
      %1296 = vdwg.mxu0
      %v1297 = vpack.c.b16 %v1090, %v1088
      %v1298 = vpack.c.b16 %v1094, %v1092
      %v1299 = vpack.c.b16 %v1098, %v1096
      %v1300 = vpack.c.b16 %v1102, %v1100
      %v1303 = vunpack.c.l.b16 %v1078
      %v1304 = vunpack.c.l.b16 %v1079
      %v1305 = vpack.c.b16 %v1304, %v1303
      %v1308 = vsel %vm549, %v1297, 0
      %v1311 = vsel %vm549, %v1298, 0
      %v1314 = vsel %vm549, %v1299, 0
      %v1317 = vsel %vm549, %v1300, 0
      %1319 = vmatpush.bf16.msra.mxu0 0
      %1320 = vmatpush.bf16.msra.mxu0 0
      %1321 = vmatpush.bf16.msra.mxu0 0
      %1322 = vmatpush.bf16.msra.mxu0 0
      %1323 = vmatpush.bf16.msra.mxu0 0
      %1324 = vmatpush.bf16.msra.mxu0 0
      %1325 = vmatpush.bf16.msra.mxu0 0
      %1326 = vmatpush.bf16.msra.mxu0 %v1305
      %1327 = vmatmul.bf16.gmra.mxu0 %v1308
      %v1328 = vpop.f32.mrf.mxu0
      %v1329 = vadd.f32 %v1278, %v1328
      %v1330 = vpop.f32.mrf.mxu0
      %v1331 = vadd.f32 %v1280, %v1330
      %1332 = vmatmul.bf16.gmra.mxu0 %v1311
      %v1333 = vpop.f32.mrf.mxu0
      %v1334 = vadd.f32 %v1283, %v1333
      %v1335 = vpop.f32.mrf.mxu0
      %v1336 = vadd.f32 %v1285, %v1335
      %1337 = vmatmul.bf16.gmra.mxu0 %v1314
      %v1338 = vpop.f32.mrf.mxu0
      %v1339 = vadd.f32 %v1288, %v1338
      %v1340 = vpop.f32.mrf.mxu0
      %v1341 = vadd.f32 %v1290, %v1340
      %1342 = vmatmul.bf16.gmra.mxu0 %v1317
      %v1343 = vpop.f32.mrf.mxu0
      %v1344 = vadd.f32 %v1293, %v1343
      %v1345 = vpop.f32.mrf.mxu0
      %v1346 = vadd.f32 %v1295, %v1345
      %1347 = vdwg.mxu0
      %vm1348 = vcmask 1042432
      %vm1349 = vcmask 1046532
      %vm1350 = vmor %vm1348, %vm1349
      %v1351 = vrot.slane %v1104, 5
      %v1352 = vrot.slane %v1351, 4
      %v1353 = vrot.slane %v1105, 5
      %v1354 = vsel %vm1350, %v1352, %v1353
      %v1355 = vrot.slane %v1106, 5
      %v1356 = vrot.slane %v1355, 4
      %v1357 = vrot.slane %v1107, 5
      %v1358 = vsel %vm1350, %v1356, %v1357
      %v1359 = vrot.slane %v1108, 5
      %v1360 = vrot.slane %v1359, 4
      %v1361 = vrot.slane %v1109, 5
      %v1362 = vsel %vm1350, %v1360, %v1361
      %v1363 = vrot.slane %v1110, 5
      %v1364 = vrot.slane %v1363, 4
      %v1365 = vrot.slane %v1111, 5
      %v1366 = vsel %vm1350, %v1364, %v1365
      %v1367 = vrot.slane %v1112, 5
      %v1368 = vrot.slane %v1367, 4
      %v1369 = vrot.slane %v1113, 5
      %v1370 = vsel %vm1350, %v1368, %v1369
      %v1371 = vrot.slane %v1114, 5
      %v1372 = vrot.slane %v1371, 4
      %v1373 = vrot.slane %v1115, 5
      %v1374 = vsel %vm1350, %v1372, %v1373
      %v1375 = vrot.slane %v1116, 5
      %v1376 = vrot.slane %v1375, 4
      %v1377 = vrot.slane %v1117, 5
      %v1378 = vsel %vm1350, %v1376, %v1377
      %v1379 = vrot.slane %v1118, 5
      %v1380 = vrot.slane %v1379, 4
      %v1381 = vrot.slane %v1119, 5
      %v1382 = vsel %vm1350, %v1380, %v1381
      %s1383 = scalar_lea.vmem %s5, 16
      %v1384 = vld [vmem:[%s1383] sm:$0xf]
      %v1385 = vld [vmem:[%s1383 + $0x4] sm:$0xf]
      %v1386 = vunpack.c.l.b16 %v1354
      %v1387 = vunpack.c.l.b16 %v1358
      %v1388 = vunpack.c.l.b16 %v1362
      %v1389 = vunpack.c.l.b16 %v1366
      %v1390 = vunpack.c.l.b16 %v1370
      %v1391 = vunpack.c.l.b16 %v1374
      %v1392 = vunpack.c.l.b16 %v1378
      %v1393 = vunpack.c.l.b16 %v1382
      %v1394 = vpack.c.b16 %v1387, %v1386
      %v1395 = vpack.c.b16 %v1389, %v1388
      %v1396 = vpack.c.b16 %v1391, %v1390
      %v1397 = vpack.c.b16 %v1393, %v1392
      %v1400 = vunpack.c.l.b16 %v1384
      %v1401 = vunpack.c.l.b16 %v1385
      %v1402 = vpack.c.b16 %v1401, %v1400
      %v1405 = vsel %vm549, %v1394, 0
      %v1408 = vsel %vm549, %v1395, 0
      %v1411 = vsel %vm549, %v1396, 0
      %v1414 = vsel %vm549, %v1397, 0
      %1416 = vmatpush.bf16.msra.mxu0 0
      %1417 = vmatpush.bf16.msra.mxu0 0
      %1418 = vmatpush.bf16.msra.mxu0 0
      %1419 = vmatpush.bf16.msra.mxu0 0
      %1420 = vmatpush.bf16.msra.mxu0 0
      %1421 = vmatpush.bf16.msra.mxu0 0
      %1422 = vmatpush.bf16.msra.mxu0 0
      %1423 = vmatpush.bf16.msra.mxu0 %v1402
      %1424 = vmatmul.bf16.gmra.mxu0 %v1405
      %v1425 = vpop.f32.mrf.mxu0
      %v1426 = vadd.f32 0.0, %v1425
      %v1427 = vpop.f32.mrf.mxu0
      %v1428 = vadd.f32 0.0, %v1427
      %1429 = vmatmul.bf16.gmra.mxu0 %v1408
      %v1430 = vpop.f32.mrf.mxu0
      %v1431 = vadd.f32 0.0, %v1430
      %v1432 = vpop.f32.mrf.mxu0
      %v1433 = vadd.f32 0.0, %v1432
      %1434 = vmatmul.bf16.gmra.mxu0 %v1411
      %v1435 = vpop.f32.mrf.mxu0
      %v1436 = vadd.f32 0.0, %v1435
      %v1437 = vpop.f32.mrf.mxu0
      %v1438 = vadd.f32 0.0, %v1437
      %1439 = vmatmul.bf16.gmra.mxu0 %v1414
      %v1440 = vpop.f32.mrf.mxu0
      %v1441 = vadd.f32 0.0, %v1440
      %v1442 = vpop.f32.mrf.mxu0
      %v1443 = vadd.f32 0.0, %v1442
      %1444 = vdwg.mxu0
      %v1445 = vadd.f32 %v1329, %v1426
      %v1446 = vadd.f32 %v1331, %v1428
      %v1447 = vadd.f32 %v1334, %v1431
      %v1448 = vadd.f32 %v1336, %v1433
      %v1449 = vadd.f32 %v1339, %v1436
      %v1450 = vadd.f32 %v1341, %v1438
      %v1451 = vadd.f32 %v1344, %v1441
      %v1452 = vadd.f32 %v1346, %v1443
      %s1453 = scalar_lea.vmem %s5, 24
      %v1454 = vld [vmem:[%s1453] sm:$0xf]
      %v1455 = vld [vmem:[%s1453 + $0x4] sm:$0xf]
      %v1457 = vunpack.c.l.b16 %v1077
      %v1458 = vpack.c.b16 %v1092, %v1090
      %v1459 = vpack.c.b16 %v1096, %v1094
      %v1460 = vpack.c.b16 %v1100, %v1098
      %v1461 = vpack.c.b16 %v1457, %v1102
      %v1464 = vunpack.c.l.b16 %v1454
      %v1465 = vunpack.c.l.b16 %v1455
      %v1466 = vpack.c.b16 %v1465, %v1464
      %v1469 = vsel %vm549, %v1458, 0
      %v1472 = vsel %vm549, %v1459, 0
      %v1475 = vsel %vm549, %v1460, 0
      %v1478 = vsel %vm549, %v1461, 0
      %1480 = vmatpush.bf16.msra.mxu0 0
      %1481 = vmatpush.bf16.msra.mxu0 0
      %1482 = vmatpush.bf16.msra.mxu0 0
      %1483 = vmatpush.bf16.msra.mxu0 0
      %1484 = vmatpush.bf16.msra.mxu0 0
      %1485 = vmatpush.bf16.msra.mxu0 0
      %1486 = vmatpush.bf16.msra.mxu0 0
      %1487 = vmatpush.bf16.msra.mxu0 %v1466
      %1488 = vmatmul.bf16.gmra.mxu0 %v1469
      %v1489 = vpop.f32.mrf.mxu0
      %v1490 = vadd.f32 0.0, %v1489
      %v1491 = vpop.f32.mrf.mxu0
      %v1492 = vadd.f32 0.0, %v1491
      %1493 = vmatmul.bf16.gmra.mxu0 %v1472
      %v1494 = vpop.f32.mrf.mxu0
      %v1495 = vadd.f32 0.0, %v1494
      %v1496 = vpop.f32.mrf.mxu0
      %v1497 = vadd.f32 0.0, %v1496
      %1498 = vmatmul.bf16.gmra.mxu0 %v1475
      %v1499 = vpop.f32.mrf.mxu0
      %v1500 = vadd.f32 0.0, %v1499
      %v1501 = vpop.f32.mrf.mxu0
      %v1502 = vadd.f32 0.0, %v1501
      %1503 = vmatmul.bf16.gmra.mxu0 %v1478
      %v1504 = vpop.f32.mrf.mxu0
      %v1505 = vadd.f32 0.0, %v1504
      %v1506 = vpop.f32.mrf.mxu0
      %v1507 = vadd.f32 0.0, %v1506
      %1508 = vdwg.mxu0
      %v1509 = vadd.f32 %v1445, %v1490
      %v1510 = vadd.f32 %v1446, %v1492
      %v1511 = vadd.f32 %v1447, %v1495
      %v1512 = vadd.f32 %v1448, %v1497
      %v1513 = vadd.f32 %v1449, %v1500
      %v1514 = vadd.f32 %v1450, %v1502
      %v1515 = vadd.f32 %v1451, %v1505
      %v1516 = vadd.f32 %v1452, %v1507
      %v1517 = vunpack.c.h.b16 %v1077
      %v1518 = vpack.c.b16 %v1457, %v1457
      %v1519 = vpack.c.b16 %v1517, %v1517
      %v1521 = vshrl.u32 %v1518, 16
      %v1523 = vrot.slane %v1521, 4
      %v1524 = vshll.u32 %v1518, 16
      %v1526 = vrot.slane %v1524, 5
      %v1527 = vor.u32 %v1523, %v1526
      %v1528 = vrot.slane %v1527, 4
      %v1530 = vshll.u32 %v1519, 16
      %v1532 = vrot.slane %v1530, 5
      %v1533 = vsel %vm1122, %v1528, %v1532
      %s1534 = scalar_lea.vmem %s5, 32
      %v1535 = vld [vmem:[%s1534] sm:$0xf]
      %v1536 = vld [vmem:[%s1534 + $0x4] sm:$0xf]
      %v1537 = vunpack.c.l.b16 %v1533
      %v1538 = vpack.c.b16 %v1240, %v1239
      %v1539 = vpack.c.b16 %v1242, %v1241
      %v1540 = vpack.c.b16 %v1244, %v1243
      %v1541 = vpack.c.b16 %v1537, %v1245
      %v1544 = vunpack.c.l.b16 %v1535
      %v1545 = vunpack.c.l.b16 %v1536
      %v1546 = vpack.c.b16 %v1545, %v1544
      %v1549 = vsel %vm549, %v1538, 0
      %v1552 = vsel %vm549, %v1539, 0
      %v1555 = vsel %vm549, %v1540, 0
      %v1558 = vsel %vm549, %v1541, 0
      %1560 = vmatpush.bf16.msra.mxu0 0
      %1561 = vmatpush.bf16.msra.mxu0 0
      %1562 = vmatpush.bf16.msra.mxu0 0
      %1563 = vmatpush.bf16.msra.mxu0 0
      %1564 = vmatpush.bf16.msra.mxu0 0
      %1565 = vmatpush.bf16.msra.mxu0 0
      %1566 = vmatpush.bf16.msra.mxu0 0
      %1567 = vmatpush.bf16.msra.mxu0 %v1546
      %1568 = vmatmul.bf16.gmra.mxu0 %v1549
      %v1569 = vpop.f32.mrf.mxu0
      %v1570 = vadd.f32 0.0, %v1569
      %v1571 = vpop.f32.mrf.mxu0
      %v1572 = vadd.f32 0.0, %v1571
      %1573 = vmatmul.bf16.gmra.mxu0 %v1552
      %v1574 = vpop.f32.mrf.mxu0
      %v1575 = vadd.f32 0.0, %v1574
      %v1576 = vpop.f32.mrf.mxu0
      %v1577 = vadd.f32 0.0, %v1576
      %1578 = vmatmul.bf16.gmra.mxu0 %v1555
      %v1579 = vpop.f32.mrf.mxu0
      %v1580 = vadd.f32 0.0, %v1579
      %v1581 = vpop.f32.mrf.mxu0
      %v1582 = vadd.f32 0.0, %v1581
      %1583 = vmatmul.bf16.gmra.mxu0 %v1558
      %v1584 = vpop.f32.mrf.mxu0
      %v1585 = vadd.f32 0.0, %v1584
      %v1586 = vpop.f32.mrf.mxu0
      %v1587 = vadd.f32 0.0, %v1586
      %1588 = vdwg.mxu0
      %v1589 = vadd.f32 %v1509, %v1570
      %v1590 = vadd.f32 %v1510, %v1572
      %v1591 = vadd.f32 %v1511, %v1575
      %v1592 = vadd.f32 %v1512, %v1577
      %v1593 = vadd.f32 %v1513, %v1580
      %v1594 = vadd.f32 %v1514, %v1582
      %v1595 = vadd.f32 %v1515, %v1585
      %v1596 = vadd.f32 %v1516, %v1587
      %v1597 = vrot.slane %v1518, 5
      %v1598 = vrot.slane %v1597, 4
      %v1599 = vrot.slane %v1519, 5
      %v1600 = vsel %vm1350, %v1598, %v1599
      %s1601 = scalar_lea.vmem %s5, 40
      %v1602 = vld [vmem:[%s1601] sm:$0xf]
      %v1603 = vld [vmem:[%s1601 + $0x4] sm:$0xf]
      %v1604 = vunpack.c.l.b16 %v1600
      %v1605 = vpack.c.b16 %v1388, %v1387
      %v1606 = vpack.c.b16 %v1390, %v1389
      %v1607 = vpack.c.b16 %v1392, %v1391
      %v1608 = vpack.c.b16 %v1604, %v1393
      %v1611 = vunpack.c.l.b16 %v1602
      %v1612 = vunpack.c.l.b16 %v1603
      %v1613 = vpack.c.b16 %v1612, %v1611
      %v1616 = vsel %vm549, %v1605, 0
      %v1619 = vsel %vm549, %v1606, 0
      %v1622 = vsel %vm549, %v1607, 0
      %v1625 = vsel %vm549, %v1608, 0
      %1627 = vmatpush.bf16.msra.mxu0 0
      %1628 = vmatpush.bf16.msra.mxu0 0
      %1629 = vmatpush.bf16.msra.mxu0 0
      %1630 = vmatpush.bf16.msra.mxu0 0
      %1631 = vmatpush.bf16.msra.mxu0 0
      %1632 = vmatpush.bf16.msra.mxu0 0
      %1633 = vmatpush.bf16.msra.mxu0 0
      %1634 = vmatpush.bf16.msra.mxu0 %v1613
      %1635 = vmatmul.bf16.gmra.mxu0 %v1616
      %v1636 = vpop.f32.mrf.mxu0
      %v1637 = vadd.f32 0.0, %v1636
      %v1638 = vpop.f32.mrf.mxu0
      %v1639 = vadd.f32 0.0, %v1638
      %1640 = vmatmul.bf16.gmra.mxu0 %v1619
      %v1641 = vpop.f32.mrf.mxu0
      %v1642 = vadd.f32 0.0, %v1641
      %v1643 = vpop.f32.mrf.mxu0
      %v1644 = vadd.f32 0.0, %v1643
      %1645 = vmatmul.bf16.gmra.mxu0 %v1622
      %v1646 = vpop.f32.mrf.mxu0
      %v1647 = vadd.f32 0.0, %v1646
      %v1648 = vpop.f32.mrf.mxu0
      %v1649 = vadd.f32 0.0, %v1648
      %1650 = vmatmul.bf16.gmra.mxu0 %v1625
      %v1651 = vpop.f32.mrf.mxu0
      %v1652 = vadd.f32 0.0, %v1651
      %v1653 = vpop.f32.mrf.mxu0
      %v1654 = vadd.f32 0.0, %v1653
      %1655 = vdwg.mxu0
      %v1656 = vadd.f32 %v1589, %v1637
      %v1657 = vadd.f32 %v1590, %v1639
      %v1658 = vadd.f32 %v1591, %v1642
      %v1659 = vadd.f32 %v1592, %v1644
      %v1660 = vadd.f32 %v1593, %v1647
      %v1661 = vadd.f32 %v1594, %v1649
      %v1662 = vadd.f32 %v1595, %v1652
      %v1663 = vadd.f32 %v1596, %v1654
      %s1664 = scalar_lea.vmem %s5, 48
      %v1665 = vld [vmem:[%s1664] sm:$0xf]
      %v1666 = vld [vmem:[%s1664 + $0x4] sm:$0xf]
      %v1667 = vpack.c.b16 %v1088, %v1457
      %v1670 = vunpack.c.l.b16 %v1665
      %v1671 = vunpack.c.l.b16 %v1666
      %v1672 = vpack.c.b16 %v1671, %v1670
      %v1675 = vsel %vm549, %v1667, 0
      %1677 = vmatpush.bf16.msra.mxu0 0
      %1678 = vmatpush.bf16.msra.mxu0 0
      %1679 = vmatpush.bf16.msra.mxu0 0
      %1680 = vmatpush.bf16.msra.mxu0 0
      %1681 = vmatpush.bf16.msra.mxu0 0
      %1682 = vmatpush.bf16.msra.mxu0 0
      %1683 = vmatpush.bf16.msra.mxu0 0
      %1684 = vmatpush.bf16.msra.mxu0 %v1672
      %1685 = vmatmul.bf16.gmra.mxu0 %v1311
      %v1686 = vpop.f32.mrf.mxu0
      %v1687 = vadd.f32 0.0, %v1686
      %v1688 = vpop.f32.mrf.mxu0
      %v1689 = vadd.f32 0.0, %v1688
      %1690 = vmatmul.bf16.gmra.mxu0 %v1314
      %v1691 = vpop.f32.mrf.mxu0
      %v1692 = vadd.f32 0.0, %v1691
      %v1693 = vpop.f32.mrf.mxu0
      %v1694 = vadd.f32 0.0, %v1693
      %1695 = vmatmul.bf16.gmra.mxu0 %v1317
      %v1696 = vpop.f32.mrf.mxu0
      %v1697 = vadd.f32 0.0, %v1696
      %v1698 = vpop.f32.mrf.mxu0
      %v1699 = vadd.f32 0.0, %v1698
      %1700 = vmatmul.bf16.gmra.mxu0 %v1675
      %v1701 = vpop.f32.mrf.mxu0
      %v1702 = vadd.f32 0.0, %v1701
      %v1703 = vpop.f32.mrf.mxu0
      %v1704 = vadd.f32 0.0, %v1703
      %1705 = vdwg.mxu0
      %v1706 = vadd.f32 %v1656, %v1687
      %v1707 = vadd.f32 %v1657, %v1689
      %v1708 = vadd.f32 %v1658, %v1692
      %v1709 = vadd.f32 %v1659, %v1694
      %v1710 = vadd.f32 %v1660, %v1697
      %v1711 = vadd.f32 %v1661, %v1699
      %v1712 = vadd.f32 %v1662, %v1702
      %v1713 = vadd.f32 %v1663, %v1704
      %s1714 = scalar_lea.vmem %s5, 56
      %v1715 = vld [vmem:[%s1714] sm:$0xf]
      %v1716 = vld [vmem:[%s1714 + $0x4] sm:$0xf]
      %v1717 = vpack.c.b16 %v1238, %v1537
      %v1720 = vunpack.c.l.b16 %v1715
      %v1721 = vunpack.c.l.b16 %v1716
      %v1722 = vpack.c.b16 %v1721, %v1720
      %v1725 = vsel %vm549, %v1717, 0
      %1727 = vmatpush.bf16.msra.mxu0 0
      %1728 = vmatpush.bf16.msra.mxu0 0
      %1729 = vmatpush.bf16.msra.mxu0 0
      %1730 = vmatpush.bf16.msra.mxu0 0
      %1731 = vmatpush.bf16.msra.mxu0 0
      %1732 = vmatpush.bf16.msra.mxu0 0
      %1733 = vmatpush.bf16.msra.mxu0 0
      %1734 = vmatpush.bf16.msra.mxu0 %v1722
      %1735 = vmatmul.bf16.gmra.mxu0 %v1260
      %v1736 = vpop.f32.mrf.mxu0
      %v1737 = vadd.f32 0.0, %v1736
      %v1738 = vpop.f32.mrf.mxu0
      %v1739 = vadd.f32 0.0, %v1738
      %1740 = vmatmul.bf16.gmra.mxu0 %v1263
      %v1741 = vpop.f32.mrf.mxu0
      %v1742 = vadd.f32 0.0, %v1741
      %v1743 = vpop.f32.mrf.mxu0
      %v1744 = vadd.f32 0.0, %v1743
      %1745 = vmatmul.bf16.gmra.mxu0 %v1266
      %v1746 = vpop.f32.mrf.mxu0
      %v1747 = vadd.f32 0.0, %v1746
      %v1748 = vpop.f32.mrf.mxu0
      %v1749 = vadd.f32 0.0, %v1748
      %1750 = vmatmul.bf16.gmra.mxu0 %v1725
      %v1751 = vpop.f32.mrf.mxu0
      %v1752 = vadd.f32 0.0, %v1751
      %v1753 = vpop.f32.mrf.mxu0
      %v1754 = vadd.f32 0.0, %v1753
      %1755 = vdwg.mxu0
      %v1756 = vadd.f32 %v1706, %v1737
      %v1757 = vadd.f32 %v1707, %v1739
      %v1758 = vadd.f32 %v1708, %v1742
      %v1759 = vadd.f32 %v1709, %v1744
      %v1760 = vadd.f32 %v1710, %v1747
      %v1761 = vadd.f32 %v1711, %v1749
      %v1762 = vadd.f32 %v1712, %v1752
      %v1763 = vadd.f32 %v1713, %v1754
      %s1764 = scalar_lea.vmem %s5, 64
      %v1765 = vld [vmem:[%s1764] sm:$0xf]
      %v1766 = vld [vmem:[%s1764 + $0x4] sm:$0xf]
      %v1767 = vpack.c.b16 %v1386, %v1604
      %v1770 = vunpack.c.l.b16 %v1765
      %v1771 = vunpack.c.l.b16 %v1766
      %v1772 = vpack.c.b16 %v1771, %v1770
      %v1775 = vsel %vm549, %v1767, 0
      %1777 = vmatpush.bf16.msra.mxu0 0
      %1778 = vmatpush.bf16.msra.mxu0 0
      %1779 = vmatpush.bf16.msra.mxu0 0
      %1780 = vmatpush.bf16.msra.mxu0 0
      %1781 = vmatpush.bf16.msra.mxu0 0
      %1782 = vmatpush.bf16.msra.mxu0 0
      %1783 = vmatpush.bf16.msra.mxu0 0
      %1784 = vmatpush.bf16.msra.mxu0 %v1772
      %1785 = vmatmul.bf16.gmra.mxu0 %v1408
      %v1786 = vpop.f32.mrf.mxu0
      %v1787 = vadd.f32 0.0, %v1786
      %v1788 = vpop.f32.mrf.mxu0
      %v1789 = vadd.f32 0.0, %v1788
      %1790 = vmatmul.bf16.gmra.mxu0 %v1411
      %v1791 = vpop.f32.mrf.mxu0
      %v1792 = vadd.f32 0.0, %v1791
      %v1793 = vpop.f32.mrf.mxu0
      %v1794 = vadd.f32 0.0, %v1793
      %1795 = vmatmul.bf16.gmra.mxu0 %v1414
      %v1796 = vpop.f32.mrf.mxu0
      %v1797 = vadd.f32 0.0, %v1796
      %v1798 = vpop.f32.mrf.mxu0
      %v1799 = vadd.f32 0.0, %v1798
      %1800 = vmatmul.bf16.gmra.mxu0 %v1775
      %v1801 = vpop.f32.mrf.mxu0
      %v1802 = vadd.f32 0.0, %v1801
      %v1803 = vpop.f32.mrf.mxu0
      %v1804 = vadd.f32 0.0, %v1803
      %1805 = vdwg.mxu0
      %v1806 = vadd.f32 %v1756, %v1787
      %v1807 = vadd.f32 %v1757, %v1789
      %v1808 = vadd.f32 %v1758, %v1792
      %v1809 = vadd.f32 %v1759, %v1794
      %v1810 = vadd.f32 %v1760, %v1797
      %v1811 = vadd.f32 %v1761, %v1799
      %v1812 = vadd.f32 %v1762, %v1802
      %v1813 = vadd.f32 %v1763, %v1804
      %v1814 = vld [vmem:[%s6] sm:$0x1]
      %v1816 = vperm.slane %v1814, 0
      %v1818 = vadd.f32 %v1806, %v1816
      %v1819 = vadd.f32 %v1807, %v1816
      %v1820 = vadd.f32 %v1808, %v1816
      %v1821 = vadd.f32 %v1809, %v1816
      %v1822 = vadd.f32 %v1810, %v1816
      %v1823 = vadd.f32 %v1811, %v1816
      %v1824 = vadd.f32 %v1812, %v1816
      %v1825 = vadd.f32 %v1813, %v1816
      %v1826 = vperm.slane %v971, 0
      %v1827 = vadd.f32 %v1818, %v1826
      %v1828 = vadd.f32 %v1819, %v1826
      %v1829 = vadd.f32 %v1820, %v1826
      %v1830 = vadd.f32 %v1821, %v1826
      %v1831 = vadd.f32 %v1822, %v1826
      %v1832 = vadd.f32 %v1823, %v1826
      %v1833 = vadd.f32 %v1824, %v1826
      %v1834 = vadd.f32 %v1825, %v1826
      %v1835 = vld [vmem:[%s9] sm:$0x1]
      %v1836 = vld [vmem:[%s10] sm:$0x1]
      %v1837 = vld [vmem:[%s11] sm:$0xff]
      %v1838 = vld [vmem:[%s11 + $0x8] sm:$0xff]
      %v1839 = vld [vmem:[%s11 + $0x10] sm:$0xff]
      %v1840 = vld [vmem:[%s11 + $0x18] sm:$0xff]
      %v1841 = vsel %vm957, %v1827, 0.0
      %v1842 = vsel %vm957, %v1828, 0.0
      %v1843 = vadd.f32 %v1841, %v1842
      %v1844 = vsel %vm957, %v1829, 0.0
      %v1845 = vadd.f32 %v1843, %v1844
      %v1846 = vsel %vm957, %v1830, 0.0
      %v1847 = vadd.f32 %v1845, %v1846
      %v1848 = vsel %vm957, %v1831, 0.0
      %v1849 = vadd.f32 %v1847, %v1848
      %v1850 = vsel %vm957, %v1832, 0.0
      %v1851 = vadd.f32 %v1849, %v1850
      %v1852 = vsel %vm957, %v1833, 0.0
      %v1853 = vadd.f32 %v1851, %v1852
      %v1854 = vsel %vm957, %v1834, 0.0
      %v1855 = vadd.f32 %v1853, %v1854
      %v1856 = vrot.slane %v1855, 4
      %v1857 = vadd.f32 %v1855, %v1856
      %v1858 = vrot.slane %v1857, 2
      %v1859 = vadd.f32 %v1857, %v1858
      %v1860 = vrot.slane %v1859, 1
      %v1861 = vadd.f32 %v1859, %v1860
      %v1863 = vsel %vm957, %v1861, 0
      %1865 = vmatpush.msra.mxu0 0.0
      %1866 = vmatpush.msra.mxu0 0.0
      %1867 = vmatpush.msra.mxu0 0.0
      %1868 = vmatpush.msra.mxu0 0.0
      %1869 = vmatpush.msra.mxu0 0.0
      %1870 = vmatpush.msra.mxu0 0.0
      %1871 = vmatpush.msra.mxu0 0.0
      %1872 = vmatpush.msra.mxu0 0.0
      %1873 = vmatpush.msra.mxu0 0.0
      %1874 = vmatpush.msra.mxu0 0.0
      %1875 = vmatpush.msra.mxu0 0.0
      %1876 = vmatpush.msra.mxu0 0.0
      %1877 = vmatpush.msra.mxu0 %v1840
      %1878 = vmatpush.msra.mxu0 %v1839
      %1879 = vmatpush.msra.mxu0 %v1838
      %1880 = vmatpush.msra.mxu0 %v1837
      %1881 = vmatmul.f32.gmra.mxu0 %v1863
      %v1882 = vpop.f32.mrf.mxu0
      %v1883 = vadd.f32 0.0, %v1882
      %1884 = vdwg.mxu0
      %v1885 = vrcp.pop 256.0
      %v1886 = vmul.f32 256.0, %v1885
      %v1887 = vsub.f32 1.0, %v1886
      %v1888 = vmul.f32 %v1885, %v1887
      %v1889 = vadd.f32 %v1885, %v1888
      %vm1890 = vweird.f32 %v1885
      %v1891 = vsel %vm1890, %v1885, %v1889
      %v1892 = vmul.f32 %v1883, %v1891
      %v1894 = vsel %vm602, %v1892, 0
      %v1897 = vsel %vm602, %v1837, 0
      %v1900 = vsel %vm602, %v1838, 0
      %v1903 = vsel %vm602, %v1839, 0
      %v1906 = vsel %vm602, %v1840, 0
      %1908 = vmatpush.xpose.msra.mxu0 0.0
      %1909 = vmatpush.xpose.msra.mxu0 0.0
      %1910 = vmatpush.xpose.msra.mxu0 0.0
      %1911 = vmatpush.xpose.msra.mxu0 0.0
      %1912 = vmatpush.xpose.msra.mxu0 0.0
      %1913 = vmatpush.xpose.msra.mxu0 0.0
      %1914 = vmatpush.xpose.msra.mxu0 0.0
      %1915 = vmatpush.xpose.msra.mxu0 0.0
      %1916 = vmatpush.xpose.msra.mxu0 0.0
      %1917 = vmatpush.xpose.msra.mxu0 0.0
      %1918 = vmatpush.xpose.msra.mxu0 0.0
      %1919 = vmatpush.xpose.msra.mxu0 0.0
      %1920 = vmatpush.xpose.msra.mxu0 %v1906
      %1921 = vmatpush.xpose.msra.mxu0 %v1903
      %1922 = vmatpush.xpose.msra.mxu0 %v1900
      %1923 = vmatpush.xpose.msra.mxu0 %v1897
      %1924 = vmatmul.f32.gmra.mxu0 %v1894
      %v1925 = vpop.f32.mrf.mxu0
      %v1926 = vadd.f32 0.0, %v1925
      %1927 = vdwg.mxu0
      %v1928 = vperm.slane %v1926, 0
      %v1929 = vsub.f32 %v1827, %v1928
      %v1930 = vsub.f32 %v1828, %v1928
      %v1931 = vsub.f32 %v1829, %v1928
      %v1932 = vsub.f32 %v1830, %v1928
      %v1933 = vsub.f32 %v1831, %v1928
      %v1934 = vsub.f32 %v1832, %v1928
      %v1935 = vsub.f32 %v1833, %v1928
      %v1936 = vsub.f32 %v1834, %v1928
      %v1937 = vmul.f32 %v1929, %v1929
      %v1938 = vmul.f32 %v1930, %v1930
      %v1939 = vmul.f32 %v1931, %v1931
      %v1940 = vmul.f32 %v1932, %v1932
      %v1941 = vmul.f32 %v1933, %v1933
      %v1942 = vmul.f32 %v1934, %v1934
      %v1943 = vmul.f32 %v1935, %v1935
      %v1944 = vmul.f32 %v1936, %v1936
      %v1945 = vsel %vm957, %v1937, 0.0
      %v1946 = vsel %vm957, %v1938, 0.0
      %v1947 = vadd.f32 %v1945, %v1946
      %v1948 = vsel %vm957, %v1939, 0.0
      %v1949 = vadd.f32 %v1947, %v1948
      %v1950 = vsel %vm957, %v1940, 0.0
      %v1951 = vadd.f32 %v1949, %v1950
      %v1952 = vsel %vm957, %v1941, 0.0
      %v1953 = vadd.f32 %v1951, %v1952
      %v1954 = vsel %vm957, %v1942, 0.0
      %v1955 = vadd.f32 %v1953, %v1954
      %v1956 = vsel %vm957, %v1943, 0.0
      %v1957 = vadd.f32 %v1955, %v1956
      %v1958 = vsel %vm957, %v1944, 0.0
      %v1959 = vadd.f32 %v1957, %v1958
      %v1960 = vrot.slane %v1959, 4
      %v1961 = vadd.f32 %v1959, %v1960
      %v1962 = vrot.slane %v1961, 2
      %v1963 = vadd.f32 %v1961, %v1962
      %v1964 = vrot.slane %v1963, 1
      %v1965 = vadd.f32 %v1963, %v1964
      %v1967 = vsel %vm957, %v1965, 0
      %1969 = vmatpush.msra.mxu0 0.0
      %1970 = vmatpush.msra.mxu0 0.0
      %1971 = vmatpush.msra.mxu0 0.0
      %1972 = vmatpush.msra.mxu0 0.0
      %1973 = vmatpush.msra.mxu0 0.0
      %1974 = vmatpush.msra.mxu0 0.0
      %1975 = vmatpush.msra.mxu0 0.0
      %1976 = vmatpush.msra.mxu0 0.0
      %1977 = vmatpush.msra.mxu0 0.0
      %1978 = vmatpush.msra.mxu0 0.0
      %1979 = vmatpush.msra.mxu0 0.0
      %1980 = vmatpush.msra.mxu0 0.0
      %1981 = vmatpush.msra.mxu0 %v1840
      %1982 = vmatpush.msra.mxu0 %v1839
      %1983 = vmatpush.msra.mxu0 %v1838
      %1984 = vmatpush.msra.mxu0 %v1837
      %1985 = vmatmul.f32.gmra.mxu0 %v1967
      %v1986 = vpop.f32.mrf.mxu0
      %v1987 = vadd.f32 0.0, %v1986
      %1988 = vdwg.mxu0
      %v1989 = vmul.f32 %v1987, %v1891
      %v1991 = vsel %vm602, %v1989, 0
      %1993 = vmatpush.xpose.msra.mxu0 0.0
      %1994 = vmatpush.xpose.msra.mxu0 0.0
      %1995 = vmatpush.xpose.msra.mxu0 0.0
      %1996 = vmatpush.xpose.msra.mxu0 0.0
      %1997 = vmatpush.xpose.msra.mxu0 0.0
      %1998 = vmatpush.xpose.msra.mxu0 0.0
      %1999 = vmatpush.xpose.msra.mxu0 0.0
      %2000 = vmatpush.xpose.msra.mxu0 0.0
      %2001 = vmatpush.xpose.msra.mxu0 0.0
      %2002 = vmatpush.xpose.msra.mxu0 0.0
      %2003 = vmatpush.xpose.msra.mxu0 0.0
      %2004 = vmatpush.xpose.msra.mxu0 0.0
      %2005 = vmatpush.xpose.msra.mxu0 %v1906
      %2006 = vmatpush.xpose.msra.mxu0 %v1903
      %2007 = vmatpush.xpose.msra.mxu0 %v1900
      %2008 = vmatpush.xpose.msra.mxu0 %v1897
      %2009 = vmatmul.f32.gmra.mxu0 %v1991
      %v2010 = vpop.f32.mrf.mxu0
      %v2011 = vadd.f32 1e-05, %v2010
      %2012 = vdwg.mxu0
      %v2013 = vrsqrt.pop %v2011
      %v2014 = vmul.f32 %v2013, %v2011
      %v2015 = vmul.f32 %v2014, %v2013
      %v2016 = vmul.f32 0.5, %v2015
      %v2017 = vsub.f32 1.5, %v2016
      %v2018 = vmul.f32 %v2013, %v2017
      %vm2019 = vweird.f32 %v2011
      %vm2020 = vweird.f32 %v2013
      %vm2021 = vmor %vm2019, %vm2020
      %v2022 = vsel %vm2021, %v2013, %v2018
      %v2023 = vperm.slane %v2022, 0
      %v2024 = vmul.f32 %v1929, %v2023
      %v2025 = vmul.f32 %v1930, %v2023
      %v2026 = vmul.f32 %v1931, %v2023
      %v2027 = vmul.f32 %v1932, %v2023
      %v2028 = vmul.f32 %v1933, %v2023
      %v2029 = vmul.f32 %v1934, %v2023
      %v2030 = vmul.f32 %v1935, %v2023
      %v2031 = vmul.f32 %v1936, %v2023
      %v2033 = vperm.slane %v1835, 0
      %v2035 = vmul.f32 %v2024, %v2033
      %v2036 = vmul.f32 %v2025, %v2033
      %v2037 = vmul.f32 %v2026, %v2033
      %v2038 = vmul.f32 %v2027, %v2033
      %v2039 = vmul.f32 %v2028, %v2033
      %v2040 = vmul.f32 %v2029, %v2033
      %v2041 = vmul.f32 %v2030, %v2033
      %v2042 = vmul.f32 %v2031, %v2033
      %v2044 = vperm.slane %v1836, 0
      %v2046 = vadd.f32 %v2035, %v2044
      %v2047 = vadd.f32 %v2036, %v2044
      %v2048 = vadd.f32 %v2037, %v2044
      %v2049 = vadd.f32 %v2038, %v2044
      %v2050 = vadd.f32 %v2039, %v2044
      %v2051 = vadd.f32 %v2040, %v2044
      %v2052 = vadd.f32 %v2041, %v2044
      %v2053 = vadd.f32 %v2042, %v2044
      %v2054 = vxor.u32 %v2046, 2147483648
      %v2055 = vxor.u32 %v2047, 2147483648
      %v2056 = vxor.u32 %v2048, 2147483648
      %v2057 = vxor.u32 %v2049, 2147483648
      %v2058 = vxor.u32 %v2050, 2147483648
      %v2059 = vxor.u32 %v2051, 2147483648
      %v2060 = vxor.u32 %v2052, 2147483648
      %v2061 = vxor.u32 %v2053, 2147483648
      %v2062 = vmul.f32 %v2054, 1.442695
      %v2063 = vpow.pop %v2062
      %v2064 = vmul.f32 %v2055, 1.442695
      %v2065 = vpow.pop %v2064
      %v2066 = vmul.f32 %v2056, 1.442695
      %v2067 = vpow.pop %v2066
      %v2068 = vmul.f32 %v2057, 1.442695
      %v2069 = vpow.pop %v2068
      %v2070 = vmul.f32 %v2058, 1.442695
      %v2071 = vpow.pop %v2070
      %v2072 = vmul.f32 %v2059, 1.442695
      %v2073 = vpow.pop %v2072
      %v2074 = vmul.f32 %v2060, 1.442695
      %v2075 = vpow.pop %v2074
      %v2076 = vmul.f32 %v2061, 1.442695
      %v2077 = vpow.pop %v2076
      %v2078 = vadd.f32 %v2063, 1.0
      %v2079 = vadd.f32 %v2065, 1.0
      %v2080 = vadd.f32 %v2067, 1.0
      %v2081 = vadd.f32 %v2069, 1.0
      %v2082 = vadd.f32 %v2071, 1.0
      %v2083 = vadd.f32 %v2073, 1.0
      %v2084 = vadd.f32 %v2075, 1.0
      %v2085 = vadd.f32 %v2077, 1.0
      %v2086 = vrcp.pop %v2078
      %v2087 = vmul.f32 %v2078, %v2086
      %v2088 = vsub.f32 1.0, %v2087
      %v2089 = vmul.f32 %v2086, %v2088
      %v2090 = vadd.f32 %v2086, %v2089
      %vm2091 = vweird.f32 %v2078
      %vm2092 = vweird.f32 %v2086
      %vm2093 = vmor %vm2091, %vm2092
      %v2094 = vsel %vm2093, %v2086, %v2090
      %v2095 = vand.u32 2147483647, %v2078
      %vm2096 = vcmp.eq.f32.partialorder %v2095, 8.507059e+37
      %v2097 = vand.u32 %v2078, 2147483648
      %v2098 = vor.u32 1.1754944e-38, %v2097
      %v2099 = vsel %vm2096, %v2098, %v2094
      %v2100 = vmul.f32 1.0, %v2099
      %v2101 = vrcp.pop %v2079
      %v2102 = vmul.f32 %v2079, %v2101
      %v2103 = vsub.f32 1.0, %v2102
      %v2104 = vmul.f32 %v2101, %v2103
      %v2105 = vadd.f32 %v2101, %v2104
      %vm2106 = vweird.f32 %v2079
      %vm2107 = vweird.f32 %v2101
      %vm2108 = vmor %vm2106, %vm2107
      %v2109 = vsel %vm2108, %v2101, %v2105
      %v2110 = vand.u32 2147483647, %v2079
      %vm2111 = vcmp.eq.f32.partialorder %v2110, 8.507059e+37
      %v2112 = vand.u32 %v2079, 2147483648
      %v2113 = vor.u32 1.1754944e-38, %v2112
      %v2114 = vsel %vm2111, %v2113, %v2109
      %v2115 = vmul.f32 1.0, %v2114
      %v2116 = vrcp.pop %v2080
      %v2117 = vmul.f32 %v2080, %v2116
      %v2118 = vsub.f32 1.0, %v2117
      %v2119 = vmul.f32 %v2116, %v2118
      %v2120 = vadd.f32 %v2116, %v2119
      %vm2121 = vweird.f32 %v2080
      %vm2122 = vweird.f32 %v2116
      %vm2123 = vmor %vm2121, %vm2122
      %v2124 = vsel %vm2123, %v2116, %v2120
      %v2125 = vand.u32 2147483647, %v2080
      %vm2126 = vcmp.eq.f32.partialorder %v2125, 8.507059e+37
      %v2127 = vand.u32 %v2080, 2147483648
      %v2128 = vor.u32 1.1754944e-38, %v2127
      %v2129 = vsel %vm2126, %v2128, %v2124
      %v2130 = vmul.f32 1.0, %v2129
      %v2131 = vrcp.pop %v2081
      %v2132 = vmul.f32 %v2081, %v2131
      %v2133 = vsub.f32 1.0, %v2132
      %v2134 = vmul.f32 %v2131, %v2133
      %v2135 = vadd.f32 %v2131, %v2134
      %vm2136 = vweird.f32 %v2081
      %vm2137 = vweird.f32 %v2131
      %vm2138 = vmor %vm2136, %vm2137
      %v2139 = vsel %vm2138, %v2131, %v2135
      %v2140 = vand.u32 2147483647, %v2081
      %vm2141 = vcmp.eq.f32.partialorder %v2140, 8.507059e+37
      %v2142 = vand.u32 %v2081, 2147483648
      %v2143 = vor.u32 1.1754944e-38, %v2142
      %v2144 = vsel %vm2141, %v2143, %v2139
      %v2145 = vmul.f32 1.0, %v2144
      %v2146 = vrcp.pop %v2082
      %v2147 = vmul.f32 %v2082, %v2146
      %v2148 = vsub.f32 1.0, %v2147
      %v2149 = vmul.f32 %v2146, %v2148
      %v2150 = vadd.f32 %v2146, %v2149
      %vm2151 = vweird.f32 %v2082
      %vm2152 = vweird.f32 %v2146
      %vm2153 = vmor %vm2151, %vm2152
      %v2154 = vsel %vm2153, %v2146, %v2150
      %v2155 = vand.u32 2147483647, %v2082
      %vm2156 = vcmp.eq.f32.partialorder %v2155, 8.507059e+37
      %v2157 = vand.u32 %v2082, 2147483648
      %v2158 = vor.u32 1.1754944e-38, %v2157
      %v2159 = vsel %vm2156, %v2158, %v2154
      %v2160 = vmul.f32 1.0, %v2159
      %v2161 = vrcp.pop %v2083
      %v2162 = vmul.f32 %v2083, %v2161
      %v2163 = vsub.f32 1.0, %v2162
      %v2164 = vmul.f32 %v2161, %v2163
      %v2165 = vadd.f32 %v2161, %v2164
      %vm2166 = vweird.f32 %v2083
      %vm2167 = vweird.f32 %v2161
      %vm2168 = vmor %vm2166, %vm2167
      %v2169 = vsel %vm2168, %v2161, %v2165
      %v2170 = vand.u32 2147483647, %v2083
      %vm2171 = vcmp.eq.f32.partialorder %v2170, 8.507059e+37
      %v2172 = vand.u32 %v2083, 2147483648
      %v2173 = vor.u32 1.1754944e-38, %v2172
      %v2174 = vsel %vm2171, %v2173, %v2169
      %v2175 = vmul.f32 1.0, %v2174
      %v2176 = vrcp.pop %v2084
      %v2177 = vmul.f32 %v2084, %v2176
      %v2178 = vsub.f32 1.0, %v2177
      %v2179 = vmul.f32 %v2176, %v2178
      %v2180 = vadd.f32 %v2176, %v2179
      %vm2181 = vweird.f32 %v2084
      %vm2182 = vweird.f32 %v2176
      %vm2183 = vmor %vm2181, %vm2182
      %v2184 = vsel %vm2183, %v2176, %v2180
      %v2185 = vand.u32 2147483647, %v2084
      %vm2186 = vcmp.eq.f32.partialorder %v2185, 8.507059e+37
      %v2187 = vand.u32 %v2084, 2147483648
      %v2188 = vor.u32 1.1754944e-38, %v2187
      %v2189 = vsel %vm2186, %v2188, %v2184
      %v2190 = vmul.f32 1.0, %v2189
      %v2191 = vrcp.pop %v2085
      %v2192 = vmul.f32 %v2085, %v2191
      %v2193 = vsub.f32 1.0, %v2192
      %v2194 = vmul.f32 %v2191, %v2193
      %v2195 = vadd.f32 %v2191, %v2194
      %vm2196 = vweird.f32 %v2085
      %vm2197 = vweird.f32 %v2191
      %vm2198 = vmor %vm2196, %vm2197
      %v2199 = vsel %vm2198, %v2191, %v2195
      %v2200 = vand.u32 2147483647, %v2085
      %vm2201 = vcmp.eq.f32.partialorder %v2200, 8.507059e+37
      %v2202 = vand.u32 %v2085, 2147483648
      %v2203 = vor.u32 1.1754944e-38, %v2202
      %v2204 = vsel %vm2201, %v2203, %v2199
      %v2205 = vmul.f32 1.0, %v2204
      %v2206 = vmul.f32 %v2046, %v2100
      %v2207 = vmul.f32 %v2047, %v2115
      %v2208 = vmul.f32 %v2048, %v2130
      %v2209 = vmul.f32 %v2049, %v2145
      %v2210 = vmul.f32 %v2050, %v2160
      %v2211 = vmul.f32 %v2051, %v2175
      %v2212 = vmul.f32 %v2052, %v2190
      %v2213 = vmul.f32 %v2053, %v2205
      %v2214 = vpack.c.bf16 %v2206, %v2206
      %v2215 = vpack.c.bf16 %v2207, %v2207
      %v2216 = vpack.c.bf16 %v2208, %v2208
      %v2217 = vpack.c.bf16 %v2209, %v2209
      %v2218 = vpack.c.bf16 %v2210, %v2210
      %v2219 = vpack.c.bf16 %v2211, %v2211
      %v2220 = vpack.c.bf16 %v2212, %v2212
      %v2221 = vpack.c.bf16 %v2213, %v2213
      %v2223 = vshrl.u32 %v2214, 16
      %v2225 = vrot.slane %v2223, 7
      %v2226 = vshll.u32 %v2214, 16
      %v2228 = vor.u32 %v2225, %v2226
      %v2230 = vshrl.u32 %v2215, 16
      %v2232 = vrot.slane %v2230, 7
      %v2233 = vshll.u32 %v2215, 16
      %v2235 = vor.u32 %v2232, %v2233
      %v2237 = vshrl.u32 %v2216, 16
      %v2239 = vrot.slane %v2237, 7
      %v2240 = vshll.u32 %v2216, 16
      %v2242 = vor.u32 %v2239, %v2240
      %v2244 = vshrl.u32 %v2217, 16
      %v2246 = vrot.slane %v2244, 7
      %v2247 = vshll.u32 %v2217, 16
      %v2249 = vor.u32 %v2246, %v2247
      %v2251 = vshrl.u32 %v2218, 16
      %v2253 = vrot.slane %v2251, 7
      %v2254 = vshll.u32 %v2218, 16
      %v2256 = vor.u32 %v2253, %v2254
      %v2258 = vshrl.u32 %v2219, 16
      %v2260 = vrot.slane %v2258, 7
      %v2261 = vshll.u32 %v2219, 16
      %v2263 = vor.u32 %v2260, %v2261
      %v2265 = vshrl.u32 %v2220, 16
      %v2267 = vrot.slane %v2265, 7
      %v2268 = vshll.u32 %v2220, 16
      %v2270 = vor.u32 %v2267, %v2268
      %v2272 = vshrl.u32 %v2221, 16
      %v2274 = vrot.slane %v2272, 7
      %v2275 = vshll.u32 %v2221, 16
      %v2277 = vor.u32 %v2274, %v2275
      %v2286 = vsel %vm1056, 0, %v2228
      %v2287 = vsel %vm1056, 0, %v2235
      %v2288 = vsel %vm1056, 0, %v2242
      %v2289 = vsel %vm1056, 0, %v2249
      %v2290 = vsel %vm1056, 0, %v2256
      %v2291 = vsel %vm1056, 0, %v2263
      %v2292 = vsel %vm1056, 0, %v2270
      %v2293 = vsel %vm1056, 0, %v2277
      %v2294 = vsel %vm1068, %v2286, 0
      %v2295 = vsel %vm1068, %v2287, 0
      %v2296 = vsel %vm1068, %v2288, 0
      %v2297 = vsel %vm1068, %v2289, 0
      %v2298 = vsel %vm1068, %v2290, 0
      %v2299 = vsel %vm1068, %v2291, 0
      %v2300 = vsel %vm1068, %v2292, 0
      %v2301 = vsel %vm1068, %v2293, 0
      %v2302 = vld [vmem:[%s12] sm:$0xf]
      %v2303 = vld [vmem:[%s12 + $0x4] sm:$0xf]
      %v2304 = vld [vmem:[%s12 + $0x8] sm:$0xf]
      %v2305 = vld [vmem:[%s12 + $0xc] sm:$0xf]
      %v2313 = vunpack.c.l.b16 %v2294
      %v2314 = vunpack.c.h.b16 %v2294
      %v2315 = vunpack.c.l.b16 %v2295
      %v2316 = vunpack.c.h.b16 %v2295
      %v2317 = vunpack.c.l.b16 %v2296
      %v2318 = vunpack.c.h.b16 %v2296
      %v2319 = vunpack.c.l.b16 %v2297
      %v2320 = vunpack.c.h.b16 %v2297
      %v2321 = vunpack.c.l.b16 %v2298
      %v2322 = vunpack.c.h.b16 %v2298
      %v2323 = vunpack.c.l.b16 %v2299
      %v2324 = vunpack.c.h.b16 %v2299
      %v2325 = vunpack.c.l.b16 %v2300
      %v2326 = vunpack.c.h.b16 %v2300
      %v2327 = vpack.c.b16 %v2313, %v2313
      %v2328 = vpack.c.b16 %v2314, %v2314
      %v2329 = vpack.c.b16 %v2315, %v2315
      %v2330 = vpack.c.b16 %v2316, %v2316
      %v2331 = vpack.c.b16 %v2317, %v2317
      %v2332 = vpack.c.b16 %v2318, %v2318
      %v2333 = vpack.c.b16 %v2319, %v2319
      %v2334 = vpack.c.b16 %v2320, %v2320
      %v2335 = vpack.c.b16 %v2321, %v2321
      %v2336 = vpack.c.b16 %v2322, %v2322
      %v2337 = vpack.c.b16 %v2323, %v2323
      %v2338 = vpack.c.b16 %v2324, %v2324
      %v2339 = vpack.c.b16 %v2325, %v2325
      %v2340 = vpack.c.b16 %v2326, %v2326
      %v2342 = vshrl.u32 %v2327, 16
      %v2344 = vrot.slane %v2342, 4
      %v2345 = vshll.u32 %v2327, 16
      %v2347 = vrot.slane %v2345, 5
      %v2348 = vor.u32 %v2344, %v2347
      %v2349 = vrot.slane %v2348, 4
      %v2351 = vshll.u32 %v2328, 16
      %v2353 = vrot.slane %v2351, 5
      %v2354 = vsel %vm1122, %v2349, %v2353
      %v2356 = vshrl.u32 %v2329, 16
      %v2358 = vrot.slane %v2356, 4
      %v2359 = vshll.u32 %v2329, 16
      %v2361 = vrot.slane %v2359, 5
      %v2362 = vor.u32 %v2358, %v2361
      %v2363 = vrot.slane %v2362, 4
      %v2365 = vshll.u32 %v2330, 16
      %v2367 = vrot.slane %v2365, 5
      %v2368 = vsel %vm1122, %v2363, %v2367
      %v2370 = vshrl.u32 %v2331, 16
      %v2372 = vrot.slane %v2370, 4
      %v2373 = vshll.u32 %v2331, 16
      %v2375 = vrot.slane %v2373, 5
      %v2376 = vor.u32 %v2372, %v2375
      %v2377 = vrot.slane %v2376, 4
      %v2379 = vshll.u32 %v2332, 16
      %v2381 = vrot.slane %v2379, 5
      %v2382 = vsel %vm1122, %v2377, %v2381
      %v2384 = vshrl.u32 %v2333, 16
      %v2386 = vrot.slane %v2384, 4
      %v2387 = vshll.u32 %v2333, 16
      %v2389 = vrot.slane %v2387, 5
      %v2390 = vor.u32 %v2386, %v2389
      %v2391 = vrot.slane %v2390, 4
      %v2393 = vshll.u32 %v2334, 16
      %v2395 = vrot.slane %v2393, 5
      %v2396 = vsel %vm1122, %v2391, %v2395
      %v2398 = vshrl.u32 %v2335, 16
      %v2400 = vrot.slane %v2398, 4
      %v2401 = vshll.u32 %v2335, 16
      %v2403 = vrot.slane %v2401, 5
      %v2404 = vor.u32 %v2400, %v2403
      %v2405 = vrot.slane %v2404, 4
      %v2407 = vshll.u32 %v2336, 16
      %v2409 = vrot.slane %v2407, 5
      %v2410 = vsel %vm1122, %v2405, %v2409
      %v2412 = vshrl.u32 %v2337, 16
      %v2414 = vrot.slane %v2412, 4
      %v2415 = vshll.u32 %v2337, 16
      %v2417 = vrot.slane %v2415, 5
      %v2418 = vor.u32 %v2414, %v2417
      %v2419 = vrot.slane %v2418, 4
      %v2421 = vshll.u32 %v2338, 16
      %v2423 = vrot.slane %v2421, 5
      %v2424 = vsel %vm1122, %v2419, %v2423
      %v2426 = vshrl.u32 %v2339, 16
      %v2428 = vrot.slane %v2426, 4
      %v2429 = vshll.u32 %v2339, 16
      %v2431 = vrot.slane %v2429, 5
      %v2432 = vor.u32 %v2428, %v2431
      %v2433 = vrot.slane %v2432, 4
      %v2435 = vshll.u32 %v2340, 16
      %v2437 = vrot.slane %v2435, 5
      %v2438 = vsel %vm1122, %v2433, %v2437
      %s2439 = scalar_lea.vmem %s12, 16
      %v2440 = vld [vmem:[%s2439] sm:$0xf]
      %v2441 = vld [vmem:[%s2439 + $0x4] sm:$0xf]
      %v2442 = vld [vmem:[%s2439 + $0x8] sm:$0xf]
      %v2443 = vld [vmem:[%s2439 + $0xc] sm:$0xf]
      %v2444 = vunpack.c.l.b16 %v2354
      %v2445 = vunpack.c.l.b16 %v2368
      %v2446 = vunpack.c.l.b16 %v2382
      %v2447 = vunpack.c.l.b16 %v2396
      %v2448 = vunpack.c.l.b16 %v2410
      %v2449 = vunpack.c.l.b16 %v2424
      %v2450 = vunpack.c.l.b16 %v2438
      %v2451 = vpack.c.b16 %v2444, %v1238
      %v2452 = vpack.c.b16 %v2446, %v2445
      %v2453 = vpack.c.b16 %v2448, %v2447
      %v2454 = vpack.c.b16 %v2450, %v2449
      %v2459 = vunpack.c.l.b16 %v2440
      %v2460 = vunpack.c.l.b16 %v2441
      %v2461 = vunpack.c.l.b16 %v2442
      %v2462 = vunpack.c.l.b16 %v2443
      %v2463 = vpack.c.b16 %v2460, %v2459
      %v2464 = vpack.c.b16 %v2462, %v2461
      %v2468 = vsel %vm957, %v2451, 0
      %v2471 = vsel %vm957, %v2452, 0
      %v2474 = vsel %vm957, %v2453, 0
      %v2477 = vsel %vm957, %v2454, 0
      %2479 = vmatpush.bf16.msra.mxu0 0
      %2480 = vmatpush.bf16.msra.mxu0 0
      %2481 = vmatpush.bf16.msra.mxu0 0
      %2482 = vmatpush.bf16.msra.mxu0 0
      %2483 = vmatpush.bf16.msra.mxu0 0
      %2484 = vmatpush.bf16.msra.mxu0 0
      %2485 = vmatpush.bf16.msra.mxu0 %v2464
      %2486 = vmatpush.bf16.msra.mxu0 %v2463
      %2487 = vmatmul.bf16.gmra.mxu0 %v2468
      %v2488 = vpop.f32.mrf.mxu0
      %v2489 = vadd.f32 0.0, %v2488
      %v2490 = vpop.f32.mrf.mxu0
      %v2491 = vadd.f32 0.0, %v2490
      %2492 = vmatmul.bf16.gmra.mxu0 %v2471
      %v2493 = vpop.f32.mrf.mxu0
      %v2494 = vadd.f32 0.0, %v2493
      %v2495 = vpop.f32.mrf.mxu0
      %v2496 = vadd.f32 0.0, %v2495
      %2497 = vmatmul.bf16.gmra.mxu0 %v2474
      %v2498 = vpop.f32.mrf.mxu0
      %v2499 = vadd.f32 0.0, %v2498
      %v2500 = vpop.f32.mrf.mxu0
      %v2501 = vadd.f32 0.0, %v2500
      %2502 = vmatmul.bf16.gmra.mxu0 %v2477
      %v2503 = vpop.f32.mrf.mxu0
      %v2504 = vadd.f32 0.0, %v2503
      %v2505 = vpop.f32.mrf.mxu0
      %v2506 = vadd.f32 0.0, %v2505
      %2507 = vdwg.mxu0
      %v2508 = vpack.c.b16 %v2313, %v1088
      %v2509 = vpack.c.b16 %v2317, %v2315
      %v2510 = vpack.c.b16 %v2321, %v2319
      %v2511 = vpack.c.b16 %v2325, %v2323
      %v2516 = vunpack.c.l.b16 %v2302
      %v2517 = vunpack.c.l.b16 %v2303
      %v2518 = vunpack.c.l.b16 %v2304
      %v2519 = vunpack.c.l.b16 %v2305
      %v2520 = vpack.c.b16 %v2517, %v2516
      %v2521 = vpack.c.b16 %v2519, %v2518
      %v2525 = vsel %vm957, %v2508, 0
      %v2528 = vsel %vm957, %v2509, 0
      %v2531 = vsel %vm957, %v2510, 0
      %v2534 = vsel %vm957, %v2511, 0
      %2536 = vmatpush.bf16.msra.mxu0 0
      %2537 = vmatpush.bf16.msra.mxu0 0
      %2538 = vmatpush.bf16.msra.mxu0 0
      %2539 = vmatpush.bf16.msra.mxu0 0
      %2540 = vmatpush.bf16.msra.mxu0 0
      %2541 = vmatpush.bf16.msra.mxu0 0
      %2542 = vmatpush.bf16.msra.mxu0 %v2521
      %2543 = vmatpush.bf16.msra.mxu0 %v2520
      %2544 = vmatmul.bf16.gmra.mxu0 %v2525
      %v2545 = vpop.f32.mrf.mxu0
      %v2546 = vadd.f32 %v2489, %v2545
      %v2547 = vpop.f32.mrf.mxu0
      %v2548 = vadd.f32 %v2491, %v2547
      %2549 = vmatmul.bf16.gmra.mxu0 %v2528
      %v2550 = vpop.f32.mrf.mxu0
      %v2551 = vadd.f32 %v2494, %v2550
      %v2552 = vpop.f32.mrf.mxu0
      %v2553 = vadd.f32 %v2496, %v2552
      %2554 = vmatmul.bf16.gmra.mxu0 %v2531
      %v2555 = vpop.f32.mrf.mxu0
      %v2556 = vadd.f32 %v2499, %v2555
      %v2557 = vpop.f32.mrf.mxu0
      %v2558 = vadd.f32 %v2501, %v2557
      %2559 = vmatmul.bf16.gmra.mxu0 %v2534
      %v2560 = vpop.f32.mrf.mxu0
      %v2561 = vadd.f32 %v2504, %v2560
      %v2562 = vpop.f32.mrf.mxu0
      %v2563 = vadd.f32 %v2506, %v2562
      %2564 = vdwg.mxu0
      %v2565 = vrot.slane %v2327, 5
      %v2566 = vrot.slane %v2565, 4
      %v2567 = vrot.slane %v2328, 5
      %v2568 = vsel %vm1350, %v2566, %v2567
      %v2569 = vrot.slane %v2329, 5
      %v2570 = vrot.slane %v2569, 4
      %v2571 = vrot.slane %v2330, 5
      %v2572 = vsel %vm1350, %v2570, %v2571
      %v2573 = vrot.slane %v2331, 5
      %v2574 = vrot.slane %v2573, 4
      %v2575 = vrot.slane %v2332, 5
      %v2576 = vsel %vm1350, %v2574, %v2575
      %v2577 = vrot.slane %v2333, 5
      %v2578 = vrot.slane %v2577, 4
      %v2579 = vrot.slane %v2334, 5
      %v2580 = vsel %vm1350, %v2578, %v2579
      %v2581 = vrot.slane %v2335, 5
      %v2582 = vrot.slane %v2581, 4
      %v2583 = vrot.slane %v2336, 5
      %v2584 = vsel %vm1350, %v2582, %v2583
      %v2585 = vrot.slane %v2337, 5
      %v2586 = vrot.slane %v2585, 4
      %v2587 = vrot.slane %v2338, 5
      %v2588 = vsel %vm1350, %v2586, %v2587
      %v2589 = vrot.slane %v2339, 5
      %v2590 = vrot.slane %v2589, 4
      %v2591 = vrot.slane %v2340, 5
      %v2592 = vsel %vm1350, %v2590, %v2591
      %s2593 = scalar_lea.vmem %s12, 32
      %v2594 = vld [vmem:[%s2593] sm:$0xf]
      %v2595 = vld [vmem:[%s2593 + $0x4] sm:$0xf]
      %v2596 = vld [vmem:[%s2593 + $0x8] sm:$0xf]
      %v2597 = vld [vmem:[%s2593 + $0xc] sm:$0xf]
      %v2598 = vunpack.c.l.b16 %v2568
      %v2599 = vunpack.c.l.b16 %v2572
      %v2600 = vunpack.c.l.b16 %v2576
      %v2601 = vunpack.c.l.b16 %v2580
      %v2602 = vunpack.c.l.b16 %v2584
      %v2603 = vunpack.c.l.b16 %v2588
      %v2604 = vunpack.c.l.b16 %v2592
      %v2605 = vpack.c.b16 %v2598, %v1386
      %v2606 = vpack.c.b16 %v2600, %v2599
      %v2607 = vpack.c.b16 %v2602, %v2601
      %v2608 = vpack.c.b16 %v2604, %v2603
      %v2613 = vunpack.c.l.b16 %v2594
      %v2614 = vunpack.c.l.b16 %v2595
      %v2615 = vunpack.c.l.b16 %v2596
      %v2616 = vunpack.c.l.b16 %v2597
      %v2617 = vpack.c.b16 %v2614, %v2613
      %v2618 = vpack.c.b16 %v2616, %v2615
      %v2622 = vsel %vm957, %v2605, 0
      %v2625 = vsel %vm957, %v2606, 0
      %v2628 = vsel %vm957, %v2607, 0
      %v2631 = vsel %vm957, %v2608, 0
      %2633 = vmatpush.bf16.msra.mxu0 0
      %2634 = vmatpush.bf16.msra.mxu0 0
      %2635 = vmatpush.bf16.msra.mxu0 0
      %2636 = vmatpush.bf16.msra.mxu0 0
      %2637 = vmatpush.bf16.msra.mxu0 0
      %2638 = vmatpush.bf16.msra.mxu0 0
      %2639 = vmatpush.bf16.msra.mxu0 %v2618
      %2640 = vmatpush.bf16.msra.mxu0 %v2617
      %2641 = vmatmul.bf16.gmra.mxu0 %v2622
      %v2642 = vpop.f32.mrf.mxu0
      %v2643 = vadd.f32 0.0, %v2642
      %v2644 = vpop.f32.mrf.mxu0
      %v2645 = vadd.f32 0.0, %v2644
      %2646 = vmatmul.bf16.gmra.mxu0 %v2625
      %v2647 = vpop.f32.mrf.mxu0
      %v2648 = vadd.f32 0.0, %v2647
      %v2649 = vpop.f32.mrf.mxu0
      %v2650 = vadd.f32 0.0, %v2649
      %2651 = vmatmul.bf16.gmra.mxu0 %v2628
      %v2652 = vpop.f32.mrf.mxu0
      %v2653 = vadd.f32 0.0, %v2652
      %v2654 = vpop.f32.mrf.mxu0
      %v2655 = vadd.f32 0.0, %v2654
      %2656 = vmatmul.bf16.gmra.mxu0 %v2631
      %v2657 = vpop.f32.mrf.mxu0
      %v2658 = vadd.f32 0.0, %v2657
      %v2659 = vpop.f32.mrf.mxu0
      %v2660 = vadd.f32 0.0, %v2659
      %2661 = vdwg.mxu0
      %v2662 = vadd.f32 %v2546, %v2643
      %v2663 = vadd.f32 %v2548, %v2645
      %v2664 = vadd.f32 %v2551, %v2648
      %v2665 = vadd.f32 %v2553, %v2650
      %v2666 = vadd.f32 %v2556, %v2653
      %v2667 = vadd.f32 %v2558, %v2655
      %v2668 = vadd.f32 %v2561, %v2658
      %v2669 = vadd.f32 %v2563, %v2660
      %s2670 = scalar_lea.vmem %s12, 48
      %v2671 = vld [vmem:[%s2670] sm:$0xf]
      %v2672 = vld [vmem:[%s2670 + $0x4] sm:$0xf]
      %v2673 = vld [vmem:[%s2670 + $0x8] sm:$0xf]
      %v2674 = vld [vmem:[%s2670 + $0xc] sm:$0xf]
      %v2676 = vunpack.c.l.b16 %v2301
      %v2677 = vpack.c.b16 %v2315, %v2313
      %v2678 = vpack.c.b16 %v2319, %v2317
      %v2679 = vpack.c.b16 %v2323, %v2321
      %v2680 = vpack.c.b16 %v2676, %v2325
      %v2685 = vunpack.c.l.b16 %v2671
      %v2686 = vunpack.c.l.b16 %v2672
      %v2687 = vunpack.c.l.b16 %v2673
      %v2688 = vunpack.c.l.b16 %v2674
      %v2689 = vpack.c.b16 %v2686, %v2685
      %v2690 = vpack.c.b16 %v2688, %v2687
      %v2694 = vsel %vm957, %v2677, 0
      %v2697 = vsel %vm957, %v2678, 0
      %v2700 = vsel %vm957, %v2679, 0
      %v2703 = vsel %vm957, %v2680, 0
      %2705 = vmatpush.bf16.msra.mxu0 0
      %2706 = vmatpush.bf16.msra.mxu0 0
      %2707 = vmatpush.bf16.msra.mxu0 0
      %2708 = vmatpush.bf16.msra.mxu0 0
      %2709 = vmatpush.bf16.msra.mxu0 0
      %2710 = vmatpush.bf16.msra.mxu0 0
      %2711 = vmatpush.bf16.msra.mxu0 %v2690
      %2712 = vmatpush.bf16.msra.mxu0 %v2689
      %2713 = vmatmul.bf16.gmra.mxu0 %v2694
      %v2714 = vpop.f32.mrf.mxu0
      %v2715 = vadd.f32 0.0, %v2714
      %v2716 = vpop.f32.mrf.mxu0
      %v2717 = vadd.f32 0.0, %v2716
      %2718 = vmatmul.bf16.gmra.mxu0 %v2697
      %v2719 = vpop.f32.mrf.mxu0
      %v2720 = vadd.f32 0.0, %v2719
      %v2721 = vpop.f32.mrf.mxu0
      %v2722 = vadd.f32 0.0, %v2721
      %2723 = vmatmul.bf16.gmra.mxu0 %v2700
      %v2724 = vpop.f32.mrf.mxu0
      %v2725 = vadd.f32 0.0, %v2724
      %v2726 = vpop.f32.mrf.mxu0
      %v2727 = vadd.f32 0.0, %v2726
      %2728 = vmatmul.bf16.gmra.mxu0 %v2703
      %v2729 = vpop.f32.mrf.mxu0
      %v2730 = vadd.f32 0.0, %v2729
      %v2731 = vpop.f32.mrf.mxu0
      %v2732 = vadd.f32 0.0, %v2731
      %2733 = vdwg.mxu0
      %v2734 = vadd.f32 %v2662, %v2715
      %v2735 = vadd.f32 %v2663, %v2717
      %v2736 = vadd.f32 %v2664, %v2720
      %v2737 = vadd.f32 %v2665, %v2722
      %v2738 = vadd.f32 %v2666, %v2725
      %v2739 = vadd.f32 %v2667, %v2727
      %v2740 = vadd.f32 %v2668, %v2730
      %v2741 = vadd.f32 %v2669, %v2732
      %v2742 = vunpack.c.h.b16 %v2301
      %v2743 = vpack.c.b16 %v2676, %v2676
      %v2744 = vpack.c.b16 %v2742, %v2742
      %v2746 = vshrl.u32 %v2743, 16
      %v2748 = vrot.slane %v2746, 4
      %v2749 = vshll.u32 %v2743, 16
      %v2751 = vrot.slane %v2749, 5
      %v2752 = vor.u32 %v2748, %v2751
      %v2753 = vrot.slane %v2752, 4
      %v2755 = vshll.u32 %v2744, 16
      %v2757 = vrot.slane %v2755, 5
      %v2758 = vsel %vm1122, %v2753, %v2757
      %s2759 = scalar_lea.vmem %s12, 64
      %v2760 = vld [vmem:[%s2759] sm:$0xf]
      %v2761 = vld [vmem:[%s2759 + $0x4] sm:$0xf]
      %v2762 = vld [vmem:[%s2759 + $0x8] sm:$0xf]
      %v2763 = vld [vmem:[%s2759 + $0xc] sm:$0xf]
      %v2764 = vunpack.c.l.b16 %v2758
      %v2765 = vpack.c.b16 %v2445, %v2444
      %v2766 = vpack.c.b16 %v2447, %v2446
      %v2767 = vpack.c.b16 %v2449, %v2448
      %v2768 = vpack.c.b16 %v2764, %v2450
      %v2773 = vunpack.c.l.b16 %v2760
      %v2774 = vunpack.c.l.b16 %v2761
      %v2775 = vunpack.c.l.b16 %v2762
      %v2776 = vunpack.c.l.b16 %v2763
      %v2777 = vpack.c.b16 %v2774, %v2773
      %v2778 = vpack.c.b16 %v2776, %v2775
      %v2782 = vsel %vm957, %v2765, 0
      %v2785 = vsel %vm957, %v2766, 0
      %v2788 = vsel %vm957, %v2767, 0
      %v2791 = vsel %vm957, %v2768, 0
      %2793 = vmatpush.bf16.msra.mxu0 0
      %2794 = vmatpush.bf16.msra.mxu0 0
      %2795 = vmatpush.bf16.msra.mxu0 0
      %2796 = vmatpush.bf16.msra.mxu0 0
      %2797 = vmatpush.bf16.msra.mxu0 0
      %2798 = vmatpush.bf16.msra.mxu0 0
      %2799 = vmatpush.bf16.msra.mxu0 %v2778
      %2800 = vmatpush.bf16.msra.mxu0 %v2777
      %2801 = vmatmul.bf16.gmra.mxu0 %v2782
      %v2802 = vpop.f32.mrf.mxu0
      %v2803 = vadd.f32 0.0, %v2802
      %v2804 = vpop.f32.mrf.mxu0
      %v2805 = vadd.f32 0.0, %v2804
      %2806 = vmatmul.bf16.gmra.mxu0 %v2785
      %v2807 = vpop.f32.mrf.mxu0
      %v2808 = vadd.f32 0.0, %v2807
      %v2809 = vpop.f32.mrf.mxu0
      %v2810 = vadd.f32 0.0, %v2809
      %2811 = vmatmul.bf16.gmra.mxu0 %v2788
      %v2812 = vpop.f32.mrf.mxu0
      %v2813 = vadd.f32 0.0, %v2812
      %v2814 = vpop.f32.mrf.mxu0
      %v2815 = vadd.f32 0.0, %v2814
      %2816 = vmatmul.bf16.gmra.mxu0 %v2791
      %v2817 = vpop.f32.mrf.mxu0
      %v2818 = vadd.f32 0.0, %v2817
      %v2819 = vpop.f32.mrf.mxu0
      %v2820 = vadd.f32 0.0, %v2819
      %2821 = vdwg.mxu0
      %v2822 = vadd.f32 %v2734, %v2803
      %v2823 = vadd.f32 %v2735, %v2805
      %v2824 = vadd.f32 %v2736, %v2808
      %v2825 = vadd.f32 %v2737, %v2810
      %v2826 = vadd.f32 %v2738, %v2813
      %v2827 = vadd.f32 %v2739, %v2815
      %v2828 = vadd.f32 %v2740, %v2818
      %v2829 = vadd.f32 %v2741, %v2820
      %v2830 = vrot.slane %v2743, 5
      %v2831 = vrot.slane %v2830, 4
      %v2832 = vrot.slane %v2744, 5
      %v2833 = vsel %vm1350, %v2831, %v2832
      %s2834 = scalar_lea.vmem %s12, 80
      %v2835 = vld [vmem:[%s2834] sm:$0xf]
      %v2836 = vld [vmem:[%s2834 + $0x4] sm:$0xf]
      %v2837 = vld [vmem:[%s2834 + $0x8] sm:$0xf]
      %v2838 = vld [vmem:[%s2834 + $0xc] sm:$0xf]
      %v2839 = vunpack.c.l.b16 %v2833
      %v2840 = vpack.c.b16 %v2599, %v2598
      %v2841 = vpack.c.b16 %v2601, %v2600
      %v2842 = vpack.c.b16 %v2603, %v2602
      %v2843 = vpack.c.b16 %v2839, %v2604
      %v2848 = vunpack.c.l.b16 %v2835
      %v2849 = vunpack.c.l.b16 %v2836
      %v2850 = vunpack.c.l.b16 %v2837
      %v2851 = vunpack.c.l.b16 %v2838
      %v2852 = vpack.c.b16 %v2849, %v2848
      %v2853 = vpack.c.b16 %v2851, %v2850
      %v2857 = vsel %vm957, %v2840, 0
      %v2860 = vsel %vm957, %v2841, 0
      %v2863 = vsel %vm957, %v2842, 0
      %v2866 = vsel %vm957, %v2843, 0
      %2868 = vmatpush.bf16.msra.mxu0 0
      %2869 = vmatpush.bf16.msra.mxu0 0
      %2870 = vmatpush.bf16.msra.mxu0 0
      %2871 = vmatpush.bf16.msra.mxu0 0
      %2872 = vmatpush.bf16.msra.mxu0 0
      %2873 = vmatpush.bf16.msra.mxu0 0
      %2874 = vmatpush.bf16.msra.mxu0 %v2853
      %2875 = vmatpush.bf16.msra.mxu0 %v2852
      %2876 = vmatmul.bf16.gmra.mxu0 %v2857
      %v2877 = vpop.f32.mrf.mxu0
      %v2878 = vadd.f32 0.0, %v2877
      %v2879 = vpop.f32.mrf.mxu0
      %v2880 = vadd.f32 0.0, %v2879
      %2881 = vmatmul.bf16.gmra.mxu0 %v2860
      %v2882 = vpop.f32.mrf.mxu0
      %v2883 = vadd.f32 0.0, %v2882
      %v2884 = vpop.f32.mrf.mxu0
      %v2885 = vadd.f32 0.0, %v2884
      %2886 = vmatmul.bf16.gmra.mxu0 %v2863
      %v2887 = vpop.f32.mrf.mxu0
      %v2888 = vadd.f32 0.0, %v2887
      %v2889 = vpop.f32.mrf.mxu0
      %v2890 = vadd.f32 0.0, %v2889
      %2891 = vmatmul.bf16.gmra.mxu0 %v2866
      %v2892 = vpop.f32.mrf.mxu0
      %v2893 = vadd.f32 0.0, %v2892
      %v2894 = vpop.f32.mrf.mxu0
      %v2895 = vadd.f32 0.0, %v2894
      %2896 = vdwg.mxu0
      %v2897 = vadd.f32 %v2822, %v2878
      %v2898 = vadd.f32 %v2823, %v2880
      %v2899 = vadd.f32 %v2824, %v2883
      %v2900 = vadd.f32 %v2825, %v2885
      %v2901 = vadd.f32 %v2826, %v2888
      %v2902 = vadd.f32 %v2827, %v2890
      %v2903 = vadd.f32 %v2828, %v2893
      %v2904 = vadd.f32 %v2829, %v2895
      %s2905 = scalar_lea.vmem %s12, 96
      %v2906 = vld [vmem:[%s2905] sm:$0xf]
      %v2907 = vld [vmem:[%s2905 + $0x4] sm:$0xf]
      %v2908 = vld [vmem:[%s2905 + $0x8] sm:$0xf]
      %v2909 = vld [vmem:[%s2905 + $0xc] sm:$0xf]
      %v2910 = vpack.c.b16 %v1088, %v2676
      %v2915 = vunpack.c.l.b16 %v2906
      %v2916 = vunpack.c.l.b16 %v2907
      %v2917 = vunpack.c.l.b16 %v2908
      %v2918 = vunpack.c.l.b16 %v2909
      %v2919 = vpack.c.b16 %v2916, %v2915
      %v2920 = vpack.c.b16 %v2918, %v2917
      %v2924 = vsel %vm957, %v2910, 0
      %2926 = vmatpush.bf16.msra.mxu0 0
      %2927 = vmatpush.bf16.msra.mxu0 0
      %2928 = vmatpush.bf16.msra.mxu0 0
      %2929 = vmatpush.bf16.msra.mxu0 0
      %2930 = vmatpush.bf16.msra.mxu0 0
      %2931 = vmatpush.bf16.msra.mxu0 0
      %2932 = vmatpush.bf16.msra.mxu0 %v2920
      %2933 = vmatpush.bf16.msra.mxu0 %v2919
      %2934 = vmatmul.bf16.gmra.mxu0 %v2528
      %v2935 = vpop.f32.mrf.mxu0
      %v2936 = vadd.f32 0.0, %v2935
      %v2937 = vpop.f32.mrf.mxu0
      %v2938 = vadd.f32 0.0, %v2937
      %2939 = vmatmul.bf16.gmra.mxu0 %v2531
      %v2940 = vpop.f32.mrf.mxu0
      %v2941 = vadd.f32 0.0, %v2940
      %v2942 = vpop.f32.mrf.mxu0
      %v2943 = vadd.f32 0.0, %v2942
      %2944 = vmatmul.bf16.gmra.mxu0 %v2534
      %v2945 = vpop.f32.mrf.mxu0
      %v2946 = vadd.f32 0.0, %v2945
      %v2947 = vpop.f32.mrf.mxu0
      %v2948 = vadd.f32 0.0, %v2947
      %2949 = vmatmul.bf16.gmra.mxu0 %v2924
      %v2950 = vpop.f32.mrf.mxu0
      %v2951 = vadd.f32 0.0, %v2950
      %v2952 = vpop.f32.mrf.mxu0
      %v2953 = vadd.f32 0.0, %v2952
      %2954 = vdwg.mxu0
      %v2955 = vadd.f32 %v2897, %v2936
      %v2956 = vadd.f32 %v2898, %v2938
      %v2957 = vadd.f32 %v2899, %v2941
      %v2958 = vadd.f32 %v2900, %v2943
      %v2959 = vadd.f32 %v2901, %v2946
      %v2960 = vadd.f32 %v2902, %v2948
      %v2961 = vadd.f32 %v2903, %v2951
      %v2962 = vadd.f32 %v2904, %v2953
      %s2963 = scalar_lea.vmem %s12, 112
      %v2964 = vld [vmem:[%s2963] sm:$0xf]
      %v2965 = vld [vmem:[%s2963 + $0x4] sm:$0xf]
      %v2966 = vld [vmem:[%s2963 + $0x8] sm:$0xf]
      %v2967 = vld [vmem:[%s2963 + $0xc] sm:$0xf]
      %v2968 = vpack.c.b16 %v1238, %v2764
      %v2973 = vunpack.c.l.b16 %v2964
      %v2974 = vunpack.c.l.b16 %v2965
      %v2975 = vunpack.c.l.b16 %v2966
      %v2976 = vunpack.c.l.b16 %v2967
      %v2977 = vpack.c.b16 %v2974, %v2973
      %v2978 = vpack.c.b16 %v2976, %v2975
      %v2982 = vsel %vm957, %v2968, 0
      %2984 = vmatpush.bf16.msra.mxu0 0
      %2985 = vmatpush.bf16.msra.mxu0 0
      %2986 = vmatpush.bf16.msra.mxu0 0
      %2987 = vmatpush.bf16.msra.mxu0 0
      %2988 = vmatpush.bf16.msra.mxu0 0
      %2989 = vmatpush.bf16.msra.mxu0 0
      %2990 = vmatpush.bf16.msra.mxu0 %v2978
      %2991 = vmatpush.bf16.msra.mxu0 %v2977
      %2992 = vmatmul.bf16.gmra.mxu0 %v2471
      %v2993 = vpop.f32.mrf.mxu0
      %v2994 = vadd.f32 0.0, %v2993
      %v2995 = vpop.f32.mrf.mxu0
      %v2996 = vadd.f32 0.0, %v2995
      %2997 = vmatmul.bf16.gmra.mxu0 %v2474
      %v2998 = vpop.f32.mrf.mxu0
      %v2999 = vadd.f32 0.0, %v2998
      %v3000 = vpop.f32.mrf.mxu0
      %v3001 = vadd.f32 0.0, %v3000
      %3002 = vmatmul.bf16.gmra.mxu0 %v2477
      %v3003 = vpop.f32.mrf.mxu0
      %v3004 = vadd.f32 0.0, %v3003
      %v3005 = vpop.f32.mrf.mxu0
      %v3006 = vadd.f32 0.0, %v3005
      %3007 = vmatmul.bf16.gmra.mxu0 %v2982
      %v3008 = vpop.f32.mrf.mxu0
      %v3009 = vadd.f32 0.0, %v3008
      %v3010 = vpop.f32.mrf.mxu0
      %v3011 = vadd.f32 0.0, %v3010
      %3012 = vdwg.mxu0
      %v3013 = vadd.f32 %v2955, %v2994
      %v3014 = vadd.f32 %v2956, %v2996
      %v3015 = vadd.f32 %v2957, %v2999
      %v3016 = vadd.f32 %v2958, %v3001
      %v3017 = vadd.f32 %v2959, %v3004
      %v3018 = vadd.f32 %v2960, %v3006
      %v3019 = vadd.f32 %v2961, %v3009
      %v3020 = vadd.f32 %v2962, %v3011
      %s3021 = scalar_lea.vmem %s12, 128
      %v3022 = vld [vmem:[%s3021] sm:$0xf]
      %v3023 = vld [vmem:[%s3021 + $0x4] sm:$0xf]
      %v3024 = vld [vmem:[%s3021 + $0x8] sm:$0xf]
      %v3025 = vld [vmem:[%s3021 + $0xc] sm:$0xf]
      %v3026 = vpack.c.b16 %v1386, %v2839
      %v3031 = vunpack.c.l.b16 %v3022
      %v3032 = vunpack.c.l.b16 %v3023
      %v3033 = vunpack.c.l.b16 %v3024
      %v3034 = vunpack.c.l.b16 %v3025
      %v3035 = vpack.c.b16 %v3032, %v3031
      %v3036 = vpack.c.b16 %v3034, %v3033
      %v3040 = vsel %vm957, %v3026, 0
      %3042 = vmatpush.bf16.msra.mxu0 0
      %3043 = vmatpush.bf16.msra.mxu0 0
      %3044 = vmatpush.bf16.msra.mxu0 0
      %3045 = vmatpush.bf16.msra.mxu0 0
      %3046 = vmatpush.bf16.msra.mxu0 0
      %3047 = vmatpush.bf16.msra.mxu0 0
      %3048 = vmatpush.bf16.msra.mxu0 %v3036
      %3049 = vmatpush.bf16.msra.mxu0 %v3035
      %3050 = vmatmul.bf16.gmra.mxu0 %v2625
      %v3051 = vpop.f32.mrf.mxu0
      %v3052 = vadd.f32 0.0, %v3051
      %v3053 = vpop.f32.mrf.mxu0
      %v3054 = vadd.f32 0.0, %v3053
      %3055 = vmatmul.bf16.gmra.mxu0 %v2628
      %v3056 = vpop.f32.mrf.mxu0
      %v3057 = vadd.f32 0.0, %v3056
      %v3058 = vpop.f32.mrf.mxu0
      %v3059 = vadd.f32 0.0, %v3058
      %3060 = vmatmul.bf16.gmra.mxu0 %v2631
      %v3061 = vpop.f32.mrf.mxu0
      %v3062 = vadd.f32 0.0, %v3061
      %v3063 = vpop.f32.mrf.mxu0
      %v3064 = vadd.f32 0.0, %v3063
      %3065 = vmatmul.bf16.gmra.mxu0 %v3040
      %v3066 = vpop.f32.mrf.mxu0
      %v3067 = vadd.f32 0.0, %v3066
      %v3068 = vpop.f32.mrf.mxu0
      %v3069 = vadd.f32 0.0, %v3068
      %3070 = vdwg.mxu0
      %v3071 = vadd.f32 %v3013, %v3052
      %v3072 = vadd.f32 %v3014, %v3054
      %v3073 = vadd.f32 %v3015, %v3057
      %v3074 = vadd.f32 %v3016, %v3059
      %v3075 = vadd.f32 %v3017, %v3062
      %v3076 = vadd.f32 %v3018, %v3064
      %v3077 = vadd.f32 %v3019, %v3067
      %v3078 = vadd.f32 %v3020, %v3069
      %v3079 = vld [vmem:[%s13] sm:$0x1]
      %v3081 = vperm.slane %v3079, 0
      %v3083 = vadd.f32 %v3071, %v3081
      %v3084 = vadd.f32 %v3072, %v3081
      %v3085 = vadd.f32 %v3073, %v3081
      %v3086 = vadd.f32 %v3074, %v3081
      %v3087 = vadd.f32 %v3075, %v3081
      %v3088 = vadd.f32 %v3076, %v3081
      %v3089 = vadd.f32 %v3077, %v3081
      %v3090 = vadd.f32 %v3078, %v3081
      %v3091 = vpack.c.bf16 %v538, %v537
      %v3092 = vpack.c.bf16 %v540, %v539
      %v3093 = vpack.c.bf16 %v542, %v541
      %v3094 = vpack.c.bf16 %v544, %v543
      %v3095 = vld [vmem:[%s14] sm:$0xf]
      %v3096 = vld [vmem:[%s14 + $0x4] sm:$0xf]
      %v3099 = vunpack.c.l.b16 %v3095
      %v3100 = vunpack.c.l.b16 %v3096
      %v3101 = vpack.c.b16 %v3100, %v3099
      %v3104 = vsel %vm549, %v3091, 0
      %v3107 = vsel %vm549, %v3092, 0
      %v3110 = vsel %vm549, %v3093, 0
      %v3113 = vsel %vm549, %v3094, 0
      %3115 = vmatpush.bf16.msra.mxu0 0
      %3116 = vmatpush.bf16.msra.mxu0 0
      %3117 = vmatpush.bf16.msra.mxu0 0
      %3118 = vmatpush.bf16.msra.mxu0 0
      %3119 = vmatpush.bf16.msra.mxu0 0
      %3120 = vmatpush.bf16.msra.mxu0 0
      %3121 = vmatpush.bf16.msra.mxu0 0
      %3122 = vmatpush.bf16.msra.mxu0 %v3101
      %3123 = vmatmul.bf16.gmra.mxu0 %v3104
      %v3124 = vpop.f32.mrf.mxu0
      %v3125 = vadd.f32 0.0, %v3124
      %v3126 = vpop.f32.mrf.mxu0
      %v3127 = vadd.f32 0.0, %v3126
      %3128 = vmatmul.bf16.gmra.mxu0 %v3107
      %v3129 = vpop.f32.mrf.mxu0
      %v3130 = vadd.f32 0.0, %v3129
      %v3131 = vpop.f32.mrf.mxu0
      %v3132 = vadd.f32 0.0, %v3131
      %3133 = vmatmul.bf16.gmra.mxu0 %v3110
      %v3134 = vpop.f32.mrf.mxu0
      %v3135 = vadd.f32 0.0, %v3134
      %v3136 = vpop.f32.mrf.mxu0
      %v3137 = vadd.f32 0.0, %v3136
      %3138 = vmatmul.bf16.gmra.mxu0 %v3113
      %v3139 = vpop.f32.mrf.mxu0
      %v3140 = vadd.f32 0.0, %v3139
      %v3141 = vpop.f32.mrf.mxu0
      %v3142 = vadd.f32 0.0, %v3141
      %3143 = vdwg.mxu0
      %v3144 = vadd.f32 %v3083, %v3125
      %v3145 = vadd.f32 %v3084, %v3127
      %v3146 = vadd.f32 %v3085, %v3130
      %v3147 = vadd.f32 %v3086, %v3132
      %v3148 = vadd.f32 %v3087, %v3135
      %v3149 = vadd.f32 %v3088, %v3137
      %v3150 = vadd.f32 %v3089, %v3140
      %v3151 = vadd.f32 %v3090, %v3142
      %v3152 = vld [vmem:[%s15] sm:$0x1]
      %v3154 = vperm.slane %v3152, 0
      %v3156 = vadd.f32 %v3144, %v3154
      %v3157 = vadd.f32 %v3145, %v3154
      %v3158 = vadd.f32 %v3146, %v3154
      %v3159 = vadd.f32 %v3147, %v3154
      %v3160 = vadd.f32 %v3148, %v3154
      %v3161 = vadd.f32 %v3149, %v3154
      %v3162 = vadd.f32 %v3150, %v3154
      %v3163 = vadd.f32 %v3151, %v3154
      %3164 = vst.msk [vmem:[%s535] sm:$0xff] %vm957, %v3156
      %3165 = vst.msk [vmem:[%s535 + $0x8] sm:$0xff] %vm957, %v3157
      %3166 = vst.msk [vmem:[%s535 + $0x10] sm:$0xff] %vm957, %v3158
      %3167 = vst.msk [vmem:[%s535 + $0x18] sm:$0xff] %vm957, %v3159
      %3168 = vst.msk [vmem:[%s535 + $0x20] sm:$0xff] %vm957, %v3160
      %3169 = vst.msk [vmem:[%s535 + $0x28] sm:$0xff] %vm957, %v3161
      %3170 = vst.msk [vmem:[%s535 + $0x30] sm:$0xff] %vm957, %v3162
      %3171 = vst.msk [vmem:[%s535 + $0x38] sm:$0xff] %vm957, %v3163
      %p3172 = scmp.lt.s32.totalorder %s27, 1
      %s3173 = scalar_select %p3172, %s27, 1
      %s3174 = smul.addr %s3173, 8
      %s3175 = smul.addr %s3174, 8
      %s3176 = scalar_lea.vmem %s16, %s3175
      // Predicated region
      $region85: #{midblock_forward.3} parent=83 // pred_check
        %p3177 = pneg %p391
      $region86: #{midblock_forward.3} parent=83 // pred_check_branch
        %3179 = sbr.rel (%p3177) target = $region88
      $region87: #{midblock_forward.3} parent=83 // pred_region
        _
      $region88: #{midblock_forward.3} parent=83 // pred_fallthru
        _
    $region84: #{midblock_forward.3} parent=5 // pred_fallthru
      _
    %p3180 = scmp.le.s32.totalorder 2, %s22
    // Predicated region
    $region89: #{midblock_forward.3} parent=5 // pred_check
      %p3181 = pneg %p3180
    $region90: #{midblock_forward.3} parent=5 // pred_check_branch
      %3183 = sbr.rel (%p3181) target = $region92
    $region91: #{midblock_forward.3} parent=5 // pred_region
      %s3184 = ssub.s32 %s22, 2
      // Predicated region
      $region93: #{midblock_forward.3} parent=91 // pred_check
        %p3185 = pneg %p397
      $region94: #{midblock_forward.3} parent=91 // pred_check_branch
        %3187 = sbr.rel (%p3185) target = $region96
      $region95: #{midblock_forward.3} parent=91 // pred_region
        %p3188 = scmp.lt.s32.totalorder %s28, 1
        %s3189 = scalar_select %p3188, %s28, 1
        %s3190 = smul.addr %s3189, 8
        %s3191 = smul.addr %s3190, 8
        %s3192 = scalar_lea.vmem %s16, %s3191
      $region96: #{midblock_forward.3} parent=91 // pred_fallthru
        _
    $region92: #{midblock_forward.3} parent=5 // pred_fallthru
      _
  $region6: #{midblock_forward.3} parent=0 // loop_footer
    %s26 = sadd.s32 1, %s22
  $region7: #{midblock_forward.3} parent=0 // loop_footer_branch
    %21 = sbr.rel target = $region3
  $region8: #{midblock_forward.3} parent=0 // loop_exit
    _

// kernel: midblock_forward.5
$region0: #{midblock_forward.5}
  #allocation0 [shape = 'u32[]', space=smem, size = 0x4, offset = 0x4, fixed_abs, tag = 'smem constant byte address 0x4 - core index']
  #allocation1 [shape = 'u32[72,128]{1,0:T(1,128)}', space=vmem, size = 0x9000, scoped, tag = 'internal scratch']
  %s0 = inlined_call_operand.vmem [shape: f32[2,64,32], index: 0, kind: input, shape index: {}]
  %s1 = inlined_call_operand.vmem [shape: f32[2,1,32], index: 1, kind: input, shape index: {}]
  %s2 = inlined_call_operand.vmem [shape: f32[1,32], index: 2, kind: input, shape index: {}]
  %s3 = inlined_call_operand.vmem [shape: f32[1,32], index: 3, kind: input, shape index: {}]
  %s4 = inlined_call_operand.vmem [shape: f32[32,8], index: 4, kind: input, shape index: {}, may-alias: {4,11}]
  %s5 = inlined_call_operand.vmem [shape: bf16[9,32,32], index: 5, kind: input, shape index: {}]
  %s6 = inlined_call_operand.vmem [shape: f32[1,32], index: 6, kind: input, shape index: {}]
  %s7 = inlined_call_operand.vmem [shape: bf16[32,32], index: 7, kind: input, shape index: {}]
  %s8 = inlined_call_operand.vmem [shape: f32[1,32], index: 8, kind: input, shape index: {}]
  %s9 = inlined_call_operand.vmem [shape: f32[1,32], index: 9, kind: input, shape index: {}]
  %s10 = inlined_call_operand.vmem [shape: f32[1,32], index: 10, kind: input, shape index: {}]
  %s11 = inlined_call_operand.vmem [shape: f32[32,8], index: 11, kind: input, shape index: {}, may-alias: {4,11}]
  %s12 = inlined_call_operand.vmem [shape: bf16[9,32,32], index: 12, kind: input, shape index: {}]
  %s13 = inlined_call_operand.vmem [shape: f32[1,32], index: 13, kind: input, shape index: {}]
  %s14 = inlined_call_operand.vmem [shape: bf16[32,32], index: 14, kind: input, shape index: {}]
  %s15 = inlined_call_operand.vmem [shape: f32[1,32], index: 15, kind: input, shape index: {}]
  %s16 = inlined_call_operand.hbm [shape: f32[2,64,32], index: 16, kind: output, shape index: {}]
  %s17 = sld [smem:[#allocation0]]
  $region97: #{midblock_forward.5} parent=0
    _
  %s19 = ssub.s32 1, %s17
  %s20 = scalar_select 0, %s19, %s17
  $region1: #{midblock_forward.5} parent=0
    #allocation2 [shape = 'u8[65536]{0}', space=vmem, size = 0x10000, scoped, tag = 'output window, operand 0']
    #allocation3 [shape = 's32[2]{0}', space=sflag, size = 0x8, scoped, tag = 'scoped memory for midblock_forward.5']
    %21 = vsyncpa [#allocation3], 0
    %s22 = scalar_lea.sflag [#allocation3], 1
    %23 = vsyncpa %s22, 0
    loop: start=0, step=1, limit=4
    $region2: #{midblock_forward.5} parent=1 // loop_pre_header
      _
    $region3: #{midblock_forward.5} parent=1 // loop_header
      %s25 = sphi 0, %s29
      %p26 = scmp.ge.s32.totalorder %s25, 4
      %s35 = sphi 0, %s37
      %s38 = sphi 0, %s35
      %s39 = sphi 0, %s38
      %s55 = sphi 0, %s39
      %s61 = sphi 0, %s63
      %s64 = sphi 0, %s61
      %s65 = sphi 0, %s64
      %s81 = sphi 0, %s65
      %s85 = sphi 0, %s85
      %s87 = sphi 0, %s85
      %s88 = sphi 0, %s87
      %s102 = sphi 0, %s88
      %s106 = sphi 0, %s106
      %s108 = sphi 0, %s106
      %s109 = sphi 0, %s108
      %s123 = sphi 0, %s109
      %s127 = sphi 0, %s127
      %s129 = sphi 0, %s127
      %s130 = sphi 0, %s129
      %s144 = sphi 0, %s130
      %s148 = sphi 0, %s148
      %s150 = sphi 0, %s148
      %s151 = sphi 0, %s150
      %s165 = sphi 0, %s151
      %s169 = sphi 0, %s169
      %s171 = sphi 0, %s169
      %s172 = sphi 0, %s171
      %s186 = sphi 0, %s172
      %s190 = sphi 0, %s190
      %s192 = sphi 0, %s190
      %s193 = sphi 0, %s192
      %s207 = sphi 0, %s193
      %s211 = sphi 0, %s211
      %s213 = sphi 0, %s211
      %s214 = sphi 0, %s213
      %s228 = sphi 0, %s214
      %s232 = sphi 0, %s232
      %s234 = sphi 0, %s232
      %s235 = sphi 0, %s234
      %s249 = sphi 0, %s235
      %s253 = sphi 0, %s253
      %s255 = sphi 0, %s253
      %s256 = sphi 0, %s255
      %s270 = sphi 0, %s256
      %s274 = sphi 0, %s274
      %s276 = sphi 0, %s274
      %s277 = sphi 0, %s276
      %s291 = sphi 0, %s277
      %s295 = sphi 0, %s295
      %s297 = sphi 0, %s295
      %s298 = sphi 0, %s297
      %s312 = sphi 0, %s298
      %s316 = sphi 0, %s316
      %s318 = sphi 0, %s316
      %s319 = sphi 0, %s318
      %s333 = sphi 0, %s319
      %s337 = sphi 0, %s337
      %s339 = sphi 0, %s337
      %s340 = sphi 0, %s339
      %s354 = sphi 0, %s340
      %s358 = sphi 0, %s358
      %s360 = sphi 0, %s358
      %s361 = sphi 0, %s360
      %s375 = sphi 0, %s361
      %s381 = sphi 0, %s383
      %s384 = sphi 0, %s381
      %s385 = sphi 0, %s384
      %s401 = sphi 0, %s385
    $region4: #{midblock_forward.5} parent=1 // loop_header_branch
      %28 = sbr.rel (%p26) target = $region8
    $region5: #{midblock_forward.5} parent=1 // loop_body
      %s30 = ssub.s32 %s25, 1
      %s31 = ssub.s32 %s25, 2
      %s32 = sadd.s32 %s25, 1
      %s33 = ssub.s32 %s25, %s32
      %p34 = scmp.eq.s32.totalorder %s33, 0
      %s36 = sadd.s32 %s35, 1
      %s37 = scalar_select %p34, %s35, %s36
      %p40 = pneg %p34
      %p41 = scmp.eq.s32.totalorder %s25, 1
      %p42 = por %p40, %p41
      %p43 = scmp.ne.s32.totalorder %s35, %s38
      %p44 = scmp.eq.s32.totalorder %s25, 0
      %p45 = por %p43, %p44
      %p46 = scmp.ne.s32.totalorder %s35, %s38
      %p47 = scmp.eq.s32.totalorder %s30, 1
      %p48 = por %p46, %p47
      %p49 = scmp.ne.s32.totalorder %s38, %s39
      %p50 = scmp.eq.s32.totalorder %s30, 0
      %p51 = por %p49, %p50
      %p52 = scmp.ne.s32.totalorder %s38, %s39
      %p53 = scmp.eq.s32.totalorder %s31, 1
      %p54 = por %p52, %p53
      %p56 = scmp.ne.s32.totalorder %s39, %s55
      %p57 = scmp.eq.s32.totalorder %s31, 0
      %p58 = por %p56, %p57
      %s59 = ssub.s32 %s25, %s32
      %p60 = scmp.eq.s32.totalorder %s59, 0
      %s62 = sadd.s32 %s61, 1
      %s63 = scalar_select %p60, %s61, %s62
      %p66 = pneg %p60
      %p67 = scmp.eq.s32.totalorder %s25, 1
      %p68 = por %p66, %p67
      %p69 = scmp.ne.s32.totalorder %s61, %s64
      %p70 = scmp.eq.s32.totalorder %s25, 0
      %p71 = por %p69, %p70
      %p72 = scmp.ne.s32.totalorder %s61, %s64
      %p73 = scmp.eq.s32.totalorder %s30, 1
      %p74 = por %p72, %p73
      %p75 = scmp.ne.s32.totalorder %s64, %s65
      %p76 = scmp.eq.s32.totalorder %s30, 0
      %p77 = por %p75, %p76
      %p78 = scmp.ne.s32.totalorder %s64, %s65
      %p79 = scmp.eq.s32.totalorder %s31, 1
      %p80 = por %p78, %p79
      %p82 = scmp.ne.s32.totalorder %s65, %s81
      %p83 = scmp.eq.s32.totalorder %s31, 0
      %p84 = por %p82, %p83
      %s86 = sadd.s32 %s85, 1
      %p89 = scmp.eq.s32.totalorder %s25, 1
      %p90 = scmp.ne.s32.totalorder %s85, %s87
      %p91 = scmp.eq.s32.totalorder %s25, 0
      %p92 = por %p90, %p91
      %p93 = scmp.ne.s32.totalorder %s85, %s87
      %p94 = scmp.eq.s32.totalorder %s30, 1
      %p95 = por %p93, %p94
      %p96 = scmp.ne.s32.totalorder %s87, %s88
      %p97 = scmp.eq.s32.totalorder %s30, 0
      %p98 = por %p96, %p97
      %p99 = scmp.ne.s32.totalorder %s87, %s88
      %p100 = scmp.eq.s32.totalorder %s31, 1
      %p101 = por %p99, %p100
      %p103 = scmp.ne.s32.totalorder %s88, %s102
      %p104 = scmp.eq.s32.totalorder %s31, 0
      %p105 = por %p103, %p104
      %s107 = sadd.s32 %s106, 1
      %p110 = scmp.eq.s32.totalorder %s25, 1
      %p111 = scmp.ne.s32.totalorder %s106, %s108
      %p112 = scmp.eq.s32.totalorder %s25, 0
      %p113 = por %p111, %p112
      %p114 = scmp.ne.s32.totalorder %s106, %s108
      %p115 = scmp.eq.s32.totalorder %s30, 1
      %p116 = por %p114, %p115
      %p117 = scmp.ne.s32.totalorder %s108, %s109
      %p118 = scmp.eq.s32.totalorder %s30, 0
      %p119 = por %p117, %p118
      %p120 = scmp.ne.s32.totalorder %s108, %s109
      %p121 = scmp.eq.s32.totalorder %s31, 1
      %p122 = por %p120, %p121
      %p124 = scmp.ne.s32.totalorder %s109, %s123
      %p125 = scmp.eq.s32.totalorder %s31, 0
      %p126 = por %p124, %p125
      %s128 = sadd.s32 %s127, 1
      %p131 = scmp.eq.s32.totalorder %s25, 1
      %p132 = scmp.ne.s32.totalorder %s127, %s129
      %p133 = scmp.eq.s32.totalorder %s25, 0
      %p134 = por %p132, %p133
      %p135 = scmp.ne.s32.totalorder %s127, %s129
      %p136 = scmp.eq.s32.totalorder %s30, 1
      %p137 = por %p135, %p136
      %p138 = scmp.ne.s32.totalorder %s129, %s130
      %p139 = scmp.eq.s32.totalorder %s30, 0
      %p140 = por %p138, %p139
      %p141 = scmp.ne.s32.totalorder %s129, %s130
      %p142 = scmp.eq.s32.totalorder %s31, 1
      %p143 = por %p141, %p142
      %p145 = scmp.ne.s32.totalorder %s130, %s144
      %p146 = scmp.eq.s32.totalorder %s31, 0
      %p147 = por %p145, %p146
      %s149 = sadd.s32 %s148, 1
      %p152 = scmp.eq.s32.totalorder %s25, 1
      %p153 = scmp.ne.s32.totalorder %s148, %s150
      %p154 = scmp.eq.s32.totalorder %s25, 0
      %p155 = por %p153, %p154
      %p156 = scmp.ne.s32.totalorder %s148, %s150
      %p157 = scmp.eq.s32.totalorder %s30, 1
      %p158 = por %p156, %p157
      %p159 = scmp.ne.s32.totalorder %s150, %s151
      %p160 = scmp.eq.s32.totalorder %s30, 0
      %p161 = por %p159, %p160
      %p162 = scmp.ne.s32.totalorder %s150, %s151
      %p163 = scmp.eq.s32.totalorder %s31, 1
      %p164 = por %p162, %p163
      %p166 = scmp.ne.s32.totalorder %s151, %s165
      %p167 = scmp.eq.s32.totalorder %s31, 0
      %p168 = por %p166, %p167
      %s170 = sadd.s32 %s169, 1
      %p173 = scmp.eq.s32.totalorder %s25, 1
      %p174 = scmp.ne.s32.totalorder %s169, %s171
      %p175 = scmp.eq.s32.totalorder %s25, 0
      %p176 = por %p174, %p175
      %p177 = scmp.ne.s32.totalorder %s169, %s171
      %p178 = scmp.eq.s32.totalorder %s30, 1
      %p179 = por %p177, %p178
      %p180 = scmp.ne.s32.totalorder %s171, %s172
      %p181 = scmp.eq.s32.totalorder %s30, 0
      %p182 = por %p180, %p181
      %p183 = scmp.ne.s32.totalorder %s171, %s172
      %p184 = scmp.eq.s32.totalorder %s31, 1
      %p185 = por %p183, %p184
      %p187 = scmp.ne.s32.totalorder %s172, %s186
      %p188 = scmp.eq.s32.totalorder %s31, 0
      %p189 = por %p187, %p188
      %s191 = sadd.s32 %s190, 1
      %p194 = scmp.eq.s32.totalorder %s25, 1
      %p195 = scmp.ne.s32.totalorder %s190, %s192
      %p196 = scmp.eq.s32.totalorder %s25, 0
      %p197 = por %p195, %p196
      %p198 = scmp.ne.s32.totalorder %s190, %s192
      %p199 = scmp.eq.s32.totalorder %s30, 1
      %p200 = por %p198, %p199
      %p201 = scmp.ne.s32.totalorder %s192, %s193
      %p202 = scmp.eq.s32.totalorder %s30, 0
      %p203 = por %p201, %p202
      %p204 = scmp.ne.s32.totalorder %s192, %s193
      %p205 = scmp.eq.s32.totalorder %s31, 1
      %p206 = por %p204, %p205
      %p208 = scmp.ne.s32.totalorder %s193, %s207
      %p209 = scmp.eq.s32.totalorder %s31, 0
      %p210 = por %p208, %p209
      %s212 = sadd.s32 %s211, 1
      %p215 = scmp.eq.s32.totalorder %s25, 1
      %p216 = scmp.ne.s32.totalorder %s211, %s213
      %p217 = scmp.eq.s32.totalorder %s25, 0
      %p218 = por %p216, %p217
      %p219 = scmp.ne.s32.totalorder %s211, %s213
      %p220 = scmp.eq.s32.totalorder %s30, 1
      %p221 = por %p219, %p220
      %p222 = scmp.ne.s32.totalorder %s213, %s214
      %p223 = scmp.eq.s32.totalorder %s30, 0
      %p224 = por %p222, %p223
      %p225 = scmp.ne.s32.totalorder %s213, %s214
      %p226 = scmp.eq.s32.totalorder %s31, 1
      %p227 = por %p225, %p226
      %p229 = scmp.ne.s32.totalorder %s214, %s228
      %p230 = scmp.eq.s32.totalorder %s31, 0
      %p231 = por %p229, %p230
      %s233 = sadd.s32 %s232, 1
      %p236 = scmp.eq.s32.totalorder %s25, 1
      %p237 = scmp.ne.s32.totalorder %s232, %s234
      %p238 = scmp.eq.s32.totalorder %s25, 0
      %p239 = por %p237, %p238
      %p240 = scmp.ne.s32.totalorder %s232, %s234
      %p241 = scmp.eq.s32.totalorder %s30, 1
      %p242 = por %p240, %p241
      %p243 = scmp.ne.s32.totalorder %s234, %s235
      %p244 = scmp.eq.s32.totalorder %s30, 0
      %p245 = por %p243, %p244
      %p246 = scmp.ne.s32.totalorder %s234, %s235
      %p247 = scmp.eq.s32.totalorder %s31, 1
      %p248 = por %p246, %p247
      %p250 = scmp.ne.s32.totalorder %s235, %s249
      %p251 = scmp.eq.s32.totalorder %s31, 0
      %p252 = por %p250, %p251
      %s254 = sadd.s32 %s253, 1
      %p257 = scmp.eq.s32.totalorder %s25, 1
      %p258 = scmp.ne.s32.totalorder %s253, %s255
      %p259 = scmp.eq.s32.totalorder %s25, 0
      %p260 = por %p258, %p259
      %p261 = scmp.ne.s32.totalorder %s253, %s255
      %p262 = scmp.eq.s32.totalorder %s30, 1
      %p263 = por %p261, %p262
      %p264 = scmp.ne.s32.totalorder %s255, %s256
      %p265 = scmp.eq.s32.totalorder %s30, 0
      %p266 = por %p264, %p265
      %p267 = scmp.ne.s32.totalorder %s255, %s256
      %p268 = scmp.eq.s32.totalorder %s31, 1
      %p269 = por %p267, %p268
      %p271 = scmp.ne.s32.totalorder %s256, %s270
      %p272 = scmp.eq.s32.totalorder %s31, 0
      %p273 = por %p271, %p272
      %s275 = sadd.s32 %s274, 1
      %p278 = scmp.eq.s32.totalorder %s25, 1
      %p279 = scmp.ne.s32.totalorder %s274, %s276
      %p280 = scmp.eq.s32.totalorder %s25, 0
      %p281 = por %p279, %p280
      %p282 = scmp.ne.s32.totalorder %s274, %s276
      %p283 = scmp.eq.s32.totalorder %s30, 1
      %p284 = por %p282, %p283
      %p285 = scmp.ne.s32.totalorder %s276, %s277
      %p286 = scmp.eq.s32.totalorder %s30, 0
      %p287 = por %p285, %p286
      %p288 = scmp.ne.s32.totalorder %s276, %s277
      %p289 = scmp.eq.s32.totalorder %s31, 1
      %p290 = por %p288, %p289
      %p292 = scmp.ne.s32.totalorder %s277, %s291
      %p293 = scmp.eq.s32.totalorder %s31, 0
      %p294 = por %p292, %p293
      %s296 = sadd.s32 %s295, 1
      %p299 = scmp.eq.s32.totalorder %s25, 1
      %p300 = scmp.ne.s32.totalorder %s295, %s297
      %p301 = scmp.eq.s32.totalorder %s25, 0
      %p302 = por %p300, %p301
      %p303 = scmp.ne.s32.totalorder %s295, %s297
      %p304 = scmp.eq.s32.totalorder %s30, 1
      %p305 = por %p303, %p304
      %p306 = scmp.ne.s32.totalorder %s297, %s298
      %p307 = scmp.eq.s32.totalorder %s30, 0
      %p308 = por %p306, %p307
      %p309 = scmp.ne.s32.totalorder %s297, %s298
      %p310 = scmp.eq.s32.totalorder %s31, 1
      %p311 = por %p309, %p310
      %p313 = scmp.ne.s32.totalorder %s298, %s312
      %p314 = scmp.eq.s32.totalorder %s31, 0
      %p315 = por %p313, %p314
      %s317 = sadd.s32 %s316, 1
      %p320 = scmp.eq.s32.totalorder %s25, 1
      %p321 = scmp.ne.s32.totalorder %s316, %s318
      %p322 = scmp.eq.s32.totalorder %s25, 0
      %p323 = por %p321, %p322
      %p324 = scmp.ne.s32.totalorder %s316, %s318
      %p325 = scmp.eq.s32.totalorder %s30, 1
      %p326 = por %p324, %p325
      %p327 = scmp.ne.s32.totalorder %s318, %s319
      %p328 = scmp.eq.s32.totalorder %s30, 0
      %p329 = por %p327, %p328
      %p330 = scmp.ne.s32.totalorder %s318, %s319
      %p331 = scmp.eq.s32.totalorder %s31, 1
      %p332 = por %p330, %p331
      %p334 = scmp.ne.s32.totalorder %s319, %s333
      %p335 = scmp.eq.s32.totalorder %s31, 0
      %p336 = por %p334, %p335
      %s338 = sadd.s32 %s337, 1
      %p341 = scmp.eq.s32.totalorder %s25, 1
      %p342 = scmp.ne.s32.totalorder %s337, %s339
      %p343 = scmp.eq.s32.totalorder %s25, 0
      %p344 = por %p342, %p343
      %p345 = scmp.ne.s32.totalorder %s337, %s339
      %p346 = scmp.eq.s32.totalorder %s30, 1
      %p347 = por %p345, %p346
      %p348 = scmp.ne.s32.totalorder %s339, %s340
      %p349 = scmp.eq.s32.totalorder %s30, 0
      %p350 = por %p348, %p349
      %p351 = scmp.ne.s32.totalorder %s339, %s340
      %p352 = scmp.eq.s32.totalorder %s31, 1
      %p353 = por %p351, %p352
      %p355 = scmp.ne.s32.totalorder %s340, %s354
      %p356 = scmp.eq.s32.totalorder %s31, 0
      %p357 = por %p355, %p356
      %s359 = sadd.s32 %s358, 1
      %p362 = scmp.eq.s32.totalorder %s25, 1
      %p363 = scmp.ne.s32.totalorder %s358, %s360
      %p364 = scmp.eq.s32.totalorder %s25, 0
      %p365 = por %p363, %p364
      %p366 = scmp.ne.s32.totalorder %s358, %s360
      %p367 = scmp.eq.s32.totalorder %s30, 1
      %p368 = por %p366, %p367
      %p369 = scmp.ne.s32.totalorder %s360, %s361
      %p370 = scmp.eq.s32.totalorder %s30, 0
      %p371 = por %p369, %p370
      %p372 = scmp.ne.s32.totalorder %s360, %s361
      %p373 = scmp.eq.s32.totalorder %s31, 1
      %p374 = por %p372, %p373
      %p376 = scmp.ne.s32.totalorder %s361, %s375
      %p377 = scmp.eq.s32.totalorder %s31, 0
      %p378 = por %p376, %p377
      %s379 = ssub.s32 %s25, %s32
      %p380 = scmp.eq.s32.totalorder %s379, 0
      %s382 = sadd.s32 %s381, 1
      %s383 = scalar_select %p380, %s381, %s382
      %p386 = pneg %p380
      %p387 = scmp.eq.s32.totalorder %s25, 1
      %p388 = por %p386, %p387
      %p389 = scmp.ne.s32.totalorder %s381, %s384
      %p390 = scmp.eq.s32.totalorder %s25, 0
      %p391 = por %p389, %p390
      %p392 = scmp.ne.s32.totalorder %s381, %s384
      %p393 = scmp.eq.s32.totalorder %s30, 1
      %p394 = por %p392, %p393
      %p395 = scmp.ne.s32.totalorder %s384, %s385
      %p396 = scmp.eq.s32.totalorder %s30, 0
      %p397 = por %p395, %p396
      %p398 = scmp.ne.s32.totalorder %s384, %s385
      %p399 = scmp.eq.s32.totalorder %s31, 1
      %p400 = por %p398, %p399
      %p402 = scmp.ne.s32.totalorder %s385, %s401
      %p403 = scmp.eq.s32.totalorder %s31, 0
      %p404 = por %p402, %p403
      %p405 = scmp.le.s32.totalorder 1, %s25
      %p406 = scmp.lt.s32.totalorder %s25, 3
      %p407 = pnand %p405, %p406
      %p408 = pneg %p407
      // Predicated region
      $region9: #{midblock_forward.5} parent=5 // pred_check
        _
      $region10: #{midblock_forward.5} parent=5 // pred_check_branch
        %410 = sbr.rel (%p407) target = $region12
      $region11: #{midblock_forward.5} parent=5 // pred_region
        %s411 = ssub.s32 %s25, 1
        // Predicated region
        $region13: #{midblock_forward.5} parent=11 // pred_check
          %p412 = pneg %p98
        $region14: #{midblock_forward.5} parent=11 // pred_check_branch
          %414 = sbr.rel (%p412) target = $region16
        $region15: #{midblock_forward.5} parent=11 // pred_region
          _
        $region16: #{midblock_forward.5} parent=11 // pred_fallthru
          _
        // Predicated region
        $region17: #{midblock_forward.5} parent=11 // pred_check
          %p415 = pneg %p119
        $region18: #{midblock_forward.5} parent=11 // pred_check_branch
          %417 = sbr.rel (%p415) target = $region20
        $region19: #{midblock_forward.5} parent=11 // pred_region
          _
        $region20: #{midblock_forward.5} parent=11 // pred_fallthru
          _
        // Predicated region
        $region21: #{midblock_forward.5} parent=11 // pred_check
          %p418 = pneg %p140
        $region22: #{midblock_forward.5} parent=11 // pred_check_branch
          %420 = sbr.rel (%p418) target = $region24
        $region23: #{midblock_forward.5} parent=11 // pred_region
          _
        $region24: #{midblock_forward.5} parent=11 // pred_fallthru
          _
        // Predicated region
        $region25: #{midblock_forward.5} parent=11 // pred_check
          %p421 = pneg %p161
        $region26: #{midblock_forward.5} parent=11 // pred_check_branch
          %423 = sbr.rel (%p421) target = $region28
        $region27: #{midblock_forward.5} parent=11 // pred_region
          _
        $region28: #{midblock_forward.5} parent=11 // pred_fallthru
          _
        // Predicated region
        $region29: #{midblock_forward.5} parent=11 // pred_check
          %p424 = pneg %p182
        $region30: #{midblock_forward.5} parent=11 // pred_check_branch
          %426 = sbr.rel (%p424) target = $region32
        $region31: #{midblock_forward.5} parent=11 // pred_region
          _
        $region32: #{midblock_forward.5} parent=11 // pred_fallthru
          _
        // Predicated region
        $region33: #{midblock_forward.5} parent=11 // pred_check
          %p427 = pneg %p203
        $region34: #{midblock_forward.5} parent=11 // pred_check_branch
          %429 = sbr.rel (%p427) target = $region36
        $region35: #{midblock_forward.5} parent=11 // pred_region
          _
        $region36: #{midblock_forward.5} parent=11 // pred_fallthru
          _
        // Predicated region
        $region37: #{midblock_forward.5} parent=11 // pred_check
          %p430 = pneg %p224
        $region38: #{midblock_forward.5} parent=11 // pred_check_branch
          %432 = sbr.rel (%p430) target = $region40
        $region39: #{midblock_forward.5} parent=11 // pred_region
          _
        $region40: #{midblock_forward.5} parent=11 // pred_fallthru
          _
        // Predicated region
        $region41: #{midblock_forward.5} parent=11 // pred_check
          %p433 = pneg %p245
        $region42: #{midblock_forward.5} parent=11 // pred_check_branch
          %435 = sbr.rel (%p433) target = $region44
        $region43: #{midblock_forward.5} parent=11 // pred_region
          _
        $region44: #{midblock_forward.5} parent=11 // pred_fallthru
          _
        // Predicated region
        $region45: #{midblock_forward.5} parent=11 // pred_check
          %p436 = pneg %p266
        $region46: #{midblock_forward.5} parent=11 // pred_check_branch
          %438 = sbr.rel (%p436) target = $region48
        $region47: #{midblock_forward.5} parent=11 // pred_region
          _
        $region48: #{midblock_forward.5} parent=11 // pred_fallthru
          _
        // Predicated region
        $region49: #{midblock_forward.5} parent=11 // pred_check
          %p439 = pneg %p287
        $region50: #{midblock_forward.5} parent=11 // pred_check_branch
          %441 = sbr.rel (%p439) target = $region52
        $region51: #{midblock_forward.5} parent=11 // pred_region
          _
        $region52: #{midblock_forward.5} parent=11 // pred_fallthru
          _
        // Predicated region
        $region53: #{midblock_forward.5} parent=11 // pred_check
          %p442 = pneg %p308
        $region54: #{midblock_forward.5} parent=11 // pred_check_branch
          %444 = sbr.rel (%p442) target = $region56
        $region55: #{midblock_forward.5} parent=11 // pred_region
          _
        $region56: #{midblock_forward.5} parent=11 // pred_fallthru
          _
        // Predicated region
        $region57: #{midblock_forward.5} parent=11 // pred_check
          %p445 = pneg %p329
        $region58: #{midblock_forward.5} parent=11 // pred_check_branch
          %447 = sbr.rel (%p445) target = $region60
        $region59: #{midblock_forward.5} parent=11 // pred_region
          _
        $region60: #{midblock_forward.5} parent=11 // pred_fallthru
          _
        // Predicated region
        $region61: #{midblock_forward.5} parent=11 // pred_check
          %p448 = pneg %p350
        $region62: #{midblock_forward.5} parent=11 // pred_check_branch
          %450 = sbr.rel (%p448) target = $region64
        $region63: #{midblock_forward.5} parent=11 // pred_region
          _
        $region64: #{midblock_forward.5} parent=11 // pred_fallthru
          _
        // Predicated region
        $region65: #{midblock_forward.5} parent=11 // pred_check
          %p451 = pneg %p371
        $region66: #{midblock_forward.5} parent=11 // pred_check_branch
          %453 = sbr.rel (%p451) target = $region68
        $region67: #{midblock_forward.5} parent=11 // pred_region
          _
        $region68: #{midblock_forward.5} parent=11 // pred_fallthru
          _
      $region12: #{midblock_forward.5} parent=5 // pred_fallthru
        _
      %p454 = scmp.lt.s32.totalorder %s25, 2
      // Predicated region
      $region69: #{midblock_forward.5} parent=5 // pred_check
        %p455 = pneg %p454
      $region70: #{midblock_forward.5} parent=5 // pred_check_branch
        %457 = sbr.rel (%p455) target = $region72
      $region71: #{midblock_forward.5} parent=5 // pred_region
        // Predicated region
        $region73: #{midblock_forward.5} parent=71 // pred_check
          %p458 = pneg %p45
        $region74: #{midblock_forward.5} parent=71 // pred_check_branch
          %460 = sbr.rel (%p458) target = $region76
        $region75: #{midblock_forward.5} parent=71 // pred_region
          %p461 = scmp.lt.s32.totalorder %s25, 1
          %s462 = scalar_select %p461, %s25, 1
          %s463 = smul.addr %s462, 8
          %s464 = smul.addr %s463, 8
          %s465 = scalar_lea.vmem %s0, %s464
        $region76: #{midblock_forward.5} parent=71 // pred_fallthru
          _
        // Predicated region
        $region77: #{midblock_forward.5} parent=71 // pred_check
          %p466 = pneg %p71
        $region78: #{midblock_forward.5} parent=71 // pred_check_branch
          %468 = sbr.rel (%p466) target = $region80
        $region79: #{midblock_forward.5} parent=71 // pred_region
          %p469 = scmp.lt.s32.totalorder %s25, 1
          %s470 = scalar_select %p469, %s25, 1
          %s471 = scalar_lea.vmem %s1, %s470
        $region80: #{midblock_forward.5} parent=71 // pred_fallthru
          _
      $region72: #{midblock_forward.5} parent=5 // pred_fallthru
        _
      %p472 = scmp.le.s32.totalorder 1, %s25
      %p473 = scmp.lt.s32.totalorder %s25, 3
      %p474 = pnand %p472, %p473
      %p475 = pneg %p474
      // Predicated region
      $region81: #{midblock_forward.5} parent=5 // pred_check
        _
      $region82: #{midblock_forward.5} parent=5 // pred_check_branch
        %477 = sbr.rel (%p474) target = $region84
      $region83: #{midblock_forward.5} parent=5 // pred_region
        %s478 = ssub.s32 %s25, 1
        %p479 = scmp.lt.s32.totalorder %s30, 1
        %s480 = scalar_select %p479, %s30, 1
        %s481 = smul.addr %s480, 8
        %s482 = smul.addr %s481, 8
        %s483 = scalar_lea.vmem %s0, %s482
        %p484 = pneg %p51
        %p485 = pneg %p48
        %p486 = scmp.lt.s32.totalorder %s30, 1
        %s487 = scalar_select %p486, %s30, 1
        %s488 = scalar_lea.vmem %s1, %s487
        %p489 = pneg %p77
        %p490 = pneg %p74
        %p491 = pneg %p98
        %p492 = pneg %p95
        %p493 = pneg %p119
        %p494 = pneg %p116
        %p495 = pneg %p140
        %p496 = pneg %p137
        %p497 = pneg %p161
        %p498 = pneg %p158
        %p499 = pneg %p182
        %p500 = pneg %p179
        %p501 = pneg %p203
        %p502 = pneg %p200
        %p503 = pneg %p224
        %p504 = pneg %p221
        %p505 = pneg %p245
        %p506 = pneg %p242
        %p507 = pneg %p266
        %p508 = pneg %p263
        %p509 = pneg %p287
        %p510 = pneg %p284
        %p511 = pneg %p308
        %p512 = pneg %p305
        %p513 = pneg %p329
        %p514 = pneg %p326
        %p515 = pneg %p350
        %p516 = pneg %p347
        %p517 = pneg %p371
        %p518 = pneg %p368
        %p519 = pneg %p397
        %p520 = pneg %p394
        %s521 = sand.u32 %s384, 1
        %s522 = scalar_lea.sflag [#allocation3], %s521
        %s523 = sand.u32 %s384, 1
        %s524 = smul.addr %s523, 64
        %s525 = scalar_lea.vmem [#allocation2], %s524
        %p526 = scmp.lt.s32.totalorder %s30, 1
        %s527 = scalar_select %p526, %s30, 1
        %s528 = smul.addr %s527, 8
        %s529 = smul.addr %s528, 8
        %s530 = scalar_lea.vmem %s0, %s529
        %p531 = scmp.lt.s32.totalorder %s30, 1
        %s532 = scalar_select %p531, %s30, 1
        %s533 = scalar_lea.vmem %s1, %s532
        %v535 = vld [vmem:[%s530] sm:$0xff]
        %v536 = vld [vmem:[%s530 + $0x8] sm:$0xff]
        %v537 = vld [vmem:[%s530 + $0x10] sm:$0xff]
        %v538 = vld [vmem:[%s530 + $0x18] sm:$0xff]
        %v539 = vld [vmem:[%s530 + $0x20] sm:$0xff]
        %v540 = vld [vmem:[%s530 + $0x28] sm:$0xff]
        %v541 = vld [vmem:[%s530 + $0x30] sm:$0xff]
        %v542 = vld [vmem:[%s530 + $0x38] sm:$0xff]
        %v543 = vld [vmem:[%s2] sm:$0x1]
        %v544 = vld [vmem:[%s3] sm:$0x1]
        %v545 = vld [vmem:[%s4] sm:$0xff]
        %v546 = vld [vmem:[%s4 + $0x8] sm:$0xff]
        %v547 = vld [vmem:[%s4 + $0x10] sm:$0xff]
        %v548 = vld [vmem:[%s4 + $0x18] sm:$0xff]
        %vm549 = vcmask 261120
        %v550 = vsel %vm549, %v535, 0.0
        %v551 = vsel %vm549, %v536, 0.0
        %v552 = vadd.f32 %v550, %v551
        %v553 = vsel %vm549, %v537, 0.0
        %v554 = vadd.f32 %v552, %v553
        %v555 = vsel %vm549, %v538, 0.0
        %v556 = vadd.f32 %v554, %v555
        %v557 = vsel %vm549, %v539, 0.0
        %v558 = vadd.f32 %v556, %v557
        %v559 = vsel %vm549, %v540, 0.0
        %v560 = vadd.f32 %v558, %v559
        %v561 = vsel %vm549, %v541, 0.0
        %v562 = vadd.f32 %v560, %v561
        %v563 = vsel %vm549, %v542, 0.0
        %v564 = vadd.f32 %v562, %v563
        %v565 = vrot.slane %v564, 4
        %v566 = vadd.f32 %v564, %v565
        %v567 = vrot.slane %v566, 2
        %v568 = vadd.f32 %v566, %v567
        %v569 = vrot.slane %v568, 1
        %v570 = vadd.f32 %v568, %v569
        %v572 = vsel %vm549, %v570, 0
        %574 = vmatpush.msra.mxu0 0.0
        %575 = vmatpush.msra.mxu0 0.0
        %576 = vmatpush.msra.mxu0 0.0
        %577 = vmatpush.msra.mxu0 0.0
        %578 = vmatpush.msra.mxu0 0.0
        %579 = vmatpush.msra.mxu0 0.0
        %580 = vmatpush.msra.mxu0 0.0
        %581 = vmatpush.msra.mxu0 0.0
        %582 = vmatpush.msra.mxu0 0.0
        %583 = vmatpush.msra.mxu0 0.0
        %584 = vmatpush.msra.mxu0 0.0
        %585 = vmatpush.msra.mxu0 0.0
        %586 = vmatpush.msra.mxu0 %v548
        %587 = vmatpush.msra.mxu0 %v547
        %588 = vmatpush.msra.mxu0 %v546
        %589 = vmatpush.msra.mxu0 %v545
        %590 = vmatmul.f32.gmra.mxu0 %v572
        %v591 = vpop.f32.mrf.mxu0
        %v592 = vadd.f32 0.0, %v591
        %593 = vdwg.mxu0
        %v594 = vrcp.pop 256.0
        %v595 = vmul.f32 256.0, %v594
        %v596 = vsub.f32 1.0, %v595
        %v597 = vmul.f32 %v594, %v596
        %v598 = vadd.f32 %v594, %v597
        %vm599 = vweird.f32 %v594
        %v600 = vsel %vm599, %v594, %v598
        %v601 = vmul.f32 %v592, %v600
        %vm602 = vcmask 64512
        %v604 = vsel %vm602, %v601, 0
        %v607 = vsel %vm602, %v545, 0
        %v610 = vsel %vm602, %v546, 0
        %v613 = vsel %vm602, %v547, 0
        %v616 = vsel %vm602, %v548, 0
        %618 = vmatpush.xpose.msra.mxu0 0.0
        %619 = vmatpush.xpose.msra.mxu0 0.0
        %620 = vmatpush.xpose.msra.mxu0 0.0
        %621 = vmatpush.xpose.msra.mxu0 0.0
        %622 = vmatpush.xpose.msra.mxu0 0.0
        %623 = vmatpush.xpose.msra.mxu0 0.0
        %624 = vmatpush.xpose.msra.mxu0 0.0
        %625 = vmatpush.xpose.msra.mxu0 0.0
        %626 = vmatpush.xpose.msra.mxu0 0.0
        %627 = vmatpush.xpose.msra.mxu0 0.0
        %628 = vmatpush.xpose.msra.mxu0 0.0
        %629 = vmatpush.xpose.msra.mxu0 0.0
        %630 = vmatpush.xpose.msra.mxu0 %v616
        %631 = vmatpush.xpose.msra.mxu0 %v613
        %632 = vmatpush.xpose.msra.mxu0 %v610
        %633 = vmatpush.xpose.msra.mxu0 %v607
        %634 = vmatmul.f32.gmra.mxu0 %v604
        %v635 = vpop.f32.mrf.mxu0
        %v636 = vadd.f32 0.0, %v635
        %637 = vdwg.mxu0
        %v638 = vperm.slane %v636, 0
        %v639 = vsub.f32 %v535, %v638
        %v640 = vsub.f32 %v536, %v638
        %v641 = vsub.f32 %v537, %v638
        %v642 = vsub.f32 %v538, %v638
        %v643 = vsub.f32 %v539, %v638
        %v644 = vsub.f32 %v540, %v638
        %v645 = vsub.f32 %v541, %v638
        %v646 = vsub.f32 %v542, %v638
        %v647 = vmul.f32 %v639, %v639
        %v648 = vmul.f32 %v640, %v640
        %v649 = vmul.f32 %v641, %v641
        %v650 = vmul.f32 %v642, %v642
        %v651 = vmul.f32 %v643, %v643
        %v652 = vmul.f32 %v644, %v644
        %v653 = vmul.f32 %v645, %v645
        %v654 = vmul.f32 %v646, %v646
        %v655 = vsel %vm549, %v647, 0.0
        %v656 = vsel %vm549, %v648, 0.0
        %v657 = vadd.f32 %v655, %v656
        %v658 = vsel %vm549, %v649, 0.0
        %v659 = vadd.f32 %v657, %v658
        %v660 = vsel %vm549, %v650, 0.0
        %v661 = vadd.f32 %v659, %v660
        %v662 = vsel %vm549, %v651, 0.0
        %v663 = vadd.f32 %v661, %v662
        %v664 = vsel %vm549, %v652, 0.0
        %v665 = vadd.f32 %v663, %v664
        %v666 = vsel %vm549, %v653, 0.0
        %v667 = vadd.f32 %v665, %v666
        %v668 = vsel %vm549, %v654, 0.0
        %v669 = vadd.f32 %v667, %v668
        %v670 = vrot.slane %v669, 4
        %v671 = vadd.f32 %v669, %v670
        %v672 = vrot.slane %v671, 2
        %v673 = vadd.f32 %v671, %v672
        %v674 = vrot.slane %v673, 1
        %v675 = vadd.f32 %v673, %v674
        %v677 = vsel %vm549, %v675, 0
        %679 = vmatpush.msra.mxu0 0.0
        %680 = vmatpush.msra.mxu0 0.0
        %681 = vmatpush.msra.mxu0 0.0
        %682 = vmatpush.msra.mxu0 0.0
        %683 = vmatpush.msra.mxu0 0.0
        %684 = vmatpush.msra.mxu0 0.0
        %685 = vmatpush.msra.mxu0 0.0
        %686 = vmatpush.msra.mxu0 0.0
        %687 = vmatpush.msra.mxu0 0.0
        %688 = vmatpush.msra.mxu0 0.0
        %689 = vmatpush.msra.mxu0 0.0
        %690 = vmatpush.msra.mxu0 0.0
        %691 = vmatpush.msra.mxu0 %v548
        %692 = vmatpush.msra.mxu0 %v547
        %693 = vmatpush.msra.mxu0 %v546
        %694 = vmatpush.msra.mxu0 %v545
        %695 = vmatmul.f32.gmra.mxu0 %v677
        %v696 = vpop.f32.mrf.mxu0
        %v697 = vadd.f32 0.0, %v696
        %698 = vdwg.mxu0
        %v699 = vmul.f32 %v697, %v600
        %v701 = vsel %vm602, %v699, 0
        %703 = vmatpush.xpose.msra.mxu0 0.0
        %704 = vmatpush.xpose.msra.mxu0 0.0
        %705 = vmatpush.xpose.msra.mxu0 0.0
        %706 = vmatpush.xpose.msra.mxu0 0.0
        %707 = vmatpush.xpose.msra.mxu0 0.0
        %708 = vmatpush.xpose.msra.mxu0 0.0
        %709 = vmatpush.xpose.msra.mxu0 0.0
        %710 = vmatpush.xpose.msra.mxu0 0.0
        %711 = vmatpush.xpose.msra.mxu0 0.0
        %712 = vmatpush.xpose.msra.mxu0 0.0
        %713 = vmatpush.xpose.msra.mxu0 0.0
        %714 = vmatpush.xpose.msra.mxu0 0.0
        %715 = vmatpush.xpose.msra.mxu0 %v616
        %716 = vmatpush.xpose.msra.mxu0 %v613
        %717 = vmatpush.xpose.msra.mxu0 %v610
        %718 = vmatpush.xpose.msra.mxu0 %v607
        %719 = vmatmul.f32.gmra.mxu0 %v701
        %v720 = vpop.f32.mrf.mxu0
        %v721 = vadd.f32 1e-05, %v720
        %722 = vdwg.mxu0
        %v723 = vrsqrt.pop %v721
        %v724 = vmul.f32 %v723, %v721
        %v725 = vmul.f32 %v724, %v723
        %v726 = vmul.f32 0.5, %v725
        %v727 = vsub.f32 1.5, %v726
        %v728 = vmul.f32 %v723, %v727
        %vm729 = vweird.f32 %v721
        %vm730 = vweird.f32 %v723
        %vm731 = vmor %vm729, %vm730
        %v732 = vsel %vm731, %v723, %v728
        %v733 = vperm.slane %v732, 0
        %v734 = vmul.f32 %v639, %v733
        %v735 = vmul.f32 %v640, %v733
        %v736 = vmul.f32 %v641, %v733
        %v737 = vmul.f32 %v642, %v733
        %v738 = vmul.f32 %v643, %v733
        %v739 = vmul.f32 %v644, %v733
        %v740 = vmul.f32 %v645, %v733
        %v741 = vmul.f32 %v646, %v733
        %v743 = vperm.slane %v543, 0
        %v745 = vmul.f32 %v734, %v743
        %v746 = vmul.f32 %v735, %v743
        %v747 = vmul.f32 %v736, %v743
        %v748 = vmul.f32 %v737, %v743
        %v749 = vmul.f32 %v738, %v743
        %v750 = vmul.f32 %v739, %v743
        %v751 = vmul.f32 %v740, %v743
        %v752 = vmul.f32 %v741, %v743
        %v754 = vperm.slane %v544, 0
        %v756 = vadd.f32 %v745, %v754
        %v757 = vadd.f32 %v746, %v754
        %v758 = vadd.f32 %v747, %v754
        %v759 = vadd.f32 %v748, %v754
        %v760 = vadd.f32 %v749, %v754
        %v761 = vadd.f32 %v750, %v754
        %v762 = vadd.f32 %v751, %v754
        %v763 = vadd.f32 %v752, %v754
        %v764 = vxor.u32 %v756, 2147483648
        %v765 = vxor.u32 %v757, 2147483648
        %v766 = vxor.u32 %v758, 2147483648
        %v767 = vxor.u32 %v759, 2147483648
        %v768 = vxor.u32 %v760, 2147483648
        %v769 = vxor.u32 %v761, 2147483648
        %v770 = vxor.u32 %v762, 2147483648
        %v771 = vxor.u32 %v763, 2147483648
        %v772 = vmul.f32 %v764, 1.442695
        %v773 = vpow.pop %v772
        %v774 = vmul.f32 %v765, 1.442695
        %v775 = vpow.pop %v774
        %v776 = vmul.f32 %v766, 1.442695
        %v777 = vpow.pop %v776
        %v778 = vmul.f32 %v767, 1.442695
        %v779 = vpow.pop %v778
        %v780 = vmul.f32 %v768, 1.442695
        %v781 = vpow.pop %v780
        %v782 = vmul.f32 %v769, 1.442695
        %v783 = vpow.pop %v782
        %v784 = vmul.f32 %v770, 1.442695
        %v785 = vpow.pop %v784
        %v786 = vmul.f32 %v771, 1.442695
        %v787 = vpow.pop %v786
        %v788 = vadd.f32 %v773, 1.0
        %v789 = vadd.f32 %v775, 1.0
        %v790 = vadd.f32 %v777, 1.0
        %v791 = vadd.f32 %v779, 1.0
        %v792 = vadd.f32 %v781, 1.0
        %v793 = vadd.f32 %v783, 1.0
        %v794 = vadd.f32 %v785, 1.0
        %v795 = vadd.f32 %v787, 1.0
        %v796 = vrcp.pop %v788
        %v797 = vmul.f32 %v788, %v796
        %v798 = vsub.f32 1.0, %v797
        %v799 = vmul.f32 %v796, %v798
        %v800 = vadd.f32 %v796, %v799
        %vm801 = vweird.f32 %v788
        %vm802 = vweird.f32 %v796
        %vm803 = vmor %vm801, %vm802
        %v804 = vsel %vm803, %v796, %v800
        %v805 = vand.u32 2147483647, %v788
        %vm806 = vcmp.eq.f32.partialorder %v805, 8.507059e+37
        %v807 = vand.u32 %v788, 2147483648
        %v808 = vor.u32 1.1754944e-38, %v807
        %v809 = vsel %vm806, %v808, %v804
        %v810 = vmul.f32 1.0, %v809
        %v811 = vrcp.pop %v789
        %v812 = vmul.f32 %v789, %v811
        %v813 = vsub.f32 1.0, %v812
        %v814 = vmul.f32 %v811, %v813
        %v815 = vadd.f32 %v811, %v814
        %vm816 = vweird.f32 %v789
        %vm817 = vweird.f32 %v811
        %vm818 = vmor %vm816, %vm817
        %v819 = vsel %vm818, %v811, %v815
        %v820 = vand.u32 2147483647, %v789
        %vm821 = vcmp.eq.f32.partialorder %v820, 8.507059e+37
        %v822 = vand.u32 %v789, 2147483648
        %v823 = vor.u32 1.1754944e-38, %v822
        %v824 = vsel %vm821, %v823, %v819
        %v825 = vmul.f32 1.0, %v824
        %v826 = vrcp.pop %v790
        %v827 = vmul.f32 %v790, %v826
        %v828 = vsub.f32 1.0, %v827
        %v829 = vmul.f32 %v826, %v828
        %v830 = vadd.f32 %v826, %v829
        %vm831 = vweird.f32 %v790
        %vm832 = vweird.f32 %v826
        %vm833 = vmor %vm831, %vm832
        %v834 = vsel %vm833, %v826, %v830
        %v835 = vand.u32 2147483647, %v790
        %vm836 = vcmp.eq.f32.partialorder %v835, 8.507059e+37
        %v837 = vand.u32 %v790, 2147483648
        %v838 = vor.u32 1.1754944e-38, %v837
        %v839 = vsel %vm836, %v838, %v834
        %v840 = vmul.f32 1.0, %v839
        %v841 = vrcp.pop %v791
        %v842 = vmul.f32 %v791, %v841
        %v843 = vsub.f32 1.0, %v842
        %v844 = vmul.f32 %v841, %v843
        %v845 = vadd.f32 %v841, %v844
        %vm846 = vweird.f32 %v791
        %vm847 = vweird.f32 %v841
        %vm848 = vmor %vm846, %vm847
        %v849 = vsel %vm848, %v841, %v845
        %v850 = vand.u32 2147483647, %v791
        %vm851 = vcmp.eq.f32.partialorder %v850, 8.507059e+37
        %v852 = vand.u32 %v791, 2147483648
        %v853 = vor.u32 1.1754944e-38, %v852
        %v854 = vsel %vm851, %v853, %v849
        %v855 = vmul.f32 1.0, %v854
        %v856 = vrcp.pop %v792
        %v857 = vmul.f32 %v792, %v856
        %v858 = vsub.f32 1.0, %v857
        %v859 = vmul.f32 %v856, %v858
        %v860 = vadd.f32 %v856, %v859
        %vm861 = vweird.f32 %v792
        %vm862 = vweird.f32 %v856
        %vm863 = vmor %vm861, %vm862
        %v864 = vsel %vm863, %v856, %v860
        %v865 = vand.u32 2147483647, %v792
        %vm866 = vcmp.eq.f32.partialorder %v865, 8.507059e+37
        %v867 = vand.u32 %v792, 2147483648
        %v868 = vor.u32 1.1754944e-38, %v867
        %v869 = vsel %vm866, %v868, %v864
        %v870 = vmul.f32 1.0, %v869
        %v871 = vrcp.pop %v793
        %v872 = vmul.f32 %v793, %v871
        %v873 = vsub.f32 1.0, %v872
        %v874 = vmul.f32 %v871, %v873
        %v875 = vadd.f32 %v871, %v874
        %vm876 = vweird.f32 %v793
        %vm877 = vweird.f32 %v871
        %vm878 = vmor %vm876, %vm877
        %v879 = vsel %vm878, %v871, %v875
        %v880 = vand.u32 2147483647, %v793
        %vm881 = vcmp.eq.f32.partialorder %v880, 8.507059e+37
        %v882 = vand.u32 %v793, 2147483648
        %v883 = vor.u32 1.1754944e-38, %v882
        %v884 = vsel %vm881, %v883, %v879
        %v885 = vmul.f32 1.0, %v884
        %v886 = vrcp.pop %v794
        %v887 = vmul.f32 %v794, %v886
        %v888 = vsub.f32 1.0, %v887
        %v889 = vmul.f32 %v886, %v888
        %v890 = vadd.f32 %v886, %v889
        %vm891 = vweird.f32 %v794
        %vm892 = vweird.f32 %v886
        %vm893 = vmor %vm891, %vm892
        %v894 = vsel %vm893, %v886, %v890
        %v895 = vand.u32 2147483647, %v794
        %vm896 = vcmp.eq.f32.partialorder %v895, 8.507059e+37
        %v897 = vand.u32 %v794, 2147483648
        %v898 = vor.u32 1.1754944e-38, %v897
        %v899 = vsel %vm896, %v898, %v894
        %v900 = vmul.f32 1.0, %v899
        %v901 = vrcp.pop %v795
        %v902 = vmul.f32 %v795, %v901
        %v903 = vsub.f32 1.0, %v902
        %v904 = vmul.f32 %v901, %v903
        %v905 = vadd.f32 %v901, %v904
        %vm906 = vweird.f32 %v795
        %vm907 = vweird.f32 %v901
        %vm908 = vmor %vm906, %vm907
        %v909 = vsel %vm908, %v901, %v905
        %v910 = vand.u32 2147483647, %v795
        %vm911 = vcmp.eq.f32.partialorder %v910, 8.507059e+37
        %v912 = vand.u32 %v795, 2147483648
        %v913 = vor.u32 1.1754944e-38, %v912
        %v914 = vsel %vm911, %v913, %v909
        %v915 = vmul.f32 1.0, %v914
        %v916 = vmul.f32 %v756, %v810
        %v917 = vmul.f32 %v757, %v825
        %v918 = vmul.f32 %v758, %v840
        %v919 = vmul.f32 %v759, %v855
        %v920 = vmul.f32 %v760, %v870
        %v921 = vmul.f32 %v761, %v885
        %v922 = vmul.f32 %v762, %v900
        %v923 = vmul.f32 %v763, %v915
        %v924 = vld [vmem:[%s533] sm:$0x1]
        %v925 = vxor.u32 %v924, 2147483648
        %v926 = vmul.f32 %v925, 1.442695
        %v927 = vpow.pop %v926
        %v928 = vadd.f32 %v927, 1.0
        %v929 = vrcp.pop %v928
        %v930 = vmul.f32 %v928, %v929
        %v931 = vsub.f32 1.0, %v930
        %v932 = vmul.f32 %v929, %v931
        %v933 = vadd.f32 %v929, %v932
        %vm934 = vweird.f32 %v928
        %vm935 = vweird.f32 %v929
        %vm936 = vmor %vm934, %vm935
        %v937 = vsel %vm936, %v929, %v933
        %v938 = vand.u32 2147483647, %v928
        %vm939 = vcmp.eq.f32.partialorder %v938, 8.507059e+37
        %v940 = vand.u32 %v928, 2147483648
        %v941 = vor.u32 1.1754944e-38, %v940
        %v942 = vsel %vm939, %v941, %v937
        %v943 = vmul.f32 1.0, %v942
        %v944 = vmul.f32 %v924, %v943
        %v945 = vpack.c.bf16 %v944, %v944
        %v946 = vld [vmem:[%s7] sm:$0xf]
        %v947 = vld [vmem:[%s7 + $0x4] sm:$0xf]
        %v948 = vld [vmem:[%s7 + $0x8] sm:$0xf]
        %v949 = vld [vmem:[%s7 + $0xc] sm:$0xf]
        %v950 = vld [vmem:[%s8] sm:$0x1]
        %v955 = vunpack.c.l.b16 %v946
        %v956 = vunpack.c.l.b16 %v947
        %v957 = vunpack.c.l.b16 %v948
        %v958 = vunpack.c.l.b16 %v949
        %v959 = vpack.c.b16 %v956, %v955
        %v960 = vpack.c.b16 %v958, %v957
        %v964 = vsel %vm549, %v945, 0
        %966 = vmatpush.bf16.msra.mxu0 0
        %967 = vmatpush.bf16.msra.mxu0 0
        %968 = vmatpush.bf16.msra.mxu0 0
        %969 = vmatpush.bf16.msra.mxu0 0
        %970 = vmatpush.bf16.msra.mxu0 0
        %971 = vmatpush.bf16.msra.mxu0 0
        %972 = vmatpush.bf16.msra.mxu0 %v960
        %973 = vmatpush.bf16.msra.mxu0 %v959
        %974 = vmatmul.bf16.gmra.mxu0 %v964
        %v975 = vpop.f32.mrf.mxu0
        %v976 = vadd.f32 %v950, %v975
        %v977 = vpop.f32.mrf.mxu0
        %978 = vdwg.mxu0
        %v979 = vpack.c.bf16 %v916, %v916
        %v980 = vpack.c.bf16 %v917, %v917
        %v981 = vpack.c.bf16 %v918, %v918
        %v982 = vpack.c.bf16 %v919, %v919
        %v983 = vpack.c.bf16 %v920, %v920
        %v984 = vpack.c.bf16 %v921, %v921
        %v985 = vpack.c.bf16 %v922, %v922
        %v986 = vpack.c.bf16 %v923, %v923
        %v988 = vshrl.u32 0, 16
        %v990 = vrot.slane %v988, 7
        %v991 = vshll.u32 0, 16
        %v993 = vor.u32 %v990, %v991
        %v995 = vshrl.u32 %v979, 16
        %v997 = vrot.slane %v995, 7
        %v998 = vshll.u32 %v979, 16
        %v1000 = vor.u32 %v997, %v998
        %v1002 = vshrl.u32 %v980, 16
        %v1004 = vrot.slane %v1002, 7
        %v1005 = vshll.u32 %v980, 16
        %v1007 = vor.u32 %v1004, %v1005
        %v1009 = vshrl.u32 %v981, 16
        %v1011 = vrot.slane %v1009, 7
        %v1012 = vshll.u32 %v981, 16
        %v1014 = vor.u32 %v1011, %v1012
        %v1016 = vshrl.u32 %v982, 16
        %v1018 = vrot.slane %v1016, 7
        %v1019 = vshll.u32 %v982, 16
        %v1021 = vor.u32 %v1018, %v1019
        %v1023 = vshrl.u32 %v983, 16
        %v1025 = vrot.slane %v1023, 7
        %v1026 = vshll.u32 %v983, 16
        %v1028 = vor.u32 %v1025, %v1026
        %v1030 = vshrl.u32 %v984, 16
        %v1032 = vrot.slane %v1030, 7
        %v1033 = vshll.u32 %v984, 16
        %v1035 = vor.u32 %v1032, %v1033
        %v1037 = vshrl.u32 %v985, 16
        %v1039 = vrot.slane %v1037, 7
        %v1040 = vshll.u32 %v985, 16
        %v1042 = vor.u32 %v1039, %v1040
        %v1044 = vshrl.u32 %v986, 16
        %v1046 = vrot.slane %v1044, 7
        %v1047 = vshll.u32 %v986, 16
        %v1049 = vor.u32 %v1046, %v1047
        %vm1059 = vcmask 1040384
        %vm1060 = vsmask.f32 256
        %vm1061 = vmand %vm1059, %vm1060
        %v1062 = vsel %vm1061, 0, %v993
        %v1063 = vsel %vm1061, 0, %v1000
        %v1064 = vsel %vm1061, 0, %v1007
        %v1065 = vsel %vm1061, 0, %v1014
        %v1066 = vsel %vm1061, 0, %v1021
        %v1067 = vsel %vm1061, 0, %v1028
        %v1068 = vsel %vm1061, 0, %v1035
        %v1069 = vsel %vm1061, 0, %v1042
        %v1070 = vsel %vm1061, 0, %v1049
        %vm1071 = vcmask 1044480
        %vm1072 = vsmask.f32 4352
        %vm1073 = vmand %vm1071, %vm1072
        %v1074 = vsel %vm1073, %v1062, 0
        %v1075 = vsel %vm1073, %v1063, 0
        %v1076 = vsel %vm1073, %v1064, 0
        %v1077 = vsel %vm1073, %v1065, 0
        %v1078 = vsel %vm1073, %v1066, 0
        %v1079 = vsel %vm1073, %v1067, 0
        %v1080 = vsel %vm1073, %v1068, 0
        %v1081 = vsel %vm1073, %v1069, 0
        %v1082 = vsel %vm1073, %v1070, 0
        %v1083 = vld [vmem:[%s5] sm:$0xf]
        %v1084 = vld [vmem:[%s5 + $0x4] sm:$0xf]
        %v1085 = vld [vmem:[%s5 + $0x8] sm:$0xf]
        %v1086 = vld [vmem:[%s5 + $0xc] sm:$0xf]
        %v1095 = vunpack.c.l.b16 %v1074
        %v1096 = vunpack.c.h.b16 %v1074
        %v1097 = vunpack.c.l.b16 %v1075
        %v1098 = vunpack.c.h.b16 %v1075
        %v1099 = vunpack.c.l.b16 %v1076
        %v1100 = vunpack.c.h.b16 %v1076
        %v1101 = vunpack.c.l.b16 %v1077
        %v1102 = vunpack.c.h.b16 %v1077
        %v1103 = vunpack.c.l.b16 %v1078
        %v1104 = vunpack.c.h.b16 %v1078
        %v1105 = vunpack.c.l.b16 %v1079
        %v1106 = vunpack.c.h.b16 %v1079
        %v1107 = vunpack.c.l.b16 %v1080
        %v1108 = vunpack.c.h.b16 %v1080
        %v1109 = vunpack.c.l.b16 %v1081
        %v1110 = vunpack.c.h.b16 %v1081
        %v1111 = vpack.c.b16 %v1095, %v1095
        %v1112 = vpack.c.b16 %v1096, %v1096
        %v1113 = vpack.c.b16 %v1097, %v1097
        %v1114 = vpack.c.b16 %v1098, %v1098
        %v1115 = vpack.c.b16 %v1099, %v1099
        %v1116 = vpack.c.b16 %v1100, %v1100
        %v1117 = vpack.c.b16 %v1101, %v1101
        %v1118 = vpack.c.b16 %v1102, %v1102
        %v1119 = vpack.c.b16 %v1103, %v1103
        %v1120 = vpack.c.b16 %v1104, %v1104
        %v1121 = vpack.c.b16 %v1105, %v1105
        %v1122 = vpack.c.b16 %v1106, %v1106
        %v1123 = vpack.c.b16 %v1107, %v1107
        %v1124 = vpack.c.b16 %v1108, %v1108
        %v1125 = vpack.c.b16 %v1109, %v1109
        %v1126 = vpack.c.b16 %v1110, %v1110
        %vm1127 = vsmask.f32 3328
        %vm1128 = vsmask.f32 7440
        %vm1129 = vmor %vm1127, %vm1128
        %v1131 = vshrl.u32 %v1111, 16
        %v1133 = vrot.slane %v1131, 4
        %v1134 = vshll.u32 %v1111, 16
        %v1136 = vrot.slane %v1134, 5
        %v1137 = vor.u32 %v1133, %v1136
        %v1138 = vrot.slane %v1137, 4
        %v1140 = vshll.u32 %v1112, 16
        %v1142 = vrot.slane %v1140, 5
        %v1143 = vsel %vm1129, %v1138, %v1142
        %v1145 = vshrl.u32 %v1113, 16
        %v1147 = vrot.slane %v1145, 4
        %v1148 = vshll.u32 %v1113, 16
        %v1150 = vrot.slane %v1148, 5
        %v1151 = vor.u32 %v1147, %v1150
        %v1152 = vrot.slane %v1151, 4
        %v1154 = vshll.u32 %v1114, 16
        %v1156 = vrot.slane %v1154, 5
        %v1157 = vsel %vm1129, %v1152, %v1156
        %v1159 = vshrl.u32 %v1115, 16
        %v1161 = vrot.slane %v1159, 4
        %v1162 = vshll.u32 %v1115, 16
        %v1164 = vrot.slane %v1162, 5
        %v1165 = vor.u32 %v1161, %v1164
        %v1166 = vrot.slane %v1165, 4
        %v1168 = vshll.u32 %v1116, 16
        %v1170 = vrot.slane %v1168, 5
        %v1171 = vsel %vm1129, %v1166, %v1170
        %v1173 = vshrl.u32 %v1117, 16
        %v1175 = vrot.slane %v1173, 4
        %v1176 = vshll.u32 %v1117, 16
        %v1178 = vrot.slane %v1176, 5
        %v1179 = vor.u32 %v1175, %v1178
        %v1180 = vrot.slane %v1179, 4
        %v1182 = vshll.u32 %v1118, 16
        %v1184 = vrot.slane %v1182, 5
        %v1185 = vsel %vm1129, %v1180, %v1184
        %v1187 = vshrl.u32 %v1119, 16
        %v1189 = vrot.slane %v1187, 4
        %v1190 = vshll.u32 %v1119, 16
        %v1192 = vrot.slane %v1190, 5
        %v1193 = vor.u32 %v1189, %v1192
        %v1194 = vrot.slane %v1193, 4
        %v1196 = vshll.u32 %v1120, 16
        %v1198 = vrot.slane %v1196, 5
        %v1199 = vsel %vm1129, %v1194, %v1198
        %v1201 = vshrl.u32 %v1121, 16
        %v1203 = vrot.slane %v1201, 4
        %v1204 = vshll.u32 %v1121, 16
        %v1206 = vrot.slane %v1204, 5
        %v1207 = vor.u32 %v1203, %v1206
        %v1208 = vrot.slane %v1207, 4
        %v1210 = vshll.u32 %v1122, 16
        %v1212 = vrot.slane %v1210, 5
        %v1213 = vsel %vm1129, %v1208, %v1212
        %v1215 = vshrl.u32 %v1123, 16
        %v1217 = vrot.slane %v1215, 4
        %v1218 = vshll.u32 %v1123, 16
        %v1220 = vrot.slane %v1218, 5
        %v1221 = vor.u32 %v1217, %v1220
        %v1222 = vrot.slane %v1221, 4
        %v1224 = vshll.u32 %v1124, 16
        %v1226 = vrot.slane %v1224, 5
        %v1227 = vsel %vm1129, %v1222, %v1226
        %v1229 = vshrl.u32 %v1125, 16
        %v1231 = vrot.slane %v1229, 4
        %v1232 = vshll.u32 %v1125, 16
        %v1234 = vrot.slane %v1232, 5
        %v1235 = vor.u32 %v1231, %v1234
        %v1236 = vrot.slane %v1235, 4
        %v1238 = vshll.u32 %v1126, 16
        %v1240 = vrot.slane %v1238, 5
        %v1241 = vsel %vm1129, %v1236, %v1240
        %s1242 = scalar_lea.vmem %s5, 16
        %v1243 = vld [vmem:[%s1242] sm:$0xf]
        %v1244 = vld [vmem:[%s1242 + $0x4] sm:$0xf]
        %v1245 = vld [vmem:[%s1242 + $0x8] sm:$0xf]
        %v1246 = vld [vmem:[%s1242 + $0xc] sm:$0xf]
        %v1247 = vunpack.c.l.b16 %v1143
        %v1248 = vunpack.c.l.b16 %v1157
        %v1249 = vunpack.c.l.b16 %v1171
        %v1250 = vunpack.c.l.b16 %v1185
        %v1251 = vunpack.c.l.b16 %v1199
        %v1252 = vunpack.c.l.b16 %v1213
        %v1253 = vunpack.c.l.b16 %v1227
        %v1254 = vunpack.c.l.b16 %v1241
        %v1255 = vpack.c.b16 %v1248, %v1247
        %v1256 = vpack.c.b16 %v1250, %v1249
        %v1257 = vpack.c.b16 %v1252, %v1251
        %v1258 = vpack.c.b16 %v1254, %v1253
        %v1263 = vunpack.c.l.b16 %v1243
        %v1264 = vunpack.c.l.b16 %v1244
        %v1265 = vunpack.c.l.b16 %v1245
        %v1266 = vunpack.c.l.b16 %v1246
        %v1267 = vpack.c.b16 %v1264, %v1263
        %v1268 = vpack.c.b16 %v1266, %v1265
        %v1272 = vsel %vm549, %v1255, 0
        %v1275 = vsel %vm549, %v1256, 0
        %v1278 = vsel %vm549, %v1257, 0
        %v1281 = vsel %vm549, %v1258, 0
        %1283 = vmatpush.bf16.msra.mxu0 0
        %1284 = vmatpush.bf16.msra.mxu0 0
        %1285 = vmatpush.bf16.msra.mxu0 0
        %1286 = vmatpush.bf16.msra.mxu0 0
        %1287 = vmatpush.bf16.msra.mxu0 0
        %1288 = vmatpush.bf16.msra.mxu0 0
        %1289 = vmatpush.bf16.msra.mxu0 %v1268
        %1290 = vmatpush.bf16.msra.mxu0 %v1267
        %1291 = vmatmul.bf16.gmra.mxu0 %v1272
        %v1292 = vpop.f32.mrf.mxu0
        %v1293 = vadd.f32 0.0, %v1292
        %v1294 = vpop.f32.mrf.mxu0
        %v1295 = vadd.f32 0.0, %v1294
        %1296 = vmatmul.bf16.gmra.mxu0 %v1275
        %v1297 = vpop.f32.mrf.mxu0
        %v1298 = vadd.f32 0.0, %v1297
        %v1299 = vpop.f32.mrf.mxu0
        %v1300 = vadd.f32 0.0, %v1299
        %1301 = vmatmul.bf16.gmra.mxu0 %v1278
        %v1302 = vpop.f32.mrf.mxu0
        %v1303 = vadd.f32 0.0, %v1302
        %v1304 = vpop.f32.mrf.mxu0
        %v1305 = vadd.f32 0.0, %v1304
        %1306 = vmatmul.bf16.gmra.mxu0 %v1281
        %v1307 = vpop.f32.mrf.mxu0
        %v1308 = vadd.f32 0.0, %v1307
        %v1309 = vpop.f32.mrf.mxu0
        %v1310 = vadd.f32 0.0, %v1309
        %1311 = vdwg.mxu0
        %v1312 = vpack.c.b16 %v1097, %v1095
        %v1313 = vpack.c.b16 %v1101, %v1099
        %v1314 = vpack.c.b16 %v1105, %v1103
        %v1315 = vpack.c.b16 %v1109, %v1107
        %v1320 = vunpack.c.l.b16 %v1083
        %v1321 = vunpack.c.l.b16 %v1084
        %v1322 = vunpack.c.l.b16 %v1085
        %v1323 = vunpack.c.l.b16 %v1086
        %v1324 = vpack.c.b16 %v1321, %v1320
        %v1325 = vpack.c.b16 %v1323, %v1322
        %v1329 = vsel %vm549, %v1312, 0
        %v1332 = vsel %vm549, %v1313, 0
        %v1335 = vsel %vm549, %v1314, 0
        %v1338 = vsel %vm549, %v1315, 0
        %1340 = vmatpush.bf16.msra.mxu0 0
        %1341 = vmatpush.bf16.msra.mxu0 0
        %1342 = vmatpush.bf16.msra.mxu0 0
        %1343 = vmatpush.bf16.msra.mxu0 0
        %1344 = vmatpush.bf16.msra.mxu0 0
        %1345 = vmatpush.bf16.msra.mxu0 0
        %1346 = vmatpush.bf16.msra.mxu0 %v1325
        %1347 = vmatpush.bf16.msra.mxu0 %v1324
        %1348 = vmatmul.bf16.gmra.mxu0 %v1329
        %v1349 = vpop.f32.mrf.mxu0
        %v1350 = vadd.f32 %v1293, %v1349
        %v1351 = vpop.f32.mrf.mxu0
        %v1352 = vadd.f32 %v1295, %v1351
        %1353 = vmatmul.bf16.gmra.mxu0 %v1332
        %v1354 = vpop.f32.mrf.mxu0
        %v1355 = vadd.f32 %v1298, %v1354
        %v1356 = vpop.f32.mrf.mxu0
        %v1357 = vadd.f32 %v1300, %v1356
        %1358 = vmatmul.bf16.gmra.mxu0 %v1335
        %v1359 = vpop.f32.mrf.mxu0
        %v1360 = vadd.f32 %v1303, %v1359
        %v1361 = vpop.f32.mrf.mxu0
        %v1362 = vadd.f32 %v1305, %v1361
        %1363 = vmatmul.bf16.gmra.mxu0 %v1338
        %v1364 = vpop.f32.mrf.mxu0
        %v1365 = vadd.f32 %v1308, %v1364
        %v1366 = vpop.f32.mrf.mxu0
        %v1367 = vadd.f32 %v1310, %v1366
        %1368 = vdwg.mxu0
        %vm1369 = vcmask 1042432
        %vm1370 = vcmask 1046532
        %vm1371 = vmor %vm1369, %vm1370
        %v1372 = vrot.slane %v1111, 5
        %v1373 = vrot.slane %v1372, 4
        %v1374 = vrot.slane %v1112, 5
        %v1375 = vsel %vm1371, %v1373, %v1374
        %v1376 = vrot.slane %v1113, 5
        %v1377 = vrot.slane %v1376, 4
        %v1378 = vrot.slane %v1114, 5
        %v1379 = vsel %vm1371, %v1377, %v1378
        %v1380 = vrot.slane %v1115, 5
        %v1381 = vrot.slane %v1380, 4
        %v1382 = vrot.slane %v1116, 5
        %v1383 = vsel %vm1371, %v1381, %v1382
        %v1384 = vrot.slane %v1117, 5
        %v1385 = vrot.slane %v1384, 4
        %v1386 = vrot.slane %v1118, 5
        %v1387 = vsel %vm1371, %v1385, %v1386
        %v1388 = vrot.slane %v1119, 5
        %v1389 = vrot.slane %v1388, 4
        %v1390 = vrot.slane %v1120, 5
        %v1391 = vsel %vm1371, %v1389, %v1390
        %v1392 = vrot.slane %v1121, 5
        %v1393 = vrot.slane %v1392, 4
        %v1394 = vrot.slane %v1122, 5
        %v1395 = vsel %vm1371, %v1393, %v1394
        %v1396 = vrot.slane %v1123, 5
        %v1397 = vrot.slane %v1396, 4
        %v1398 = vrot.slane %v1124, 5
        %v1399 = vsel %vm1371, %v1397, %v1398
        %v1400 = vrot.slane %v1125, 5
        %v1401 = vrot.slane %v1400, 4
        %v1402 = vrot.slane %v1126, 5
        %v1403 = vsel %vm1371, %v1401, %v1402
        %s1404 = scalar_lea.vmem %s5, 32
        %v1405 = vld [vmem:[%s1404] sm:$0xf]
        %v1406 = vld [vmem:[%s1404 + $0x4] sm:$0xf]
        %v1407 = vld [vmem:[%s1404 + $0x8] sm:$0xf]
        %v1408 = vld [vmem:[%s1404 + $0xc] sm:$0xf]
        %v1409 = vunpack.c.l.b16 %v1375
        %v1410 = vunpack.c.l.b16 %v1379
        %v1411 = vunpack.c.l.b16 %v1383
        %v1412 = vunpack.c.l.b16 %v1387
        %v1413 = vunpack.c.l.b16 %v1391
        %v1414 = vunpack.c.l.b16 %v1395
        %v1415 = vunpack.c.l.b16 %v1399
        %v1416 = vunpack.c.l.b16 %v1403
        %v1417 = vpack.c.b16 %v1410, %v1409
        %v1418 = vpack.c.b16 %v1412, %v1411
        %v1419 = vpack.c.b16 %v1414, %v1413
        %v1420 = vpack.c.b16 %v1416, %v1415
        %v1425 = vunpack.c.l.b16 %v1405
        %v1426 = vunpack.c.l.b16 %v1406
        %v1427 = vunpack.c.l.b16 %v1407
        %v1428 = vunpack.c.l.b16 %v1408
        %v1429 = vpack.c.b16 %v1426, %v1425
        %v1430 = vpack.c.b16 %v1428, %v1427
        %v1434 = vsel %vm549, %v1417, 0
        %v1437 = vsel %vm549, %v1418, 0
        %v1440 = vsel %vm549, %v1419, 0
        %v1443 = vsel %vm549, %v1420, 0
        %1445 = vmatpush.bf16.msra.mxu0 0
        %1446 = vmatpush.bf16.msra.mxu0 0
        %1447 = vmatpush.bf16.msra.mxu0 0
        %1448 = vmatpush.bf16.msra.mxu0 0
        %1449 = vmatpush.bf16.msra.mxu0 0
        %1450 = vmatpush.bf16.msra.mxu0 0
        %1451 = vmatpush.bf16.msra.mxu0 %v1430
        %1452 = vmatpush.bf16.msra.mxu0 %v1429
        %1453 = vmatmul.bf16.gmra.mxu0 %v1434
        %v1454 = vpop.f32.mrf.mxu0
        %v1455 = vadd.f32 0.0, %v1454
        %v1456 = vpop.f32.mrf.mxu0
        %v1457 = vadd.f32 0.0, %v1456
        %1458 = vmatmul.bf16.gmra.mxu0 %v1437
        %v1459 = vpop.f32.mrf.mxu0
        %v1460 = vadd.f32 0.0, %v1459
        %v1461 = vpop.f32.mrf.mxu0
        %v1462 = vadd.f32 0.0, %v1461
        %1463 = vmatmul.bf16.gmra.mxu0 %v1440
        %v1464 = vpop.f32.mrf.mxu0
        %v1465 = vadd.f32 0.0, %v1464
        %v1466 = vpop.f32.mrf.mxu0
        %v1467 = vadd.f32 0.0, %v1466
        %1468 = vmatmul.bf16.gmra.mxu0 %v1443
        %v1469 = vpop.f32.mrf.mxu0
        %v1470 = vadd.f32 0.0, %v1469
        %v1471 = vpop.f32.mrf.mxu0
        %v1472 = vadd.f32 0.0, %v1471
        %1473 = vdwg.mxu0
        %v1474 = vadd.f32 %v1350, %v1455
        %v1475 = vadd.f32 %v1352, %v1457
        %v1476 = vadd.f32 %v1355, %v1460
        %v1477 = vadd.f32 %v1357, %v1462
        %v1478 = vadd.f32 %v1360, %v1465
        %v1479 = vadd.f32 %v1362, %v1467
        %v1480 = vadd.f32 %v1365, %v1470
        %v1481 = vadd.f32 %v1367, %v1472
        %s1482 = scalar_lea.vmem %s5, 48
        %v1483 = vld [vmem:[%s1482] sm:$0xf]
        %v1484 = vld [vmem:[%s1482 + $0x4] sm:$0xf]
        %v1485 = vld [vmem:[%s1482 + $0x8] sm:$0xf]
        %v1486 = vld [vmem:[%s1482 + $0xc] sm:$0xf]
        %v1488 = vunpack.c.l.b16 %v1082
        %v1489 = vpack.c.b16 %v1099, %v1097
        %v1490 = vpack.c.b16 %v1103, %v1101
        %v1491 = vpack.c.b16 %v1107, %v1105
        %v1492 = vpack.c.b16 %v1488, %v1109
        %v1497 = vunpack.c.l.b16 %v1483
        %v1498 = vunpack.c.l.b16 %v1484
        %v1499 = vunpack.c.l.b16 %v1485
        %v1500 = vunpack.c.l.b16 %v1486
        %v1501 = vpack.c.b16 %v1498, %v1497
        %v1502 = vpack.c.b16 %v1500, %v1499
        %v1506 = vsel %vm549, %v1489, 0
        %v1509 = vsel %vm549, %v1490, 0
        %v1512 = vsel %vm549, %v1491, 0
        %v1515 = vsel %vm549, %v1492, 0
        %1517 = vmatpush.bf16.msra.mxu0 0
        %1518 = vmatpush.bf16.msra.mxu0 0
        %1519 = vmatpush.bf16.msra.mxu0 0
        %1520 = vmatpush.bf16.msra.mxu0 0
        %1521 = vmatpush.bf16.msra.mxu0 0
        %1522 = vmatpush.bf16.msra.mxu0 0
        %1523 = vmatpush.bf16.msra.mxu0 %v1502
        %1524 = vmatpush.bf16.msra.mxu0 %v1501
        %1525 = vmatmul.bf16.gmra.mxu0 %v1506
        %v1526 = vpop.f32.mrf.mxu0
        %v1527 = vadd.f32 0.0, %v1526
        %v1528 = vpop.f32.mrf.mxu0
        %v1529 = vadd.f32 0.0, %v1528
        %1530 = vmatmul.bf16.gmra.mxu0 %v1509
        %v1531 = vpop.f32.mrf.mxu0
        %v1532 = vadd.f32 0.0, %v1531
        %v1533 = vpop.f32.mrf.mxu0
        %v1534 = vadd.f32 0.0, %v1533
        %1535 = vmatmul.bf16.gmra.mxu0 %v1512
        %v1536 = vpop.f32.mrf.mxu0
        %v1537 = vadd.f32 0.0, %v1536
        %v1538 = vpop.f32.mrf.mxu0
        %v1539 = vadd.f32 0.0, %v1538
        %1540 = vmatmul.bf16.gmra.mxu0 %v1515
        %v1541 = vpop.f32.mrf.mxu0
        %v1542 = vadd.f32 0.0, %v1541
        %v1543 = vpop.f32.mrf.mxu0
        %v1544 = vadd.f32 0.0, %v1543
        %1545 = vdwg.mxu0
        %v1546 = vadd.f32 %v1474, %v1527
        %v1547 = vadd.f32 %v1475, %v1529
        %v1548 = vadd.f32 %v1476, %v1532
        %v1549 = vadd.f32 %v1477, %v1534
        %v1550 = vadd.f32 %v1478, %v1537
        %v1551 = vadd.f32 %v1479, %v1539
        %v1552 = vadd.f32 %v1480, %v1542
        %v1553 = vadd.f32 %v1481, %v1544
        %v1554 = vunpack.c.h.b16 %v1082
        %v1555 = vpack.c.b16 %v1488, %v1488
        %v1556 = vpack.c.b16 %v1554, %v1554
        %v1558 = vshrl.u32 %v1555, 16
        %v1560 = vrot.slane %v1558, 4
        %v1561 = vshll.u32 %v1555, 16
        %v1563 = vrot.slane %v1561, 5
        %v1564 = vor.u32 %v1560, %v1563
        %v1565 = vrot.slane %v1564, 4
        %v1567 = vshll.u32 %v1556, 16
        %v1569 = vrot.slane %v1567, 5
        %v1570 = vsel %vm1129, %v1565, %v1569
        %s1571 = scalar_lea.vmem %s5, 64
        %v1572 = vld [vmem:[%s1571] sm:$0xf]
        %v1573 = vld [vmem:[%s1571 + $0x4] sm:$0xf]
        %v1574 = vld [vmem:[%s1571 + $0x8] sm:$0xf]
        %v1575 = vld [vmem:[%s1571 + $0xc] sm:$0xf]
        %v1576 = vunpack.c.l.b16 %v1570
        %v1577 = vpack.c.b16 %v1249, %v1248
        %v1578 = vpack.c.b16 %v1251, %v1250
        %v1579 = vpack.c.b16 %v1253, %v1252
        %v1580 = vpack.c.b16 %v1576, %v1254
        %v1585 = vunpack.c.l.b16 %v1572
        %v1586 = vunpack.c.l.b16 %v1573
        %v1587 = vunpack.c.l.b16 %v1574
        %v1588 = vunpack.c.l.b16 %v1575
        %v1589 = vpack.c.b16 %v1586, %v1585
        %v1590 = vpack.c.b16 %v1588, %v1587
        %v1594 = vsel %vm549, %v1577, 0
        %v1597 = vsel %vm549, %v1578, 0
        %v1600 = vsel %vm549, %v1579, 0
        %v1603 = vsel %vm549, %v1580, 0
        %1605 = vmatpush.bf16.msra.mxu0 0
        %1606 = vmatpush.bf16.msra.mxu0 0
        %1607 = vmatpush.bf16.msra.mxu0 0
        %1608 = vmatpush.bf16.msra.mxu0 0
        %1609 = vmatpush.bf16.msra.mxu0 0
        %1610 = vmatpush.bf16.msra.mxu0 0
        %1611 = vmatpush.bf16.msra.mxu0 %v1590
        %1612 = vmatpush.bf16.msra.mxu0 %v1589
        %1613 = vmatmul.bf16.gmra.mxu0 %v1594
        %v1614 = vpop.f32.mrf.mxu0
        %v1615 = vadd.f32 0.0, %v1614
        %v1616 = vpop.f32.mrf.mxu0
        %v1617 = vadd.f32 0.0, %v1616
        %1618 = vmatmul.bf16.gmra.mxu0 %v1597
        %v1619 = vpop.f32.mrf.mxu0
        %v1620 = vadd.f32 0.0, %v1619
        %v1621 = vpop.f32.mrf.mxu0
        %v1622 = vadd.f32 0.0, %v1621
        %1623 = vmatmul.bf16.gmra.mxu0 %v1600
        %v1624 = vpop.f32.mrf.mxu0
        %v1625 = vadd.f32 0.0, %v1624
        %v1626 = vpop.f32.mrf.mxu0
        %v1627 = vadd.f32 0.0, %v1626
        %1628 = vmatmul.bf16.gmra.mxu0 %v1603
        %v1629 = vpop.f32.mrf.mxu0
        %v1630 = vadd.f32 0.0, %v1629
        %v1631 = vpop.f32.mrf.mxu0
        %v1632 = vadd.f32 0.0, %v1631
        %1633 = vdwg.mxu0
        %v1634 = vadd.f32 %v1546, %v1615
        %v1635 = vadd.f32 %v1547, %v1617
        %v1636 = vadd.f32 %v1548, %v1620
        %v1637 = vadd.f32 %v1549, %v1622
        %v1638 = vadd.f32 %v1550, %v1625
        %v1639 = vadd.f32 %v1551, %v1627
        %v1640 = vadd.f32 %v1552, %v1630
        %v1641 = vadd.f32 %v1553, %v1632
        %v1642 = vrot.slane %v1555, 5
        %v1643 = vrot.slane %v1642, 4
        %v1644 = vrot.slane %v1556, 5
        %v1645 = vsel %vm1371, %v1643, %v1644
        %s1646 = scalar_lea.vmem %s5, 80
        %v1647 = vld [vmem:[%s1646] sm:$0xf]
        %v1648 = vld [vmem:[%s1646 + $0x4] sm:$0xf]
        %v1649 = vld [vmem:[%s1646 + $0x8] sm:$0xf]
        %v1650 = vld [vmem:[%s1646 + $0xc] sm:$0xf]
        %v1651 = vunpack.c.l.b16 %v1645
        %v1652 = vpack.c.b16 %v1411, %v1410
        %v1653 = vpack.c.b16 %v1413, %v1412
        %v1654 = vpack.c.b16 %v1415, %v1414
        %v1655 = vpack.c.b16 %v1651, %v1416
        %v1660 = vunpack.c.l.b16 %v1647
        %v1661 = vunpack.c.l.b16 %v1648
        %v1662 = vunpack.c.l.b16 %v1649
        %v1663 = vunpack.c.l.b16 %v1650
        %v1664 = vpack.c.b16 %v1661, %v1660
        %v1665 = vpack.c.b16 %v1663, %v1662
        %v1669 = vsel %vm549, %v1652, 0
        %v1672 = vsel %vm549, %v1653, 0
        %v1675 = vsel %vm549, %v1654, 0
        %v1678 = vsel %vm549, %v1655, 0
        %1680 = vmatpush.bf16.msra.mxu0 0
        %1681 = vmatpush.bf16.msra.mxu0 0
        %1682 = vmatpush.bf16.msra.mxu0 0
        %1683 = vmatpush.bf16.msra.mxu0 0
        %1684 = vmatpush.bf16.msra.mxu0 0
        %1685 = vmatpush.bf16.msra.mxu0 0
        %1686 = vmatpush.bf16.msra.mxu0 %v1665
        %1687 = vmatpush.bf16.msra.mxu0 %v1664
        %1688 = vmatmul.bf16.gmra.mxu0 %v1669
        %v1689 = vpop.f32.mrf.mxu0
        %v1690 = vadd.f32 0.0, %v1689
        %v1691 = vpop.f32.mrf.mxu0
        %v1692 = vadd.f32 0.0, %v1691
        %1693 = vmatmul.bf16.gmra.mxu0 %v1672
        %v1694 = vpop.f32.mrf.mxu0
        %v1695 = vadd.f32 0.0, %v1694
        %v1696 = vpop.f32.mrf.mxu0
        %v1697 = vadd.f32 0.0, %v1696
        %1698 = vmatmul.bf16.gmra.mxu0 %v1675
        %v1699 = vpop.f32.mrf.mxu0
        %v1700 = vadd.f32 0.0, %v1699
        %v1701 = vpop.f32.mrf.mxu0
        %v1702 = vadd.f32 0.0, %v1701
        %1703 = vmatmul.bf16.gmra.mxu0 %v1678
        %v1704 = vpop.f32.mrf.mxu0
        %v1705 = vadd.f32 0.0, %v1704
        %v1706 = vpop.f32.mrf.mxu0
        %v1707 = vadd.f32 0.0, %v1706
        %1708 = vdwg.mxu0
        %v1709 = vadd.f32 %v1634, %v1690
        %v1710 = vadd.f32 %v1635, %v1692
        %v1711 = vadd.f32 %v1636, %v1695
        %v1712 = vadd.f32 %v1637, %v1697
        %v1713 = vadd.f32 %v1638, %v1700
        %v1714 = vadd.f32 %v1639, %v1702
        %v1715 = vadd.f32 %v1640, %v1705
        %v1716 = vadd.f32 %v1641, %v1707
        %s1717 = scalar_lea.vmem %s5, 96
        %v1718 = vld [vmem:[%s1717] sm:$0xf]
        %v1719 = vld [vmem:[%s1717 + $0x4] sm:$0xf]
        %v1720 = vld [vmem:[%s1717 + $0x8] sm:$0xf]
        %v1721 = vld [vmem:[%s1717 + $0xc] sm:$0xf]
        %v1722 = vpack.c.b16 %v1095, %v1488
        %v1727 = vunpack.c.l.b16 %v1718
        %v1728 = vunpack.c.l.b16 %v1719
        %v1729 = vunpack.c.l.b16 %v1720
        %v1730 = vunpack.c.l.b16 %v1721
        %v1731 = vpack.c.b16 %v1728, %v1727
        %v1732 = vpack.c.b16 %v1730, %v1729
        %v1736 = vsel %vm549, %v1722, 0
        %1738 = vmatpush.bf16.msra.mxu0 0
        %1739 = vmatpush.bf16.msra.mxu0 0
        %1740 = vmatpush.bf16.msra.mxu0 0
        %1741 = vmatpush.bf16.msra.mxu0 0
        %1742 = vmatpush.bf16.msra.mxu0 0
        %1743 = vmatpush.bf16.msra.mxu0 0
        %1744 = vmatpush.bf16.msra.mxu0 %v1732
        %1745 = vmatpush.bf16.msra.mxu0 %v1731
        %1746 = vmatmul.bf16.gmra.mxu0 %v1332
        %v1747 = vpop.f32.mrf.mxu0
        %v1748 = vadd.f32 0.0, %v1747
        %v1749 = vpop.f32.mrf.mxu0
        %v1750 = vadd.f32 0.0, %v1749
        %1751 = vmatmul.bf16.gmra.mxu0 %v1335
        %v1752 = vpop.f32.mrf.mxu0
        %v1753 = vadd.f32 0.0, %v1752
        %v1754 = vpop.f32.mrf.mxu0
        %v1755 = vadd.f32 0.0, %v1754
        %1756 = vmatmul.bf16.gmra.mxu0 %v1338
        %v1757 = vpop.f32.mrf.mxu0
        %v1758 = vadd.f32 0.0, %v1757
        %v1759 = vpop.f32.mrf.mxu0
        %v1760 = vadd.f32 0.0, %v1759
        %1761 = vmatmul.bf16.gmra.mxu0 %v1736
        %v1762 = vpop.f32.mrf.mxu0
        %v1763 = vadd.f32 0.0, %v1762
        %v1764 = vpop.f32.mrf.mxu0
        %v1765 = vadd.f32 0.0, %v1764
        %1766 = vdwg.mxu0
        %v1767 = vadd.f32 %v1709, %v1748
        %v1768 = vadd.f32 %v1710, %v1750
        %v1769 = vadd.f32 %v1711, %v1753
        %v1770 = vadd.f32 %v1712, %v1755
        %v1771 = vadd.f32 %v1713, %v1758
        %v1772 = vadd.f32 %v1714, %v1760
        %v1773 = vadd.f32 %v1715, %v1763
        %v1774 = vadd.f32 %v1716, %v1765
        %s1775 = scalar_lea.vmem %s5, 112
        %v1776 = vld [vmem:[%s1775] sm:$0xf]
        %v1777 = vld [vmem:[%s1775 + $0x4] sm:$0xf]
        %v1778 = vld [vmem:[%s1775 + $0x8] sm:$0xf]
        %v1779 = vld [vmem:[%s1775 + $0xc] sm:$0xf]
        %v1780 = vpack.c.b16 %v1247, %v1576
        %v1785 = vunpack.c.l.b16 %v1776
        %v1786 = vunpack.c.l.b16 %v1777
        %v1787 = vunpack.c.l.b16 %v1778
        %v1788 = vunpack.c.l.b16 %v1779
        %v1789 = vpack.c.b16 %v1786, %v1785
        %v1790 = vpack.c.b16 %v1788, %v1787
        %v1794 = vsel %vm549, %v1780, 0
        %1796 = vmatpush.bf16.msra.mxu0 0
        %1797 = vmatpush.bf16.msra.mxu0 0
        %1798 = vmatpush.bf16.msra.mxu0 0
        %1799 = vmatpush.bf16.msra.mxu0 0
        %1800 = vmatpush.bf16.msra.mxu0 0
        %1801 = vmatpush.bf16.msra.mxu0 0
        %1802 = vmatpush.bf16.msra.mxu0 %v1790
        %1803 = vmatpush.bf16.msra.mxu0 %v1789
        %1804 = vmatmul.bf16.gmra.mxu0 %v1275
        %v1805 = vpop.f32.mrf.mxu0
        %v1806 = vadd.f32 0.0, %v1805
        %v1807 = vpop.f32.mrf.mxu0
        %v1808 = vadd.f32 0.0, %v1807
        %1809 = vmatmul.bf16.gmra.mxu0 %v1278
        %v1810 = vpop.f32.mrf.mxu0
        %v1811 = vadd.f32 0.0, %v1810
        %v1812 = vpop.f32.mrf.mxu0
        %v1813 = vadd.f32 0.0, %v1812
        %1814 = vmatmul.bf16.gmra.mxu0 %v1281
        %v1815 = vpop.f32.mrf.mxu0
        %v1816 = vadd.f32 0.0, %v1815
        %v1817 = vpop.f32.mrf.mxu0
        %v1818 = vadd.f32 0.0, %v1817
        %1819 = vmatmul.bf16.gmra.mxu0 %v1794
        %v1820 = vpop.f32.mrf.mxu0
        %v1821 = vadd.f32 0.0, %v1820
        %v1822 = vpop.f32.mrf.mxu0
        %v1823 = vadd.f32 0.0, %v1822
        %1824 = vdwg.mxu0
        %v1825 = vadd.f32 %v1767, %v1806
        %v1826 = vadd.f32 %v1768, %v1808
        %v1827 = vadd.f32 %v1769, %v1811
        %v1828 = vadd.f32 %v1770, %v1813
        %v1829 = vadd.f32 %v1771, %v1816
        %v1830 = vadd.f32 %v1772, %v1818
        %v1831 = vadd.f32 %v1773, %v1821
        %v1832 = vadd.f32 %v1774, %v1823
        %s1833 = scalar_lea.vmem %s5, 128
        %v1834 = vld [vmem:[%s1833] sm:$0xf]
        %v1835 = vld [vmem:[%s1833 + $0x4] sm:$0xf]
        %v1836 = vld [vmem:[%s1833 + $0x8] sm:$0xf]
        %v1837 = vld [vmem:[%s1833 + $0xc] sm:$0xf]
        %v1838 = vpack.c.b16 %v1409, %v1651
        %v1843 = vunpack.c.l.b16 %v1834
        %v1844 = vunpack.c.l.b16 %v1835
        %v1845 = vunpack.c.l.b16 %v1836
        %v1846 = vunpack.c.l.b16 %v1837
        %v1847 = vpack.c.b16 %v1844, %v1843
        %v1848 = vpack.c.b16 %v1846, %v1845
        %v1852 = vsel %vm549, %v1838, 0
        %1854 = vmatpush.bf16.msra.mxu0 0
        %1855 = vmatpush.bf16.msra.mxu0 0
        %1856 = vmatpush.bf16.msra.mxu0 0
        %1857 = vmatpush.bf16.msra.mxu0 0
        %1858 = vmatpush.bf16.msra.mxu0 0
        %1859 = vmatpush.bf16.msra.mxu0 0
        %1860 = vmatpush.bf16.msra.mxu0 %v1848
        %1861 = vmatpush.bf16.msra.mxu0 %v1847
        %1862 = vmatmul.bf16.gmra.mxu0 %v1437
        %v1863 = vpop.f32.mrf.mxu0
        %v1864 = vadd.f32 0.0, %v1863
        %v1865 = vpop.f32.mrf.mxu0
        %v1866 = vadd.f32 0.0, %v1865
        %1867 = vmatmul.bf16.gmra.mxu0 %v1440
        %v1868 = vpop.f32.mrf.mxu0
        %v1869 = vadd.f32 0.0, %v1868
        %v1870 = vpop.f32.mrf.mxu0
        %v1871 = vadd.f32 0.0, %v1870
        %1872 = vmatmul.bf16.gmra.mxu0 %v1443
        %v1873 = vpop.f32.mrf.mxu0
        %v1874 = vadd.f32 0.0, %v1873
        %v1875 = vpop.f32.mrf.mxu0
        %v1876 = vadd.f32 0.0, %v1875
        %1877 = vmatmul.bf16.gmra.mxu0 %v1852
        %v1878 = vpop.f32.mrf.mxu0
        %v1879 = vadd.f32 0.0, %v1878
        %v1880 = vpop.f32.mrf.mxu0
        %v1881 = vadd.f32 0.0, %v1880
        %1882 = vdwg.mxu0
        %v1883 = vadd.f32 %v1825, %v1864
        %v1884 = vadd.f32 %v1826, %v1866
        %v1885 = vadd.f32 %v1827, %v1869
        %v1886 = vadd.f32 %v1828, %v1871
        %v1887 = vadd.f32 %v1829, %v1874
        %v1888 = vadd.f32 %v1830, %v1876
        %v1889 = vadd.f32 %v1831, %v1879
        %v1890 = vadd.f32 %v1832, %v1881
        %v1891 = vld [vmem:[%s6] sm:$0x1]
        %v1893 = vperm.slane %v1891, 0
        %v1895 = vadd.f32 %v1883, %v1893
        %v1896 = vadd.f32 %v1884, %v1893
        %v1897 = vadd.f32 %v1885, %v1893
        %v1898 = vadd.f32 %v1886, %v1893
        %v1899 = vadd.f32 %v1887, %v1893
        %v1900 = vadd.f32 %v1888, %v1893
        %v1901 = vadd.f32 %v1889, %v1893
        %v1902 = vadd.f32 %v1890, %v1893
        %v1903 = vperm.slane %v976, 0
        %v1904 = vadd.f32 %v1895, %v1903
        %v1905 = vadd.f32 %v1896, %v1903
        %v1906 = vadd.f32 %v1897, %v1903
        %v1907 = vadd.f32 %v1898, %v1903
        %v1908 = vadd.f32 %v1899, %v1903
        %v1909 = vadd.f32 %v1900, %v1903
        %v1910 = vadd.f32 %v1901, %v1903
        %v1911 = vadd.f32 %v1902, %v1903
        %v1912 = vld [vmem:[%s9] sm:$0x1]
        %v1913 = vld [vmem:[%s10] sm:$0x1]
        %v1914 = vld [vmem:[%s11] sm:$0xff]
        %v1915 = vld [vmem:[%s11 + $0x8] sm:$0xff]
        %v1916 = vld [vmem:[%s11 + $0x10] sm:$0xff]
        %v1917 = vld [vmem:[%s11 + $0x18] sm:$0xff]
        %v1918 = vsel %vm549, %v1904, 0.0
        %v1919 = vsel %vm549, %v1905, 0.0
        %v1920 = vadd.f32 %v1918, %v1919
        %v1921 = vsel %vm549, %v1906, 0.0
        %v1922 = vadd.f32 %v1920, %v1921
        %v1923 = vsel %vm549, %v1907, 0.0
        %v1924 = vadd.f32 %v1922, %v1923
        %v1925 = vsel %vm549, %v1908, 0.0
        %v1926 = vadd.f32 %v1924, %v1925
        %v1927 = vsel %vm549, %v1909, 0.0
        %v1928 = vadd.f32 %v1926, %v1927
        %v1929 = vsel %vm549, %v1910, 0.0
        %v1930 = vadd.f32 %v1928, %v1929
        %v1931 = vsel %vm549, %v1911, 0.0
        %v1932 = vadd.f32 %v1930, %v1931
        %v1933 = vrot.slane %v1932, 4
        %v1934 = vadd.f32 %v1932, %v1933
        %v1935 = vrot.slane %v1934, 2
        %v1936 = vadd.f32 %v1934, %v1935
        %v1937 = vrot.slane %v1936, 1
        %v1938 = vadd.f32 %v1936, %v1937
        %v1940 = vsel %vm549, %v1938, 0
        %1942 = vmatpush.msra.mxu0 0.0
        %1943 = vmatpush.msra.mxu0 0.0
        %1944 = vmatpush.msra.mxu0 0.0
        %1945 = vmatpush.msra.mxu0 0.0
        %1946 = vmatpush.msra.mxu0 0.0
        %1947 = vmatpush.msra.mxu0 0.0
        %1948 = vmatpush.msra.mxu0 0.0
        %1949 = vmatpush.msra.mxu0 0.0
        %1950 = vmatpush.msra.mxu0 0.0
        %1951 = vmatpush.msra.mxu0 0.0
        %1952 = vmatpush.msra.mxu0 0.0
        %1953 = vmatpush.msra.mxu0 0.0
        %1954 = vmatpush.msra.mxu0 %v1917
        %1955 = vmatpush.msra.mxu0 %v1916
        %1956 = vmatpush.msra.mxu0 %v1915
        %1957 = vmatpush.msra.mxu0 %v1914
        %1958 = vmatmul.f32.gmra.mxu0 %v1940
        %v1959 = vpop.f32.mrf.mxu0
        %v1960 = vadd.f32 0.0, %v1959
        %1961 = vdwg.mxu0
        %v1962 = vmul.f32 %v1960, %v600
        %v1964 = vsel %vm602, %v1962, 0
        %v1967 = vsel %vm602, %v1914, 0
        %v1970 = vsel %vm602, %v1915, 0
        %v1973 = vsel %vm602, %v1916, 0
        %v1976 = vsel %vm602, %v1917, 0
        %1978 = vmatpush.xpose.msra.mxu0 0.0
        %1979 = vmatpush.xpose.msra.mxu0 0.0
        %1980 = vmatpush.xpose.msra.mxu0 0.0
        %1981 = vmatpush.xpose.msra.mxu0 0.0
        %1982 = vmatpush.xpose.msra.mxu0 0.0
        %1983 = vmatpush.xpose.msra.mxu0 0.0
        %1984 = vmatpush.xpose.msra.mxu0 0.0
        %1985 = vmatpush.xpose.msra.mxu0 0.0
        %1986 = vmatpush.xpose.msra.mxu0 0.0
        %1987 = vmatpush.xpose.msra.mxu0 0.0
        %1988 = vmatpush.xpose.msra.mxu0 0.0
        %1989 = vmatpush.xpose.msra.mxu0 0.0
        %1990 = vmatpush.xpose.msra.mxu0 %v1976
        %1991 = vmatpush.xpose.msra.mxu0 %v1973
        %1992 = vmatpush.xpose.msra.mxu0 %v1970
        %1993 = vmatpush.xpose.msra.mxu0 %v1967
        %1994 = vmatmul.f32.gmra.mxu0 %v1964
        %v1995 = vpop.f32.mrf.mxu0
        %v1996 = vadd.f32 0.0, %v1995
        %1997 = vdwg.mxu0
        %v1998 = vperm.slane %v1996, 0
        %v1999 = vsub.f32 %v1904, %v1998
        %v2000 = vsub.f32 %v1905, %v1998
        %v2001 = vsub.f32 %v1906, %v1998
        %v2002 = vsub.f32 %v1907, %v1998
        %v2003 = vsub.f32 %v1908, %v1998
        %v2004 = vsub.f32 %v1909, %v1998
        %v2005 = vsub.f32 %v1910, %v1998
        %v2006 = vsub.f32 %v1911, %v1998
        %v2007 = vmul.f32 %v1999, %v1999
        %v2008 = vmul.f32 %v2000, %v2000
        %v2009 = vmul.f32 %v2001, %v2001
        %v2010 = vmul.f32 %v2002, %v2002
        %v2011 = vmul.f32 %v2003, %v2003
        %v2012 = vmul.f32 %v2004, %v2004
        %v2013 = vmul.f32 %v2005, %v2005
        %v2014 = vmul.f32 %v2006, %v2006
        %v2015 = vsel %vm549, %v2007, 0.0
        %v2016 = vsel %vm549, %v2008, 0.0
        %v2017 = vadd.f32 %v2015, %v2016
        %v2018 = vsel %vm549, %v2009, 0.0
        %v2019 = vadd.f32 %v2017, %v2018
        %v2020 = vsel %vm549, %v2010, 0.0
        %v2021 = vadd.f32 %v2019, %v2020
        %v2022 = vsel %vm549, %v2011, 0.0
        %v2023 = vadd.f32 %v2021, %v2022
        %v2024 = vsel %vm549, %v2012, 0.0
        %v2025 = vadd.f32 %v2023, %v2024
        %v2026 = vsel %vm549, %v2013, 0.0
        %v2027 = vadd.f32 %v2025, %v2026
        %v2028 = vsel %vm549, %v2014, 0.0
        %v2029 = vadd.f32 %v2027, %v2028
        %v2030 = vrot.slane %v2029, 4
        %v2031 = vadd.f32 %v2029, %v2030
        %v2032 = vrot.slane %v2031, 2
        %v2033 = vadd.f32 %v2031, %v2032
        %v2034 = vrot.slane %v2033, 1
        %v2035 = vadd.f32 %v2033, %v2034
        %v2037 = vsel %vm549, %v2035, 0
        %2039 = vmatpush.msra.mxu0 0.0
        %2040 = vmatpush.msra.mxu0 0.0
        %2041 = vmatpush.msra.mxu0 0.0
        %2042 = vmatpush.msra.mxu0 0.0
        %2043 = vmatpush.msra.mxu0 0.0
        %2044 = vmatpush.msra.mxu0 0.0
        %2045 = vmatpush.msra.mxu0 0.0
        %2046 = vmatpush.msra.mxu0 0.0
        %2047 = vmatpush.msra.mxu0 0.0
        %2048 = vmatpush.msra.mxu0 0.0
        %2049 = vmatpush.msra.mxu0 0.0
        %2050 = vmatpush.msra.mxu0 0.0
        %2051 = vmatpush.msra.mxu0 %v1917
        %2052 = vmatpush.msra.mxu0 %v1916
        %2053 = vmatpush.msra.mxu0 %v1915
        %2054 = vmatpush.msra.mxu0 %v1914
        %2055 = vmatmul.f32.gmra.mxu0 %v2037
        %v2056 = vpop.f32.mrf.mxu0
        %v2057 = vadd.f32 0.0, %v2056
        %2058 = vdwg.mxu0
        %v2059 = vmul.f32 %v2057, %v600
        %v2061 = vsel %vm602, %v2059, 0
        %2063 = vmatpush.xpose.msra.mxu0 0.0
        %2064 = vmatpush.xpose.msra.mxu0 0.0
        %2065 = vmatpush.xpose.msra.mxu0 0.0
        %2066 = vmatpush.xpose.msra.mxu0 0.0
        %2067 = vmatpush.xpose.msra.mxu0 0.0
        %2068 = vmatpush.xpose.msra.mxu0 0.0
        %2069 = vmatpush.xpose.msra.mxu0 0.0
        %2070 = vmatpush.xpose.msra.mxu0 0.0
        %2071 = vmatpush.xpose.msra.mxu0 0.0
        %2072 = vmatpush.xpose.msra.mxu0 0.0
        %2073 = vmatpush.xpose.msra.mxu0 0.0
        %2074 = vmatpush.xpose.msra.mxu0 0.0
        %2075 = vmatpush.xpose.msra.mxu0 %v1976
        %2076 = vmatpush.xpose.msra.mxu0 %v1973
        %2077 = vmatpush.xpose.msra.mxu0 %v1970
        %2078 = vmatpush.xpose.msra.mxu0 %v1967
        %2079 = vmatmul.f32.gmra.mxu0 %v2061
        %v2080 = vpop.f32.mrf.mxu0
        %v2081 = vadd.f32 1e-05, %v2080
        %2082 = vdwg.mxu0
        %v2083 = vrsqrt.pop %v2081
        %v2084 = vmul.f32 %v2083, %v2081
        %v2085 = vmul.f32 %v2084, %v2083
        %v2086 = vmul.f32 0.5, %v2085
        %v2087 = vsub.f32 1.5, %v2086
        %v2088 = vmul.f32 %v2083, %v2087
        %vm2089 = vweird.f32 %v2081
        %vm2090 = vweird.f32 %v2083
        %vm2091 = vmor %vm2089, %vm2090
        %v2092 = vsel %vm2091, %v2083, %v2088
        %v2093 = vperm.slane %v2092, 0
        %v2094 = vmul.f32 %v1999, %v2093
        %v2095 = vmul.f32 %v2000, %v2093
        %v2096 = vmul.f32 %v2001, %v2093
        %v2097 = vmul.f32 %v2002, %v2093
        %v2098 = vmul.f32 %v2003, %v2093
        %v2099 = vmul.f32 %v2004, %v2093
        %v2100 = vmul.f32 %v2005, %v2093
        %v2101 = vmul.f32 %v2006, %v2093
        %v2103 = vperm.slane %v1912, 0
        %v2105 = vmul.f32 %v2094, %v2103
        %v2106 = vmul.f32 %v2095, %v2103
        %v2107 = vmul.f32 %v2096, %v2103
        %v2108 = vmul.f32 %v2097, %v2103
        %v2109 = vmul.f32 %v2098, %v2103
        %v2110 = vmul.f32 %v2099, %v2103
        %v2111 = vmul.f32 %v2100, %v2103
        %v2112 = vmul.f32 %v2101, %v2103
        %v2114 = vperm.slane %v1913, 0
        %v2116 = vadd.f32 %v2105, %v2114
        %v2117 = vadd.f32 %v2106, %v2114
        %v2118 = vadd.f32 %v2107, %v2114
        %v2119 = vadd.f32 %v2108, %v2114
        %v2120 = vadd.f32 %v2109, %v2114
        %v2121 = vadd.f32 %v2110, %v2114
        %v2122 = vadd.f32 %v2111, %v2114
        %v2123 = vadd.f32 %v2112, %v2114
        %v2124 = vxor.u32 %v2116, 2147483648
        %v2125 = vxor.u32 %v2117, 2147483648
        %v2126 = vxor.u32 %v2118, 2147483648
        %v2127 = vxor.u32 %v2119, 2147483648
        %v2128 = vxor.u32 %v2120, 2147483648
        %v2129 = vxor.u32 %v2121, 2147483648
        %v2130 = vxor.u32 %v2122, 2147483648
        %v2131 = vxor.u32 %v2123, 2147483648
        %v2132 = vmul.f32 %v2124, 1.442695
        %v2133 = vpow.pop %v2132
        %v2134 = vmul.f32 %v2125, 1.442695
        %v2135 = vpow.pop %v2134
        %v2136 = vmul.f32 %v2126, 1.442695
        %v2137 = vpow.pop %v2136
        %v2138 = vmul.f32 %v2127, 1.442695
        %v2139 = vpow.pop %v2138
        %v2140 = vmul.f32 %v2128, 1.442695
        %v2141 = vpow.pop %v2140
        %v2142 = vmul.f32 %v2129, 1.442695
        %v2143 = vpow.pop %v2142
        %v2144 = vmul.f32 %v2130, 1.442695
        %v2145 = vpow.pop %v2144
        %v2146 = vmul.f32 %v2131, 1.442695
        %v2147 = vpow.pop %v2146
        %v2148 = vadd.f32 %v2133, 1.0
        %v2149 = vadd.f32 %v2135, 1.0
        %v2150 = vadd.f32 %v2137, 1.0
        %v2151 = vadd.f32 %v2139, 1.0
        %v2152 = vadd.f32 %v2141, 1.0
        %v2153 = vadd.f32 %v2143, 1.0
        %v2154 = vadd.f32 %v2145, 1.0
        %v2155 = vadd.f32 %v2147, 1.0
        %v2156 = vrcp.pop %v2148
        %v2157 = vmul.f32 %v2148, %v2156
        %v2158 = vsub.f32 1.0, %v2157
        %v2159 = vmul.f32 %v2156, %v2158
        %v2160 = vadd.f32 %v2156, %v2159
        %vm2161 = vweird.f32 %v2148
        %vm2162 = vweird.f32 %v2156
        %vm2163 = vmor %vm2161, %vm2162
        %v2164 = vsel %vm2163, %v2156, %v2160
        %v2165 = vand.u32 2147483647, %v2148
        %vm2166 = vcmp.eq.f32.partialorder %v2165, 8.507059e+37
        %v2167 = vand.u32 %v2148, 2147483648
        %v2168 = vor.u32 1.1754944e-38, %v2167
        %v2169 = vsel %vm2166, %v2168, %v2164
        %v2170 = vmul.f32 1.0, %v2169
        %v2171 = vrcp.pop %v2149
        %v2172 = vmul.f32 %v2149, %v2171
        %v2173 = vsub.f32 1.0, %v2172
        %v2174 = vmul.f32 %v2171, %v2173
        %v2175 = vadd.f32 %v2171, %v2174
        %vm2176 = vweird.f32 %v2149
        %vm2177 = vweird.f32 %v2171
        %vm2178 = vmor %vm2176, %vm2177
        %v2179 = vsel %vm2178, %v2171, %v2175
        %v2180 = vand.u32 2147483647, %v2149
        %vm2181 = vcmp.eq.f32.partialorder %v2180, 8.507059e+37
        %v2182 = vand.u32 %v2149, 2147483648
        %v2183 = vor.u32 1.1754944e-38, %v2182
        %v2184 = vsel %vm2181, %v2183, %v2179
        %v2185 = vmul.f32 1.0, %v2184
        %v2186 = vrcp.pop %v2150
        %v2187 = vmul.f32 %v2150, %v2186
        %v2188 = vsub.f32 1.0, %v2187
        %v2189 = vmul.f32 %v2186, %v2188
        %v2190 = vadd.f32 %v2186, %v2189
        %vm2191 = vweird.f32 %v2150
        %vm2192 = vweird.f32 %v2186
        %vm2193 = vmor %vm2191, %vm2192
        %v2194 = vsel %vm2193, %v2186, %v2190
        %v2195 = vand.u32 2147483647, %v2150
        %vm2196 = vcmp.eq.f32.partialorder %v2195, 8.507059e+37
        %v2197 = vand.u32 %v2150, 2147483648
        %v2198 = vor.u32 1.1754944e-38, %v2197
        %v2199 = vsel %vm2196, %v2198, %v2194
        %v2200 = vmul.f32 1.0, %v2199
        %v2201 = vrcp.pop %v2151
        %v2202 = vmul.f32 %v2151, %v2201
        %v2203 = vsub.f32 1.0, %v2202
        %v2204 = vmul.f32 %v2201, %v2203
        %v2205 = vadd.f32 %v2201, %v2204
        %vm2206 = vweird.f32 %v2151
        %vm2207 = vweird.f32 %v2201
        %vm2208 = vmor %vm2206, %vm2207
        %v2209 = vsel %vm2208, %v2201, %v2205
        %v2210 = vand.u32 2147483647, %v2151
        %vm2211 = vcmp.eq.f32.partialorder %v2210, 8.507059e+37
        %v2212 = vand.u32 %v2151, 2147483648
        %v2213 = vor.u32 1.1754944e-38, %v2212
        %v2214 = vsel %vm2211, %v2213, %v2209
        %v2215 = vmul.f32 1.0, %v2214
        %v2216 = vrcp.pop %v2152
        %v2217 = vmul.f32 %v2152, %v2216
        %v2218 = vsub.f32 1.0, %v2217
        %v2219 = vmul.f32 %v2216, %v2218
        %v2220 = vadd.f32 %v2216, %v2219
        %vm2221 = vweird.f32 %v2152
        %vm2222 = vweird.f32 %v2216
        %vm2223 = vmor %vm2221, %vm2222
        %v2224 = vsel %vm2223, %v2216, %v2220
        %v2225 = vand.u32 2147483647, %v2152
        %vm2226 = vcmp.eq.f32.partialorder %v2225, 8.507059e+37
        %v2227 = vand.u32 %v2152, 2147483648
        %v2228 = vor.u32 1.1754944e-38, %v2227
        %v2229 = vsel %vm2226, %v2228, %v2224
        %v2230 = vmul.f32 1.0, %v2229
        %v2231 = vrcp.pop %v2153
        %v2232 = vmul.f32 %v2153, %v2231
        %v2233 = vsub.f32 1.0, %v2232
        %v2234 = vmul.f32 %v2231, %v2233
        %v2235 = vadd.f32 %v2231, %v2234
        %vm2236 = vweird.f32 %v2153
        %vm2237 = vweird.f32 %v2231
        %vm2238 = vmor %vm2236, %vm2237
        %v2239 = vsel %vm2238, %v2231, %v2235
        %v2240 = vand.u32 2147483647, %v2153
        %vm2241 = vcmp.eq.f32.partialorder %v2240, 8.507059e+37
        %v2242 = vand.u32 %v2153, 2147483648
        %v2243 = vor.u32 1.1754944e-38, %v2242
        %v2244 = vsel %vm2241, %v2243, %v2239
        %v2245 = vmul.f32 1.0, %v2244
        %v2246 = vrcp.pop %v2154
        %v2247 = vmul.f32 %v2154, %v2246
        %v2248 = vsub.f32 1.0, %v2247
        %v2249 = vmul.f32 %v2246, %v2248
        %v2250 = vadd.f32 %v2246, %v2249
        %vm2251 = vweird.f32 %v2154
        %vm2252 = vweird.f32 %v2246
        %vm2253 = vmor %vm2251, %vm2252
        %v2254 = vsel %vm2253, %v2246, %v2250
        %v2255 = vand.u32 2147483647, %v2154
        %vm2256 = vcmp.eq.f32.partialorder %v2255, 8.507059e+37
        %v2257 = vand.u32 %v2154, 2147483648
        %v2258 = vor.u32 1.1754944e-38, %v2257
        %v2259 = vsel %vm2256, %v2258, %v2254
        %v2260 = vmul.f32 1.0, %v2259
        %v2261 = vrcp.pop %v2155
        %v2262 = vmul.f32 %v2155, %v2261
        %v2263 = vsub.f32 1.0, %v2262
        %v2264 = vmul.f32 %v2261, %v2263
        %v2265 = vadd.f32 %v2261, %v2264
        %vm2266 = vweird.f32 %v2155
        %vm2267 = vweird.f32 %v2261
        %vm2268 = vmor %vm2266, %vm2267
        %v2269 = vsel %vm2268, %v2261, %v2265
        %v2270 = vand.u32 2147483647, %v2155
        %vm2271 = vcmp.eq.f32.partialorder %v2270, 8.507059e+37
        %v2272 = vand.u32 %v2155, 2147483648
        %v2273 = vor.u32 1.1754944e-38, %v2272
        %v2274 = vsel %vm2271, %v2273, %v2269
        %v2275 = vmul.f32 1.0, %v2274
        %v2276 = vmul.f32 %v2116, %v2170
        %v2277 = vmul.f32 %v2117, %v2185
        %v2278 = vmul.f32 %v2118, %v2200
        %v2279 = vmul.f32 %v2119, %v2215
        %v2280 = vmul.f32 %v2120, %v2230
        %v2281 = vmul.f32 %v2121, %v2245
        %v2282 = vmul.f32 %v2122, %v2260
        %v2283 = vmul.f32 %v2123, %v2275
        %v2284 = vpack.c.bf16 %v2276, %v2276
        %v2285 = vpack.c.bf16 %v2277, %v2277
        %v2286 = vpack.c.bf16 %v2278, %v2278
        %v2287 = vpack.c.bf16 %v2279, %v2279
        %v2288 = vpack.c.bf16 %v2280, %v2280
        %v2289 = vpack.c.bf16 %v2281, %v2281
        %v2290 = vpack.c.bf16 %v2282, %v2282
        %v2291 = vpack.c.bf16 %v2283, %v2283
        %v2293 = vshrl.u32 %v2284, 16
        %v2295 = vrot.slane %v2293, 7
        %v2296 = vshll.u32 %v2284, 16
        %v2298 = vor.u32 %v2295, %v2296
        %v2300 = vshrl.u32 %v2285, 16
        %v2302 = vrot.slane %v2300, 7
        %v2303 = vshll.u32 %v2285, 16
        %v2305 = vor.u32 %v2302, %v2303
        %v2307 = vshrl.u32 %v2286, 16
        %v2309 = vrot.slane %v2307, 7
        %v2310 = vshll.u32 %v2286, 16
        %v2312 = vor.u32 %v2309, %v2310
        %v2314 = vshrl.u32 %v2287, 16
        %v2316 = vrot.slane %v2314, 7
        %v2317 = vshll.u32 %v2287, 16
        %v2319 = vor.u32 %v2316, %v2317
        %v2321 = vshrl.u32 %v2288, 16
        %v2323 = vrot.slane %v2321, 7
        %v2324 = vshll.u32 %v2288, 16
        %v2326 = vor.u32 %v2323, %v2324
        %v2328 = vshrl.u32 %v2289, 16
        %v2330 = vrot.slane %v2328, 7
        %v2331 = vshll.u32 %v2289, 16
        %v2333 = vor.u32 %v2330, %v2331
        %v2335 = vshrl.u32 %v2290, 16
        %v2337 = vrot.slane %v2335, 7
        %v2338 = vshll.u32 %v2290, 16
        %v2340 = vor.u32 %v2337, %v2338
        %v2342 = vshrl.u32 %v2291, 16
        %v2344 = vrot.slane %v2342, 7
        %v2345 = vshll.u32 %v2291, 16
        %v2347 = vor.u32 %v2344, %v2345
        %v2356 = vsel %vm1061, 0, %v2298
        %v2357 = vsel %vm1061, 0, %v2305
        %v2358 = vsel %vm1061, 0, %v2312
        %v2359 = vsel %vm1061, 0, %v2319
        %v2360 = vsel %vm1061, 0, %v2326
        %v2361 = vsel %vm1061, 0, %v2333
        %v2362 = vsel %vm1061, 0, %v2340
        %v2363 = vsel %vm1061, 0, %v2347
        %v2364 = vsel %vm1073, %v2356, 0
        %v2365 = vsel %vm1073, %v2357, 0
        %v2366 = vsel %vm1073, %v2358, 0
        %v2367 = vsel %vm1073, %v2359, 0
        %v2368 = vsel %vm1073, %v2360, 0
        %v2369 = vsel %vm1073, %v2361, 0
        %v2370 = vsel %vm1073, %v2362, 0
        %v2371 = vsel %vm1073, %v2363, 0
        %v2372 = vld [vmem:[%s12] sm:$0xf]
        %v2373 = vld [vmem:[%s12 + $0x4] sm:$0xf]
        %v2374 = vld [vmem:[%s12 + $0x8] sm:$0xf]
        %v2375 = vld [vmem:[%s12 + $0xc] sm:$0xf]
        %v2383 = vunpack.c.l.b16 %v2364
        %v2384 = vunpack.c.h.b16 %v2364
        %v2385 = vunpack.c.l.b16 %v2365
        %v2386 = vunpack.c.h.b16 %v2365
        %v2387 = vunpack.c.l.b16 %v2366
        %v2388 = vunpack.c.h.b16 %v2366
        %v2389 = vunpack.c.l.b16 %v2367
        %v2390 = vunpack.c.h.b16 %v2367
        %v2391 = vunpack.c.l.b16 %v2368
        %v2392 = vunpack.c.h.b16 %v2368
        %v2393 = vunpack.c.l.b16 %v2369
        %v2394 = vunpack.c.h.b16 %v2369
        %v2395 = vunpack.c.l.b16 %v2370
        %v2396 = vunpack.c.h.b16 %v2370
        %v2397 = vpack.c.b16 %v2383, %v2383
        %v2398 = vpack.c.b16 %v2384, %v2384
        %v2399 = vpack.c.b16 %v2385, %v2385
        %v2400 = vpack.c.b16 %v2386, %v2386
        %v2401 = vpack.c.b16 %v2387, %v2387
        %v2402 = vpack.c.b16 %v2388, %v2388
        %v2403 = vpack.c.b16 %v2389, %v2389
        %v2404 = vpack.c.b16 %v2390, %v2390
        %v2405 = vpack.c.b16 %v2391, %v2391
        %v2406 = vpack.c.b16 %v2392, %v2392
        %v2407 = vpack.c.b16 %v2393, %v2393
        %v2408 = vpack.c.b16 %v2394, %v2394
        %v2409 = vpack.c.b16 %v2395, %v2395
        %v2410 = vpack.c.b16 %v2396, %v2396
        %v2412 = vshrl.u32 %v2397, 16
        %v2414 = vrot.slane %v2412, 4
        %v2415 = vshll.u32 %v2397, 16
        %v2417 = vrot.slane %v2415, 5
        %v2418 = vor.u32 %v2414, %v2417
        %v2419 = vrot.slane %v2418, 4
        %v2421 = vshll.u32 %v2398, 16
        %v2423 = vrot.slane %v2421, 5
        %v2424 = vsel %vm1129, %v2419, %v2423
        %v2426 = vshrl.u32 %v2399, 16
        %v2428 = vrot.slane %v2426, 4
        %v2429 = vshll.u32 %v2399, 16
        %v2431 = vrot.slane %v2429, 5
        %v2432 = vor.u32 %v2428, %v2431
        %v2433 = vrot.slane %v2432, 4
        %v2435 = vshll.u32 %v2400, 16
        %v2437 = vrot.slane %v2435, 5
        %v2438 = vsel %vm1129, %v2433, %v2437
        %v2440 = vshrl.u32 %v2401, 16
        %v2442 = vrot.slane %v2440, 4
        %v2443 = vshll.u32 %v2401, 16
        %v2445 = vrot.slane %v2443, 5
        %v2446 = vor.u32 %v2442, %v2445
        %v2447 = vrot.slane %v2446, 4
        %v2449 = vshll.u32 %v2402, 16
        %v2451 = vrot.slane %v2449, 5
        %v2452 = vsel %vm1129, %v2447, %v2451
        %v2454 = vshrl.u32 %v2403, 16
        %v2456 = vrot.slane %v2454, 4
        %v2457 = vshll.u32 %v2403, 16
        %v2459 = vrot.slane %v2457, 5
        %v2460 = vor.u32 %v2456, %v2459
        %v2461 = vrot.slane %v2460, 4
        %v2463 = vshll.u32 %v2404, 16
        %v2465 = vrot.slane %v2463, 5
        %v2466 = vsel %vm1129, %v2461, %v2465
        %v2468 = vshrl.u32 %v2405, 16
        %v2470 = vrot.slane %v2468, 4
        %v2471 = vshll.u32 %v2405, 16
        %v2473 = vrot.slane %v2471, 5
        %v2474 = vor.u32 %v2470, %v2473
        %v2475 = vrot.slane %v2474, 4
        %v2477 = vshll.u32 %v2406, 16
        %v2479 = vrot.slane %v2477, 5
        %v2480 = vsel %vm1129, %v2475, %v2479
        %v2482 = vshrl.u32 %v2407, 16
        %v2484 = vrot.slane %v2482, 4
        %v2485 = vshll.u32 %v2407, 16
        %v2487 = vrot.slane %v2485, 5
        %v2488 = vor.u32 %v2484, %v2487
        %v2489 = vrot.slane %v2488, 4
        %v2491 = vshll.u32 %v2408, 16
        %v2493 = vrot.slane %v2491, 5
        %v2494 = vsel %vm1129, %v2489, %v2493
        %v2496 = vshrl.u32 %v2409, 16
        %v2498 = vrot.slane %v2496, 4
        %v2499 = vshll.u32 %v2409, 16
        %v2501 = vrot.slane %v2499, 5
        %v2502 = vor.u32 %v2498, %v2501
        %v2503 = vrot.slane %v2502, 4
        %v2505 = vshll.u32 %v2410, 16
        %v2507 = vrot.slane %v2505, 5
        %v2508 = vsel %vm1129, %v2503, %v2507
        %s2509 = scalar_lea.vmem %s12, 16
        %v2510 = vld [vmem:[%s2509] sm:$0xf]
        %v2511 = vld [vmem:[%s2509 + $0x4] sm:$0xf]
        %v2512 = vld [vmem:[%s2509 + $0x8] sm:$0xf]
        %v2513 = vld [vmem:[%s2509 + $0xc] sm:$0xf]
        %v2514 = vunpack.c.l.b16 %v2424
        %v2515 = vunpack.c.l.b16 %v2438
        %v2516 = vunpack.c.l.b16 %v2452
        %v2517 = vunpack.c.l.b16 %v2466
        %v2518 = vunpack.c.l.b16 %v2480
        %v2519 = vunpack.c.l.b16 %v2494
        %v2520 = vunpack.c.l.b16 %v2508
        %v2521 = vpack.c.b16 %v2514, %v1247
        %v2522 = vpack.c.b16 %v2516, %v2515
        %v2523 = vpack.c.b16 %v2518, %v2517
        %v2524 = vpack.c.b16 %v2520, %v2519
        %v2529 = vunpack.c.l.b16 %v2510
        %v2530 = vunpack.c.l.b16 %v2511
        %v2531 = vunpack.c.l.b16 %v2512
        %v2532 = vunpack.c.l.b16 %v2513
        %v2533 = vpack.c.b16 %v2530, %v2529
        %v2534 = vpack.c.b16 %v2532, %v2531
        %v2538 = vsel %vm549, %v2521, 0
        %v2541 = vsel %vm549, %v2522, 0
        %v2544 = vsel %vm549, %v2523, 0
        %v2547 = vsel %vm549, %v2524, 0
        %2549 = vmatpush.bf16.msra.mxu0 0
        %2550 = vmatpush.bf16.msra.mxu0 0
        %2551 = vmatpush.bf16.msra.mxu0 0
        %2552 = vmatpush.bf16.msra.mxu0 0
        %2553 = vmatpush.bf16.msra.mxu0 0
        %2554 = vmatpush.bf16.msra.mxu0 0
        %2555 = vmatpush.bf16.msra.mxu0 %v2534
        %2556 = vmatpush.bf16.msra.mxu0 %v2533
        %2557 = vmatmul.bf16.gmra.mxu0 %v2538
        %v2558 = vpop.f32.mrf.mxu0
        %v2559 = vadd.f32 0.0, %v2558
        %v2560 = vpop.f32.mrf.mxu0
        %v2561 = vadd.f32 0.0, %v2560
        %2562 = vmatmul.bf16.gmra.mxu0 %v2541
        %v2563 = vpop.f32.mrf.mxu0
        %v2564 = vadd.f32 0.0, %v2563
        %v2565 = vpop.f32.mrf.mxu0
        %v2566 = vadd.f32 0.0, %v2565
        %2567 = vmatmul.bf16.gmra.mxu0 %v2544
        %v2568 = vpop.f32.mrf.mxu0
        %v2569 = vadd.f32 0.0, %v2568
        %v2570 = vpop.f32.mrf.mxu0
        %v2571 = vadd.f32 0.0, %v2570
        %2572 = vmatmul.bf16.gmra.mxu0 %v2547
        %v2573 = vpop.f32.mrf.mxu0
        %v2574 = vadd.f32 0.0, %v2573
        %v2575 = vpop.f32.mrf.mxu0
        %v2576 = vadd.f32 0.0, %v2575
        %2577 = vdwg.mxu0
        %v2578 = vpack.c.b16 %v2383, %v1095
        %v2579 = vpack.c.b16 %v2387, %v2385
        %v2580 = vpack.c.b16 %v2391, %v2389
        %v2581 = vpack.c.b16 %v2395, %v2393
        %v2586 = vunpack.c.l.b16 %v2372
        %v2587 = vunpack.c.l.b16 %v2373
        %v2588 = vunpack.c.l.b16 %v2374
        %v2589 = vunpack.c.l.b16 %v2375
        %v2590 = vpack.c.b16 %v2587, %v2586
        %v2591 = vpack.c.b16 %v2589, %v2588
        %v2595 = vsel %vm549, %v2578, 0
        %v2598 = vsel %vm549, %v2579, 0
        %v2601 = vsel %vm549, %v2580, 0
        %v2604 = vsel %vm549, %v2581, 0
        %2606 = vmatpush.bf16.msra.mxu0 0
        %2607 = vmatpush.bf16.msra.mxu0 0
        %2608 = vmatpush.bf16.msra.mxu0 0
        %2609 = vmatpush.bf16.msra.mxu0 0
        %2610 = vmatpush.bf16.msra.mxu0 0
        %2611 = vmatpush.bf16.msra.mxu0 0
        %2612 = vmatpush.bf16.msra.mxu0 %v2591
        %2613 = vmatpush.bf16.msra.mxu0 %v2590
        %2614 = vmatmul.bf16.gmra.mxu0 %v2595
        %v2615 = vpop.f32.mrf.mxu0
        %v2616 = vadd.f32 %v2559, %v2615
        %v2617 = vpop.f32.mrf.mxu0
        %v2618 = vadd.f32 %v2561, %v2617
        %2619 = vmatmul.bf16.gmra.mxu0 %v2598
        %v2620 = vpop.f32.mrf.mxu0
        %v2621 = vadd.f32 %v2564, %v2620
        %v2622 = vpop.f32.mrf.mxu0
        %v2623 = vadd.f32 %v2566, %v2622
        %2624 = vmatmul.bf16.gmra.mxu0 %v2601
        %v2625 = vpop.f32.mrf.mxu0
        %v2626 = vadd.f32 %v2569, %v2625
        %v2627 = vpop.f32.mrf.mxu0
        %v2628 = vadd.f32 %v2571, %v2627
        %2629 = vmatmul.bf16.gmra.mxu0 %v2604
        %v2630 = vpop.f32.mrf.mxu0
        %v2631 = vadd.f32 %v2574, %v2630
        %v2632 = vpop.f32.mrf.mxu0
        %v2633 = vadd.f32 %v2576, %v2632
        %2634 = vdwg.mxu0
        %v2635 = vrot.slane %v2397, 5
        %v2636 = vrot.slane %v2635, 4
        %v2637 = vrot.slane %v2398, 5
        %v2638 = vsel %vm1371, %v2636, %v2637
        %v2639 = vrot.slane %v2399, 5
        %v2640 = vrot.slane %v2639, 4
        %v2641 = vrot.slane %v2400, 5
        %v2642 = vsel %vm1371, %v2640, %v2641
        %v2643 = vrot.slane %v2401, 5
        %v2644 = vrot.slane %v2643, 4
        %v2645 = vrot.slane %v2402, 5
        %v2646 = vsel %vm1371, %v2644, %v2645
        %v2647 = vrot.slane %v2403, 5
        %v2648 = vrot.slane %v2647, 4
        %v2649 = vrot.slane %v2404, 5
        %v2650 = vsel %vm1371, %v2648, %v2649
        %v2651 = vrot.slane %v2405, 5
        %v2652 = vrot.slane %v2651, 4
        %v2653 = vrot.slane %v2406, 5
        %v2654 = vsel %vm1371, %v2652, %v2653
        %v2655 = vrot.slane %v2407, 5
        %v2656 = vrot.slane %v2655, 4
        %v2657 = vrot.slane %v2408, 5
        %v2658 = vsel %vm1371, %v2656, %v2657
        %v2659 = vrot.slane %v2409, 5
        %v2660 = vrot.slane %v2659, 4
        %v2661 = vrot.slane %v2410, 5
        %v2662 = vsel %vm1371, %v2660, %v2661
        %s2663 = scalar_lea.vmem %s12, 32
        %v2664 = vld [vmem:[%s2663] sm:$0xf]
        %v2665 = vld [vmem:[%s2663 + $0x4] sm:$0xf]
        %v2666 = vld [vmem:[%s2663 + $0x8] sm:$0xf]
        %v2667 = vld [vmem:[%s2663 + $0xc] sm:$0xf]
        %v2668 = vunpack.c.l.b16 %v2638
        %v2669 = vunpack.c.l.b16 %v2642
        %v2670 = vunpack.c.l.b16 %v2646
        %v2671 = vunpack.c.l.b16 %v2650
        %v2672 = vunpack.c.l.b16 %v2654
        %v2673 = vunpack.c.l.b16 %v2658
        %v2674 = vunpack.c.l.b16 %v2662
        %v2675 = vpack.c.b16 %v2668, %v1409
        %v2676 = vpack.c.b16 %v2670, %v2669
        %v2677 = vpack.c.b16 %v2672, %v2671
        %v2678 = vpack.c.b16 %v2674, %v2673
        %v2683 = vunpack.c.l.b16 %v2664
        %v2684 = vunpack.c.l.b16 %v2665
        %v2685 = vunpack.c.l.b16 %v2666
        %v2686 = vunpack.c.l.b16 %v2667
        %v2687 = vpack.c.b16 %v2684, %v2683
        %v2688 = vpack.c.b16 %v2686, %v2685
        %v2692 = vsel %vm549, %v2675, 0
        %v2695 = vsel %vm549, %v2676, 0
        %v2698 = vsel %vm549, %v2677, 0
        %v2701 = vsel %vm549, %v2678, 0
        %2703 = vmatpush.bf16.msra.mxu0 0
        %2704 = vmatpush.bf16.msra.mxu0 0
        %2705 = vmatpush.bf16.msra.mxu0 0
        %2706 = vmatpush.bf16.msra.mxu0 0
        %2707 = vmatpush.bf16.msra.mxu0 0
        %2708 = vmatpush.bf16.msra.mxu0 0
        %2709 = vmatpush.bf16.msra.mxu0 %v2688
        %2710 = vmatpush.bf16.msra.mxu0 %v2687
        %2711 = vmatmul.bf16.gmra.mxu0 %v2692
        %v2712 = vpop.f32.mrf.mxu0
        %v2713 = vadd.f32 0.0, %v2712
        %v2714 = vpop.f32.mrf.mxu0
        %v2715 = vadd.f32 0.0, %v2714
        %2716 = vmatmul.bf16.gmra.mxu0 %v2695
        %v2717 = vpop.f32.mrf.mxu0
        %v2718 = vadd.f32 0.0, %v2717
        %v2719 = vpop.f32.mrf.mxu0
        %v2720 = vadd.f32 0.0, %v2719
        %2721 = vmatmul.bf16.gmra.mxu0 %v2698
        %v2722 = vpop.f32.mrf.mxu0
        %v2723 = vadd.f32 0.0, %v2722
        %v2724 = vpop.f32.mrf.mxu0
        %v2725 = vadd.f32 0.0, %v2724
        %2726 = vmatmul.bf16.gmra.mxu0 %v2701
        %v2727 = vpop.f32.mrf.mxu0
        %v2728 = vadd.f32 0.0, %v2727
        %v2729 = vpop.f32.mrf.mxu0
        %v2730 = vadd.f32 0.0, %v2729
        %2731 = vdwg.mxu0
        %v2732 = vadd.f32 %v2616, %v2713
        %v2733 = vadd.f32 %v2618, %v2715
        %v2734 = vadd.f32 %v2621, %v2718
        %v2735 = vadd.f32 %v2623, %v2720
        %v2736 = vadd.f32 %v2626, %v2723
        %v2737 = vadd.f32 %v2628, %v2725
        %v2738 = vadd.f32 %v2631, %v2728
        %v2739 = vadd.f32 %v2633, %v2730
        %s2740 = scalar_lea.vmem %s12, 48
        %v2741 = vld [vmem:[%s2740] sm:$0xf]
        %v2742 = vld [vmem:[%s2740 + $0x4] sm:$0xf]
        %v2743 = vld [vmem:[%s2740 + $0x8] sm:$0xf]
        %v2744 = vld [vmem:[%s2740 + $0xc] sm:$0xf]
        %v2746 = vunpack.c.l.b16 %v2371
        %v2747 = vpack.c.b16 %v2385, %v2383
        %v2748 = vpack.c.b16 %v2389, %v2387
        %v2749 = vpack.c.b16 %v2393, %v2391
        %v2750 = vpack.c.b16 %v2746, %v2395
        %v2755 = vunpack.c.l.b16 %v2741
        %v2756 = vunpack.c.l.b16 %v2742
        %v2757 = vunpack.c.l.b16 %v2743
        %v2758 = vunpack.c.l.b16 %v2744
        %v2759 = vpack.c.b16 %v2756, %v2755
        %v2760 = vpack.c.b16 %v2758, %v2757
        %v2764 = vsel %vm549, %v2747, 0
        %v2767 = vsel %vm549, %v2748, 0
        %v2770 = vsel %vm549, %v2749, 0
        %v2773 = vsel %vm549, %v2750, 0
        %2775 = vmatpush.bf16.msra.mxu0 0
        %2776 = vmatpush.bf16.msra.mxu0 0
        %2777 = vmatpush.bf16.msra.mxu0 0
        %2778 = vmatpush.bf16.msra.mxu0 0
        %2779 = vmatpush.bf16.msra.mxu0 0
        %2780 = vmatpush.bf16.msra.mxu0 0
        %2781 = vmatpush.bf16.msra.mxu0 %v2760
        %2782 = vmatpush.bf16.msra.mxu0 %v2759
        %2783 = vmatmul.bf16.gmra.mxu0 %v2764
        %v2784 = vpop.f32.mrf.mxu0
        %v2785 = vadd.f32 0.0, %v2784
        %v2786 = vpop.f32.mrf.mxu0
        %v2787 = vadd.f32 0.0, %v2786
        %2788 = vmatmul.bf16.gmra.mxu0 %v2767
        %v2789 = vpop.f32.mrf.mxu0
        %v2790 = vadd.f32 0.0, %v2789
        %v2791 = vpop.f32.mrf.mxu0
        %v2792 = vadd.f32 0.0, %v2791
        %2793 = vmatmul.bf16.gmra.mxu0 %v2770
        %v2794 = vpop.f32.mrf.mxu0
        %v2795 = vadd.f32 0.0, %v2794
        %v2796 = vpop.f32.mrf.mxu0
        %v2797 = vadd.f32 0.0, %v2796
        %2798 = vmatmul.bf16.gmra.mxu0 %v2773
        %v2799 = vpop.f32.mrf.mxu0
        %v2800 = vadd.f32 0.0, %v2799
        %v2801 = vpop.f32.mrf.mxu0
        %v2802 = vadd.f32 0.0, %v2801
        %2803 = vdwg.mxu0
        %v2804 = vadd.f32 %v2732, %v2785
        %v2805 = vadd.f32 %v2733, %v2787
        %v2806 = vadd.f32 %v2734, %v2790
        %v2807 = vadd.f32 %v2735, %v2792
        %v2808 = vadd.f32 %v2736, %v2795
        %v2809 = vadd.f32 %v2737, %v2797
        %v2810 = vadd.f32 %v2738, %v2800
        %v2811 = vadd.f32 %v2739, %v2802
        %v2812 = vunpack.c.h.b16 %v2371
        %v2813 = vpack.c.b16 %v2746, %v2746
        %v2814 = vpack.c.b16 %v2812, %v2812
        %v2816 = vshrl.u32 %v2813, 16
        %v2818 = vrot.slane %v2816, 4
        %v2819 = vshll.u32 %v2813, 16
        %v2821 = vrot.slane %v2819, 5
        %v2822 = vor.u32 %v2818, %v2821
        %v2823 = vrot.slane %v2822, 4
        %v2825 = vshll.u32 %v2814, 16
        %v2827 = vrot.slane %v2825, 5
        %v2828 = vsel %vm1129, %v2823, %v2827
        %s2829 = scalar_lea.vmem %s12, 64
        %v2830 = vld [vmem:[%s2829] sm:$0xf]
        %v2831 = vld [vmem:[%s2829 + $0x4] sm:$0xf]
        %v2832 = vld [vmem:[%s2829 + $0x8] sm:$0xf]
        %v2833 = vld [vmem:[%s2829 + $0xc] sm:$0xf]
        %v2834 = vunpack.c.l.b16 %v2828
        %v2835 = vpack.c.b16 %v2515, %v2514
        %v2836 = vpack.c.b16 %v2517, %v2516
        %v2837 = vpack.c.b16 %v2519, %v2518
        %v2838 = vpack.c.b16 %v2834, %v2520
        %v2843 = vunpack.c.l.b16 %v2830
        %v2844 = vunpack.c.l.b16 %v2831
        %v2845 = vunpack.c.l.b16 %v2832
        %v2846 = vunpack.c.l.b16 %v2833
        %v2847 = vpack.c.b16 %v2844, %v2843
        %v2848 = vpack.c.b16 %v2846, %v2845
        %v2852 = vsel %vm549, %v2835, 0
        %v2855 = vsel %vm549, %v2836, 0
        %v2858 = vsel %vm549, %v2837, 0
        %v2861 = vsel %vm549, %v2838, 0
        %2863 = vmatpush.bf16.msra.mxu0 0
        %2864 = vmatpush.bf16.msra.mxu0 0
        %2865 = vmatpush.bf16.msra.mxu0 0
        %2866 = vmatpush.bf16.msra.mxu0 0
        %2867 = vmatpush.bf16.msra.mxu0 0
        %2868 = vmatpush.bf16.msra.mxu0 0
        %2869 = vmatpush.bf16.msra.mxu0 %v2848
        %2870 = vmatpush.bf16.msra.mxu0 %v2847
        %2871 = vmatmul.bf16.gmra.mxu0 %v2852
        %v2872 = vpop.f32.mrf.mxu0
        %v2873 = vadd.f32 0.0, %v2872
        %v2874 = vpop.f32.mrf.mxu0
        %v2875 = vadd.f32 0.0, %v2874
        %2876 = vmatmul.bf16.gmra.mxu0 %v2855
        %v2877 = vpop.f32.mrf.mxu0
        %v2878 = vadd.f32 0.0, %v2877
        %v2879 = vpop.f32.mrf.mxu0
        %v2880 = vadd.f32 0.0, %v2879
        %2881 = vmatmul.bf16.gmra.mxu0 %v2858
        %v2882 = vpop.f32.mrf.mxu0
        %v2883 = vadd.f32 0.0, %v2882
        %v2884 = vpop.f32.mrf.mxu0
        %v2885 = vadd.f32 0.0, %v2884
        %2886 = vmatmul.bf16.gmra.mxu0 %v2861
        %v2887 = vpop.f32.mrf.mxu0
        %v2888 = vadd.f32 0.0, %v2887
        %v2889 = vpop.f32.mrf.mxu0
        %v2890 = vadd.f32 0.0, %v2889
        %2891 = vdwg.mxu0
        %v2892 = vadd.f32 %v2804, %v2873
        %v2893 = vadd.f32 %v2805, %v2875
        %v2894 = vadd.f32 %v2806, %v2878
        %v2895 = vadd.f32 %v2807, %v2880
        %v2896 = vadd.f32 %v2808, %v2883
        %v2897 = vadd.f32 %v2809, %v2885
        %v2898 = vadd.f32 %v2810, %v2888
        %v2899 = vadd.f32 %v2811, %v2890
        %v2900 = vrot.slane %v2813, 5
        %v2901 = vrot.slane %v2900, 4
        %v2902 = vrot.slane %v2814, 5
        %v2903 = vsel %vm1371, %v2901, %v2902
        %s2904 = scalar_lea.vmem %s12, 80
        %v2905 = vld [vmem:[%s2904] sm:$0xf]
        %v2906 = vld [vmem:[%s2904 + $0x4] sm:$0xf]
        %v2907 = vld [vmem:[%s2904 + $0x8] sm:$0xf]
        %v2908 = vld [vmem:[%s2904 + $0xc] sm:$0xf]
        %v2909 = vunpack.c.l.b16 %v2903
        %v2910 = vpack.c.b16 %v2669, %v2668
        %v2911 = vpack.c.b16 %v2671, %v2670
        %v2912 = vpack.c.b16 %v2673, %v2672
        %v2913 = vpack.c.b16 %v2909, %v2674
        %v2918 = vunpack.c.l.b16 %v2905
        %v2919 = vunpack.c.l.b16 %v2906
        %v2920 = vunpack.c.l.b16 %v2907
        %v2921 = vunpack.c.l.b16 %v2908
        %v2922 = vpack.c.b16 %v2919, %v2918
        %v2923 = vpack.c.b16 %v2921, %v2920
        %v2927 = vsel %vm549, %v2910, 0
        %v2930 = vsel %vm549, %v2911, 0
        %v2933 = vsel %vm549, %v2912, 0
        %v2936 = vsel %vm549, %v2913, 0
        %2938 = vmatpush.bf16.msra.mxu0 0
        %2939 = vmatpush.bf16.msra.mxu0 0
        %2940 = vmatpush.bf16.msra.mxu0 0
        %2941 = vmatpush.bf16.msra.mxu0 0
        %2942 = vmatpush.bf16.msra.mxu0 0
        %2943 = vmatpush.bf16.msra.mxu0 0
        %2944 = vmatpush.bf16.msra.mxu0 %v2923
        %2945 = vmatpush.bf16.msra.mxu0 %v2922
        %2946 = vmatmul.bf16.gmra.mxu0 %v2927
        %v2947 = vpop.f32.mrf.mxu0
        %v2948 = vadd.f32 0.0, %v2947
        %v2949 = vpop.f32.mrf.mxu0
        %v2950 = vadd.f32 0.0, %v2949
        %2951 = vmatmul.bf16.gmra.mxu0 %v2930
        %v2952 = vpop.f32.mrf.mxu0
        %v2953 = vadd.f32 0.0, %v2952
        %v2954 = vpop.f32.mrf.mxu0
        %v2955 = vadd.f32 0.0, %v2954
        %2956 = vmatmul.bf16.gmra.mxu0 %v2933
        %v2957 = vpop.f32.mrf.mxu0
        %v2958 = vadd.f32 0.0, %v2957
        %v2959 = vpop.f32.mrf.mxu0
        %v2960 = vadd.f32 0.0, %v2959
        %2961 = vmatmul.bf16.gmra.mxu0 %v2936
        %v2962 = vpop.f32.mrf.mxu0
        %v2963 = vadd.f32 0.0, %v2962
        %v2964 = vpop.f32.mrf.mxu0
        %v2965 = vadd.f32 0.0, %v2964
        %2966 = vdwg.mxu0
        %v2967 = vadd.f32 %v2892, %v2948
        %v2968 = vadd.f32 %v2893, %v2950
        %v2969 = vadd.f32 %v2894, %v2953
        %v2970 = vadd.f32 %v2895, %v2955
        %v2971 = vadd.f32 %v2896, %v2958
        %v2972 = vadd.f32 %v2897, %v2960
        %v2973 = vadd.f32 %v2898, %v2963
        %v2974 = vadd.f32 %v2899, %v2965
        %s2975 = scalar_lea.vmem %s12, 96
        %v2976 = vld [vmem:[%s2975] sm:$0xf]
        %v2977 = vld [vmem:[%s2975 + $0x4] sm:$0xf]
        %v2978 = vld [vmem:[%s2975 + $0x8] sm:$0xf]
        %v2979 = vld [vmem:[%s2975 + $0xc] sm:$0xf]
        %v2980 = vpack.c.b16 %v1095, %v2746
        %v2985 = vunpack.c.l.b16 %v2976
        %v2986 = vunpack.c.l.b16 %v2977
        %v2987 = vunpack.c.l.b16 %v2978
        %v2988 = vunpack.c.l.b16 %v2979
        %v2989 = vpack.c.b16 %v2986, %v2985
        %v2990 = vpack.c.b16 %v2988, %v2987
        %v2994 = vsel %vm549, %v2980, 0
        %2996 = vmatpush.bf16.msra.mxu0 0
        %2997 = vmatpush.bf16.msra.mxu0 0
        %2998 = vmatpush.bf16.msra.mxu0 0
        %2999 = vmatpush.bf16.msra.mxu0 0
        %3000 = vmatpush.bf16.msra.mxu0 0
        %3001 = vmatpush.bf16.msra.mxu0 0
        %3002 = vmatpush.bf16.msra.mxu0 %v2990
        %3003 = vmatpush.bf16.msra.mxu0 %v2989
        %3004 = vmatmul.bf16.gmra.mxu0 %v2598
        %v3005 = vpop.f32.mrf.mxu0
        %v3006 = vadd.f32 0.0, %v3005
        %v3007 = vpop.f32.mrf.mxu0
        %v3008 = vadd.f32 0.0, %v3007
        %3009 = vmatmul.bf16.gmra.mxu0 %v2601
        %v3010 = vpop.f32.mrf.mxu0
        %v3011 = vadd.f32 0.0, %v3010
        %v3012 = vpop.f32.mrf.mxu0
        %v3013 = vadd.f32 0.0, %v3012
        %3014 = vmatmul.bf16.gmra.mxu0 %v2604
        %v3015 = vpop.f32.mrf.mxu0
        %v3016 = vadd.f32 0.0, %v3015
        %v3017 = vpop.f32.mrf.mxu0
        %v3018 = vadd.f32 0.0, %v3017
        %3019 = vmatmul.bf16.gmra.mxu0 %v2994
        %v3020 = vpop.f32.mrf.mxu0
        %v3021 = vadd.f32 0.0, %v3020
        %v3022 = vpop.f32.mrf.mxu0
        %v3023 = vadd.f32 0.0, %v3022
        %3024 = vdwg.mxu0
        %v3025 = vadd.f32 %v2967, %v3006
        %v3026 = vadd.f32 %v2968, %v3008
        %v3027 = vadd.f32 %v2969, %v3011
        %v3028 = vadd.f32 %v2970, %v3013
        %v3029 = vadd.f32 %v2971, %v3016
        %v3030 = vadd.f32 %v2972, %v3018
        %v3031 = vadd.f32 %v2973, %v3021
        %v3032 = vadd.f32 %v2974, %v3023
        %s3033 = scalar_lea.vmem %s12, 112
        %v3034 = vld [vmem:[%s3033] sm:$0xf]
        %v3035 = vld [vmem:[%s3033 + $0x4] sm:$0xf]
        %v3036 = vld [vmem:[%s3033 + $0x8] sm:$0xf]
        %v3037 = vld [vmem:[%s3033 + $0xc] sm:$0xf]
        %v3038 = vpack.c.b16 %v1247, %v2834
        %v3043 = vunpack.c.l.b16 %v3034
        %v3044 = vunpack.c.l.b16 %v3035
        %v3045 = vunpack.c.l.b16 %v3036
        %v3046 = vunpack.c.l.b16 %v3037
        %v3047 = vpack.c.b16 %v3044, %v3043
        %v3048 = vpack.c.b16 %v3046, %v3045
        %v3052 = vsel %vm549, %v3038, 0
        %3054 = vmatpush.bf16.msra.mxu0 0
        %3055 = vmatpush.bf16.msra.mxu0 0
        %3056 = vmatpush.bf16.msra.mxu0 0
        %3057 = vmatpush.bf16.msra.mxu0 0
        %3058 = vmatpush.bf16.msra.mxu0 0
        %3059 = vmatpush.bf16.msra.mxu0 0
        %3060 = vmatpush.bf16.msra.mxu0 %v3048
        %3061 = vmatpush.bf16.msra.mxu0 %v3047
        %3062 = vmatmul.bf16.gmra.mxu0 %v2541
        %v3063 = vpop.f32.mrf.mxu0
        %v3064 = vadd.f32 0.0, %v3063
        %v3065 = vpop.f32.mrf.mxu0
        %v3066 = vadd.f32 0.0, %v3065
        %3067 = vmatmul.bf16.gmra.mxu0 %v2544
        %v3068 = vpop.f32.mrf.mxu0
        %v3069 = vadd.f32 0.0, %v3068
        %v3070 = vpop.f32.mrf.mxu0
        %v3071 = vadd.f32 0.0, %v3070
        %3072 = vmatmul.bf16.gmra.mxu0 %v2547
        %v3073 = vpop.f32.mrf.mxu0
        %v3074 = vadd.f32 0.0, %v3073
        %v3075 = vpop.f32.mrf.mxu0
        %v3076 = vadd.f32 0.0, %v3075
        %3077 = vmatmul.bf16.gmra.mxu0 %v3052
        %v3078 = vpop.f32.mrf.mxu0
        %v3079 = vadd.f32 0.0, %v3078
        %v3080 = vpop.f32.mrf.mxu0
        %v3081 = vadd.f32 0.0, %v3080
        %3082 = vdwg.mxu0
        %v3083 = vadd.f32 %v3025, %v3064
        %v3084 = vadd.f32 %v3026, %v3066
        %v3085 = vadd.f32 %v3027, %v3069
        %v3086 = vadd.f32 %v3028, %v3071
        %v3087 = vadd.f32 %v3029, %v3074
        %v3088 = vadd.f32 %v3030, %v3076
        %v3089 = vadd.f32 %v3031, %v3079
        %v3090 = vadd.f32 %v3032, %v3081
        %s3091 = scalar_lea.vmem %s12, 128
        %v3092 = vld [vmem:[%s3091] sm:$0xf]
        %v3093 = vld [vmem:[%s3091 + $0x4] sm:$0xf]
        %v3094 = vld [vmem:[%s3091 + $0x8] sm:$0xf]
        %v3095 = vld [vmem:[%s3091 + $0xc] sm:$0xf]
        %v3096 = vpack.c.b16 %v1409, %v2909
        %v3101 = vunpack.c.l.b16 %v3092
        %v3102 = vunpack.c.l.b16 %v3093
        %v3103 = vunpack.c.l.b16 %v3094
        %v3104 = vunpack.c.l.b16 %v3095
        %v3105 = vpack.c.b16 %v3102, %v3101
        %v3106 = vpack.c.b16 %v3104, %v3103
        %v3110 = vsel %vm549, %v3096, 0
        %3112 = vmatpush.bf16.msra.mxu0 0
        %3113 = vmatpush.bf16.msra.mxu0 0
        %3114 = vmatpush.bf16.msra.mxu0 0
        %3115 = vmatpush.bf16.msra.mxu0 0
        %3116 = vmatpush.bf16.msra.mxu0 0
        %3117 = vmatpush.bf16.msra.mxu0 0
        %3118 = vmatpush.bf16.msra.mxu0 %v3106
        %3119 = vmatpush.bf16.msra.mxu0 %v3105
        %3120 = vmatmul.bf16.gmra.mxu0 %v2695
        %v3121 = vpop.f32.mrf.mxu0
        %v3122 = vadd.f32 0.0, %v3121
        %v3123 = vpop.f32.mrf.mxu0
        %v3124 = vadd.f32 0.0, %v3123
        %3125 = vmatmul.bf16.gmra.mxu0 %v2698
        %v3126 = vpop.f32.mrf.mxu0
        %v3127 = vadd.f32 0.0, %v3126
        %v3128 = vpop.f32.mrf.mxu0
        %v3129 = vadd.f32 0.0, %v3128
        %3130 = vmatmul.bf16.gmra.mxu0 %v2701
        %v3131 = vpop.f32.mrf.mxu0
        %v3132 = vadd.f32 0.0, %v3131
        %v3133 = vpop.f32.mrf.mxu0
        %v3134 = vadd.f32 0.0, %v3133
        %3135 = vmatmul.bf16.gmra.mxu0 %v3110
        %v3136 = vpop.f32.mrf.mxu0
        %v3137 = vadd.f32 0.0, %v3136
        %v3138 = vpop.f32.mrf.mxu0
        %v3139 = vadd.f32 0.0, %v3138
        %3140 = vdwg.mxu0
        %v3141 = vadd.f32 %v3083, %v3122
        %v3142 = vadd.f32 %v3084, %v3124
        %v3143 = vadd.f32 %v3085, %v3127
        %v3144 = vadd.f32 %v3086, %v3129
        %v3145 = vadd.f32 %v3087, %v3132
        %v3146 = vadd.f32 %v3088, %v3134
        %v3147 = vadd.f32 %v3089, %v3137
        %v3148 = vadd.f32 %v3090, %v3139
        %v3149 = vld [vmem:[%s13] sm:$0x1]
        %v3151 = vperm.slane %v3149, 0
        %v3153 = vadd.f32 %v3141, %v3151
        %v3154 = vadd.f32 %v3142, %v3151
        %v3155 = vadd.f32 %v3143, %v3151
        %v3156 = vadd.f32 %v3144, %v3151
        %v3157 = vadd.f32 %v3145, %v3151
        %v3158 = vadd.f32 %v3146, %v3151
        %v3159 = vadd.f32 %v3147, %v3151
        %v3160 = vadd.f32 %v3148, %v3151
        %v3161 = vpack.c.bf16 %v536, %v535
        %v3162 = vpack.c.bf16 %v538, %v537
        %v3163 = vpack.c.bf16 %v540, %v539
        %v3164 = vpack.c.bf16 %v542, %v541
        %v3165 = vld [vmem:[%s14] sm:$0xf]
        %v3166 = vld [vmem:[%s14 + $0x4] sm:$0xf]
        %v3167 = vld [vmem:[%s14 + $0x8] sm:$0xf]
        %v3168 = vld [vmem:[%s14 + $0xc] sm:$0xf]
        %v3173 = vunpack.c.l.b16 %v3165
        %v3174 = vunpack.c.l.b16 %v3166
        %v3175 = vunpack.c.l.b16 %v3167
        %v3176 = vunpack.c.l.b16 %v3168
        %v3177 = vpack.c.b16 %v3174, %v3173
        %v3178 = vpack.c.b16 %v3176, %v3175
        %v3182 = vsel %vm549, %v3161, 0
        %v3185 = vsel %vm549, %v3162, 0
        %v3188 = vsel %vm549, %v3163, 0
        %v3191 = vsel %vm549, %v3164, 0
        %3193 = vmatpush.bf16.msra.mxu0 0
        %3194 = vmatpush.bf16.msra.mxu0 0
        %3195 = vmatpush.bf16.msra.mxu0 0
        %3196 = vmatpush.bf16.msra.mxu0 0
        %3197 = vmatpush.bf16.msra.mxu0 0
        %3198 = vmatpush.bf16.msra.mxu0 0
        %3199 = vmatpush.bf16.msra.mxu0 %v3178
        %3200 = vmatpush.bf16.msra.mxu0 %v3177
        %3201 = vmatmul.bf16.gmra.mxu0 %v3182
        %v3202 = vpop.f32.mrf.mxu0
        %v3203 = vadd.f32 0.0, %v3202
        %v3204 = vpop.f32.mrf.mxu0
        %v3205 = vadd.f32 0.0, %v3204
        %3206 = vmatmul.bf16.gmra.mxu0 %v3185
        %v3207 = vpop.f32.mrf.mxu0
        %v3208 = vadd.f32 0.0, %v3207
        %v3209 = vpop.f32.mrf.mxu0
        %v3210 = vadd.f32 0.0, %v3209
        %3211 = vmatmul.bf16.gmra.mxu0 %v3188
        %v3212 = vpop.f32.mrf.mxu0
        %v3213 = vadd.f32 0.0, %v3212
        %v3214 = vpop.f32.mrf.mxu0
        %v3215 = vadd.f32 0.0, %v3214
        %3216 = vmatmul.bf16.gmra.mxu0 %v3191
        %v3217 = vpop.f32.mrf.mxu0
        %v3218 = vadd.f32 0.0, %v3217
        %v3219 = vpop.f32.mrf.mxu0
        %v3220 = vadd.f32 0.0, %v3219
        %3221 = vdwg.mxu0
        %v3222 = vadd.f32 %v3153, %v3203
        %v3223 = vadd.f32 %v3154, %v3205
        %v3224 = vadd.f32 %v3155, %v3208
        %v3225 = vadd.f32 %v3156, %v3210
        %v3226 = vadd.f32 %v3157, %v3213
        %v3227 = vadd.f32 %v3158, %v3215
        %v3228 = vadd.f32 %v3159, %v3218
        %v3229 = vadd.f32 %v3160, %v3220
        %v3230 = vld [vmem:[%s15] sm:$0x1]
        %v3232 = vperm.slane %v3230, 0
        %v3234 = vadd.f32 %v3222, %v3232
        %v3235 = vadd.f32 %v3223, %v3232
        %v3236 = vadd.f32 %v3224, %v3232
        %v3237 = vadd.f32 %v3225, %v3232
        %v3238 = vadd.f32 %v3226, %v3232
        %v3239 = vadd.f32 %v3227, %v3232
        %v3240 = vadd.f32 %v3228, %v3232
        %v3241 = vadd.f32 %v3229, %v3232
        %3242 = vst.msk [vmem:[%s525] sm:$0xff] %vm549, %v3234
        %3243 = vst.msk [vmem:[%s525 + $0x8] sm:$0xff] %vm549, %v3235
        %3244 = vst.msk [vmem:[%s525 + $0x10] sm:$0xff] %vm549, %v3236
        %3245 = vst.msk [vmem:[%s525 + $0x18] sm:$0xff] %vm549, %v3237
        %3246 = vst.msk [vmem:[%s525 + $0x20] sm:$0xff] %vm549, %v3238
        %3247 = vst.msk [vmem:[%s525 + $0x28] sm:$0xff] %vm549, %v3239
        %3248 = vst.msk [vmem:[%s525 + $0x30] sm:$0xff] %vm549, %v3240
        %3249 = vst.msk [vmem:[%s525 + $0x38] sm:$0xff] %vm549, %v3241
        %s3250 = sand.u32 %s384, 1
        %s3251 = scalar_lea.sflag [#allocation3], %s3250
        %s3252 = sand.u32 %s384, 1
        %s3253 = smul.addr %s3252, 64
        %s3254 = scalar_lea.vmem [#allocation2], %s3253
        // Predicated region
        $region85: #{midblock_forward.5} parent=83 // pred_check
          %p3255 = pneg %p394
        $region86: #{midblock_forward.5} parent=83 // pred_check_branch
          %3257 = sbr.rel (%p3255) target = $region88
        $region87: #{midblock_forward.5} parent=83 // pred_region
          %3259 = vsyncadd %s3251, 0
          %s3260 = smul.addr %s30, 8
          %s3261 = smul.addr %s3260, 8
          %s3262 = scalar_lea.hbm %s16, %s3261
          %s3263 = sshll.u32 %s3254, 4
          %s3264 = int_to_ptr.vmem [resolvable:$true] %s3263
          %s3265 = sshll.u32 %s3262, 4
          %s3266 = int_to_ptr.hbm [resolvable:$true] %s3265
          %3271 = dma.vmem_to_hbm [thread:$0]  %s3264, 1024, %s3266, %s3251, 128, 128, 8
        $region88: #{midblock_forward.5} parent=83 // pred_fallthru
          _
      $region84: #{midblock_forward.5} parent=5 // pred_fallthru
        _
      %p3272 = scmp.le.s32.totalorder 2, %s25
      // Predicated region
      $region89: #{midblock_forward.5} parent=5 // pred_check
        %p3273 = pneg %p3272
      $region90: #{midblock_forward.5} parent=5 // pred_check_branch
        %3275 = sbr.rel (%p3273) target = $region92
      $region91: #{midblock_forward.5} parent=5 // pred_region
        %s3276 = ssub.s32 %s25, 2
        // Predicated region
        $region93: #{midblock_forward.5} parent=91 // pred_check
          %p3277 = pneg %p400
        $region94: #{midblock_forward.5} parent=91 // pred_check_branch
          %3279 = sbr.rel (%p3277) target = $region96
        $region95: #{midblock_forward.5} parent=91 // pred_region
          %s3280 = sand.u32 %s385, 1
          %s3281 = scalar_lea.sflag [#allocation3], %s3280
          %s3282 = sand.u32 %s385, 1
          %s3283 = smul.addr %s3282, 64
          %s3284 = scalar_lea.vmem [#allocation2], %s3283
          %3286 = dma.done %s3281, 1024
        $region96: #{midblock_forward.5} parent=91 // pred_fallthru
          _
      $region92: #{midblock_forward.5} parent=5 // pred_fallthru
        _
    $region6: #{midblock_forward.5} parent=1 // loop_footer
      %s29 = sadd.s32 1, %s25
    $region7: #{midblock_forward.5} parent=1 // loop_footer_branch
      %24 = sbr.rel target = $region3
    $region8: #{midblock_forward.5} parent=1 // loop_exit
      _
    %3287 = vsyncpa [#allocation3], 1
    %s3288 = scalar_lea.sflag [#allocation3], 1
    %3289 = vsyncpa %s3288, 1

</llo_original>
